<compile_context>
chip_gen: v5e
topology: v5e:2x2
jax: 0.10.0
libtpu: 0.0.40
codegen_flags: <defaults>
</compile_context>

<pallas_src>
import functools

import jax
import jax.numpy as jnp
from jax import lax
from jax.experimental import pallas as pl
from jax.experimental.pallas import tpu as pltpu

C1 = 32   # conv1 out channels
C2 = 64   # conv2 out channels
K = 3     # 3x3 kernels


def _banded_weights(w1, w2, W):
    """Fold the 3x3 conv w-offsets into banded matmul weights.

    a1[oi, w_in, w_out*C1 + c]          = w1[(oh+1)*3 + (w_in-w_out+1), c]
    a2[oi, w_in*C1 + c1, w_out*C2 + c2] = w2[(oh+1)*3 + (w_in-w_out+1), c1, c2]
    zero outside the |w_in - w_out| <= 1 band; oi indexes oh in (-1, 0, +1).
    The band structure also implements the zero-padding along W.
    """
    dw = jnp.arange(W)[:, None] - jnp.arange(W)[None, :]     # w_in - w_out (= ow)
    valid = jnp.abs(dw) <= 1
    base = jnp.clip(dw, -1, 1) + 1                            # ow + 1 in {0,1,2}
    a1_l, a2_l = [], []
    for oh in (-1, 0, 1):
        taps = (oh + 1) * 3 + base                            # (W, W) tap indices
        t1 = jnp.where(valid[:, :, None], w1[taps], 0.0)      # (W, W, C1)
        a1_l.append(t1.reshape(W, W * C1))
        t2 = jnp.where(valid[:, :, None, None], w2[taps], 0.0)  # (W, W, C1, C2)
        a2_l.append(t2.transpose(0, 2, 1, 3).reshape(W * C1, W * C2))
    a1 = jnp.stack(a1_l).astype(jnp.float32)                  # (3, W, W*C1)
    a2 = jnp.stack(a2_l).astype(jnp.bfloat16)                 # (3, W*C1, W*C2)
    return a1, a2


def _cond_cnn_kernel(x_ref, hmask_ref, a1_ref, b1_ref, a2_ref, b2_ref,
                     w3_ref, b3_ref, o_ref, *, Bblk, H, W):
    L = Bblk * H
    HW = H * W

    x = x_ref[...]                       # (L, W) f32, raw image rows
    m_lo = hmask_ref[:, 0:1]             # (L, 1): 1.0 where h >= 1
    m_hi = hmask_ref[:, 1:2]             # (L, 1): 1.0 where h <= H-2

    def shift_rows(a, oh):
        # a[r + oh, :] with zeros where h+oh leaves the image.  The mask also
        # kills roll wrap-around and any cross-image (batch) leakage because
        # images are stacked contiguously along rows.  (Invariant: |oh| <= 1.)
        rolled = pltpu.roll(a, (-oh) % L, axis=0)
        return rolled * (m_lo if oh < 0 else m_hi)

    # ---- conv1 (1->32, 3x3, pad=1): 3 banded matmuls over h-offsets ----
    h1 = jnp.dot(x, a1_ref[1], preferred_element_type=jnp.float32)
    h1 += jnp.dot(shift_rows(x, -1), a1_ref[0], preferred_element_type=jnp.float32)
    h1 += jnp.dot(shift_rows(x, 1), a1_ref[2], preferred_element_type=jnp.float32)
    h1 = jnp.maximum(h1 + b1_ref[...], 0.0)                   # (L, W*C1) f32

    # ---- conv2 (32->64, 3x3, pad=1): same structure, bf16 MXU, f32 acc ----
    h2 = jnp.dot(h1.astype(jnp.bfloat16), a2_ref[1],
                 preferred_element_type=jnp.float32)
    h2 += jnp.dot(shift_rows(h1, -1).astype(jnp.bfloat16), a2_ref[0],
                  preferred_element_type=jnp.float32)
    h2 += jnp.dot(shift_rows(h1, 1).astype(jnp.bfloat16), a2_ref[2],
                  preferred_element_type=jnp.float32)
    h2 = jnp.maximum(h2 + b2_ref[...], 0.0)                    # (L, W*C2) f32

    # ---- AdaptiveAvgPool2d((1,1)) + 1x1 conv ----
    # Sum over h here; the sum over w is folded into the W-tiled w3 weight.
    g = jnp.sum(h2.reshape(Bblk, H, H and h2.shape[-1]), axis=1)   # (Bblk, W*C2)
    out = jnp.dot(g, w3_ref[...], preferred_element_type=jnp.float32)
    o_ref[0] = out * (1.0 / HW) + b3_ref[...]                  # (Bblk, OUT)


def conditioning_cnn(x_nchw, params, output_size, *, batch_block=4):
    """Pallas forward.  x_nchw: (B, 1, H, W) float32 -> (B, 1, output_size)."""
    w1, b1, w2, b2, w3, b3 = params
    B, Cin, H, W = x_nchw.shape
    assert Cin == 1

    Bblk = max(1, min(batch_block, B))
    nblk = -(-B // Bblk)
    Bpad = nblk * Bblk
    L = Bblk * H
    assert nblk == 1 or (L % 8) == 0, "batch block * H must be sublane aligned"

    # Raw image rows (no wrapper-side im2col): (Bpad*H, W), W on the lane axis.
    x = x_nchw[:, 0, :, :]
    if Bpad != B:
        x = jnp.pad(x, ((0, Bpad - B), (0, 0), (0, 0)))
    x_rows = x.reshape(Bpad * H, W).astype(jnp.float32)

    # Tiny per-row h-validity masks (shared by every batch block).
    hh = jnp.tile(jnp.arange(H), Bblk).reshape(L, 1)
    hmask = jnp.concatenate([hh >= 1, hh <= H - 2], axis=1).astype(jnp.float32)

    # Banded / tiled weights and biases in the lane-dense layout.
    a1, a2 = _banded_weights(w1, w2, W)                    # (3,W,W*C1), (3,W*C1,W*C2)
    b1d = jnp.tile(b1.reshape(1, C1), (1, W))              # (1, W*C1)
    b2d = jnp.tile(b2.reshape(1, C2), (1, W))              # (1, W*C2)
    w3d = jnp.tile(w3, (W, 1)).astype(jnp.float32)         # (W*C2, OUT)
    b3d = b3.reshape(1, output_size)

    kernel = functools.partial(_cond_cnn_kernel, Bblk=Bblk, H=H, W=W)
    out = pl.pallas_call(
        kernel,
        out_shape=jax.ShapeDtypeStruct((nblk, Bblk, output_size), jnp.float32),
        grid_spec=pltpu.PrefetchScalarGridSpec(
            num_scalar_prefetch=0,
            grid=(nblk,),
            in_specs=[
                pl.BlockSpec((L, W), lambda b: (b, 0)),                    # image rows
                pl.BlockSpec((L, 2), lambda b: (0, 0)),                    # h masks
                pl.BlockSpec((3, W, W * C1), lambda b: (0, 0, 0)),         # conv1 banded
                pl.BlockSpec((1, W * C1), lambda b: (0, 0)),               # b1 tiled
                pl.BlockSpec((3, W * C1, W * C2), lambda b: (0, 0, 0)),    # conv2 banded
                pl.BlockSpec((1, W * C2), lambda b: (0, 0)),               # b2 tiled
                pl.BlockSpec((W * C2, output_size), lambda b: (0, 0)),     # w3 tiled
                pl.BlockSpec((1, output_size), lambda b: (0, 0)),          # b3
            ],
            # (Bblk, output_size) is a small masked store; fine at these sizes.
            out_specs=pl.BlockSpec((1, Bblk, output_size), lambda b: (b, 0, 0)),
        ),
        compiler_params=pltpu.CompilerParams(
            dimension_semantics=("parallel",)),
    )(x_rows, hmask, a1, b1d, a2, b2d, w3d, b3d)

    return out.reshape(Bpad, output_size)[:B].reshape(B, 1, output_size)


def init_params(key, output_size):
    """Deterministic synthetic parameters (same shapes as the torch module)."""
    k1, k2, k3 = jax.random.split(key, 3)
    # conv1 weight stored as (kh*kw, C1)          [torch: (32, 1, 3, 3)]
    w1 = 0.1 * jax.random.normal(k1, (K * K, C1), jnp.float32)
    b1 = 0.01 * jnp.arange(C1, dtype=jnp.float32).reshape(1, C1)
    # conv2 weight stored as (kh*kw, C1, C2)      [torch: (64, 32, 3, 3)]
    w2 = 0.05 * jax.random.normal(k2, (K * K, C1, C2), jnp.float32)
    b2 = 0.01 * jnp.arange(C2, dtype=jnp.float32).reshape(1, C2)
    # conv3 weight stored as (C2, output_size)    [torch: (out, 64, 1, 1)]
    w3 = 0.1 * jax.random.normal(k3, (C2, output_size), jnp.float32)
    b3 = 0.01 * jnp.arange(output_size, dtype=jnp.float32).reshape(1, output_size)
    return (w1, b1, w2, b2, w3, b3)


def reference(x_nchw, params, output_size):
    """Pure-JAX reference (mirrors the torch NCHW semantics)."""
    w1, b1, w2, b2, w3, b3 = params
    dn = ("NCHW", "OIHW", "NCHW")
    w1_oihw = w1.reshape(K, K, 1, C1).transpose(3, 2, 0, 1)      # (32, 1, 3, 3)
    w2_oihw = w2.reshape(K, K, C1, C2).transpose(3, 2, 0, 1)     # (64, 32, 3, 3)
    w3_oihw = w3.T.reshape(output_size, C2, 1, 1)                # (out, 64, 1, 1)

    h1 = lax.conv_general_dilated(x_nchw, w1_oihw, (1, 1), "SAME",
                                  dimension_numbers=dn) + b1.reshape(1, C1, 1, 1)
    h1 = jnp.maximum(h1, 0.0)
    h2 = lax.conv_general_dilated(h1, w2_oihw, (1, 1), "SAME",
                                  dimension_numbers=dn) + b2.reshape(1, C2, 1, 1)
    h2 = jnp.maximum(h2, 0.0)
    pooled = jnp.mean(h2, axis=(2, 3), keepdims=True)            # (B, 64, 1, 1)
    out = lax.conv_general_dilated(pooled, w3_oihw, (1, 1), "VALID",
                                   dimension_numbers=dn)
    out = out + b3.reshape(1, output_size, 1, 1)
    return out.reshape(x_nchw.shape[0], 1, output_size)


if __name__ == "__main__":
    B, H, W = 16, 16, 16
    OUTPUT_SIZE = 32

    key = jax.random.PRNGKey(0)
    kx, kp = jax.random.split(key)
    x = jax.random.normal(kx, (B, 1, H, W), jnp.float32)   # NCHW, 1 channel
    params = init_params(kp, OUTPUT_SIZE)

    out = conditioning_cnn(x, params, OUTPUT_SIZE)
    out = jax.block_until_ready(out)
    assert out.shape == (B, 1, OUTPUT_SIZE)

    ref = jax.block_until_ready(reference(x, params, OUTPUT_SIZE))
    # conv2 runs with bf16 MXU operands (f32 accumulation) -> relaxed tol.
    assert jnp.allclose(out, ref, rtol=2e-2, atol=2e-2), (
        f"max abs diff {float(jnp.max(jnp.abs(out - ref)))}")

    print("KERNEL_OK")
</pallas_src>

<mosaic_0001>
module attributes {stable_mosaic.version = 11 : i64} {
  func.func @_cond_cnn_kernel(%arg0: i32, %arg1: memref<64x16xf32, #tpu.memory_space<vmem>>, %arg2: memref<64x2xf32, #tpu.memory_space<vmem>>, %arg3: memref<3x16x512xf32, #tpu.memory_space<vmem>>, %arg4: memref<1x512xf32, #tpu.memory_space<vmem>>, %arg5: memref<3x512x1024xbf16, #tpu.memory_space<vmem>>, %arg6: memref<1x1024xf32, #tpu.memory_space<vmem>>, %arg7: memref<1024x32xf32, #tpu.memory_space<vmem>>, %arg8: memref<1x32xf32, #tpu.memory_space<vmem>>, %arg9: memref<1x4x32xf32, #tpu.memory_space<vmem>>) attributes {dimension_semantics = [#tpu.dimension_semantics<parallel>], iteration_bounds = array<i64: 4>, scalar_prefetch = 0 : i64, scratch_operands = 0 : i64, tpu.core_type = #tpu.core_type<tc>, window_params = [{transform_indices = @transform_0, window_bounds = array<i64: 64, 16>}, {pipeline_mode = #tpu.pipeline_mode<synchronous>, transform_indices = @transform_1, window_bounds = array<i64: 64, 2>}, {pipeline_mode = #tpu.pipeline_mode<synchronous>, transform_indices = @transform_2, window_bounds = array<i64: 3, 16, 512>}, {pipeline_mode = #tpu.pipeline_mode<synchronous>, transform_indices = @transform_3, window_bounds = array<i64: 1, 512>}, {pipeline_mode = #tpu.pipeline_mode<synchronous>, transform_indices = @transform_4, window_bounds = array<i64: 3, 512, 1024>}, {pipeline_mode = #tpu.pipeline_mode<synchronous>, transform_indices = @transform_5, window_bounds = array<i64: 1, 1024>}, {pipeline_mode = #tpu.pipeline_mode<synchronous>, transform_indices = @transform_6, window_bounds = array<i64: 1024, 32>}, {pipeline_mode = #tpu.pipeline_mode<synchronous>, transform_indices = @transform_7, window_bounds = array<i64: 1, 32>}, {transform_indices = @transform_8, window_bounds = array<i64: 1, 4, 32>}]} {
    %c0 = arith.constant 0 : index
    %c0_0 = arith.constant 0 : index
    %0 = vector.load %arg1[%c0, %c0_0] : memref<64x16xf32, #tpu.memory_space<vmem>>, vector<64x16xf32>
    %c0_1 = arith.constant 0 : index
    %c0_2 = arith.constant 0 : index
    %1 = vector.load %arg2[%c0_1, %c0_2] : memref<64x2xf32, #tpu.memory_space<vmem>>, vector<64x1xf32>
    %c0_3 = arith.constant 0 : index
    %c1 = arith.constant 1 : index
    %2 = vector.load %arg2[%c0_3, %c1] : memref<64x2xf32, #tpu.memory_space<vmem>>, vector<64x1xf32>
    %c1_4 = arith.constant 1 : index
    %c0_5 = arith.constant 0 : index
    %c0_6 = arith.constant 0 : index
    %3 = vector.load %arg3[%c1_4, %c0_5, %c0_6] : memref<3x16x512xf32, #tpu.memory_space<vmem>>, vector<1x16x512xf32>
    %4 = vector.shape_cast %3 : vector<1x16x512xf32> to vector<16x512xf32>
    %cst = arith.constant dense<0.000000e+00> : vector<64x512xf32>
    %5 = tpu.matmul %0, %4, %cst {dimension_numbers = #tpu.dot_dimension_numbers<[1], [0], [0], [1], [0, 0, 1, 1], [], []>} : vector<64x16xf32>, vector<16x512xf32>, vector<64x512xf32> -> vector<64x512xf32>
    %c1_i32 = arith.constant 1 : i32
    %6 = tpu.dynamic_rotate %0 by %c1_i32 dim 0 : vector<64x16xf32>, i32 -> vector<64x16xf32>
    %7 = vector.broadcast %1 : vector<64x1xf32> to vector<64x16xf32>
    %8 = arith.mulf %6, %7 : vector<64x16xf32>
    %c0_7 = arith.constant 0 : index
    %c0_8 = arith.constant 0 : index
    %c0_9 = arith.constant 0 : index
    %9 = vector.load %arg3[%c0_7, %c0_8, %c0_9] : memref<3x16x512xf32, #tpu.memory_space<vmem>>, vector<1x16x512xf32>
    %10 = vector.shape_cast %9 : vector<1x16x512xf32> to vector<16x512xf32>
    %cst_10 = arith.constant dense<0.000000e+00> : vector<64x512xf32>
    %11 = tpu.matmul %8, %10, %cst_10 {dimension_numbers = #tpu.dot_dimension_numbers<[1], [0], [0], [1], [0, 0, 1, 1], [], []>} : vector<64x16xf32>, vector<16x512xf32>, vector<64x512xf32> -> vector<64x512xf32>
    %12 = arith.addf %5, %11 : vector<64x512xf32>
    %c63_i32 = arith.constant 63 : i32
    %13 = tpu.dynamic_rotate %0 by %c63_i32 dim 0 : vector<64x16xf32>, i32 -> vector<64x16xf32>
    %14 = vector.broadcast %2 : vector<64x1xf32> to vector<64x16xf32>
    %15 = arith.mulf %13, %14 : vector<64x16xf32>
    %c2 = arith.constant 2 : index
    %c0_11 = arith.constant 0 : index
    %c0_12 = arith.constant 0 : index
    %16 = vector.load %arg3[%c2, %c0_11, %c0_12] : memref<3x16x512xf32, #tpu.memory_space<vmem>>, vector<1x16x512xf32>
    %17 = vector.shape_cast %16 : vector<1x16x512xf32> to vector<16x512xf32>
    %cst_13 = arith.constant dense<0.000000e+00> : vector<64x512xf32>
    %18 = tpu.matmul %15, %17, %cst_13 {dimension_numbers = #tpu.dot_dimension_numbers<[1], [0], [0], [1], [0, 0, 1, 1], [], []>} : vector<64x16xf32>, vector<16x512xf32>, vector<64x512xf32> -> vector<64x512xf32>
    %19 = arith.addf %12, %18 : vector<64x512xf32>
    %c0_14 = arith.constant 0 : index
    %c0_15 = arith.constant 0 : index
    %20 = vector.load %arg4[%c0_14, %c0_15] : memref<1x512xf32, #tpu.memory_space<vmem>>, vector<1x512xf32>
    %21 = vector.broadcast %20 : vector<1x512xf32> to vector<64x512xf32>
    %22 = arith.addf %19, %21 : vector<64x512xf32>
    %cst_16 = arith.constant 0.000000e+00 : f32
    %23 = vector.broadcast %cst_16 : f32 to vector<64x512xf32>
    %24 = arith.maximumf %22, %23 : vector<64x512xf32>
    %25 = arith.truncf %24 : vector<64x512xf32> to vector<64x512xbf16>
    %c1_17 = arith.constant 1 : index
    %c0_18 = arith.constant 0 : index
    %c0_19 = arith.constant 0 : index
    %26 = vector.load %arg5[%c1_17, %c0_18, %c0_19] : memref<3x512x1024xbf16, #tpu.memory_space<vmem>>, vector<1x512x1024xbf16>
    %27 = vector.shape_cast %26 : vector<1x512x1024xbf16> to vector<512x1024xbf16>
    %cst_20 = arith.constant dense<0.000000e+00> : vector<64x1024xf32>
    %28 = tpu.matmul %25, %27, %cst_20 {dimension_numbers = #tpu.dot_dimension_numbers<[1], [0], [0], [1], [0, 0, 1, 1], [], []>} : vector<64x512xbf16>, vector<512x1024xbf16>, vector<64x1024xf32> -> vector<64x1024xf32>
    %c1_i32_21 = arith.constant 1 : i32
    %29 = tpu.dynamic_rotate %24 by %c1_i32_21 dim 0 : vector<64x512xf32>, i32 -> vector<64x512xf32>
    %30 = vector.broadcast %1 : vector<64x1xf32> to vector<64x512xf32>
    %31 = arith.mulf %29, %30 : vector<64x512xf32>
    %32 = arith.truncf %31 : vector<64x512xf32> to vector<64x512xbf16>
    %c0_22 = arith.constant 0 : index
    %c0_23 = arith.constant 0 : index
    %c0_24 = arith.constant 0 : index
    %33 = vector.load %arg5[%c0_22, %c0_23, %c0_24] : memref<3x512x1024xbf16, #tpu.memory_space<vmem>>, vector<1x512x1024xbf16>
    %34 = vector.shape_cast %33 : vector<1x512x1024xbf16> to vector<512x1024xbf16>
    %cst_25 = arith.constant dense<0.000000e+00> : vector<64x1024xf32>
    %35 = tpu.matmul %32, %34, %cst_25 {dimension_numbers = #tpu.dot_dimension_numbers<[1], [0], [0], [1], [0, 0, 1, 1], [], []>} : vector<64x512xbf16>, vector<512x1024xbf16>, vector<64x1024xf32> -> vector<64x1024xf32>
    %36 = arith.addf %28, %35 : vector<64x1024xf32>
    %c63_i32_26 = arith.constant 63 : i32
    %37 = tpu.dynamic_rotate %24 by %c63_i32_26 dim 0 : vector<64x512xf32>, i32 -> vector<64x512xf32>
    %38 = vector.broadcast %2 : vector<64x1xf32> to vector<64x512xf32>
    %39 = arith.mulf %37, %38 : vector<64x512xf32>
    %40 = arith.truncf %39 : vector<64x512xf32> to vector<64x512xbf16>
    %c2_27 = arith.constant 2 : index
    %c0_28 = arith.constant 0 : index
    %c0_29 = arith.constant 0 : index
    %41 = vector.load %arg5[%c2_27, %c0_28, %c0_29] : memref<3x512x1024xbf16, #tpu.memory_space<vmem>>, vector<1x512x1024xbf16>
    %42 = vector.shape_cast %41 : vector<1x512x1024xbf16> to vector<512x1024xbf16>
    %cst_30 = arith.constant dense<0.000000e+00> : vector<64x1024xf32>
    %43 = tpu.matmul %40, %42, %cst_30 {dimension_numbers = #tpu.dot_dimension_numbers<[1], [0], [0], [1], [0, 0, 1, 1], [], []>} : vector<64x512xbf16>, vector<512x1024xbf16>, vector<64x1024xf32> -> vector<64x1024xf32>
    %44 = arith.addf %36, %43 : vector<64x1024xf32>
    %c0_31 = arith.constant 0 : index
    %c0_32 = arith.constant 0 : index
    %45 = vector.load %arg6[%c0_31, %c0_32] : memref<1x1024xf32, #tpu.memory_space<vmem>>, vector<1x1024xf32>
    %46 = vector.broadcast %45 : vector<1x1024xf32> to vector<64x1024xf32>
    %47 = arith.addf %44, %46 : vector<64x1024xf32>
    %cst_33 = arith.constant 0.000000e+00 : f32
    %48 = vector.broadcast %cst_33 : f32 to vector<64x1024xf32>
    %49 = arith.maximumf %47, %48 : vector<64x1024xf32>
    %50 = vector.shape_cast %49 : vector<64x1024xf32> to vector<4x16x1024xf32>
    %cst_34 = arith.constant dense<0.000000e+00> : vector<4x1024xf32>
    %51 = vector.multi_reduction <add>, %50, %cst_34 [1] : vector<4x16x1024xf32> to vector<4x1024xf32>
    %c0_35 = arith.constant 0 : index
    %c0_36 = arith.constant 0 : index
    %52 = vector.load %arg7[%c0_35, %c0_36] : memref<1024x32xf32, #tpu.memory_space<vmem>>, vector<1024x32xf32>
    %cst_37 = arith.constant dense<0.000000e+00> : vector<4x32xf32>
    %53 = tpu.matmul %51, %52, %cst_37 {dimension_numbers = #tpu.dot_dimension_numbers<[1], [0], [0], [1], [0, 0, 1, 1], [], []>} : vector<4x1024xf32>, vector<1024x32xf32>, vector<4x32xf32> -> vector<4x32xf32>
    %cst_38 = arith.constant 3.906250e-03 : f32
    %54 = vector.broadcast %cst_38 : f32 to vector<4x32xf32>
    %55 = arith.mulf %53, %54 : vector<4x32xf32>
    %c0_39 = arith.constant 0 : index
    %c0_40 = arith.constant 0 : index
    %56 = vector.load %arg8[%c0_39, %c0_40] : memref<1x32xf32, #tpu.memory_space<vmem>>, vector<1x32xf32>
    %57 = vector.broadcast %56 : vector<1x32xf32> to vector<4x32xf32>
    %58 = arith.addf %55, %57 : vector<4x32xf32>
    %c0_41 = arith.constant 0 : index
    %c0_42 = arith.constant 0 : index
    %c0_43 = arith.constant 0 : index
    %59 = vector.load %arg9[%c0_41, %c0_42, %c0_43] : memref<1x4x32xf32, #tpu.memory_space<vmem>>, vector<1x4x32xf32>
    %60 = vector.shape_cast %59 : vector<1x4x32xf32> to vector<4x32xf32>
    %61 = vector.shape_cast %58 : vector<4x32xf32> to vector<1x4x32xf32>
    tpu.vector_store %arg9[%c0_41, %c0_42, %c0_43], %61 {strides = array<i32>} : memref<1x4x32xf32, #tpu.memory_space<vmem>>, vector<1x4x32xf32>,
    return
  }
  func.func @transform_0(%arg0: i32) -> (i32, i32) {
    %c0_i32 = arith.constant 0 : i32
    %c0_i32_0 = arith.constant 0 : i32
    return %arg0, %c0_i32 : i32, i32
  }
  func.func @transform_1(%arg0: i32) -> (i32, i32) {
    %c0_i32 = arith.constant 0 : i32
    %c0_i32_0 = arith.constant 0 : i32
    %c0_i32_1 = arith.constant 0 : i32
    return %c0_i32, %c0_i32_0 : i32, i32
  }
  func.func @transform_2(%arg0: i32) -> (i32, i32, i32) {
    %c0_i32 = arith.constant 0 : i32
    %c0_i32_0 = arith.constant 0 : i32
    %c0_i32_1 = arith.constant 0 : i32
    %c0_i32_2 = arith.constant 0 : i32
    return %c0_i32, %c0_i32_0, %c0_i32_1 : i32, i32, i32
  }
  func.func @transform_3(%arg0: i32) -> (i32, i32) {
    %c0_i32 = arith.constant 0 : i32
    %c0_i32_0 = arith.constant 0 : i32
    %c0_i32_1 = arith.constant 0 : i32
    return %c0_i32, %c0_i32_0 : i32, i32
  }
  func.func @transform_4(%arg0: i32) -> (i32, i32, i32) {
    %c0_i32 = arith.constant 0 : i32
    %c0_i32_0 = arith.constant 0 : i32
    %c0_i32_1 = arith.constant 0 : i32
    %c0_i32_2 = arith.constant 0 : i32
    return %c0_i32, %c0_i32_0, %c0_i32_1 : i32, i32, i32
  }
  func.func @transform_5(%arg0: i32) -> (i32, i32) {
    %c0_i32 = arith.constant 0 : i32
    %c0_i32_0 = arith.constant 0 : i32
    %c0_i32_1 = arith.constant 0 : i32
    return %c0_i32, %c0_i32_0 : i32, i32
  }
  func.func @transform_6(%arg0: i32) -> (i32, i32) {
    %c0_i32 = arith.constant 0 : i32
    %c0_i32_0 = arith.constant 0 : i32
    %c0_i32_1 = arith.constant 0 : i32
    return %c0_i32, %c0_i32_0 : i32, i32
  }
  func.func @transform_7(%arg0: i32) -> (i32, i32) {
    %c0_i32 = arith.constant 0 : i32
    %c0_i32_0 = arith.constant 0 : i32
    %c0_i32_1 = arith.constant 0 : i32
    return %c0_i32, %c0_i32_0 : i32, i32
  }
  func.func @transform_8(%arg0: i32) -> (i32, i32, i32) {
    %c0_i32 = arith.constant 0 : i32
    %c0_i32_0 = arith.constant 0 : i32
    %c0_i32_1 = arith.constant 0 : i32
    return %arg0, %c0_i32, %c0_i32_0 : i32, i32, i32
  }
}

</mosaic_0001>

<llo_original>
// kernel: tpu_custom_call.1
$region0: #{tpu_custom_call.1}
  #allocation0 [shape = 'u32[]', space=smem, size = 0x4, offset = 0x4, fixed_abs, tag = 'smem constant byte address 0x4 - core index']
  #allocation1 [shape = 'u32[72,128]{1,0:T(1,128)}', space=vmem, size = 0x9000, scoped, tag = 'internal scratch']
  %s0 = inlined_call_operand.vmem [shape: f32[256,16], index: 0, kind: input, shape index: {}]
  %s1 = inlined_call_operand.vmem [shape: f32[64,2], index: 1, kind: input, shape index: {}]
  %s2 = inlined_call_operand.hbm [shape: f32[3,16,512], index: 2, kind: input, shape index: {}]
  %s3 = inlined_call_operand.hbm [shape: f32[1,512], index: 3, kind: input, shape index: {}]
  %s4 = inlined_call_operand.hbm [shape: bf16[3,512,1024], index: 4, kind: input, shape index: {}]
  %s5 = inlined_call_operand.hbm [shape: f32[1,1024], index: 5, kind: input, shape index: {}]
  %s6 = inlined_call_operand.vmem [shape: f32[1024,32], index: 6, kind: input, shape index: {}]
  %s7 = inlined_call_operand.hbm [shape: f32[1,32], index: 7, kind: input, shape index: {}]
  %s8 = inlined_call_operand.hbm [shape: f32[4,4,32], index: 8, kind: output, shape index: {}]
  %s9 = sld [smem:[#allocation0]]
  $region85: #{tpu_custom_call.1} parent=0
    _
  %s11 = ssub.s32 1, %s9
  %s12 = scalar_select 0, %s11, %s9
  $region1: #{tpu_custom_call.1} parent=0
    #allocation2 [shape = 'u8[98304]{0}', space=vmem, size = 0x18000, scoped, tag = 'input window, operand 2, single buffered']
    #allocation3 [shape = 's32[2]{0}', space=sflag, size = 0x8, scoped, tag = 'scoped memory for tpu_custom_call.1']
    #allocation4 [shape = 's32[2]{0}', space=sflag, size = 0x8, scoped, tag = 'scoped memory for tpu_custom_call.1']
    #allocation5 [shape = 'u8[2048]{0}', space=vmem, size = 0x800, scoped, tag = 'input window, operand 3, single buffered']
    #allocation6 [shape = 's32[1]{0}', space=sflag, size = 0x4, scoped, tag = 'scoped memory for tpu_custom_call.1']
    #allocation7 [shape = 'u8[3145728]{0}', space=vmem, size = 0x300000, scoped, tag = 'input window, operand 4, single buffered']
    #allocation8 [shape = 'u8[4096]{0}', space=vmem, size = 0x1000, scoped, tag = 'input window, operand 5, single buffered']
    #allocation9 [shape = 's32[1]{0}', space=sflag, size = 0x4, scoped, tag = 'scoped memory for tpu_custom_call.1']
    #allocation10 [shape = 'u8[512]{0}', space=vmem, size = 0x400, scoped, tag = 'input window, operand 7, single buffered']
    #allocation11 [shape = 'u8[4096]{0}', space=vmem, size = 0x1000, scoped, tag = 'output window, operand 0']
    %13 = vsyncpa [#allocation3], 0
    %14 = vsyncpa [#allocation6], 0
    %15 = vsyncpa [#allocation9], 0
    %16 = vsyncpa [#allocation4], 0
    %s17 = scalar_lea.sflag [#allocation4], 1
    %18 = vsyncpa %s17, 0
    loop: start=0, step=1, limit=6
    $region2: #{tpu_custom_call.1} parent=1 // loop_pre_header
      _
    $region3: #{tpu_custom_call.1} parent=1 // loop_header
      %s20 = sphi 0, %s24
      %p21 = scmp.ge.s32.totalorder %s20, 6
      %s30 = sphi 0, %s32
      %s33 = sphi 0, %s30
      %s34 = sphi 0, %s33
      %s50 = sphi 0, %s34
      %s54 = sphi 0, %s54
      %s56 = sphi 0, %s54
      %s57 = sphi 0, %s56
      %s71 = sphi 0, %s57
      %s75 = sphi 0, %s75
      %s77 = sphi 0, %s75
      %s78 = sphi 0, %s77
      %s92 = sphi 0, %s78
      %s96 = sphi 0, %s96
      %s98 = sphi 0, %s96
      %s99 = sphi 0, %s98
      %s113 = sphi 0, %s99
      %s117 = sphi 0, %s117
      %s119 = sphi 0, %s117
      %s120 = sphi 0, %s119
      %s134 = sphi 0, %s120
      %s138 = sphi 0, %s138
      %s140 = sphi 0, %s138
      %s141 = sphi 0, %s140
      %s155 = sphi 0, %s141
      %s159 = sphi 0, %s159
      %s161 = sphi 0, %s159
      %s162 = sphi 0, %s161
      %s176 = sphi 0, %s162
      %s180 = sphi 0, %s180
      %s182 = sphi 0, %s180
      %s183 = sphi 0, %s182
      %s197 = sphi 0, %s183
      %s203 = sphi 0, %s205
      %s206 = sphi 0, %s203
      %s207 = sphi 0, %s206
      %s223 = sphi 0, %s207
    $region4: #{tpu_custom_call.1} parent=1 // loop_header_branch
      %23 = sbr.rel (%p21) target = $region8
    $region5: #{tpu_custom_call.1} parent=1 // loop_body
      %s25 = ssub.s32 %s20, 1
      %s26 = ssub.s32 %s20, 2
      %s27 = sadd.s32 %s20, 1
      %s28 = ssub.s32 %s20, %s27
      %p29 = scmp.eq.s32.totalorder %s28, 0
      %s31 = sadd.s32 %s30, 1
      %s32 = scalar_select %p29, %s30, %s31
      %p35 = pneg %p29
      %p36 = scmp.eq.s32.totalorder %s20, 3
      %p37 = por %p35, %p36
      %p38 = scmp.ne.s32.totalorder %s30, %s33
      %p39 = scmp.eq.s32.totalorder %s20, 0
      %p40 = por %p38, %p39
      %p41 = scmp.ne.s32.totalorder %s30, %s33
      %p42 = scmp.eq.s32.totalorder %s25, 3
      %p43 = por %p41, %p42
      %p44 = scmp.ne.s32.totalorder %s33, %s34
      %p45 = scmp.eq.s32.totalorder %s25, 0
      %p46 = por %p44, %p45
      %p47 = scmp.ne.s32.totalorder %s33, %s34
      %p48 = scmp.eq.s32.totalorder %s26, 3
      %p49 = por %p47, %p48
      %p51 = scmp.ne.s32.totalorder %s34, %s50
      %p52 = scmp.eq.s32.totalorder %s26, 0
      %p53 = por %p51, %p52
      %s55 = sadd.s32 %s54, 1
      %p58 = scmp.eq.s32.totalorder %s20, 3
      %p59 = scmp.ne.s32.totalorder %s54, %s56
      %p60 = scmp.eq.s32.totalorder %s20, 0
      %p61 = por %p59, %p60
      %p62 = scmp.ne.s32.totalorder %s54, %s56
      %p63 = scmp.eq.s32.totalorder %s25, 3
      %p64 = por %p62, %p63
      %p65 = scmp.ne.s32.totalorder %s56, %s57
      %p66 = scmp.eq.s32.totalorder %s25, 0
      %p67 = por %p65, %p66
      %p68 = scmp.ne.s32.totalorder %s56, %s57
      %p69 = scmp.eq.s32.totalorder %s26, 3
      %p70 = por %p68, %p69
      %p72 = scmp.ne.s32.totalorder %s57, %s71
      %p73 = scmp.eq.s32.totalorder %s26, 0
      %p74 = por %p72, %p73
      %s76 = sadd.s32 %s75, 1
      %p79 = scmp.eq.s32.totalorder %s20, 3
      %p80 = scmp.ne.s32.totalorder %s75, %s77
      %p81 = scmp.eq.s32.totalorder %s20, 0
      %p82 = por %p80, %p81
      %p83 = scmp.ne.s32.totalorder %s75, %s77
      %p84 = scmp.eq.s32.totalorder %s25, 3
      %p85 = por %p83, %p84
      %p86 = scmp.ne.s32.totalorder %s77, %s78
      %p87 = scmp.eq.s32.totalorder %s25, 0
      %p88 = por %p86, %p87
      %p89 = scmp.ne.s32.totalorder %s77, %s78
      %p90 = scmp.eq.s32.totalorder %s26, 3
      %p91 = por %p89, %p90
      %p93 = scmp.ne.s32.totalorder %s78, %s92
      %p94 = scmp.eq.s32.totalorder %s26, 0
      %p95 = por %p93, %p94
      %s97 = sadd.s32 %s96, 1
      %p100 = scmp.eq.s32.totalorder %s20, 3
      %p101 = scmp.ne.s32.totalorder %s96, %s98
      %p102 = scmp.eq.s32.totalorder %s20, 0
      %p103 = por %p101, %p102
      %p104 = scmp.ne.s32.totalorder %s96, %s98
      %p105 = scmp.eq.s32.totalorder %s25, 3
      %p106 = por %p104, %p105
      %p107 = scmp.ne.s32.totalorder %s98, %s99
      %p108 = scmp.eq.s32.totalorder %s25, 0
      %p109 = por %p107, %p108
      %p110 = scmp.ne.s32.totalorder %s98, %s99
      %p111 = scmp.eq.s32.totalorder %s26, 3
      %p112 = por %p110, %p111
      %p114 = scmp.ne.s32.totalorder %s99, %s113
      %p115 = scmp.eq.s32.totalorder %s26, 0
      %p116 = por %p114, %p115
      %s118 = sadd.s32 %s117, 1
      %p121 = scmp.eq.s32.totalorder %s20, 3
      %p122 = scmp.ne.s32.totalorder %s117, %s119
      %p123 = scmp.eq.s32.totalorder %s20, 0
      %p124 = por %p122, %p123
      %p125 = scmp.ne.s32.totalorder %s117, %s119
      %p126 = scmp.eq.s32.totalorder %s25, 3
      %p127 = por %p125, %p126
      %p128 = scmp.ne.s32.totalorder %s119, %s120
      %p129 = scmp.eq.s32.totalorder %s25, 0
      %p130 = por %p128, %p129
      %p131 = scmp.ne.s32.totalorder %s119, %s120
      %p132 = scmp.eq.s32.totalorder %s26, 3
      %p133 = por %p131, %p132
      %p135 = scmp.ne.s32.totalorder %s120, %s134
      %p136 = scmp.eq.s32.totalorder %s26, 0
      %p137 = por %p135, %p136
      %s139 = sadd.s32 %s138, 1
      %p142 = scmp.eq.s32.totalorder %s20, 3
      %p143 = scmp.ne.s32.totalorder %s138, %s140
      %p144 = scmp.eq.s32.totalorder %s20, 0
      %p145 = por %p143, %p144
      %p146 = scmp.ne.s32.totalorder %s138, %s140
      %p147 = scmp.eq.s32.totalorder %s25, 3
      %p148 = por %p146, %p147
      %p149 = scmp.ne.s32.totalorder %s140, %s141
      %p150 = scmp.eq.s32.totalorder %s25, 0
      %p151 = por %p149, %p150
      %p152 = scmp.ne.s32.totalorder %s140, %s141
      %p153 = scmp.eq.s32.totalorder %s26, 3
      %p154 = por %p152, %p153
      %p156 = scmp.ne.s32.totalorder %s141, %s155
      %p157 = scmp.eq.s32.totalorder %s26, 0
      %p158 = por %p156, %p157
      %s160 = sadd.s32 %s159, 1
      %p163 = scmp.eq.s32.totalorder %s20, 3
      %p164 = scmp.ne.s32.totalorder %s159, %s161
      %p165 = scmp.eq.s32.totalorder %s20, 0
      %p166 = por %p164, %p165
      %p167 = scmp.ne.s32.totalorder %s159, %s161
      %p168 = scmp.eq.s32.totalorder %s25, 3
      %p169 = por %p167, %p168
      %p170 = scmp.ne.s32.totalorder %s161, %s162
      %p171 = scmp.eq.s32.totalorder %s25, 0
      %p172 = por %p170, %p171
      %p173 = scmp.ne.s32.totalorder %s161, %s162
      %p174 = scmp.eq.s32.totalorder %s26, 3
      %p175 = por %p173, %p174
      %p177 = scmp.ne.s32.totalorder %s162, %s176
      %p178 = scmp.eq.s32.totalorder %s26, 0
      %p179 = por %p177, %p178
      %s181 = sadd.s32 %s180, 1
      %p184 = scmp.eq.s32.totalorder %s20, 3
      %p185 = scmp.ne.s32.totalorder %s180, %s182
      %p186 = scmp.eq.s32.totalorder %s20, 0
      %p187 = por %p185, %p186
      %p188 = scmp.ne.s32.totalorder %s180, %s182
      %p189 = scmp.eq.s32.totalorder %s25, 3
      %p190 = por %p188, %p189
      %p191 = scmp.ne.s32.totalorder %s182, %s183
      %p192 = scmp.eq.s32.totalorder %s25, 0
      %p193 = por %p191, %p192
      %p194 = scmp.ne.s32.totalorder %s182, %s183
      %p195 = scmp.eq.s32.totalorder %s26, 3
      %p196 = por %p194, %p195
      %p198 = scmp.ne.s32.totalorder %s183, %s197
      %p199 = scmp.eq.s32.totalorder %s26, 0
      %p200 = por %p198, %p199
      %s201 = ssub.s32 %s20, %s27
      %p202 = scmp.eq.s32.totalorder %s201, 0
      %s204 = sadd.s32 %s203, 1
      %s205 = scalar_select %p202, %s203, %s204
      %p208 = pneg %p202
      %p209 = scmp.eq.s32.totalorder %s20, 3
      %p210 = por %p208, %p209
      %p211 = scmp.ne.s32.totalorder %s203, %s206
      %p212 = scmp.eq.s32.totalorder %s20, 0
      %p213 = por %p211, %p212
      %p214 = scmp.ne.s32.totalorder %s203, %s206
      %p215 = scmp.eq.s32.totalorder %s25, 3
      %p216 = por %p214, %p215
      %p217 = scmp.ne.s32.totalorder %s206, %s207
      %p218 = scmp.eq.s32.totalorder %s25, 0
      %p219 = por %p217, %p218
      %p220 = scmp.ne.s32.totalorder %s206, %s207
      %p221 = scmp.eq.s32.totalorder %s26, 3
      %p222 = por %p220, %p221
      %p224 = scmp.ne.s32.totalorder %s207, %s223
      %p225 = scmp.eq.s32.totalorder %s26, 0
      %p226 = por %p224, %p225
      %p227 = scmp.le.s32.totalorder 1, %s20
      %p228 = scmp.lt.s32.totalorder %s20, 5
      %p229 = pnand %p227, %p228
      %p230 = pneg %p229
      // Predicated region
      $region9: #{tpu_custom_call.1} parent=5 // pred_check
        _
      $region10: #{tpu_custom_call.1} parent=5 // pred_check_branch
        %232 = sbr.rel (%p229) target = $region12
      $region11: #{tpu_custom_call.1} parent=5 // pred_region
        %s233 = ssub.s32 %s20, 1
        // Predicated region
        $region13: #{tpu_custom_call.1} parent=11 // pred_check
          %p234 = pneg %p67
        $region14: #{tpu_custom_call.1} parent=11 // pred_check_branch
          %236 = sbr.rel (%p234) target = $region16
        $region15: #{tpu_custom_call.1} parent=11 // pred_region
          _
        $region16: #{tpu_custom_call.1} parent=11 // pred_fallthru
          _
        // Predicated region
        $region17: #{tpu_custom_call.1} parent=11 // pred_check
          %p237 = pneg %p88
        $region18: #{tpu_custom_call.1} parent=11 // pred_check_branch
          %239 = sbr.rel (%p237) target = $region20
        $region19: #{tpu_custom_call.1} parent=11 // pred_region
          %241 = vsyncadd [#allocation3], 0
          %s242 = sshll.u32 %s2, 4
          %s243 = int_to_ptr.hbm [resolvable:$true] %s242
          %s244 = sshll.u32 [#allocation2], 4
          %s245 = int_to_ptr.vmem [resolvable:$true] %s244
          %250 = dma.hbm_to_vmem [thread:$0]  %s243, 3072, %s245, [#allocation3], 512, 512, 32
        $region20: #{tpu_custom_call.1} parent=11 // pred_fallthru
          _
        // Predicated region
        $region21: #{tpu_custom_call.1} parent=11 // pred_check
          %p251 = pneg %p109
        $region22: #{tpu_custom_call.1} parent=11 // pred_check_branch
          %253 = sbr.rel (%p251) target = $region24
        $region23: #{tpu_custom_call.1} parent=11 // pred_region
          %255 = vsyncadd [#allocation6], 0
          %s257 = sshll.u32 %s3, 4
          %s258 = int_to_ptr.hbm [resolvable:$true] %s257
          %s259 = sshll.u32 [#allocation5], 4
          %s260 = int_to_ptr.vmem [resolvable:$true] %s259
          %262 = dma.hbm_to_vmem [thread:$0]  %s258, 64, %s260, [#allocation6]
        $region24: #{tpu_custom_call.1} parent=11 // pred_fallthru
          _
        // Predicated region
        $region25: #{tpu_custom_call.1} parent=11 // pred_check
          %p263 = pneg %p130
        $region26: #{tpu_custom_call.1} parent=11 // pred_check_branch
          %265 = sbr.rel (%p263) target = $region28
        $region27: #{tpu_custom_call.1} parent=11 // pred_region
          %267 = vsyncadd [#allocation6], 0
          %s268 = sshll.u32 %s4, 4
          %s269 = int_to_ptr.hbm [resolvable:$true] %s268
          %s270 = sshll.u32 [#allocation7], 4
          %s271 = int_to_ptr.vmem [resolvable:$true] %s270
          %276 = dma.hbm_to_vmem [thread:$0]  %s269, 98304, %s271, [#allocation6], 512, 512, 32
        $region28: #{tpu_custom_call.1} parent=11 // pred_fallthru
          _
        // Predicated region
        $region29: #{tpu_custom_call.1} parent=11 // pred_check
          %p277 = pneg %p151
        $region30: #{tpu_custom_call.1} parent=11 // pred_check_branch
          %279 = sbr.rel (%p277) target = $region32
        $region31: #{tpu_custom_call.1} parent=11 // pred_region
          %281 = vsyncadd [#allocation9], 0
          %s283 = sshll.u32 %s5, 4
          %s284 = int_to_ptr.hbm [resolvable:$true] %s283
          %s285 = sshll.u32 [#allocation8], 4
          %s286 = int_to_ptr.vmem [resolvable:$true] %s285
          %288 = dma.hbm_to_vmem [thread:$0]  %s284, 128, %s286, [#allocation9]
        $region32: #{tpu_custom_call.1} parent=11 // pred_fallthru
          _
        // Predicated region
        $region33: #{tpu_custom_call.1} parent=11 // pred_check
          %p289 = pneg %p172
        $region34: #{tpu_custom_call.1} parent=11 // pred_check_branch
          %291 = sbr.rel (%p289) target = $region36
        $region35: #{tpu_custom_call.1} parent=11 // pred_region
          _
        $region36: #{tpu_custom_call.1} parent=11 // pred_fallthru
          _
        // Predicated region
        $region37: #{tpu_custom_call.1} parent=11 // pred_check
          %p292 = pneg %p193
        $region38: #{tpu_custom_call.1} parent=11 // pred_check_branch
          %294 = sbr.rel (%p292) target = $region40
        $region39: #{tpu_custom_call.1} parent=11 // pred_region
          %296 = vsyncadd [#allocation9], 0
          %s298 = sshll.u32 %s7, 4
          %s299 = int_to_ptr.hbm [resolvable:$true] %s298
          %s300 = sshll.u32 [#allocation10], 4
          %s301 = int_to_ptr.vmem [resolvable:$true] %s300
          %303 = dma.hbm_to_vmem [thread:$0]  %s299, 16, %s301, [#allocation9]
        $region40: #{tpu_custom_call.1} parent=11 // pred_fallthru
          _
      $region12: #{tpu_custom_call.1} parent=5 // pred_fallthru
        _
      %p304 = scmp.lt.s32.totalorder %s20, 4
      // Predicated region
      $region41: #{tpu_custom_call.1} parent=5 // pred_check
        %p305 = pneg %p304
      $region42: #{tpu_custom_call.1} parent=5 // pred_check_branch
        %307 = sbr.rel (%p305) target = $region44
      $region43: #{tpu_custom_call.1} parent=5 // pred_region
        // Predicated region
        $region45: #{tpu_custom_call.1} parent=43 // pred_check
          %p308 = pneg %p40
        $region46: #{tpu_custom_call.1} parent=43 // pred_check_branch
          %310 = sbr.rel (%p308) target = $region48
        $region47: #{tpu_custom_call.1} parent=43 // pred_region
          %s311 = smul.u32 8, %s20
          %p312 = scmp.lt.s32.totalorder %s311, 31
          %s313 = scalar_select %p312, %s311, 31
          %s314 = smul.addr %s313, 8
          %s315 = scalar_lea.vmem %s0, %s314
          %s316 = smul.u32 8, %s20
        $region48: #{tpu_custom_call.1} parent=43 // pred_fallthru
          _
      $region44: #{tpu_custom_call.1} parent=5 // pred_fallthru
        _
      %p317 = scmp.le.s32.totalorder 1, %s20
      %p318 = scmp.lt.s32.totalorder %s20, 5
      %p319 = pnand %p317, %p318
      %p320 = pneg %p319
      // Predicated region
      $region49: #{tpu_custom_call.1} parent=5 // pred_check
        _
      $region50: #{tpu_custom_call.1} parent=5 // pred_check_branch
        %322 = sbr.rel (%p319) target = $region52
      $region51: #{tpu_custom_call.1} parent=5 // pred_region
        %s323 = ssub.s32 %s20, 1
        // Predicated region
        $region53: #{tpu_custom_call.1} parent=51 // pred_check
          %p324 = pneg %p88
        $region54: #{tpu_custom_call.1} parent=51 // pred_check_branch
          %326 = sbr.rel (%p324) target = $region56
        $region55: #{tpu_custom_call.1} parent=51 // pred_region
          %328 = dma.done [#allocation3], 3072
        $region56: #{tpu_custom_call.1} parent=51 // pred_fallthru
          _
        // Predicated region
        $region57: #{tpu_custom_call.1} parent=51 // pred_check
          %p329 = pneg %p109
        $region58: #{tpu_custom_call.1} parent=51 // pred_check_branch
          %331 = sbr.rel (%p329) target = $region60
        $region59: #{tpu_custom_call.1} parent=51 // pred_region
          %333 = dma.done [#allocation6], 64
        $region60: #{tpu_custom_call.1} parent=51 // pred_fallthru
          _
        // Predicated region
        $region61: #{tpu_custom_call.1} parent=51 // pred_check
          %p334 = pneg %p130
        $region62: #{tpu_custom_call.1} parent=51 // pred_check_branch
          %336 = sbr.rel (%p334) target = $region64
        $region63: #{tpu_custom_call.1} parent=51 // pred_region
          %338 = dma.done [#allocation6], 98304
        $region64: #{tpu_custom_call.1} parent=51 // pred_fallthru
          _
        // Predicated region
        $region65: #{tpu_custom_call.1} parent=51 // pred_check
          %p339 = pneg %p151
        $region66: #{tpu_custom_call.1} parent=51 // pred_check_branch
          %341 = sbr.rel (%p339) target = $region68
        $region67: #{tpu_custom_call.1} parent=51 // pred_region
          %343 = dma.done [#allocation9], 128
        $region68: #{tpu_custom_call.1} parent=51 // pred_fallthru
          _
        // Predicated region
        $region69: #{tpu_custom_call.1} parent=51 // pred_check
          %p344 = pneg %p193
        $region70: #{tpu_custom_call.1} parent=51 // pred_check_branch
          %346 = sbr.rel (%p344) target = $region72
        $region71: #{tpu_custom_call.1} parent=51 // pred_region
          %348 = dma.done [#allocation9], 16
        $region72: #{tpu_custom_call.1} parent=51 // pred_fallthru
          _
        %s349 = smul.u32 8, %s25
        %p350 = scmp.lt.s32.totalorder %s349, 31
        %s351 = scalar_select %p350, %s349, 31
        %s352 = smul.addr %s351, 8
        %s353 = scalar_lea.vmem %s0, %s352
        %p354 = pneg %p46
        %p355 = pneg %p43
        %p356 = pneg %p67
        %p357 = pneg %p64
        %p358 = pneg %p88
        %p359 = pneg %p85
        %p360 = pneg %p109
        %p361 = pneg %p106
        %p362 = pneg %p130
        %p363 = pneg %p127
        %p364 = pneg %p151
        %p365 = pneg %p148
        %p366 = pneg %p172
        %p367 = pneg %p169
        %p368 = pneg %p193
        %p369 = pneg %p190
        %p370 = pneg %p219
        %p371 = pneg %p216
        %s372 = sand.u32 %s206, 1
        %s373 = scalar_lea.sflag [#allocation4], %s372
        %s374 = sand.u32 %s206, 1
        %s375 = smul.addr %s374, 4
        %s376 = scalar_lea.vmem [#allocation11], %s375
        %s377 = smul.u32 8, %s25
        %p378 = scmp.lt.s32.totalorder %s377, 31
        %s379 = scalar_select %p378, %s377, 31
        %s380 = smul.addr %s379, 8
        %s381 = scalar_lea.vmem %s0, %s380
        %s382 = smul.u32 8, %s25
        %v383 = vld [vmem:[%s381] sm:$0xff]
        %v384 = vld [vmem:[%s381 + $0x8] sm:$0xff]
        %v385 = vld [vmem:[%s381 + $0x10] sm:$0xff]
        %v386 = vld [vmem:[%s381 + $0x18] sm:$0xff]
        %v387 = vld [vmem:[%s381 + $0x20] sm:$0xff]
        %v388 = vld [vmem:[%s381 + $0x28] sm:$0xff]
        %v389 = vld [vmem:[%s381 + $0x30] sm:$0xff]
        %v390 = vld [vmem:[%s381 + $0x38] sm:$0xff]
        %v391 = vld [vmem:[%s1] sm:$0xff]
        %v392 = vld [vmem:[%s1 + $0x8] sm:$0xff]
        %v393 = vld [vmem:[%s1 + $0x10] sm:$0xff]
        %v394 = vld [vmem:[%s1 + $0x18] sm:$0xff]
        %v395 = vld [vmem:[%s1 + $0x20] sm:$0xff]
        %v396 = vld [vmem:[%s1 + $0x28] sm:$0xff]
        %v397 = vld [vmem:[%s1 + $0x30] sm:$0xff]
        %v398 = vld [vmem:[%s1 + $0x38] sm:$0xff]
        %s399 = scalar_lea.vmem [#allocation2], 64
        %v400 = vld [vmem:[%s399] sm:$0xff]
        %v401 = vld [vmem:[%s399 + $0x8] sm:$0xff]
        %v402 = vld [vmem:[%s399 + $0x10] sm:$0xff]
        %v403 = vld [vmem:[%s399 + $0x18] sm:$0xff]
        %v404 = vld [vmem:[%s399 + $0x20] sm:$0xff]
        %v405 = vld [vmem:[%s399 + $0x28] sm:$0xff]
        %v406 = vld [vmem:[%s399 + $0x30] sm:$0xff]
        %v407 = vld [vmem:[%s399 + $0x38] sm:$0xff]
        %v408 = vrot.slane %v383, 7
        %v409 = vrot.slane %v384, 7
        %v410 = vrot.slane %v385, 7
        %v411 = vrot.slane %v386, 7
        %v412 = vrot.slane %v387, 7
        %v413 = vrot.slane %v388, 7
        %v414 = vrot.slane %v389, 7
        %v415 = vrot.slane %v390, 7
        %v416 = vlaneseq
        %v417 = vshrl.u32 %v416, 7
        %vm418 = vcmp.lt.s32.totalorder %v417, 1
        %v419 = vsel %vm418, %v414, %v415
        %v420 = vsel %vm418, %v413, %v414
        %v421 = vsel %vm418, %v412, %v413
        %v422 = vsel %vm418, %v411, %v412
        %v423 = vsel %vm418, %v410, %v411
        %v424 = vsel %vm418, %v409, %v410
        %v425 = vsel %vm418, %v408, %v409
        %v426 = vsel %vm418, %v415, %v408
        %428 = vset.pattern.permute.xlu0 0
        %429 = vperm.xlu0 %428, %v391
        %v430 = vpop.permute.xlu0 %429
        %433 = vset.pattern.permute.xlu0 0
        %434 = vperm.xlu0 %433, %v392
        %v435 = vpop.permute.xlu0 %434
        %438 = vset.pattern.permute.xlu0 0
        %439 = vperm.xlu0 %438, %v393
        %v440 = vpop.permute.xlu0 %439
        %443 = vset.pattern.permute.xlu0 0
        %444 = vperm.xlu0 %443, %v394
        %v445 = vpop.permute.xlu0 %444
        %448 = vset.pattern.permute.xlu0 0
        %449 = vperm.xlu0 %448, %v395
        %v450 = vpop.permute.xlu0 %449
        %453 = vset.pattern.permute.xlu0 0
        %454 = vperm.xlu0 %453, %v396
        %v455 = vpop.permute.xlu0 %454
        %458 = vset.pattern.permute.xlu0 0
        %459 = vperm.xlu0 %458, %v397
        %v460 = vpop.permute.xlu0 %459
        %463 = vset.pattern.permute.xlu0 0
        %464 = vperm.xlu0 %463, %v398
        %v465 = vpop.permute.xlu0 %464
        %v467 = vmul.f32 %v426, %v430
        %v468 = vmul.f32 %v425, %v435
        %v469 = vmul.f32 %v424, %v440
        %v470 = vmul.f32 %v423, %v445
        %v471 = vmul.f32 %v422, %v450
        %v472 = vmul.f32 %v421, %v455
        %v473 = vmul.f32 %v420, %v460
        %v474 = vmul.f32 %v419, %v465
        %v475 = vld [vmem:[#allocation2] sm:$0xff]
        %v476 = vld [vmem:[#allocation2 + $0x8] sm:$0xff]
        %v477 = vld [vmem:[#allocation2 + $0x10] sm:$0xff]
        %v478 = vld [vmem:[#allocation2 + $0x18] sm:$0xff]
        %v479 = vld [vmem:[#allocation2 + $0x20] sm:$0xff]
        %v480 = vld [vmem:[#allocation2 + $0x28] sm:$0xff]
        %v481 = vld [vmem:[#allocation2 + $0x30] sm:$0xff]
        %v482 = vld [vmem:[#allocation2 + $0x38] sm:$0xff]
        %vm483 = vcmask 130048
        %v485 = vsel %vm483, %v467, 0
        %v488 = vsel %vm483, %v468, 0
        %v491 = vsel %vm483, %v469, 0
        %v494 = vsel %vm483, %v470, 0
        %v497 = vsel %vm483, %v471, 0
        %v500 = vsel %vm483, %v472, 0
        %v503 = vsel %vm483, %v473, 0
        %v506 = vsel %vm483, %v474, 0
        %508 = vmatpush.msra.mxu0 0.0
        %509 = vmatpush.msra.mxu0 0.0
        %510 = vmatpush.msra.mxu0 0.0
        %511 = vmatpush.msra.mxu0 0.0
        %512 = vmatpush.msra.mxu0 0.0
        %513 = vmatpush.msra.mxu0 0.0
        %514 = vmatpush.msra.mxu0 0.0
        %515 = vmatpush.msra.mxu0 0.0
        %516 = vmatpush.msra.mxu0 0.0
        %517 = vmatpush.msra.mxu0 0.0
        %518 = vmatpush.msra.mxu0 0.0
        %519 = vmatpush.msra.mxu0 0.0
        %520 = vmatpush.msra.mxu0 0.0
        %521 = vmatpush.msra.mxu0 0.0
        %522 = vmatpush.msra.mxu0 %v479
        %523 = vmatpush.msra.mxu0 %v475
        %524 = vmatmul.f32.gmra.mxu0 %v485
        %v525 = vpop.f32.mrf.mxu0
        %v526 = vadd.f32 0.0, %v525
        %527 = vmatmul.f32.gmra.mxu0 %v488
        %v528 = vpop.f32.mrf.mxu0
        %v529 = vadd.f32 0.0, %v528
        %530 = vmatmul.f32.gmra.mxu0 %v491
        %v531 = vpop.f32.mrf.mxu0
        %v532 = vadd.f32 0.0, %v531
        %533 = vmatmul.f32.gmra.mxu0 %v494
        %v534 = vpop.f32.mrf.mxu0
        %v535 = vadd.f32 0.0, %v534
        %536 = vmatmul.f32.gmra.mxu0 %v497
        %v537 = vpop.f32.mrf.mxu0
        %v538 = vadd.f32 0.0, %v537
        %539 = vmatmul.f32.gmra.mxu0 %v500
        %v540 = vpop.f32.mrf.mxu0
        %v541 = vadd.f32 0.0, %v540
        %542 = vmatmul.f32.gmra.mxu0 %v503
        %v543 = vpop.f32.mrf.mxu0
        %v544 = vadd.f32 0.0, %v543
        %545 = vmatmul.f32.gmra.mxu0 %v506
        %v546 = vpop.f32.mrf.mxu0
        %v547 = vadd.f32 0.0, %v546
        %548 = vdwg.mxu0
        %549 = vmatpush.msra.mxu0 0.0
        %550 = vmatpush.msra.mxu0 0.0
        %551 = vmatpush.msra.mxu0 0.0
        %552 = vmatpush.msra.mxu0 0.0
        %553 = vmatpush.msra.mxu0 0.0
        %554 = vmatpush.msra.mxu0 0.0
        %555 = vmatpush.msra.mxu0 0.0
        %556 = vmatpush.msra.mxu0 0.0
        %557 = vmatpush.msra.mxu0 0.0
        %558 = vmatpush.msra.mxu0 0.0
        %559 = vmatpush.msra.mxu0 0.0
        %560 = vmatpush.msra.mxu0 0.0
        %561 = vmatpush.msra.mxu0 0.0
        %562 = vmatpush.msra.mxu0 0.0
        %563 = vmatpush.msra.mxu0 %v480
        %564 = vmatpush.msra.mxu0 %v476
        %565 = vmatmul.f32.gmra.mxu0 %v485
        %v566 = vpop.f32.mrf.mxu0
        %v567 = vadd.f32 0.0, %v566
        %568 = vmatmul.f32.gmra.mxu0 %v488
        %v569 = vpop.f32.mrf.mxu0
        %v570 = vadd.f32 0.0, %v569
        %571 = vmatmul.f32.gmra.mxu0 %v491
        %v572 = vpop.f32.mrf.mxu0
        %v573 = vadd.f32 0.0, %v572
        %574 = vmatmul.f32.gmra.mxu0 %v494
        %v575 = vpop.f32.mrf.mxu0
        %v576 = vadd.f32 0.0, %v575
        %577 = vmatmul.f32.gmra.mxu0 %v497
        %v578 = vpop.f32.mrf.mxu0
        %v579 = vadd.f32 0.0, %v578
        %580 = vmatmul.f32.gmra.mxu0 %v500
        %v581 = vpop.f32.mrf.mxu0
        %v582 = vadd.f32 0.0, %v581
        %583 = vmatmul.f32.gmra.mxu0 %v503
        %v584 = vpop.f32.mrf.mxu0
        %v585 = vadd.f32 0.0, %v584
        %586 = vmatmul.f32.gmra.mxu0 %v506
        %v587 = vpop.f32.mrf.mxu0
        %v588 = vadd.f32 0.0, %v587
        %589 = vdwg.mxu0
        %590 = vmatpush.msra.mxu0 0.0
        %591 = vmatpush.msra.mxu0 0.0
        %592 = vmatpush.msra.mxu0 0.0
        %593 = vmatpush.msra.mxu0 0.0
        %594 = vmatpush.msra.mxu0 0.0
        %595 = vmatpush.msra.mxu0 0.0
        %596 = vmatpush.msra.mxu0 0.0
        %597 = vmatpush.msra.mxu0 0.0
        %598 = vmatpush.msra.mxu0 0.0
        %599 = vmatpush.msra.mxu0 0.0
        %600 = vmatpush.msra.mxu0 0.0
        %601 = vmatpush.msra.mxu0 0.0
        %602 = vmatpush.msra.mxu0 0.0
        %603 = vmatpush.msra.mxu0 0.0
        %604 = vmatpush.msra.mxu0 %v481
        %605 = vmatpush.msra.mxu0 %v477
        %606 = vmatmul.f32.gmra.mxu0 %v485
        %v607 = vpop.f32.mrf.mxu0
        %v608 = vadd.f32 0.0, %v607
        %609 = vmatmul.f32.gmra.mxu0 %v488
        %v610 = vpop.f32.mrf.mxu0
        %v611 = vadd.f32 0.0, %v610
        %612 = vmatmul.f32.gmra.mxu0 %v491
        %v613 = vpop.f32.mrf.mxu0
        %v614 = vadd.f32 0.0, %v613
        %615 = vmatmul.f32.gmra.mxu0 %v494
        %v616 = vpop.f32.mrf.mxu0
        %v617 = vadd.f32 0.0, %v616
        %618 = vmatmul.f32.gmra.mxu0 %v497
        %v619 = vpop.f32.mrf.mxu0
        %v620 = vadd.f32 0.0, %v619
        %621 = vmatmul.f32.gmra.mxu0 %v500
        %v622 = vpop.f32.mrf.mxu0
        %v623 = vadd.f32 0.0, %v622
        %624 = vmatmul.f32.gmra.mxu0 %v503
        %v625 = vpop.f32.mrf.mxu0
        %v626 = vadd.f32 0.0, %v625
        %627 = vmatmul.f32.gmra.mxu0 %v506
        %v628 = vpop.f32.mrf.mxu0
        %v629 = vadd.f32 0.0, %v628
        %630 = vdwg.mxu0
        %631 = vmatpush.msra.mxu0 0.0
        %632 = vmatpush.msra.mxu0 0.0
        %633 = vmatpush.msra.mxu0 0.0
        %634 = vmatpush.msra.mxu0 0.0
        %635 = vmatpush.msra.mxu0 0.0
        %636 = vmatpush.msra.mxu0 0.0
        %637 = vmatpush.msra.mxu0 0.0
        %638 = vmatpush.msra.mxu0 0.0
        %639 = vmatpush.msra.mxu0 0.0
        %640 = vmatpush.msra.mxu0 0.0
        %641 = vmatpush.msra.mxu0 0.0
        %642 = vmatpush.msra.mxu0 0.0
        %643 = vmatpush.msra.mxu0 0.0
        %644 = vmatpush.msra.mxu0 0.0
        %645 = vmatpush.msra.mxu0 %v482
        %646 = vmatpush.msra.mxu0 %v478
        %647 = vmatmul.f32.gmra.mxu0 %v485
        %v648 = vpop.f32.mrf.mxu0
        %v649 = vadd.f32 0.0, %v648
        %650 = vmatmul.f32.gmra.mxu0 %v488
        %v651 = vpop.f32.mrf.mxu0
        %v652 = vadd.f32 0.0, %v651
        %653 = vmatmul.f32.gmra.mxu0 %v491
        %v654 = vpop.f32.mrf.mxu0
        %v655 = vadd.f32 0.0, %v654
        %656 = vmatmul.f32.gmra.mxu0 %v494
        %v657 = vpop.f32.mrf.mxu0
        %v658 = vadd.f32 0.0, %v657
        %659 = vmatmul.f32.gmra.mxu0 %v497
        %v660 = vpop.f32.mrf.mxu0
        %v661 = vadd.f32 0.0, %v660
        %662 = vmatmul.f32.gmra.mxu0 %v500
        %v663 = vpop.f32.mrf.mxu0
        %v664 = vadd.f32 0.0, %v663
        %665 = vmatmul.f32.gmra.mxu0 %v503
        %v666 = vpop.f32.mrf.mxu0
        %v667 = vadd.f32 0.0, %v666
        %668 = vmatmul.f32.gmra.mxu0 %v506
        %v669 = vpop.f32.mrf.mxu0
        %v670 = vadd.f32 0.0, %v669
        %671 = vdwg.mxu0
        %v673 = vsel %vm483, %v383, 0
        %v676 = vsel %vm483, %v384, 0
        %v679 = vsel %vm483, %v385, 0
        %v682 = vsel %vm483, %v386, 0
        %v685 = vsel %vm483, %v387, 0
        %v688 = vsel %vm483, %v388, 0
        %v691 = vsel %vm483, %v389, 0
        %v694 = vsel %vm483, %v390, 0
        %696 = vmatpush.msra.mxu0 0.0
        %697 = vmatpush.msra.mxu0 0.0
        %698 = vmatpush.msra.mxu0 0.0
        %699 = vmatpush.msra.mxu0 0.0
        %700 = vmatpush.msra.mxu0 0.0
        %701 = vmatpush.msra.mxu0 0.0
        %702 = vmatpush.msra.mxu0 0.0
        %703 = vmatpush.msra.mxu0 0.0
        %704 = vmatpush.msra.mxu0 0.0
        %705 = vmatpush.msra.mxu0 0.0
        %706 = vmatpush.msra.mxu0 0.0
        %707 = vmatpush.msra.mxu0 0.0
        %708 = vmatpush.msra.mxu0 0.0
        %709 = vmatpush.msra.mxu0 0.0
        %710 = vmatpush.msra.mxu0 %v404
        %711 = vmatpush.msra.mxu0 %v400
        %712 = vmatmul.f32.gmra.mxu0 %v673
        %v713 = vpop.f32.mrf.mxu0
        %v714 = vadd.f32 %v526, %v713
        %715 = vmatmul.f32.gmra.mxu0 %v676
        %v716 = vpop.f32.mrf.mxu0
        %v717 = vadd.f32 %v529, %v716
        %718 = vmatmul.f32.gmra.mxu0 %v679
        %v719 = vpop.f32.mrf.mxu0
        %v720 = vadd.f32 %v532, %v719
        %721 = vmatmul.f32.gmra.mxu0 %v682
        %v722 = vpop.f32.mrf.mxu0
        %v723 = vadd.f32 %v535, %v722
        %724 = vmatmul.f32.gmra.mxu0 %v685
        %v725 = vpop.f32.mrf.mxu0
        %v726 = vadd.f32 %v538, %v725
        %727 = vmatmul.f32.gmra.mxu0 %v688
        %v728 = vpop.f32.mrf.mxu0
        %v729 = vadd.f32 %v541, %v728
        %730 = vmatmul.f32.gmra.mxu0 %v691
        %v731 = vpop.f32.mrf.mxu0
        %v732 = vadd.f32 %v544, %v731
        %733 = vmatmul.f32.gmra.mxu0 %v694
        %v734 = vpop.f32.mrf.mxu0
        %v735 = vadd.f32 %v547, %v734
        %736 = vdwg.mxu0
        %737 = vmatpush.msra.mxu0 0.0
        %738 = vmatpush.msra.mxu0 0.0
        %739 = vmatpush.msra.mxu0 0.0
        %740 = vmatpush.msra.mxu0 0.0
        %741 = vmatpush.msra.mxu0 0.0
        %742 = vmatpush.msra.mxu0 0.0
        %743 = vmatpush.msra.mxu0 0.0
        %744 = vmatpush.msra.mxu0 0.0
        %745 = vmatpush.msra.mxu0 0.0
        %746 = vmatpush.msra.mxu0 0.0
        %747 = vmatpush.msra.mxu0 0.0
        %748 = vmatpush.msra.mxu0 0.0
        %749 = vmatpush.msra.mxu0 0.0
        %750 = vmatpush.msra.mxu0 0.0
        %751 = vmatpush.msra.mxu0 %v405
        %752 = vmatpush.msra.mxu0 %v401
        %753 = vmatmul.f32.gmra.mxu0 %v673
        %v754 = vpop.f32.mrf.mxu0
        %v755 = vadd.f32 %v567, %v754
        %756 = vmatmul.f32.gmra.mxu0 %v676
        %v757 = vpop.f32.mrf.mxu0
        %v758 = vadd.f32 %v570, %v757
        %759 = vmatmul.f32.gmra.mxu0 %v679
        %v760 = vpop.f32.mrf.mxu0
        %v761 = vadd.f32 %v573, %v760
        %762 = vmatmul.f32.gmra.mxu0 %v682
        %v763 = vpop.f32.mrf.mxu0
        %v764 = vadd.f32 %v576, %v763
        %765 = vmatmul.f32.gmra.mxu0 %v685
        %v766 = vpop.f32.mrf.mxu0
        %v767 = vadd.f32 %v579, %v766
        %768 = vmatmul.f32.gmra.mxu0 %v688
        %v769 = vpop.f32.mrf.mxu0
        %v770 = vadd.f32 %v582, %v769
        %771 = vmatmul.f32.gmra.mxu0 %v691
        %v772 = vpop.f32.mrf.mxu0
        %v773 = vadd.f32 %v585, %v772
        %774 = vmatmul.f32.gmra.mxu0 %v694
        %v775 = vpop.f32.mrf.mxu0
        %v776 = vadd.f32 %v588, %v775
        %777 = vdwg.mxu0
        %778 = vmatpush.msra.mxu0 0.0
        %779 = vmatpush.msra.mxu0 0.0
        %780 = vmatpush.msra.mxu0 0.0
        %781 = vmatpush.msra.mxu0 0.0
        %782 = vmatpush.msra.mxu0 0.0
        %783 = vmatpush.msra.mxu0 0.0
        %784 = vmatpush.msra.mxu0 0.0
        %785 = vmatpush.msra.mxu0 0.0
        %786 = vmatpush.msra.mxu0 0.0
        %787 = vmatpush.msra.mxu0 0.0
        %788 = vmatpush.msra.mxu0 0.0
        %789 = vmatpush.msra.mxu0 0.0
        %790 = vmatpush.msra.mxu0 0.0
        %791 = vmatpush.msra.mxu0 0.0
        %792 = vmatpush.msra.mxu0 %v406
        %793 = vmatpush.msra.mxu0 %v402
        %794 = vmatmul.f32.gmra.mxu0 %v673
        %v795 = vpop.f32.mrf.mxu0
        %v796 = vadd.f32 %v608, %v795
        %797 = vmatmul.f32.gmra.mxu0 %v676
        %v798 = vpop.f32.mrf.mxu0
        %v799 = vadd.f32 %v611, %v798
        %800 = vmatmul.f32.gmra.mxu0 %v679
        %v801 = vpop.f32.mrf.mxu0
        %v802 = vadd.f32 %v614, %v801
        %803 = vmatmul.f32.gmra.mxu0 %v682
        %v804 = vpop.f32.mrf.mxu0
        %v805 = vadd.f32 %v617, %v804
        %806 = vmatmul.f32.gmra.mxu0 %v685
        %v807 = vpop.f32.mrf.mxu0
        %v808 = vadd.f32 %v620, %v807
        %809 = vmatmul.f32.gmra.mxu0 %v688
        %v810 = vpop.f32.mrf.mxu0
        %v811 = vadd.f32 %v623, %v810
        %812 = vmatmul.f32.gmra.mxu0 %v691
        %v813 = vpop.f32.mrf.mxu0
        %v814 = vadd.f32 %v626, %v813
        %815 = vmatmul.f32.gmra.mxu0 %v694
        %v816 = vpop.f32.mrf.mxu0
        %v817 = vadd.f32 %v629, %v816
        %818 = vdwg.mxu0
        %819 = vmatpush.msra.mxu0 0.0
        %820 = vmatpush.msra.mxu0 0.0
        %821 = vmatpush.msra.mxu0 0.0
        %822 = vmatpush.msra.mxu0 0.0
        %823 = vmatpush.msra.mxu0 0.0
        %824 = vmatpush.msra.mxu0 0.0
        %825 = vmatpush.msra.mxu0 0.0
        %826 = vmatpush.msra.mxu0 0.0
        %827 = vmatpush.msra.mxu0 0.0
        %828 = vmatpush.msra.mxu0 0.0
        %829 = vmatpush.msra.mxu0 0.0
        %830 = vmatpush.msra.mxu0 0.0
        %831 = vmatpush.msra.mxu0 0.0
        %832 = vmatpush.msra.mxu0 0.0
        %833 = vmatpush.msra.mxu0 %v407
        %834 = vmatpush.msra.mxu0 %v403
        %835 = vmatmul.f32.gmra.mxu0 %v673
        %v836 = vpop.f32.mrf.mxu0
        %v837 = vadd.f32 %v649, %v836
        %838 = vmatmul.f32.gmra.mxu0 %v676
        %v839 = vpop.f32.mrf.mxu0
        %v840 = vadd.f32 %v652, %v839
        %841 = vmatmul.f32.gmra.mxu0 %v679
        %v842 = vpop.f32.mrf.mxu0
        %v843 = vadd.f32 %v655, %v842
        %844 = vmatmul.f32.gmra.mxu0 %v682
        %v845 = vpop.f32.mrf.mxu0
        %v846 = vadd.f32 %v658, %v845
        %847 = vmatmul.f32.gmra.mxu0 %v685
        %v848 = vpop.f32.mrf.mxu0
        %v849 = vadd.f32 %v661, %v848
        %850 = vmatmul.f32.gmra.mxu0 %v688
        %v851 = vpop.f32.mrf.mxu0
        %v852 = vadd.f32 %v664, %v851
        %853 = vmatmul.f32.gmra.mxu0 %v691
        %v854 = vpop.f32.mrf.mxu0
        %v855 = vadd.f32 %v667, %v854
        %856 = vmatmul.f32.gmra.mxu0 %v694
        %v857 = vpop.f32.mrf.mxu0
        %v858 = vadd.f32 %v670, %v857
        %859 = vdwg.mxu0
        %v860 = vrot.slane %v383, 1
        %v861 = vrot.slane %v384, 1
        %v862 = vrot.slane %v385, 1
        %v863 = vrot.slane %v386, 1
        %v864 = vrot.slane %v387, 1
        %v865 = vrot.slane %v388, 1
        %v866 = vrot.slane %v389, 1
        %v867 = vrot.slane %v390, 1
        %vm868 = vcmp.lt.s32.totalorder %v417, 7
        %v869 = vsel %vm868, %v866, %v867
        %v870 = vsel %vm868, %v865, %v866
        %v871 = vsel %vm868, %v864, %v865
        %v872 = vsel %vm868, %v863, %v864
        %v873 = vsel %vm868, %v862, %v863
        %v874 = vsel %vm868, %v861, %v862
        %v875 = vsel %vm868, %v860, %v861
        %v876 = vsel %vm868, %v867, %v860
        %877 = vset.pattern.permute.xlu0 1
        %878 = vperm.xlu0 %877, %v391
        %v879 = vpop.permute.xlu0 %878
        %881 = vset.pattern.permute.xlu0 1
        %882 = vperm.xlu0 %881, %v392
        %v883 = vpop.permute.xlu0 %882
        %885 = vset.pattern.permute.xlu0 1
        %886 = vperm.xlu0 %885, %v393
        %v887 = vpop.permute.xlu0 %886
        %889 = vset.pattern.permute.xlu0 1
        %890 = vperm.xlu0 %889, %v394
        %v891 = vpop.permute.xlu0 %890
        %893 = vset.pattern.permute.xlu0 1
        %894 = vperm.xlu0 %893, %v395
        %v895 = vpop.permute.xlu0 %894
        %897 = vset.pattern.permute.xlu0 1
        %898 = vperm.xlu0 %897, %v396
        %v899 = vpop.permute.xlu0 %898
        %901 = vset.pattern.permute.xlu0 1
        %902 = vperm.xlu0 %901, %v397
        %v903 = vpop.permute.xlu0 %902
        %905 = vset.pattern.permute.xlu0 1
        %906 = vperm.xlu0 %905, %v398
        %v907 = vpop.permute.xlu0 %906
        %v909 = vmul.f32 %v875, %v879
        %v910 = vmul.f32 %v874, %v883
        %v911 = vmul.f32 %v873, %v887
        %v912 = vmul.f32 %v872, %v891
        %v913 = vmul.f32 %v871, %v895
        %v914 = vmul.f32 %v870, %v899
        %v915 = vmul.f32 %v869, %v903
        %v916 = vmul.f32 %v876, %v907
        %s917 = scalar_lea.vmem [#allocation2], 128
        %v918 = vld [vmem:[%s917] sm:$0xff]
        %v919 = vld [vmem:[%s917 + $0x8] sm:$0xff]
        %v920 = vld [vmem:[%s917 + $0x10] sm:$0xff]
        %v921 = vld [vmem:[%s917 + $0x18] sm:$0xff]
        %v922 = vld [vmem:[%s917 + $0x20] sm:$0xff]
        %v923 = vld [vmem:[%s917 + $0x28] sm:$0xff]
        %v924 = vld [vmem:[%s917 + $0x30] sm:$0xff]
        %v925 = vld [vmem:[%s917 + $0x38] sm:$0xff]
        %v927 = vsel %vm483, %v909, 0
        %v930 = vsel %vm483, %v910, 0
        %v933 = vsel %vm483, %v911, 0
        %v936 = vsel %vm483, %v912, 0
        %v939 = vsel %vm483, %v913, 0
        %v942 = vsel %vm483, %v914, 0
        %v945 = vsel %vm483, %v915, 0
        %v948 = vsel %vm483, %v916, 0
        %950 = vmatpush.msra.mxu0 0.0
        %951 = vmatpush.msra.mxu0 0.0
        %952 = vmatpush.msra.mxu0 0.0
        %953 = vmatpush.msra.mxu0 0.0
        %954 = vmatpush.msra.mxu0 0.0
        %955 = vmatpush.msra.mxu0 0.0
        %956 = vmatpush.msra.mxu0 0.0
        %957 = vmatpush.msra.mxu0 0.0
        %958 = vmatpush.msra.mxu0 0.0
        %959 = vmatpush.msra.mxu0 0.0
        %960 = vmatpush.msra.mxu0 0.0
        %961 = vmatpush.msra.mxu0 0.0
        %962 = vmatpush.msra.mxu0 0.0
        %963 = vmatpush.msra.mxu0 0.0
        %964 = vmatpush.msra.mxu0 %v922
        %965 = vmatpush.msra.mxu0 %v918
        %966 = vmatmul.f32.gmra.mxu0 %v927
        %v967 = vpop.f32.mrf.mxu0
        %v968 = vadd.f32 0.0, %v967
        %969 = vmatmul.f32.gmra.mxu0 %v930
        %v970 = vpop.f32.mrf.mxu0
        %v971 = vadd.f32 0.0, %v970
        %972 = vmatmul.f32.gmra.mxu0 %v933
        %v973 = vpop.f32.mrf.mxu0
        %v974 = vadd.f32 0.0, %v973
        %975 = vmatmul.f32.gmra.mxu0 %v936
        %v976 = vpop.f32.mrf.mxu0
        %v977 = vadd.f32 0.0, %v976
        %978 = vmatmul.f32.gmra.mxu0 %v939
        %v979 = vpop.f32.mrf.mxu0
        %v980 = vadd.f32 0.0, %v979
        %981 = vmatmul.f32.gmra.mxu0 %v942
        %v982 = vpop.f32.mrf.mxu0
        %v983 = vadd.f32 0.0, %v982
        %984 = vmatmul.f32.gmra.mxu0 %v945
        %v985 = vpop.f32.mrf.mxu0
        %v986 = vadd.f32 0.0, %v985
        %987 = vmatmul.f32.gmra.mxu0 %v948
        %v988 = vpop.f32.mrf.mxu0
        %v989 = vadd.f32 0.0, %v988
        %990 = vdwg.mxu0
        %991 = vmatpush.msra.mxu0 0.0
        %992 = vmatpush.msra.mxu0 0.0
        %993 = vmatpush.msra.mxu0 0.0
        %994 = vmatpush.msra.mxu0 0.0
        %995 = vmatpush.msra.mxu0 0.0
        %996 = vmatpush.msra.mxu0 0.0
        %997 = vmatpush.msra.mxu0 0.0
        %998 = vmatpush.msra.mxu0 0.0
        %999 = vmatpush.msra.mxu0 0.0
        %1000 = vmatpush.msra.mxu0 0.0
        %1001 = vmatpush.msra.mxu0 0.0
        %1002 = vmatpush.msra.mxu0 0.0
        %1003 = vmatpush.msra.mxu0 0.0
        %1004 = vmatpush.msra.mxu0 0.0
        %1005 = vmatpush.msra.mxu0 %v923
        %1006 = vmatpush.msra.mxu0 %v919
        %1007 = vmatmul.f32.gmra.mxu0 %v927
        %v1008 = vpop.f32.mrf.mxu0
        %v1009 = vadd.f32 0.0, %v1008
        %1010 = vmatmul.f32.gmra.mxu0 %v930
        %v1011 = vpop.f32.mrf.mxu0
        %v1012 = vadd.f32 0.0, %v1011
        %1013 = vmatmul.f32.gmra.mxu0 %v933
        %v1014 = vpop.f32.mrf.mxu0
        %v1015 = vadd.f32 0.0, %v1014
        %1016 = vmatmul.f32.gmra.mxu0 %v936
        %v1017 = vpop.f32.mrf.mxu0
        %v1018 = vadd.f32 0.0, %v1017
        %1019 = vmatmul.f32.gmra.mxu0 %v939
        %v1020 = vpop.f32.mrf.mxu0
        %v1021 = vadd.f32 0.0, %v1020
        %1022 = vmatmul.f32.gmra.mxu0 %v942
        %v1023 = vpop.f32.mrf.mxu0
        %v1024 = vadd.f32 0.0, %v1023
        %1025 = vmatmul.f32.gmra.mxu0 %v945
        %v1026 = vpop.f32.mrf.mxu0
        %v1027 = vadd.f32 0.0, %v1026
        %1028 = vmatmul.f32.gmra.mxu0 %v948
        %v1029 = vpop.f32.mrf.mxu0
        %v1030 = vadd.f32 0.0, %v1029
        %1031 = vdwg.mxu0
        %1032 = vmatpush.msra.mxu0 0.0
        %1033 = vmatpush.msra.mxu0 0.0
        %1034 = vmatpush.msra.mxu0 0.0
        %1035 = vmatpush.msra.mxu0 0.0
        %1036 = vmatpush.msra.mxu0 0.0
        %1037 = vmatpush.msra.mxu0 0.0
        %1038 = vmatpush.msra.mxu0 0.0
        %1039 = vmatpush.msra.mxu0 0.0
        %1040 = vmatpush.msra.mxu0 0.0
        %1041 = vmatpush.msra.mxu0 0.0
        %1042 = vmatpush.msra.mxu0 0.0
        %1043 = vmatpush.msra.mxu0 0.0
        %1044 = vmatpush.msra.mxu0 0.0
        %1045 = vmatpush.msra.mxu0 0.0
        %1046 = vmatpush.msra.mxu0 %v924
        %1047 = vmatpush.msra.mxu0 %v920
        %1048 = vmatmul.f32.gmra.mxu0 %v927
        %v1049 = vpop.f32.mrf.mxu0
        %v1050 = vadd.f32 0.0, %v1049
        %1051 = vmatmul.f32.gmra.mxu0 %v930
        %v1052 = vpop.f32.mrf.mxu0
        %v1053 = vadd.f32 0.0, %v1052
        %1054 = vmatmul.f32.gmra.mxu0 %v933
        %v1055 = vpop.f32.mrf.mxu0
        %v1056 = vadd.f32 0.0, %v1055
        %1057 = vmatmul.f32.gmra.mxu0 %v936
        %v1058 = vpop.f32.mrf.mxu0
        %v1059 = vadd.f32 0.0, %v1058
        %1060 = vmatmul.f32.gmra.mxu0 %v939
        %v1061 = vpop.f32.mrf.mxu0
        %v1062 = vadd.f32 0.0, %v1061
        %1063 = vmatmul.f32.gmra.mxu0 %v942
        %v1064 = vpop.f32.mrf.mxu0
        %v1065 = vadd.f32 0.0, %v1064
        %1066 = vmatmul.f32.gmra.mxu0 %v945
        %v1067 = vpop.f32.mrf.mxu0
        %v1068 = vadd.f32 0.0, %v1067
        %1069 = vmatmul.f32.gmra.mxu0 %v948
        %v1070 = vpop.f32.mrf.mxu0
        %v1071 = vadd.f32 0.0, %v1070
        %1072 = vdwg.mxu0
        %1073 = vmatpush.msra.mxu0 0.0
        %1074 = vmatpush.msra.mxu0 0.0
        %1075 = vmatpush.msra.mxu0 0.0
        %1076 = vmatpush.msra.mxu0 0.0
        %1077 = vmatpush.msra.mxu0 0.0
        %1078 = vmatpush.msra.mxu0 0.0
        %1079 = vmatpush.msra.mxu0 0.0
        %1080 = vmatpush.msra.mxu0 0.0
        %1081 = vmatpush.msra.mxu0 0.0
        %1082 = vmatpush.msra.mxu0 0.0
        %1083 = vmatpush.msra.mxu0 0.0
        %1084 = vmatpush.msra.mxu0 0.0
        %1085 = vmatpush.msra.mxu0 0.0
        %1086 = vmatpush.msra.mxu0 0.0
        %1087 = vmatpush.msra.mxu0 %v925
        %1088 = vmatpush.msra.mxu0 %v921
        %1089 = vmatmul.f32.gmra.mxu0 %v927
        %v1090 = vpop.f32.mrf.mxu0
        %v1091 = vadd.f32 0.0, %v1090
        %1092 = vmatmul.f32.gmra.mxu0 %v930
        %v1093 = vpop.f32.mrf.mxu0
        %v1094 = vadd.f32 0.0, %v1093
        %1095 = vmatmul.f32.gmra.mxu0 %v933
        %v1096 = vpop.f32.mrf.mxu0
        %v1097 = vadd.f32 0.0, %v1096
        %1098 = vmatmul.f32.gmra.mxu0 %v936
        %v1099 = vpop.f32.mrf.mxu0
        %v1100 = vadd.f32 0.0, %v1099
        %1101 = vmatmul.f32.gmra.mxu0 %v939
        %v1102 = vpop.f32.mrf.mxu0
        %v1103 = vadd.f32 0.0, %v1102
        %1104 = vmatmul.f32.gmra.mxu0 %v942
        %v1105 = vpop.f32.mrf.mxu0
        %v1106 = vadd.f32 0.0, %v1105
        %1107 = vmatmul.f32.gmra.mxu0 %v945
        %v1108 = vpop.f32.mrf.mxu0
        %v1109 = vadd.f32 0.0, %v1108
        %1110 = vmatmul.f32.gmra.mxu0 %v948
        %v1111 = vpop.f32.mrf.mxu0
        %v1112 = vadd.f32 0.0, %v1111
        %1113 = vdwg.mxu0
        %v1114 = vadd.f32 %v714, %v968
        %v1115 = vadd.f32 %v755, %v1009
        %v1116 = vadd.f32 %v796, %v1050
        %v1117 = vadd.f32 %v837, %v1091
        %v1118 = vadd.f32 %v717, %v971
        %v1119 = vadd.f32 %v758, %v1012
        %v1120 = vadd.f32 %v799, %v1053
        %v1121 = vadd.f32 %v840, %v1094
        %v1122 = vadd.f32 %v720, %v974
        %v1123 = vadd.f32 %v761, %v1015
        %v1124 = vadd.f32 %v802, %v1056
        %v1125 = vadd.f32 %v843, %v1097
        %v1126 = vadd.f32 %v723, %v977
        %v1127 = vadd.f32 %v764, %v1018
        %v1128 = vadd.f32 %v805, %v1059
        %v1129 = vadd.f32 %v846, %v1100
        %v1130 = vadd.f32 %v726, %v980
        %v1131 = vadd.f32 %v767, %v1021
        %v1132 = vadd.f32 %v808, %v1062
        %v1133 = vadd.f32 %v849, %v1103
        %v1134 = vadd.f32 %v729, %v983
        %v1135 = vadd.f32 %v770, %v1024
        %v1136 = vadd.f32 %v811, %v1065
        %v1137 = vadd.f32 %v852, %v1106
        %v1138 = vadd.f32 %v732, %v986
        %v1139 = vadd.f32 %v773, %v1027
        %v1140 = vadd.f32 %v814, %v1068
        %v1141 = vadd.f32 %v855, %v1109
        %v1142 = vadd.f32 %v735, %v989
        %v1143 = vadd.f32 %v776, %v1030
        %v1144 = vadd.f32 %v817, %v1071
        %v1145 = vadd.f32 %v858, %v1112
        %v1146 = vld [vmem:[#allocation5] sm:$0xf]
        %v1148 = vperm.slane %v1146, 0
        %v1149 = vperm.slane %v1146, 1
        %v1150 = vperm.slane %v1146, 2
        %v1151 = vperm.slane %v1146, 3
        %v1156 = vadd.f32 %v1114, %v1148
        %v1157 = vadd.f32 %v1115, %v1149
        %v1158 = vadd.f32 %v1116, %v1150
        %v1159 = vadd.f32 %v1117, %v1151
        %v1160 = vadd.f32 %v1118, %v1148
        %v1161 = vadd.f32 %v1119, %v1149
        %v1162 = vadd.f32 %v1120, %v1150
        %v1163 = vadd.f32 %v1121, %v1151
        %v1164 = vadd.f32 %v1122, %v1148
        %v1165 = vadd.f32 %v1123, %v1149
        %v1166 = vadd.f32 %v1124, %v1150
        %v1167 = vadd.f32 %v1125, %v1151
        %v1168 = vadd.f32 %v1126, %v1148
        %v1169 = vadd.f32 %v1127, %v1149
        %v1170 = vadd.f32 %v1128, %v1150
        %v1171 = vadd.f32 %v1129, %v1151
        %v1172 = vadd.f32 %v1130, %v1148
        %v1173 = vadd.f32 %v1131, %v1149
        %v1174 = vadd.f32 %v1132, %v1150
        %v1175 = vadd.f32 %v1133, %v1151
        %v1176 = vadd.f32 %v1134, %v1148
        %v1177 = vadd.f32 %v1135, %v1149
        %v1178 = vadd.f32 %v1136, %v1150
        %v1179 = vadd.f32 %v1137, %v1151
        %v1180 = vadd.f32 %v1138, %v1148
        %v1181 = vadd.f32 %v1139, %v1149
        %v1182 = vadd.f32 %v1140, %v1150
        %v1183 = vadd.f32 %v1141, %v1151
        %v1184 = vadd.f32 %v1142, %v1148
        %v1185 = vadd.f32 %v1143, %v1149
        %v1186 = vadd.f32 %v1144, %v1150
        %v1187 = vadd.f32 %v1145, %v1151
        %v1188 = vmax.f32 %v1156, 0.0
        %v1189 = vmax.f32 %v1157, 0.0
        %v1190 = vmax.f32 %v1158, 0.0
        %v1191 = vmax.f32 %v1159, 0.0
        %v1192 = vmax.f32 %v1160, 0.0
        %v1193 = vmax.f32 %v1161, 0.0
        %v1194 = vmax.f32 %v1162, 0.0
        %v1195 = vmax.f32 %v1163, 0.0
        %v1196 = vmax.f32 %v1164, 0.0
        %v1197 = vmax.f32 %v1165, 0.0
        %v1198 = vmax.f32 %v1166, 0.0
        %v1199 = vmax.f32 %v1167, 0.0
        %v1200 = vmax.f32 %v1168, 0.0
        %v1201 = vmax.f32 %v1169, 0.0
        %v1202 = vmax.f32 %v1170, 0.0
        %v1203 = vmax.f32 %v1171, 0.0
        %v1204 = vmax.f32 %v1172, 0.0
        %v1205 = vmax.f32 %v1173, 0.0
        %v1206 = vmax.f32 %v1174, 0.0
        %v1207 = vmax.f32 %v1175, 0.0
        %v1208 = vmax.f32 %v1176, 0.0
        %v1209 = vmax.f32 %v1177, 0.0
        %v1210 = vmax.f32 %v1178, 0.0
        %v1211 = vmax.f32 %v1179, 0.0
        %v1212 = vmax.f32 %v1180, 0.0
        %v1213 = vmax.f32 %v1181, 0.0
        %v1214 = vmax.f32 %v1182, 0.0
        %v1215 = vmax.f32 %v1183, 0.0
        %v1216 = vmax.f32 %v1184, 0.0
        %v1217 = vmax.f32 %v1185, 0.0
        %v1218 = vmax.f32 %v1186, 0.0
        %v1219 = vmax.f32 %v1187, 0.0
        %v1220 = vpack.c.bf16 %v1192, %v1188
        %v1221 = vpack.c.bf16 %v1193, %v1189
        %v1222 = vpack.c.bf16 %v1194, %v1190
        %v1223 = vpack.c.bf16 %v1195, %v1191
        %v1224 = vpack.c.bf16 %v1200, %v1196
        %v1225 = vpack.c.bf16 %v1201, %v1197
        %v1226 = vpack.c.bf16 %v1202, %v1198
        %v1227 = vpack.c.bf16 %v1203, %v1199
        %v1228 = vpack.c.bf16 %v1208, %v1204
        %v1229 = vpack.c.bf16 %v1209, %v1205
        %v1230 = vpack.c.bf16 %v1210, %v1206
        %v1231 = vpack.c.bf16 %v1211, %v1207
        %v1232 = vpack.c.bf16 %v1216, %v1212
        %v1233 = vpack.c.bf16 %v1217, %v1213
        %v1234 = vpack.c.bf16 %v1218, %v1214
        %v1235 = vpack.c.bf16 %v1219, %v1215
        %s1236 = scalar_lea.vmem [#allocation7], 2048
        %v1237 = vld [vmem:[%s1236] sm:$0xff]
        %v1238 = vld [vmem:[%s1236 + $0x8] sm:$0xff]
        %v1239 = vld [vmem:[%s1236 + $0x10] sm:$0xff]
        %v1240 = vld [vmem:[%s1236 + $0x18] sm:$0xff]
        %v1241 = vld [vmem:[%s1236 + $0x20] sm:$0xff]
        %v1242 = vld [vmem:[%s1236 + $0x28] sm:$0xff]
        %v1243 = vld [vmem:[%s1236 + $0x30] sm:$0xff]
        %v1244 = vld [vmem:[%s1236 + $0x38] sm:$0xff]
        %v1245 = vld [vmem:[%s1236 + $0x40] sm:$0xff]
        %v1246 = vld [vmem:[%s1236 + $0x48] sm:$0xff]
        %v1247 = vld [vmem:[%s1236 + $0x50] sm:$0xff]
        %v1248 = vld [vmem:[%s1236 + $0x58] sm:$0xff]
        %v1249 = vld [vmem:[%s1236 + $0x60] sm:$0xff]
        %v1250 = vld [vmem:[%s1236 + $0x68] sm:$0xff]
        %v1251 = vld [vmem:[%s1236 + $0x70] sm:$0xff]
        %v1252 = vld [vmem:[%s1236 + $0x78] sm:$0xff]
        %v1253 = vld [vmem:[%s1236 + $0x80] sm:$0xff]
        %v1254 = vld [vmem:[%s1236 + $0x88] sm:$0xff]
        %v1255 = vld [vmem:[%s1236 + $0x90] sm:$0xff]
        %v1256 = vld [vmem:[%s1236 + $0x98] sm:$0xff]
        %v1257 = vld [vmem:[%s1236 + $0xa0] sm:$0xff]
        %v1258 = vld [vmem:[%s1236 + $0xa8] sm:$0xff]
        %v1259 = vld [vmem:[%s1236 + $0xb0] sm:$0xff]
        %v1260 = vld [vmem:[%s1236 + $0xb8] sm:$0xff]
        %v1261 = vld [vmem:[%s1236 + $0xc0] sm:$0xff]
        %v1262 = vld [vmem:[%s1236 + $0xc8] sm:$0xff]
        %v1263 = vld [vmem:[%s1236 + $0xd0] sm:$0xff]
        %v1264 = vld [vmem:[%s1236 + $0xd8] sm:$0xff]
        %v1265 = vld [vmem:[%s1236 + $0xe0] sm:$0xff]
        %v1266 = vld [vmem:[%s1236 + $0xe8] sm:$0xff]
        %v1267 = vld [vmem:[%s1236 + $0xf0] sm:$0xff]
        %v1268 = vld [vmem:[%s1236 + $0xf8] sm:$0xff]
        %v1269 = vld [vmem:[%s1236 + $0x100] sm:$0xff]
        %v1270 = vld [vmem:[%s1236 + $0x108] sm:$0xff]
        %v1271 = vld [vmem:[%s1236 + $0x110] sm:$0xff]
        %v1272 = vld [vmem:[%s1236 + $0x118] sm:$0xff]
        %v1273 = vld [vmem:[%s1236 + $0x120] sm:$0xff]
        %v1274 = vld [vmem:[%s1236 + $0x128] sm:$0xff]
        %v1275 = vld [vmem:[%s1236 + $0x130] sm:$0xff]
        %v1276 = vld [vmem:[%s1236 + $0x138] sm:$0xff]
        %v1277 = vld [vmem:[%s1236 + $0x140] sm:$0xff]
        %v1278 = vld [vmem:[%s1236 + $0x148] sm:$0xff]
        %v1279 = vld [vmem:[%s1236 + $0x150] sm:$0xff]
        %v1280 = vld [vmem:[%s1236 + $0x158] sm:$0xff]
        %v1281 = vld [vmem:[%s1236 + $0x160] sm:$0xff]
        %v1282 = vld [vmem:[%s1236 + $0x168] sm:$0xff]
        %v1283 = vld [vmem:[%s1236 + $0x170] sm:$0xff]
        %v1284 = vld [vmem:[%s1236 + $0x178] sm:$0xff]
        %v1285 = vld [vmem:[%s1236 + $0x180] sm:$0xff]
        %v1286 = vld [vmem:[%s1236 + $0x188] sm:$0xff]
        %v1287 = vld [vmem:[%s1236 + $0x190] sm:$0xff]
        %v1288 = vld [vmem:[%s1236 + $0x198] sm:$0xff]
        %v1289 = vld [vmem:[%s1236 + $0x1a0] sm:$0xff]
        %v1290 = vld [vmem:[%s1236 + $0x1a8] sm:$0xff]
        %v1291 = vld [vmem:[%s1236 + $0x1b0] sm:$0xff]
        %v1292 = vld [vmem:[%s1236 + $0x1b8] sm:$0xff]
        %v1293 = vld [vmem:[%s1236 + $0x1c0] sm:$0xff]
        %v1294 = vld [vmem:[%s1236 + $0x1c8] sm:$0xff]
        %v1295 = vld [vmem:[%s1236 + $0x1d0] sm:$0xff]
        %v1296 = vld [vmem:[%s1236 + $0x1d8] sm:$0xff]
        %v1297 = vld [vmem:[%s1236 + $0x1e0] sm:$0xff]
        %v1298 = vld [vmem:[%s1236 + $0x1e8] sm:$0xff]
        %v1299 = vld [vmem:[%s1236 + $0x1f0] sm:$0xff]
        %v1300 = vld [vmem:[%s1236 + $0x1f8] sm:$0xff]
        %v1301 = vld [vmem:[%s1236 + $0x200] sm:$0xff]
        %v1302 = vld [vmem:[%s1236 + $0x208] sm:$0xff]
        %v1303 = vld [vmem:[%s1236 + $0x210] sm:$0xff]
        %v1304 = vld [vmem:[%s1236 + $0x218] sm:$0xff]
        %v1305 = vld [vmem:[%s1236 + $0x220] sm:$0xff]
        %v1306 = vld [vmem:[%s1236 + $0x228] sm:$0xff]
        %v1307 = vld [vmem:[%s1236 + $0x230] sm:$0xff]
        %v1308 = vld [vmem:[%s1236 + $0x238] sm:$0xff]
        %v1309 = vld [vmem:[%s1236 + $0x240] sm:$0xff]
        %v1310 = vld [vmem:[%s1236 + $0x248] sm:$0xff]
        %v1311 = vld [vmem:[%s1236 + $0x250] sm:$0xff]
        %v1312 = vld [vmem:[%s1236 + $0x258] sm:$0xff]
        %v1313 = vld [vmem:[%s1236 + $0x260] sm:$0xff]
        %v1314 = vld [vmem:[%s1236 + $0x268] sm:$0xff]
        %v1315 = vld [vmem:[%s1236 + $0x270] sm:$0xff]
        %v1316 = vld [vmem:[%s1236 + $0x278] sm:$0xff]
        %v1317 = vld [vmem:[%s1236 + $0x280] sm:$0xff]
        %v1318 = vld [vmem:[%s1236 + $0x288] sm:$0xff]
        %v1319 = vld [vmem:[%s1236 + $0x290] sm:$0xff]
        %v1320 = vld [vmem:[%s1236 + $0x298] sm:$0xff]
        %v1321 = vld [vmem:[%s1236 + $0x2a0] sm:$0xff]
        %v1322 = vld [vmem:[%s1236 + $0x2a8] sm:$0xff]
        %v1323 = vld [vmem:[%s1236 + $0x2b0] sm:$0xff]
        %v1324 = vld [vmem:[%s1236 + $0x2b8] sm:$0xff]
        %v1325 = vld [vmem:[%s1236 + $0x2c0] sm:$0xff]
        %v1326 = vld [vmem:[%s1236 + $0x2c8] sm:$0xff]
        %v1327 = vld [vmem:[%s1236 + $0x2d0] sm:$0xff]
        %v1328 = vld [vmem:[%s1236 + $0x2d8] sm:$0xff]
        %v1329 = vld [vmem:[%s1236 + $0x2e0] sm:$0xff]
        %v1330 = vld [vmem:[%s1236 + $0x2e8] sm:$0xff]
        %v1331 = vld [vmem:[%s1236 + $0x2f0] sm:$0xff]
        %v1332 = vld [vmem:[%s1236 + $0x2f8] sm:$0xff]
        %v1333 = vld [vmem:[%s1236 + $0x300] sm:$0xff]
        %v1334 = vld [vmem:[%s1236 + $0x308] sm:$0xff]
        %v1335 = vld [vmem:[%s1236 + $0x310] sm:$0xff]
        %v1336 = vld [vmem:[%s1236 + $0x318] sm:$0xff]
        %v1337 = vld [vmem:[%s1236 + $0x320] sm:$0xff]
        %v1338 = vld [vmem:[%s1236 + $0x328] sm:$0xff]
        %v1339 = vld [vmem:[%s1236 + $0x330] sm:$0xff]
        %v1340 = vld [vmem:[%s1236 + $0x338] sm:$0xff]
        %v1341 = vld [vmem:[%s1236 + $0x340] sm:$0xff]
        %v1342 = vld [vmem:[%s1236 + $0x348] sm:$0xff]
        %v1343 = vld [vmem:[%s1236 + $0x350] sm:$0xff]
        %v1344 = vld [vmem:[%s1236 + $0x358] sm:$0xff]
        %v1345 = vld [vmem:[%s1236 + $0x360] sm:$0xff]
        %v1346 = vld [vmem:[%s1236 + $0x368] sm:$0xff]
        %v1347 = vld [vmem:[%s1236 + $0x370] sm:$0xff]
        %v1348 = vld [vmem:[%s1236 + $0x378] sm:$0xff]
        %v1349 = vld [vmem:[%s1236 + $0x380] sm:$0xff]
        %v1350 = vld [vmem:[%s1236 + $0x388] sm:$0xff]
        %v1351 = vld [vmem:[%s1236 + $0x390] sm:$0xff]
        %v1352 = vld [vmem:[%s1236 + $0x398] sm:$0xff]
        %v1353 = vld [vmem:[%s1236 + $0x3a0] sm:$0xff]
        %v1354 = vld [vmem:[%s1236 + $0x3a8] sm:$0xff]
        %v1355 = vld [vmem:[%s1236 + $0x3b0] sm:$0xff]
        %v1356 = vld [vmem:[%s1236 + $0x3b8] sm:$0xff]
        %v1357 = vld [vmem:[%s1236 + $0x3c0] sm:$0xff]
        %v1358 = vld [vmem:[%s1236 + $0x3c8] sm:$0xff]
        %v1359 = vld [vmem:[%s1236 + $0x3d0] sm:$0xff]
        %v1360 = vld [vmem:[%s1236 + $0x3d8] sm:$0xff]
        %v1361 = vld [vmem:[%s1236 + $0x3e0] sm:$0xff]
        %v1362 = vld [vmem:[%s1236 + $0x3e8] sm:$0xff]
        %v1363 = vld [vmem:[%s1236 + $0x3f0] sm:$0xff]
        %v1364 = vld [vmem:[%s1236 + $0x3f8] sm:$0xff]
        %v1365 = vld [vmem:[%s1236 + $0x400] sm:$0xff]
        %v1366 = vld [vmem:[%s1236 + $0x408] sm:$0xff]
        %v1367 = vld [vmem:[%s1236 + $0x410] sm:$0xff]
        %v1368 = vld [vmem:[%s1236 + $0x418] sm:$0xff]
        %v1369 = vld [vmem:[%s1236 + $0x420] sm:$0xff]
        %v1370 = vld [vmem:[%s1236 + $0x428] sm:$0xff]
        %v1371 = vld [vmem:[%s1236 + $0x430] sm:$0xff]
        %v1372 = vld [vmem:[%s1236 + $0x438] sm:$0xff]
        %v1373 = vld [vmem:[%s1236 + $0x440] sm:$0xff]
        %v1374 = vld [vmem:[%s1236 + $0x448] sm:$0xff]
        %v1375 = vld [vmem:[%s1236 + $0x450] sm:$0xff]
        %v1376 = vld [vmem:[%s1236 + $0x458] sm:$0xff]
        %v1377 = vld [vmem:[%s1236 + $0x460] sm:$0xff]
        %v1378 = vld [vmem:[%s1236 + $0x468] sm:$0xff]
        %v1379 = vld [vmem:[%s1236 + $0x470] sm:$0xff]
        %v1380 = vld [vmem:[%s1236 + $0x478] sm:$0xff]
        %v1381 = vld [vmem:[%s1236 + $0x480] sm:$0xff]
        %v1382 = vld [vmem:[%s1236 + $0x488] sm:$0xff]
        %v1383 = vld [vmem:[%s1236 + $0x490] sm:$0xff]
        %v1384 = vld [vmem:[%s1236 + $0x498] sm:$0xff]
        %v1385 = vld [vmem:[%s1236 + $0x4a0] sm:$0xff]
        %v1386 = vld [vmem:[%s1236 + $0x4a8] sm:$0xff]
        %v1387 = vld [vmem:[%s1236 + $0x4b0] sm:$0xff]
        %v1388 = vld [vmem:[%s1236 + $0x4b8] sm:$0xff]
        %v1389 = vld [vmem:[%s1236 + $0x4c0] sm:$0xff]
        %v1390 = vld [vmem:[%s1236 + $0x4c8] sm:$0xff]
        %v1391 = vld [vmem:[%s1236 + $0x4d0] sm:$0xff]
        %v1392 = vld [vmem:[%s1236 + $0x4d8] sm:$0xff]
        %v1393 = vld [vmem:[%s1236 + $0x4e0] sm:$0xff]
        %v1394 = vld [vmem:[%s1236 + $0x4e8] sm:$0xff]
        %v1395 = vld [vmem:[%s1236 + $0x4f0] sm:$0xff]
        %v1396 = vld [vmem:[%s1236 + $0x4f8] sm:$0xff]
        %v1397 = vld [vmem:[%s1236 + $0x500] sm:$0xff]
        %v1398 = vld [vmem:[%s1236 + $0x508] sm:$0xff]
        %v1399 = vld [vmem:[%s1236 + $0x510] sm:$0xff]
        %v1400 = vld [vmem:[%s1236 + $0x518] sm:$0xff]
        %v1401 = vld [vmem:[%s1236 + $0x520] sm:$0xff]
        %v1402 = vld [vmem:[%s1236 + $0x528] sm:$0xff]
        %v1403 = vld [vmem:[%s1236 + $0x530] sm:$0xff]
        %v1404 = vld [vmem:[%s1236 + $0x538] sm:$0xff]
        %v1405 = vld [vmem:[%s1236 + $0x540] sm:$0xff]
        %v1406 = vld [vmem:[%s1236 + $0x548] sm:$0xff]
        %v1407 = vld [vmem:[%s1236 + $0x550] sm:$0xff]
        %v1408 = vld [vmem:[%s1236 + $0x558] sm:$0xff]
        %v1409 = vld [vmem:[%s1236 + $0x560] sm:$0xff]
        %v1410 = vld [vmem:[%s1236 + $0x568] sm:$0xff]
        %v1411 = vld [vmem:[%s1236 + $0x570] sm:$0xff]
        %v1412 = vld [vmem:[%s1236 + $0x578] sm:$0xff]
        %v1413 = vld [vmem:[%s1236 + $0x580] sm:$0xff]
        %v1414 = vld [vmem:[%s1236 + $0x588] sm:$0xff]
        %v1415 = vld [vmem:[%s1236 + $0x590] sm:$0xff]
        %v1416 = vld [vmem:[%s1236 + $0x598] sm:$0xff]
        %v1417 = vld [vmem:[%s1236 + $0x5a0] sm:$0xff]
        %v1418 = vld [vmem:[%s1236 + $0x5a8] sm:$0xff]
        %v1419 = vld [vmem:[%s1236 + $0x5b0] sm:$0xff]
        %v1420 = vld [vmem:[%s1236 + $0x5b8] sm:$0xff]
        %v1421 = vld [vmem:[%s1236 + $0x5c0] sm:$0xff]
        %v1422 = vld [vmem:[%s1236 + $0x5c8] sm:$0xff]
        %v1423 = vld [vmem:[%s1236 + $0x5d0] sm:$0xff]
        %v1424 = vld [vmem:[%s1236 + $0x5d8] sm:$0xff]
        %v1425 = vld [vmem:[%s1236 + $0x5e0] sm:$0xff]
        %v1426 = vld [vmem:[%s1236 + $0x5e8] sm:$0xff]
        %v1427 = vld [vmem:[%s1236 + $0x5f0] sm:$0xff]
        %v1428 = vld [vmem:[%s1236 + $0x5f8] sm:$0xff]
        %v1429 = vld [vmem:[%s1236 + $0x600] sm:$0xff]
        %v1430 = vld [vmem:[%s1236 + $0x608] sm:$0xff]
        %v1431 = vld [vmem:[%s1236 + $0x610] sm:$0xff]
        %v1432 = vld [vmem:[%s1236 + $0x618] sm:$0xff]
        %v1433 = vld [vmem:[%s1236 + $0x620] sm:$0xff]
        %v1434 = vld [vmem:[%s1236 + $0x628] sm:$0xff]
        %v1435 = vld [vmem:[%s1236 + $0x630] sm:$0xff]
        %v1436 = vld [vmem:[%s1236 + $0x638] sm:$0xff]
        %v1437 = vld [vmem:[%s1236 + $0x640] sm:$0xff]
        %v1438 = vld [vmem:[%s1236 + $0x648] sm:$0xff]
        %v1439 = vld [vmem:[%s1236 + $0x650] sm:$0xff]
        %v1440 = vld [vmem:[%s1236 + $0x658] sm:$0xff]
        %v1441 = vld [vmem:[%s1236 + $0x660] sm:$0xff]
        %v1442 = vld [vmem:[%s1236 + $0x668] sm:$0xff]
        %v1443 = vld [vmem:[%s1236 + $0x670] sm:$0xff]
        %v1444 = vld [vmem:[%s1236 + $0x678] sm:$0xff]
        %v1445 = vld [vmem:[%s1236 + $0x680] sm:$0xff]
        %v1446 = vld [vmem:[%s1236 + $0x688] sm:$0xff]
        %v1447 = vld [vmem:[%s1236 + $0x690] sm:$0xff]
        %v1448 = vld [vmem:[%s1236 + $0x698] sm:$0xff]
        %v1449 = vld [vmem:[%s1236 + $0x6a0] sm:$0xff]
        %v1450 = vld [vmem:[%s1236 + $0x6a8] sm:$0xff]
        %v1451 = vld [vmem:[%s1236 + $0x6b0] sm:$0xff]
        %v1452 = vld [vmem:[%s1236 + $0x6b8] sm:$0xff]
        %v1453 = vld [vmem:[%s1236 + $0x6c0] sm:$0xff]
        %v1454 = vld [vmem:[%s1236 + $0x6c8] sm:$0xff]
        %v1455 = vld [vmem:[%s1236 + $0x6d0] sm:$0xff]
        %v1456 = vld [vmem:[%s1236 + $0x6d8] sm:$0xff]
        %v1457 = vld [vmem:[%s1236 + $0x6e0] sm:$0xff]
        %v1458 = vld [vmem:[%s1236 + $0x6e8] sm:$0xff]
        %v1459 = vld [vmem:[%s1236 + $0x6f0] sm:$0xff]
        %v1460 = vld [vmem:[%s1236 + $0x6f8] sm:$0xff]
        %v1461 = vld [vmem:[%s1236 + $0x700] sm:$0xff]
        %v1462 = vld [vmem:[%s1236 + $0x708] sm:$0xff]
        %v1463 = vld [vmem:[%s1236 + $0x710] sm:$0xff]
        %v1464 = vld [vmem:[%s1236 + $0x718] sm:$0xff]
        %v1465 = vld [vmem:[%s1236 + $0x720] sm:$0xff]
        %v1466 = vld [vmem:[%s1236 + $0x728] sm:$0xff]
        %v1467 = vld [vmem:[%s1236 + $0x730] sm:$0xff]
        %v1468 = vld [vmem:[%s1236 + $0x738] sm:$0xff]
        %v1469 = vld [vmem:[%s1236 + $0x740] sm:$0xff]
        %v1470 = vld [vmem:[%s1236 + $0x748] sm:$0xff]
        %v1471 = vld [vmem:[%s1236 + $0x750] sm:$0xff]
        %v1472 = vld [vmem:[%s1236 + $0x758] sm:$0xff]
        %v1473 = vld [vmem:[%s1236 + $0x760] sm:$0xff]
        %v1474 = vld [vmem:[%s1236 + $0x768] sm:$0xff]
        %v1475 = vld [vmem:[%s1236 + $0x770] sm:$0xff]
        %v1476 = vld [vmem:[%s1236 + $0x778] sm:$0xff]
        %v1477 = vld [vmem:[%s1236 + $0x780] sm:$0xff]
        %v1478 = vld [vmem:[%s1236 + $0x788] sm:$0xff]
        %v1479 = vld [vmem:[%s1236 + $0x790] sm:$0xff]
        %v1480 = vld [vmem:[%s1236 + $0x798] sm:$0xff]
        %v1481 = vld [vmem:[%s1236 + $0x7a0] sm:$0xff]
        %v1482 = vld [vmem:[%s1236 + $0x7a8] sm:$0xff]
        %v1483 = vld [vmem:[%s1236 + $0x7b0] sm:$0xff]
        %v1484 = vld [vmem:[%s1236 + $0x7b8] sm:$0xff]
        %v1485 = vld [vmem:[%s1236 + $0x7c0] sm:$0xff]
        %v1486 = vld [vmem:[%s1236 + $0x7c8] sm:$0xff]
        %v1487 = vld [vmem:[%s1236 + $0x7d0] sm:$0xff]
        %v1488 = vld [vmem:[%s1236 + $0x7d8] sm:$0xff]
        %v1489 = vld [vmem:[%s1236 + $0x7e0] sm:$0xff]
        %v1490 = vld [vmem:[%s1236 + $0x7e8] sm:$0xff]
        %v1491 = vld [vmem:[%s1236 + $0x7f0] sm:$0xff]
        %v1492 = vld [vmem:[%s1236 + $0x7f8] sm:$0xff]
        %v1493 = vrot.slane %v1188, 7
        %v1494 = vrot.slane %v1189, 7
        %v1495 = vrot.slane %v1190, 7
        %v1496 = vrot.slane %v1191, 7
        %v1497 = vrot.slane %v1192, 7
        %v1498 = vrot.slane %v1193, 7
        %v1499 = vrot.slane %v1194, 7
        %v1500 = vrot.slane %v1195, 7
        %v1501 = vrot.slane %v1196, 7
        %v1502 = vrot.slane %v1197, 7
        %v1503 = vrot.slane %v1198, 7
        %v1504 = vrot.slane %v1199, 7
        %v1505 = vrot.slane %v1200, 7
        %v1506 = vrot.slane %v1201, 7
        %v1507 = vrot.slane %v1202, 7
        %v1508 = vrot.slane %v1203, 7
        %v1509 = vrot.slane %v1204, 7
        %v1510 = vrot.slane %v1205, 7
        %v1511 = vrot.slane %v1206, 7
        %v1512 = vrot.slane %v1207, 7
        %v1513 = vrot.slane %v1208, 7
        %v1514 = vrot.slane %v1209, 7
        %v1515 = vrot.slane %v1210, 7
        %v1516 = vrot.slane %v1211, 7
        %v1517 = vrot.slane %v1212, 7
        %v1518 = vrot.slane %v1213, 7
        %v1519 = vrot.slane %v1214, 7
        %v1520 = vrot.slane %v1215, 7
        %v1521 = vrot.slane %v1216, 7
        %v1522 = vrot.slane %v1217, 7
        %v1523 = vrot.slane %v1218, 7
        %v1524 = vrot.slane %v1219, 7
        %v1525 = vsel %vm418, %v1517, %v1521
        %v1526 = vsel %vm418, %v1518, %v1522
        %v1527 = vsel %vm418, %v1519, %v1523
        %v1528 = vsel %vm418, %v1520, %v1524
        %v1529 = vsel %vm418, %v1513, %v1517
        %v1530 = vsel %vm418, %v1514, %v1518
        %v1531 = vsel %vm418, %v1515, %v1519
        %v1532 = vsel %vm418, %v1516, %v1520
        %v1533 = vsel %vm418, %v1509, %v1513
        %v1534 = vsel %vm418, %v1510, %v1514
        %v1535 = vsel %vm418, %v1511, %v1515
        %v1536 = vsel %vm418, %v1512, %v1516
        %v1537 = vsel %vm418, %v1505, %v1509
        %v1538 = vsel %vm418, %v1506, %v1510
        %v1539 = vsel %vm418, %v1507, %v1511
        %v1540 = vsel %vm418, %v1508, %v1512
        %v1541 = vsel %vm418, %v1501, %v1505
        %v1542 = vsel %vm418, %v1502, %v1506
        %v1543 = vsel %vm418, %v1503, %v1507
        %v1544 = vsel %vm418, %v1504, %v1508
        %v1545 = vsel %vm418, %v1497, %v1501
        %v1546 = vsel %vm418, %v1498, %v1502
        %v1547 = vsel %vm418, %v1499, %v1503
        %v1548 = vsel %vm418, %v1500, %v1504
        %v1549 = vsel %vm418, %v1493, %v1497
        %v1550 = vsel %vm418, %v1494, %v1498
        %v1551 = vsel %vm418, %v1495, %v1499
        %v1552 = vsel %vm418, %v1496, %v1500
        %v1553 = vsel %vm418, %v1521, %v1493
        %v1554 = vsel %vm418, %v1522, %v1494
        %v1555 = vsel %vm418, %v1523, %v1495
        %v1556 = vsel %vm418, %v1524, %v1496
        %v1557 = vmul.f32 %v1553, %v430
        %v1558 = vmul.f32 %v1554, %v430
        %v1559 = vmul.f32 %v1555, %v430
        %v1560 = vmul.f32 %v1556, %v430
        %v1561 = vmul.f32 %v1549, %v435
        %v1562 = vmul.f32 %v1550, %v435
        %v1563 = vmul.f32 %v1551, %v435
        %v1564 = vmul.f32 %v1552, %v435
        %v1565 = vmul.f32 %v1545, %v440
        %v1566 = vmul.f32 %v1546, %v440
        %v1567 = vmul.f32 %v1547, %v440
        %v1568 = vmul.f32 %v1548, %v440
        %v1569 = vmul.f32 %v1541, %v445
        %v1570 = vmul.f32 %v1542, %v445
        %v1571 = vmul.f32 %v1543, %v445
        %v1572 = vmul.f32 %v1544, %v445
        %v1573 = vmul.f32 %v1537, %v450
        %v1574 = vmul.f32 %v1538, %v450
        %v1575 = vmul.f32 %v1539, %v450
        %v1576 = vmul.f32 %v1540, %v450
        %v1577 = vmul.f32 %v1533, %v455
        %v1578 = vmul.f32 %v1534, %v455
        %v1579 = vmul.f32 %v1535, %v455
        %v1580 = vmul.f32 %v1536, %v455
        %v1581 = vmul.f32 %v1529, %v460
        %v1582 = vmul.f32 %v1530, %v460
        %v1583 = vmul.f32 %v1531, %v460
        %v1584 = vmul.f32 %v1532, %v460
        %v1585 = vmul.f32 %v1525, %v465
        %v1586 = vmul.f32 %v1526, %v465
        %v1587 = vmul.f32 %v1527, %v465
        %v1588 = vmul.f32 %v1528, %v465
        %v1589 = vpack.c.bf16 %v1561, %v1557
        %v1590 = vpack.c.bf16 %v1562, %v1558
        %v1591 = vpack.c.bf16 %v1563, %v1559
        %v1592 = vpack.c.bf16 %v1564, %v1560
        %v1593 = vpack.c.bf16 %v1569, %v1565
        %v1594 = vpack.c.bf16 %v1570, %v1566
        %v1595 = vpack.c.bf16 %v1571, %v1567
        %v1596 = vpack.c.bf16 %v1572, %v1568
        %v1597 = vpack.c.bf16 %v1577, %v1573
        %v1598 = vpack.c.bf16 %v1578, %v1574
        %v1599 = vpack.c.bf16 %v1579, %v1575
        %v1600 = vpack.c.bf16 %v1580, %v1576
        %v1601 = vpack.c.bf16 %v1585, %v1581
        %v1602 = vpack.c.bf16 %v1586, %v1582
        %v1603 = vpack.c.bf16 %v1587, %v1583
        %v1604 = vpack.c.bf16 %v1588, %v1584
        %v1605 = vld [vmem:[#allocation7] sm:$0xff]
        %v1606 = vld [vmem:[#allocation7 + $0x8] sm:$0xff]
        %v1607 = vld [vmem:[#allocation7 + $0x10] sm:$0xff]
        %v1608 = vld [vmem:[#allocation7 + $0x18] sm:$0xff]
        %v1609 = vld [vmem:[#allocation7 + $0x20] sm:$0xff]
        %v1610 = vld [vmem:[#allocation7 + $0x28] sm:$0xff]
        %v1611 = vld [vmem:[#allocation7 + $0x30] sm:$0xff]
        %v1612 = vld [vmem:[#allocation7 + $0x38] sm:$0xff]
        %v1613 = vld [vmem:[#allocation7 + $0x40] sm:$0xff]
        %v1614 = vld [vmem:[#allocation7 + $0x48] sm:$0xff]
        %v1615 = vld [vmem:[#allocation7 + $0x50] sm:$0xff]
        %v1616 = vld [vmem:[#allocation7 + $0x58] sm:$0xff]
        %v1617 = vld [vmem:[#allocation7 + $0x60] sm:$0xff]
        %v1618 = vld [vmem:[#allocation7 + $0x68] sm:$0xff]
        %v1619 = vld [vmem:[#allocation7 + $0x70] sm:$0xff]
        %v1620 = vld [vmem:[#allocation7 + $0x78] sm:$0xff]
        %v1621 = vld [vmem:[#allocation7 + $0x80] sm:$0xff]
        %v1622 = vld [vmem:[#allocation7 + $0x88] sm:$0xff]
        %v1623 = vld [vmem:[#allocation7 + $0x90] sm:$0xff]
        %v1624 = vld [vmem:[#allocation7 + $0x98] sm:$0xff]
        %v1625 = vld [vmem:[#allocation7 + $0xa0] sm:$0xff]
        %v1626 = vld [vmem:[#allocation7 + $0xa8] sm:$0xff]
        %v1627 = vld [vmem:[#allocation7 + $0xb0] sm:$0xff]
        %v1628 = vld [vmem:[#allocation7 + $0xb8] sm:$0xff]
        %v1629 = vld [vmem:[#allocation7 + $0xc0] sm:$0xff]
        %v1630 = vld [vmem:[#allocation7 + $0xc8] sm:$0xff]
        %v1631 = vld [vmem:[#allocation7 + $0xd0] sm:$0xff]
        %v1632 = vld [vmem:[#allocation7 + $0xd8] sm:$0xff]
        %v1633 = vld [vmem:[#allocation7 + $0xe0] sm:$0xff]
        %v1634 = vld [vmem:[#allocation7 + $0xe8] sm:$0xff]
        %v1635 = vld [vmem:[#allocation7 + $0xf0] sm:$0xff]
        %v1636 = vld [vmem:[#allocation7 + $0xf8] sm:$0xff]
        %v1637 = vld [vmem:[#allocation7 + $0x100] sm:$0xff]
        %v1638 = vld [vmem:[#allocation7 + $0x108] sm:$0xff]
        %v1639 = vld [vmem:[#allocation7 + $0x110] sm:$0xff]
        %v1640 = vld [vmem:[#allocation7 + $0x118] sm:$0xff]
        %v1641 = vld [vmem:[#allocation7 + $0x120] sm:$0xff]
        %v1642 = vld [vmem:[#allocation7 + $0x128] sm:$0xff]
        %v1643 = vld [vmem:[#allocation7 + $0x130] sm:$0xff]
        %v1644 = vld [vmem:[#allocation7 + $0x138] sm:$0xff]
        %v1645 = vld [vmem:[#allocation7 + $0x140] sm:$0xff]
        %v1646 = vld [vmem:[#allocation7 + $0x148] sm:$0xff]
        %v1647 = vld [vmem:[#allocation7 + $0x150] sm:$0xff]
        %v1648 = vld [vmem:[#allocation7 + $0x158] sm:$0xff]
        %v1649 = vld [vmem:[#allocation7 + $0x160] sm:$0xff]
        %v1650 = vld [vmem:[#allocation7 + $0x168] sm:$0xff]
        %v1651 = vld [vmem:[#allocation7 + $0x170] sm:$0xff]
        %v1652 = vld [vmem:[#allocation7 + $0x178] sm:$0xff]
        %v1653 = vld [vmem:[#allocation7 + $0x180] sm:$0xff]
        %v1654 = vld [vmem:[#allocation7 + $0x188] sm:$0xff]
        %v1655 = vld [vmem:[#allocation7 + $0x190] sm:$0xff]
        %v1656 = vld [vmem:[#allocation7 + $0x198] sm:$0xff]
        %v1657 = vld [vmem:[#allocation7 + $0x1a0] sm:$0xff]
        %v1658 = vld [vmem:[#allocation7 + $0x1a8] sm:$0xff]
        %v1659 = vld [vmem:[#allocation7 + $0x1b0] sm:$0xff]
        %v1660 = vld [vmem:[#allocation7 + $0x1b8] sm:$0xff]
        %v1661 = vld [vmem:[#allocation7 + $0x1c0] sm:$0xff]
        %v1662 = vld [vmem:[#allocation7 + $0x1c8] sm:$0xff]
        %v1663 = vld [vmem:[#allocation7 + $0x1d0] sm:$0xff]
        %v1664 = vld [vmem:[#allocation7 + $0x1d8] sm:$0xff]
        %v1665 = vld [vmem:[#allocation7 + $0x1e0] sm:$0xff]
        %v1666 = vld [vmem:[#allocation7 + $0x1e8] sm:$0xff]
        %v1667 = vld [vmem:[#allocation7 + $0x1f0] sm:$0xff]
        %v1668 = vld [vmem:[#allocation7 + $0x1f8] sm:$0xff]
        %v1669 = vld [vmem:[#allocation7 + $0x200] sm:$0xff]
        %v1670 = vld [vmem:[#allocation7 + $0x208] sm:$0xff]
        %v1671 = vld [vmem:[#allocation7 + $0x210] sm:$0xff]
        %v1672 = vld [vmem:[#allocation7 + $0x218] sm:$0xff]
        %v1673 = vld [vmem:[#allocation7 + $0x220] sm:$0xff]
        %v1674 = vld [vmem:[#allocation7 + $0x228] sm:$0xff]
        %v1675 = vld [vmem:[#allocation7 + $0x230] sm:$0xff]
        %v1676 = vld [vmem:[#allocation7 + $0x238] sm:$0xff]
        %v1677 = vld [vmem:[#allocation7 + $0x240] sm:$0xff]
        %v1678 = vld [vmem:[#allocation7 + $0x248] sm:$0xff]
        %v1679 = vld [vmem:[#allocation7 + $0x250] sm:$0xff]
        %v1680 = vld [vmem:[#allocation7 + $0x258] sm:$0xff]
        %v1681 = vld [vmem:[#allocation7 + $0x260] sm:$0xff]
        %v1682 = vld [vmem:[#allocation7 + $0x268] sm:$0xff]
        %v1683 = vld [vmem:[#allocation7 + $0x270] sm:$0xff]
        %v1684 = vld [vmem:[#allocation7 + $0x278] sm:$0xff]
        %v1685 = vld [vmem:[#allocation7 + $0x280] sm:$0xff]
        %v1686 = vld [vmem:[#allocation7 + $0x288] sm:$0xff]
        %v1687 = vld [vmem:[#allocation7 + $0x290] sm:$0xff]
        %v1688 = vld [vmem:[#allocation7 + $0x298] sm:$0xff]
        %v1689 = vld [vmem:[#allocation7 + $0x2a0] sm:$0xff]
        %v1690 = vld [vmem:[#allocation7 + $0x2a8] sm:$0xff]
        %v1691 = vld [vmem:[#allocation7 + $0x2b0] sm:$0xff]
        %v1692 = vld [vmem:[#allocation7 + $0x2b8] sm:$0xff]
        %v1693 = vld [vmem:[#allocation7 + $0x2c0] sm:$0xff]
        %v1694 = vld [vmem:[#allocation7 + $0x2c8] sm:$0xff]
        %v1695 = vld [vmem:[#allocation7 + $0x2d0] sm:$0xff]
        %v1696 = vld [vmem:[#allocation7 + $0x2d8] sm:$0xff]
        %v1697 = vld [vmem:[#allocation7 + $0x2e0] sm:$0xff]
        %v1698 = vld [vmem:[#allocation7 + $0x2e8] sm:$0xff]
        %v1699 = vld [vmem:[#allocation7 + $0x2f0] sm:$0xff]
        %v1700 = vld [vmem:[#allocation7 + $0x2f8] sm:$0xff]
        %v1701 = vld [vmem:[#allocation7 + $0x300] sm:$0xff]
        %v1702 = vld [vmem:[#allocation7 + $0x308] sm:$0xff]
        %v1703 = vld [vmem:[#allocation7 + $0x310] sm:$0xff]
        %v1704 = vld [vmem:[#allocation7 + $0x318] sm:$0xff]
        %v1705 = vld [vmem:[#allocation7 + $0x320] sm:$0xff]
        %v1706 = vld [vmem:[#allocation7 + $0x328] sm:$0xff]
        %v1707 = vld [vmem:[#allocation7 + $0x330] sm:$0xff]
        %v1708 = vld [vmem:[#allocation7 + $0x338] sm:$0xff]
        %v1709 = vld [vmem:[#allocation7 + $0x340] sm:$0xff]
        %v1710 = vld [vmem:[#allocation7 + $0x348] sm:$0xff]
        %v1711 = vld [vmem:[#allocation7 + $0x350] sm:$0xff]
        %v1712 = vld [vmem:[#allocation7 + $0x358] sm:$0xff]
        %v1713 = vld [vmem:[#allocation7 + $0x360] sm:$0xff]
        %v1714 = vld [vmem:[#allocation7 + $0x368] sm:$0xff]
        %v1715 = vld [vmem:[#allocation7 + $0x370] sm:$0xff]
        %v1716 = vld [vmem:[#allocation7 + $0x378] sm:$0xff]
        %v1717 = vld [vmem:[#allocation7 + $0x380] sm:$0xff]
        %v1718 = vld [vmem:[#allocation7 + $0x388] sm:$0xff]
        %v1719 = vld [vmem:[#allocation7 + $0x390] sm:$0xff]
        %v1720 = vld [vmem:[#allocation7 + $0x398] sm:$0xff]
        %v1721 = vld [vmem:[#allocation7 + $0x3a0] sm:$0xff]
        %v1722 = vld [vmem:[#allocation7 + $0x3a8] sm:$0xff]
        %v1723 = vld [vmem:[#allocation7 + $0x3b0] sm:$0xff]
        %v1724 = vld [vmem:[#allocation7 + $0x3b8] sm:$0xff]
        %v1725 = vld [vmem:[#allocation7 + $0x3c0] sm:$0xff]
        %v1726 = vld [vmem:[#allocation7 + $0x3c8] sm:$0xff]
        %v1727 = vld [vmem:[#allocation7 + $0x3d0] sm:$0xff]
        %v1728 = vld [vmem:[#allocation7 + $0x3d8] sm:$0xff]
        %v1729 = vld [vmem:[#allocation7 + $0x3e0] sm:$0xff]
        %v1730 = vld [vmem:[#allocation7 + $0x3e8] sm:$0xff]
        %v1731 = vld [vmem:[#allocation7 + $0x3f0] sm:$0xff]
        %v1732 = vld [vmem:[#allocation7 + $0x3f8] sm:$0xff]
        %v1733 = vld [vmem:[#allocation7 + $0x400] sm:$0xff]
        %v1734 = vld [vmem:[#allocation7 + $0x408] sm:$0xff]
        %v1735 = vld [vmem:[#allocation7 + $0x410] sm:$0xff]
        %v1736 = vld [vmem:[#allocation7 + $0x418] sm:$0xff]
        %v1737 = vld [vmem:[#allocation7 + $0x420] sm:$0xff]
        %v1738 = vld [vmem:[#allocation7 + $0x428] sm:$0xff]
        %v1739 = vld [vmem:[#allocation7 + $0x430] sm:$0xff]
        %v1740 = vld [vmem:[#allocation7 + $0x438] sm:$0xff]
        %v1741 = vld [vmem:[#allocation7 + $0x440] sm:$0xff]
        %v1742 = vld [vmem:[#allocation7 + $0x448] sm:$0xff]
        %v1743 = vld [vmem:[#allocation7 + $0x450] sm:$0xff]
        %v1744 = vld [vmem:[#allocation7 + $0x458] sm:$0xff]
        %v1745 = vld [vmem:[#allocation7 + $0x460] sm:$0xff]
        %v1746 = vld [vmem:[#allocation7 + $0x468] sm:$0xff]
        %v1747 = vld [vmem:[#allocation7 + $0x470] sm:$0xff]
        %v1748 = vld [vmem:[#allocation7 + $0x478] sm:$0xff]
        %v1749 = vld [vmem:[#allocation7 + $0x480] sm:$0xff]
        %v1750 = vld [vmem:[#allocation7 + $0x488] sm:$0xff]
        %v1751 = vld [vmem:[#allocation7 + $0x490] sm:$0xff]
        %v1752 = vld [vmem:[#allocation7 + $0x498] sm:$0xff]
        %v1753 = vld [vmem:[#allocation7 + $0x4a0] sm:$0xff]
        %v1754 = vld [vmem:[#allocation7 + $0x4a8] sm:$0xff]
        %v1755 = vld [vmem:[#allocation7 + $0x4b0] sm:$0xff]
        %v1756 = vld [vmem:[#allocation7 + $0x4b8] sm:$0xff]
        %v1757 = vld [vmem:[#allocation7 + $0x4c0] sm:$0xff]
        %v1758 = vld [vmem:[#allocation7 + $0x4c8] sm:$0xff]
        %v1759 = vld [vmem:[#allocation7 + $0x4d0] sm:$0xff]
        %v1760 = vld [vmem:[#allocation7 + $0x4d8] sm:$0xff]
        %v1761 = vld [vmem:[#allocation7 + $0x4e0] sm:$0xff]
        %v1762 = vld [vmem:[#allocation7 + $0x4e8] sm:$0xff]
        %v1763 = vld [vmem:[#allocation7 + $0x4f0] sm:$0xff]
        %v1764 = vld [vmem:[#allocation7 + $0x4f8] sm:$0xff]
        %v1765 = vld [vmem:[#allocation7 + $0x500] sm:$0xff]
        %v1766 = vld [vmem:[#allocation7 + $0x508] sm:$0xff]
        %v1767 = vld [vmem:[#allocation7 + $0x510] sm:$0xff]
        %v1768 = vld [vmem:[#allocation7 + $0x518] sm:$0xff]
        %v1769 = vld [vmem:[#allocation7 + $0x520] sm:$0xff]
        %v1770 = vld [vmem:[#allocation7 + $0x528] sm:$0xff]
        %v1771 = vld [vmem:[#allocation7 + $0x530] sm:$0xff]
        %v1772 = vld [vmem:[#allocation7 + $0x538] sm:$0xff]
        %v1773 = vld [vmem:[#allocation7 + $0x540] sm:$0xff]
        %v1774 = vld [vmem:[#allocation7 + $0x548] sm:$0xff]
        %v1775 = vld [vmem:[#allocation7 + $0x550] sm:$0xff]
        %v1776 = vld [vmem:[#allocation7 + $0x558] sm:$0xff]
        %v1777 = vld [vmem:[#allocation7 + $0x560] sm:$0xff]
        %v1778 = vld [vmem:[#allocation7 + $0x568] sm:$0xff]
        %v1779 = vld [vmem:[#allocation7 + $0x570] sm:$0xff]
        %v1780 = vld [vmem:[#allocation7 + $0x578] sm:$0xff]
        %v1781 = vld [vmem:[#allocation7 + $0x580] sm:$0xff]
        %v1782 = vld [vmem:[#allocation7 + $0x588] sm:$0xff]
        %v1783 = vld [vmem:[#allocation7 + $0x590] sm:$0xff]
        %v1784 = vld [vmem:[#allocation7 + $0x598] sm:$0xff]
        %v1785 = vld [vmem:[#allocation7 + $0x5a0] sm:$0xff]
        %v1786 = vld [vmem:[#allocation7 + $0x5a8] sm:$0xff]
        %v1787 = vld [vmem:[#allocation7 + $0x5b0] sm:$0xff]
        %v1788 = vld [vmem:[#allocation7 + $0x5b8] sm:$0xff]
        %v1789 = vld [vmem:[#allocation7 + $0x5c0] sm:$0xff]
        %v1790 = vld [vmem:[#allocation7 + $0x5c8] sm:$0xff]
        %v1791 = vld [vmem:[#allocation7 + $0x5d0] sm:$0xff]
        %v1792 = vld [vmem:[#allocation7 + $0x5d8] sm:$0xff]
        %v1793 = vld [vmem:[#allocation7 + $0x5e0] sm:$0xff]
        %v1794 = vld [vmem:[#allocation7 + $0x5e8] sm:$0xff]
        %v1795 = vld [vmem:[#allocation7 + $0x5f0] sm:$0xff]
        %v1796 = vld [vmem:[#allocation7 + $0x5f8] sm:$0xff]
        %v1797 = vld [vmem:[#allocation7 + $0x600] sm:$0xff]
        %v1798 = vld [vmem:[#allocation7 + $0x608] sm:$0xff]
        %v1799 = vld [vmem:[#allocation7 + $0x610] sm:$0xff]
        %v1800 = vld [vmem:[#allocation7 + $0x618] sm:$0xff]
        %v1801 = vld [vmem:[#allocation7 + $0x620] sm:$0xff]
        %v1802 = vld [vmem:[#allocation7 + $0x628] sm:$0xff]
        %v1803 = vld [vmem:[#allocation7 + $0x630] sm:$0xff]
        %v1804 = vld [vmem:[#allocation7 + $0x638] sm:$0xff]
        %v1805 = vld [vmem:[#allocation7 + $0x640] sm:$0xff]
        %v1806 = vld [vmem:[#allocation7 + $0x648] sm:$0xff]
        %v1807 = vld [vmem:[#allocation7 + $0x650] sm:$0xff]
        %v1808 = vld [vmem:[#allocation7 + $0x658] sm:$0xff]
        %v1809 = vld [vmem:[#allocation7 + $0x660] sm:$0xff]
        %v1810 = vld [vmem:[#allocation7 + $0x668] sm:$0xff]
        %v1811 = vld [vmem:[#allocation7 + $0x670] sm:$0xff]
        %v1812 = vld [vmem:[#allocation7 + $0x678] sm:$0xff]
        %v1813 = vld [vmem:[#allocation7 + $0x680] sm:$0xff]
        %v1814 = vld [vmem:[#allocation7 + $0x688] sm:$0xff]
        %v1815 = vld [vmem:[#allocation7 + $0x690] sm:$0xff]
        %v1816 = vld [vmem:[#allocation7 + $0x698] sm:$0xff]
        %v1817 = vld [vmem:[#allocation7 + $0x6a0] sm:$0xff]
        %v1818 = vld [vmem:[#allocation7 + $0x6a8] sm:$0xff]
        %v1819 = vld [vmem:[#allocation7 + $0x6b0] sm:$0xff]
        %v1820 = vld [vmem:[#allocation7 + $0x6b8] sm:$0xff]
        %v1821 = vld [vmem:[#allocation7 + $0x6c0] sm:$0xff]
        %v1822 = vld [vmem:[#allocation7 + $0x6c8] sm:$0xff]
        %v1823 = vld [vmem:[#allocation7 + $0x6d0] sm:$0xff]
        %v1824 = vld [vmem:[#allocation7 + $0x6d8] sm:$0xff]
        %v1825 = vld [vmem:[#allocation7 + $0x6e0] sm:$0xff]
        %v1826 = vld [vmem:[#allocation7 + $0x6e8] sm:$0xff]
        %v1827 = vld [vmem:[#allocation7 + $0x6f0] sm:$0xff]
        %v1828 = vld [vmem:[#allocation7 + $0x6f8] sm:$0xff]
        %v1829 = vld [vmem:[#allocation7 + $0x700] sm:$0xff]
        %v1830 = vld [vmem:[#allocation7 + $0x708] sm:$0xff]
        %v1831 = vld [vmem:[#allocation7 + $0x710] sm:$0xff]
        %v1832 = vld [vmem:[#allocation7 + $0x718] sm:$0xff]
        %v1833 = vld [vmem:[#allocation7 + $0x720] sm:$0xff]
        %v1834 = vld [vmem:[#allocation7 + $0x728] sm:$0xff]
        %v1835 = vld [vmem:[#allocation7 + $0x730] sm:$0xff]
        %v1836 = vld [vmem:[#allocation7 + $0x738] sm:$0xff]
        %v1837 = vld [vmem:[#allocation7 + $0x740] sm:$0xff]
        %v1838 = vld [vmem:[#allocation7 + $0x748] sm:$0xff]
        %v1839 = vld [vmem:[#allocation7 + $0x750] sm:$0xff]
        %v1840 = vld [vmem:[#allocation7 + $0x758] sm:$0xff]
        %v1841 = vld [vmem:[#allocation7 + $0x760] sm:$0xff]
        %v1842 = vld [vmem:[#allocation7 + $0x768] sm:$0xff]
        %v1843 = vld [vmem:[#allocation7 + $0x770] sm:$0xff]
        %v1844 = vld [vmem:[#allocation7 + $0x778] sm:$0xff]
        %v1845 = vld [vmem:[#allocation7 + $0x780] sm:$0xff]
        %v1846 = vld [vmem:[#allocation7 + $0x788] sm:$0xff]
        %v1847 = vld [vmem:[#allocation7 + $0x790] sm:$0xff]
        %v1848 = vld [vmem:[#allocation7 + $0x798] sm:$0xff]
        %v1849 = vld [vmem:[#allocation7 + $0x7a0] sm:$0xff]
        %v1850 = vld [vmem:[#allocation7 + $0x7a8] sm:$0xff]
        %v1851 = vld [vmem:[#allocation7 + $0x7b0] sm:$0xff]
        %v1852 = vld [vmem:[#allocation7 + $0x7b8] sm:$0xff]
        %v1853 = vld [vmem:[#allocation7 + $0x7c0] sm:$0xff]
        %v1854 = vld [vmem:[#allocation7 + $0x7c8] sm:$0xff]
        %v1855 = vld [vmem:[#allocation7 + $0x7d0] sm:$0xff]
        %v1856 = vld [vmem:[#allocation7 + $0x7d8] sm:$0xff]
        %v1857 = vld [vmem:[#allocation7 + $0x7e0] sm:$0xff]
        %v1858 = vld [vmem:[#allocation7 + $0x7e8] sm:$0xff]
        %v1859 = vld [vmem:[#allocation7 + $0x7f0] sm:$0xff]
        %v1860 = vld [vmem:[#allocation7 + $0x7f8] sm:$0xff]
        %v2117 = vunpack.c.l.b16 %v1605
        %v2118 = vunpack.c.h.b16 %v1605
        %v2119 = vunpack.c.l.b16 %v1606
        %v2120 = vunpack.c.h.b16 %v1606
        %v2121 = vunpack.c.l.b16 %v1607
        %v2122 = vunpack.c.h.b16 %v1607
        %v2123 = vunpack.c.l.b16 %v1608
        %v2124 = vunpack.c.h.b16 %v1608
        %v2125 = vunpack.c.l.b16 %v1609
        %v2126 = vunpack.c.h.b16 %v1609
        %v2127 = vunpack.c.l.b16 %v1610
        %v2128 = vunpack.c.h.b16 %v1610
        %v2129 = vunpack.c.l.b16 %v1611
        %v2130 = vunpack.c.h.b16 %v1611
        %v2131 = vunpack.c.l.b16 %v1612
        %v2132 = vunpack.c.h.b16 %v1612
        %v2133 = vunpack.c.l.b16 %v1613
        %v2134 = vunpack.c.h.b16 %v1613
        %v2135 = vunpack.c.l.b16 %v1614
        %v2136 = vunpack.c.h.b16 %v1614
        %v2137 = vunpack.c.l.b16 %v1615
        %v2138 = vunpack.c.h.b16 %v1615
        %v2139 = vunpack.c.l.b16 %v1616
        %v2140 = vunpack.c.h.b16 %v1616
        %v2141 = vunpack.c.l.b16 %v1617
        %v2142 = vunpack.c.h.b16 %v1617
        %v2143 = vunpack.c.l.b16 %v1618
        %v2144 = vunpack.c.h.b16 %v1618
        %v2145 = vunpack.c.l.b16 %v1619
        %v2146 = vunpack.c.h.b16 %v1619
        %v2147 = vunpack.c.l.b16 %v1620
        %v2148 = vunpack.c.h.b16 %v1620
        %v2149 = vunpack.c.l.b16 %v1621
        %v2150 = vunpack.c.h.b16 %v1621
        %v2151 = vunpack.c.l.b16 %v1622
        %v2152 = vunpack.c.h.b16 %v1622
        %v2153 = vunpack.c.l.b16 %v1623
        %v2154 = vunpack.c.h.b16 %v1623
        %v2155 = vunpack.c.l.b16 %v1624
        %v2156 = vunpack.c.h.b16 %v1624
        %v2157 = vunpack.c.l.b16 %v1625
        %v2158 = vunpack.c.h.b16 %v1625
        %v2159 = vunpack.c.l.b16 %v1626
        %v2160 = vunpack.c.h.b16 %v1626
        %v2161 = vunpack.c.l.b16 %v1627
        %v2162 = vunpack.c.h.b16 %v1627
        %v2163 = vunpack.c.l.b16 %v1628
        %v2164 = vunpack.c.h.b16 %v1628
        %v2165 = vunpack.c.l.b16 %v1629
        %v2166 = vunpack.c.h.b16 %v1629
        %v2167 = vunpack.c.l.b16 %v1630
        %v2168 = vunpack.c.h.b16 %v1630
        %v2169 = vunpack.c.l.b16 %v1631
        %v2170 = vunpack.c.h.b16 %v1631
        %v2171 = vunpack.c.l.b16 %v1632
        %v2172 = vunpack.c.h.b16 %v1632
        %v2173 = vunpack.c.l.b16 %v1633
        %v2174 = vunpack.c.h.b16 %v1633
        %v2175 = vunpack.c.l.b16 %v1634
        %v2176 = vunpack.c.h.b16 %v1634
        %v2177 = vunpack.c.l.b16 %v1635
        %v2178 = vunpack.c.h.b16 %v1635
        %v2179 = vunpack.c.l.b16 %v1636
        %v2180 = vunpack.c.h.b16 %v1636
        %v2181 = vunpack.c.l.b16 %v1637
        %v2182 = vunpack.c.h.b16 %v1637
        %v2183 = vunpack.c.l.b16 %v1638
        %v2184 = vunpack.c.h.b16 %v1638
        %v2185 = vunpack.c.l.b16 %v1639
        %v2186 = vunpack.c.h.b16 %v1639
        %v2187 = vunpack.c.l.b16 %v1640
        %v2188 = vunpack.c.h.b16 %v1640
        %v2189 = vunpack.c.l.b16 %v1641
        %v2190 = vunpack.c.h.b16 %v1641
        %v2191 = vunpack.c.l.b16 %v1642
        %v2192 = vunpack.c.h.b16 %v1642
        %v2193 = vunpack.c.l.b16 %v1643
        %v2194 = vunpack.c.h.b16 %v1643
        %v2195 = vunpack.c.l.b16 %v1644
        %v2196 = vunpack.c.h.b16 %v1644
        %v2197 = vunpack.c.l.b16 %v1645
        %v2198 = vunpack.c.h.b16 %v1645
        %v2199 = vunpack.c.l.b16 %v1646
        %v2200 = vunpack.c.h.b16 %v1646
        %v2201 = vunpack.c.l.b16 %v1647
        %v2202 = vunpack.c.h.b16 %v1647
        %v2203 = vunpack.c.l.b16 %v1648
        %v2204 = vunpack.c.h.b16 %v1648
        %v2205 = vunpack.c.l.b16 %v1649
        %v2206 = vunpack.c.h.b16 %v1649
        %v2207 = vunpack.c.l.b16 %v1650
        %v2208 = vunpack.c.h.b16 %v1650
        %v2209 = vunpack.c.l.b16 %v1651
        %v2210 = vunpack.c.h.b16 %v1651
        %v2211 = vunpack.c.l.b16 %v1652
        %v2212 = vunpack.c.h.b16 %v1652
        %v2213 = vunpack.c.l.b16 %v1653
        %v2214 = vunpack.c.h.b16 %v1653
        %v2215 = vunpack.c.l.b16 %v1654
        %v2216 = vunpack.c.h.b16 %v1654
        %v2217 = vunpack.c.l.b16 %v1655
        %v2218 = vunpack.c.h.b16 %v1655
        %v2219 = vunpack.c.l.b16 %v1656
        %v2220 = vunpack.c.h.b16 %v1656
        %v2221 = vunpack.c.l.b16 %v1657
        %v2222 = vunpack.c.h.b16 %v1657
        %v2223 = vunpack.c.l.b16 %v1658
        %v2224 = vunpack.c.h.b16 %v1658
        %v2225 = vunpack.c.l.b16 %v1659
        %v2226 = vunpack.c.h.b16 %v1659
        %v2227 = vunpack.c.l.b16 %v1660
        %v2228 = vunpack.c.h.b16 %v1660
        %v2229 = vunpack.c.l.b16 %v1661
        %v2230 = vunpack.c.h.b16 %v1661
        %v2231 = vunpack.c.l.b16 %v1662
        %v2232 = vunpack.c.h.b16 %v1662
        %v2233 = vunpack.c.l.b16 %v1663
        %v2234 = vunpack.c.h.b16 %v1663
        %v2235 = vunpack.c.l.b16 %v1664
        %v2236 = vunpack.c.h.b16 %v1664
        %v2237 = vunpack.c.l.b16 %v1665
        %v2238 = vunpack.c.h.b16 %v1665
        %v2239 = vunpack.c.l.b16 %v1666
        %v2240 = vunpack.c.h.b16 %v1666
        %v2241 = vunpack.c.l.b16 %v1667
        %v2242 = vunpack.c.h.b16 %v1667
        %v2243 = vunpack.c.l.b16 %v1668
        %v2244 = vunpack.c.h.b16 %v1668
        %v2245 = vunpack.c.l.b16 %v1669
        %v2246 = vunpack.c.h.b16 %v1669
        %v2247 = vunpack.c.l.b16 %v1670
        %v2248 = vunpack.c.h.b16 %v1670
        %v2249 = vunpack.c.l.b16 %v1671
        %v2250 = vunpack.c.h.b16 %v1671
        %v2251 = vunpack.c.l.b16 %v1672
        %v2252 = vunpack.c.h.b16 %v1672
        %v2253 = vunpack.c.l.b16 %v1673
        %v2254 = vunpack.c.h.b16 %v1673
        %v2255 = vunpack.c.l.b16 %v1674
        %v2256 = vunpack.c.h.b16 %v1674
        %v2257 = vunpack.c.l.b16 %v1675
        %v2258 = vunpack.c.h.b16 %v1675
        %v2259 = vunpack.c.l.b16 %v1676
        %v2260 = vunpack.c.h.b16 %v1676
        %v2261 = vunpack.c.l.b16 %v1677
        %v2262 = vunpack.c.h.b16 %v1677
        %v2263 = vunpack.c.l.b16 %v1678
        %v2264 = vunpack.c.h.b16 %v1678
        %v2265 = vunpack.c.l.b16 %v1679
        %v2266 = vunpack.c.h.b16 %v1679
        %v2267 = vunpack.c.l.b16 %v1680
        %v2268 = vunpack.c.h.b16 %v1680
        %v2269 = vunpack.c.l.b16 %v1681
        %v2270 = vunpack.c.h.b16 %v1681
        %v2271 = vunpack.c.l.b16 %v1682
        %v2272 = vunpack.c.h.b16 %v1682
        %v2273 = vunpack.c.l.b16 %v1683
        %v2274 = vunpack.c.h.b16 %v1683
        %v2275 = vunpack.c.l.b16 %v1684
        %v2276 = vunpack.c.h.b16 %v1684
        %v2277 = vunpack.c.l.b16 %v1685
        %v2278 = vunpack.c.h.b16 %v1685
        %v2279 = vunpack.c.l.b16 %v1686
        %v2280 = vunpack.c.h.b16 %v1686
        %v2281 = vunpack.c.l.b16 %v1687
        %v2282 = vunpack.c.h.b16 %v1687
        %v2283 = vunpack.c.l.b16 %v1688
        %v2284 = vunpack.c.h.b16 %v1688
        %v2285 = vunpack.c.l.b16 %v1689
        %v2286 = vunpack.c.h.b16 %v1689
        %v2287 = vunpack.c.l.b16 %v1690
        %v2288 = vunpack.c.h.b16 %v1690
        %v2289 = vunpack.c.l.b16 %v1691
        %v2290 = vunpack.c.h.b16 %v1691
        %v2291 = vunpack.c.l.b16 %v1692
        %v2292 = vunpack.c.h.b16 %v1692
        %v2293 = vunpack.c.l.b16 %v1693
        %v2294 = vunpack.c.h.b16 %v1693
        %v2295 = vunpack.c.l.b16 %v1694
        %v2296 = vunpack.c.h.b16 %v1694
        %v2297 = vunpack.c.l.b16 %v1695
        %v2298 = vunpack.c.h.b16 %v1695
        %v2299 = vunpack.c.l.b16 %v1696
        %v2300 = vunpack.c.h.b16 %v1696
        %v2301 = vunpack.c.l.b16 %v1697
        %v2302 = vunpack.c.h.b16 %v1697
        %v2303 = vunpack.c.l.b16 %v1698
        %v2304 = vunpack.c.h.b16 %v1698
        %v2305 = vunpack.c.l.b16 %v1699
        %v2306 = vunpack.c.h.b16 %v1699
        %v2307 = vunpack.c.l.b16 %v1700
        %v2308 = vunpack.c.h.b16 %v1700
        %v2309 = vunpack.c.l.b16 %v1701
        %v2310 = vunpack.c.h.b16 %v1701
        %v2311 = vunpack.c.l.b16 %v1702
        %v2312 = vunpack.c.h.b16 %v1702
        %v2313 = vunpack.c.l.b16 %v1703
        %v2314 = vunpack.c.h.b16 %v1703
        %v2315 = vunpack.c.l.b16 %v1704
        %v2316 = vunpack.c.h.b16 %v1704
        %v2317 = vunpack.c.l.b16 %v1705
        %v2318 = vunpack.c.h.b16 %v1705
        %v2319 = vunpack.c.l.b16 %v1706
        %v2320 = vunpack.c.h.b16 %v1706
        %v2321 = vunpack.c.l.b16 %v1707
        %v2322 = vunpack.c.h.b16 %v1707
        %v2323 = vunpack.c.l.b16 %v1708
        %v2324 = vunpack.c.h.b16 %v1708
        %v2325 = vunpack.c.l.b16 %v1709
        %v2326 = vunpack.c.h.b16 %v1709
        %v2327 = vunpack.c.l.b16 %v1710
        %v2328 = vunpack.c.h.b16 %v1710
        %v2329 = vunpack.c.l.b16 %v1711
        %v2330 = vunpack.c.h.b16 %v1711
        %v2331 = vunpack.c.l.b16 %v1712
        %v2332 = vunpack.c.h.b16 %v1712
        %v2333 = vunpack.c.l.b16 %v1713
        %v2334 = vunpack.c.h.b16 %v1713
        %v2335 = vunpack.c.l.b16 %v1714
        %v2336 = vunpack.c.h.b16 %v1714
        %v2337 = vunpack.c.l.b16 %v1715
        %v2338 = vunpack.c.h.b16 %v1715
        %v2339 = vunpack.c.l.b16 %v1716
        %v2340 = vunpack.c.h.b16 %v1716
        %v2341 = vunpack.c.l.b16 %v1717
        %v2342 = vunpack.c.h.b16 %v1717
        %v2343 = vunpack.c.l.b16 %v1718
        %v2344 = vunpack.c.h.b16 %v1718
        %v2345 = vunpack.c.l.b16 %v1719
        %v2346 = vunpack.c.h.b16 %v1719
        %v2347 = vunpack.c.l.b16 %v1720
        %v2348 = vunpack.c.h.b16 %v1720
        %v2349 = vunpack.c.l.b16 %v1721
        %v2350 = vunpack.c.h.b16 %v1721
        %v2351 = vunpack.c.l.b16 %v1722
        %v2352 = vunpack.c.h.b16 %v1722
        %v2353 = vunpack.c.l.b16 %v1723
        %v2354 = vunpack.c.h.b16 %v1723
        %v2355 = vunpack.c.l.b16 %v1724
        %v2356 = vunpack.c.h.b16 %v1724
        %v2357 = vunpack.c.l.b16 %v1725
        %v2358 = vunpack.c.h.b16 %v1725
        %v2359 = vunpack.c.l.b16 %v1726
        %v2360 = vunpack.c.h.b16 %v1726
        %v2361 = vunpack.c.l.b16 %v1727
        %v2362 = vunpack.c.h.b16 %v1727
        %v2363 = vunpack.c.l.b16 %v1728
        %v2364 = vunpack.c.h.b16 %v1728
        %v2365 = vunpack.c.l.b16 %v1729
        %v2366 = vunpack.c.h.b16 %v1729
        %v2367 = vunpack.c.l.b16 %v1730
        %v2368 = vunpack.c.h.b16 %v1730
        %v2369 = vunpack.c.l.b16 %v1731
        %v2370 = vunpack.c.h.b16 %v1731
        %v2371 = vunpack.c.l.b16 %v1732
        %v2372 = vunpack.c.h.b16 %v1732
        %v2373 = vunpack.c.l.b16 %v1733
        %v2374 = vunpack.c.h.b16 %v1733
        %v2375 = vunpack.c.l.b16 %v1734
        %v2376 = vunpack.c.h.b16 %v1734
        %v2377 = vunpack.c.l.b16 %v1735
        %v2378 = vunpack.c.h.b16 %v1735
        %v2379 = vunpack.c.l.b16 %v1736
        %v2380 = vunpack.c.h.b16 %v1736
        %v2381 = vunpack.c.l.b16 %v1737
        %v2382 = vunpack.c.h.b16 %v1737
        %v2383 = vunpack.c.l.b16 %v1738
        %v2384 = vunpack.c.h.b16 %v1738
        %v2385 = vunpack.c.l.b16 %v1739
        %v2386 = vunpack.c.h.b16 %v1739
        %v2387 = vunpack.c.l.b16 %v1740
        %v2388 = vunpack.c.h.b16 %v1740
        %v2389 = vunpack.c.l.b16 %v1741
        %v2390 = vunpack.c.h.b16 %v1741
        %v2391 = vunpack.c.l.b16 %v1742
        %v2392 = vunpack.c.h.b16 %v1742
        %v2393 = vunpack.c.l.b16 %v1743
        %v2394 = vunpack.c.h.b16 %v1743
        %v2395 = vunpack.c.l.b16 %v1744
        %v2396 = vunpack.c.h.b16 %v1744
        %v2397 = vunpack.c.l.b16 %v1745
        %v2398 = vunpack.c.h.b16 %v1745
        %v2399 = vunpack.c.l.b16 %v1746
        %v2400 = vunpack.c.h.b16 %v1746
        %v2401 = vunpack.c.l.b16 %v1747
        %v2402 = vunpack.c.h.b16 %v1747
        %v2403 = vunpack.c.l.b16 %v1748
        %v2404 = vunpack.c.h.b16 %v1748
        %v2405 = vunpack.c.l.b16 %v1749
        %v2406 = vunpack.c.h.b16 %v1749
        %v2407 = vunpack.c.l.b16 %v1750
        %v2408 = vunpack.c.h.b16 %v1750
        %v2409 = vunpack.c.l.b16 %v1751
        %v2410 = vunpack.c.h.b16 %v1751
        %v2411 = vunpack.c.l.b16 %v1752
        %v2412 = vunpack.c.h.b16 %v1752
        %v2413 = vunpack.c.l.b16 %v1753
        %v2414 = vunpack.c.h.b16 %v1753
        %v2415 = vunpack.c.l.b16 %v1754
        %v2416 = vunpack.c.h.b16 %v1754
        %v2417 = vunpack.c.l.b16 %v1755
        %v2418 = vunpack.c.h.b16 %v1755
        %v2419 = vunpack.c.l.b16 %v1756
        %v2420 = vunpack.c.h.b16 %v1756
        %v2421 = vunpack.c.l.b16 %v1757
        %v2422 = vunpack.c.h.b16 %v1757
        %v2423 = vunpack.c.l.b16 %v1758
        %v2424 = vunpack.c.h.b16 %v1758
        %v2425 = vunpack.c.l.b16 %v1759
        %v2426 = vunpack.c.h.b16 %v1759
        %v2427 = vunpack.c.l.b16 %v1760
        %v2428 = vunpack.c.h.b16 %v1760
        %v2429 = vunpack.c.l.b16 %v1761
        %v2430 = vunpack.c.h.b16 %v1761
        %v2431 = vunpack.c.l.b16 %v1762
        %v2432 = vunpack.c.h.b16 %v1762
        %v2433 = vunpack.c.l.b16 %v1763
        %v2434 = vunpack.c.h.b16 %v1763
        %v2435 = vunpack.c.l.b16 %v1764
        %v2436 = vunpack.c.h.b16 %v1764
        %v2437 = vunpack.c.l.b16 %v1765
        %v2438 = vunpack.c.h.b16 %v1765
        %v2439 = vunpack.c.l.b16 %v1766
        %v2440 = vunpack.c.h.b16 %v1766
        %v2441 = vunpack.c.l.b16 %v1767
        %v2442 = vunpack.c.h.b16 %v1767
        %v2443 = vunpack.c.l.b16 %v1768
        %v2444 = vunpack.c.h.b16 %v1768
        %v2445 = vunpack.c.l.b16 %v1769
        %v2446 = vunpack.c.h.b16 %v1769
        %v2447 = vunpack.c.l.b16 %v1770
        %v2448 = vunpack.c.h.b16 %v1770
        %v2449 = vunpack.c.l.b16 %v1771
        %v2450 = vunpack.c.h.b16 %v1771
        %v2451 = vunpack.c.l.b16 %v1772
        %v2452 = vunpack.c.h.b16 %v1772
        %v2453 = vunpack.c.l.b16 %v1773
        %v2454 = vunpack.c.h.b16 %v1773
        %v2455 = vunpack.c.l.b16 %v1774
        %v2456 = vunpack.c.h.b16 %v1774
        %v2457 = vunpack.c.l.b16 %v1775
        %v2458 = vunpack.c.h.b16 %v1775
        %v2459 = vunpack.c.l.b16 %v1776
        %v2460 = vunpack.c.h.b16 %v1776
        %v2461 = vunpack.c.l.b16 %v1777
        %v2462 = vunpack.c.h.b16 %v1777
        %v2463 = vunpack.c.l.b16 %v1778
        %v2464 = vunpack.c.h.b16 %v1778
        %v2465 = vunpack.c.l.b16 %v1779
        %v2466 = vunpack.c.h.b16 %v1779
        %v2467 = vunpack.c.l.b16 %v1780
        %v2468 = vunpack.c.h.b16 %v1780
        %v2469 = vunpack.c.l.b16 %v1781
        %v2470 = vunpack.c.h.b16 %v1781
        %v2471 = vunpack.c.l.b16 %v1782
        %v2472 = vunpack.c.h.b16 %v1782
        %v2473 = vunpack.c.l.b16 %v1783
        %v2474 = vunpack.c.h.b16 %v1783
        %v2475 = vunpack.c.l.b16 %v1784
        %v2476 = vunpack.c.h.b16 %v1784
        %v2477 = vunpack.c.l.b16 %v1785
        %v2478 = vunpack.c.h.b16 %v1785
        %v2479 = vunpack.c.l.b16 %v1786
        %v2480 = vunpack.c.h.b16 %v1786
        %v2481 = vunpack.c.l.b16 %v1787
        %v2482 = vunpack.c.h.b16 %v1787
        %v2483 = vunpack.c.l.b16 %v1788
        %v2484 = vunpack.c.h.b16 %v1788
        %v2485 = vunpack.c.l.b16 %v1789
        %v2486 = vunpack.c.h.b16 %v1789
        %v2487 = vunpack.c.l.b16 %v1790
        %v2488 = vunpack.c.h.b16 %v1790
        %v2489 = vunpack.c.l.b16 %v1791
        %v2490 = vunpack.c.h.b16 %v1791
        %v2491 = vunpack.c.l.b16 %v1792
        %v2492 = vunpack.c.h.b16 %v1792
        %v2493 = vunpack.c.l.b16 %v1793
        %v2494 = vunpack.c.h.b16 %v1793
        %v2495 = vunpack.c.l.b16 %v1794
        %v2496 = vunpack.c.h.b16 %v1794
        %v2497 = vunpack.c.l.b16 %v1795
        %v2498 = vunpack.c.h.b16 %v1795
        %v2499 = vunpack.c.l.b16 %v1796
        %v2500 = vunpack.c.h.b16 %v1796
        %v2501 = vunpack.c.l.b16 %v1797
        %v2502 = vunpack.c.h.b16 %v1797
        %v2503 = vunpack.c.l.b16 %v1798
        %v2504 = vunpack.c.h.b16 %v1798
        %v2505 = vunpack.c.l.b16 %v1799
        %v2506 = vunpack.c.h.b16 %v1799
        %v2507 = vunpack.c.l.b16 %v1800
        %v2508 = vunpack.c.h.b16 %v1800
        %v2509 = vunpack.c.l.b16 %v1801
        %v2510 = vunpack.c.h.b16 %v1801
        %v2511 = vunpack.c.l.b16 %v1802
        %v2512 = vunpack.c.h.b16 %v1802
        %v2513 = vunpack.c.l.b16 %v1803
        %v2514 = vunpack.c.h.b16 %v1803
        %v2515 = vunpack.c.l.b16 %v1804
        %v2516 = vunpack.c.h.b16 %v1804
        %v2517 = vunpack.c.l.b16 %v1805
        %v2518 = vunpack.c.h.b16 %v1805
        %v2519 = vunpack.c.l.b16 %v1806
        %v2520 = vunpack.c.h.b16 %v1806
        %v2521 = vunpack.c.l.b16 %v1807
        %v2522 = vunpack.c.h.b16 %v1807
        %v2523 = vunpack.c.l.b16 %v1808
        %v2524 = vunpack.c.h.b16 %v1808
        %v2525 = vunpack.c.l.b16 %v1809
        %v2526 = vunpack.c.h.b16 %v1809
        %v2527 = vunpack.c.l.b16 %v1810
        %v2528 = vunpack.c.h.b16 %v1810
        %v2529 = vunpack.c.l.b16 %v1811
        %v2530 = vunpack.c.h.b16 %v1811
        %v2531 = vunpack.c.l.b16 %v1812
        %v2532 = vunpack.c.h.b16 %v1812
        %v2533 = vunpack.c.l.b16 %v1813
        %v2534 = vunpack.c.h.b16 %v1813
        %v2535 = vunpack.c.l.b16 %v1814
        %v2536 = vunpack.c.h.b16 %v1814
        %v2537 = vunpack.c.l.b16 %v1815
        %v2538 = vunpack.c.h.b16 %v1815
        %v2539 = vunpack.c.l.b16 %v1816
        %v2540 = vunpack.c.h.b16 %v1816
        %v2541 = vunpack.c.l.b16 %v1817
        %v2542 = vunpack.c.h.b16 %v1817
        %v2543 = vunpack.c.l.b16 %v1818
        %v2544 = vunpack.c.h.b16 %v1818
        %v2545 = vunpack.c.l.b16 %v1819
        %v2546 = vunpack.c.h.b16 %v1819
        %v2547 = vunpack.c.l.b16 %v1820
        %v2548 = vunpack.c.h.b16 %v1820
        %v2549 = vunpack.c.l.b16 %v1821
        %v2550 = vunpack.c.h.b16 %v1821
        %v2551 = vunpack.c.l.b16 %v1822
        %v2552 = vunpack.c.h.b16 %v1822
        %v2553 = vunpack.c.l.b16 %v1823
        %v2554 = vunpack.c.h.b16 %v1823
        %v2555 = vunpack.c.l.b16 %v1824
        %v2556 = vunpack.c.h.b16 %v1824
        %v2557 = vunpack.c.l.b16 %v1825
        %v2558 = vunpack.c.h.b16 %v1825
        %v2559 = vunpack.c.l.b16 %v1826
        %v2560 = vunpack.c.h.b16 %v1826
        %v2561 = vunpack.c.l.b16 %v1827
        %v2562 = vunpack.c.h.b16 %v1827
        %v2563 = vunpack.c.l.b16 %v1828
        %v2564 = vunpack.c.h.b16 %v1828
        %v2565 = vunpack.c.l.b16 %v1829
        %v2566 = vunpack.c.h.b16 %v1829
        %v2567 = vunpack.c.l.b16 %v1830
        %v2568 = vunpack.c.h.b16 %v1830
        %v2569 = vunpack.c.l.b16 %v1831
        %v2570 = vunpack.c.h.b16 %v1831
        %v2571 = vunpack.c.l.b16 %v1832
        %v2572 = vunpack.c.h.b16 %v1832
        %v2573 = vunpack.c.l.b16 %v1833
        %v2574 = vunpack.c.h.b16 %v1833
        %v2575 = vunpack.c.l.b16 %v1834
        %v2576 = vunpack.c.h.b16 %v1834
        %v2577 = vunpack.c.l.b16 %v1835
        %v2578 = vunpack.c.h.b16 %v1835
        %v2579 = vunpack.c.l.b16 %v1836
        %v2580 = vunpack.c.h.b16 %v1836
        %v2581 = vunpack.c.l.b16 %v1837
        %v2582 = vunpack.c.h.b16 %v1837
        %v2583 = vunpack.c.l.b16 %v1838
        %v2584 = vunpack.c.h.b16 %v1838
        %v2585 = vunpack.c.l.b16 %v1839
        %v2586 = vunpack.c.h.b16 %v1839
        %v2587 = vunpack.c.l.b16 %v1840
        %v2588 = vunpack.c.h.b16 %v1840
        %v2589 = vunpack.c.l.b16 %v1841
        %v2590 = vunpack.c.h.b16 %v1841
        %v2591 = vunpack.c.l.b16 %v1842
        %v2592 = vunpack.c.h.b16 %v1842
        %v2593 = vunpack.c.l.b16 %v1843
        %v2594 = vunpack.c.h.b16 %v1843
        %v2595 = vunpack.c.l.b16 %v1844
        %v2596 = vunpack.c.h.b16 %v1844
        %v2597 = vunpack.c.l.b16 %v1845
        %v2598 = vunpack.c.h.b16 %v1845
        %v2599 = vunpack.c.l.b16 %v1846
        %v2600 = vunpack.c.h.b16 %v1846
        %v2601 = vunpack.c.l.b16 %v1847
        %v2602 = vunpack.c.h.b16 %v1847
        %v2603 = vunpack.c.l.b16 %v1848
        %v2604 = vunpack.c.h.b16 %v1848
        %v2605 = vunpack.c.l.b16 %v1849
        %v2606 = vunpack.c.h.b16 %v1849
        %v2607 = vunpack.c.l.b16 %v1850
        %v2608 = vunpack.c.h.b16 %v1850
        %v2609 = vunpack.c.l.b16 %v1851
        %v2610 = vunpack.c.h.b16 %v1851
        %v2611 = vunpack.c.l.b16 %v1852
        %v2612 = vunpack.c.h.b16 %v1852
        %v2613 = vunpack.c.l.b16 %v1853
        %v2614 = vunpack.c.h.b16 %v1853
        %v2615 = vunpack.c.l.b16 %v1854
        %v2616 = vunpack.c.h.b16 %v1854
        %v2617 = vunpack.c.l.b16 %v1855
        %v2618 = vunpack.c.h.b16 %v1855
        %v2619 = vunpack.c.l.b16 %v1856
        %v2620 = vunpack.c.h.b16 %v1856
        %v2621 = vunpack.c.l.b16 %v1857
        %v2622 = vunpack.c.h.b16 %v1857
        %v2623 = vunpack.c.l.b16 %v1858
        %v2624 = vunpack.c.h.b16 %v1858
        %v2625 = vunpack.c.l.b16 %v1859
        %v2626 = vunpack.c.h.b16 %v1859
        %v2627 = vunpack.c.l.b16 %v1860
        %v2628 = vunpack.c.h.b16 %v1860
        %v2629 = vpack.c.b16 %v2125, %v2117
        %v2630 = vpack.c.b16 %v2126, %v2118
        %v2631 = vpack.c.b16 %v2127, %v2119
        %v2632 = vpack.c.b16 %v2128, %v2120
        %v2633 = vpack.c.b16 %v2129, %v2121
        %v2634 = vpack.c.b16 %v2130, %v2122
        %v2635 = vpack.c.b16 %v2131, %v2123
        %v2636 = vpack.c.b16 %v2132, %v2124
        %v2637 = vpack.c.b16 %v2141, %v2133
        %v2638 = vpack.c.b16 %v2142, %v2134
        %v2639 = vpack.c.b16 %v2143, %v2135
        %v2640 = vpack.c.b16 %v2144, %v2136
        %v2641 = vpack.c.b16 %v2145, %v2137
        %v2642 = vpack.c.b16 %v2146, %v2138
        %v2643 = vpack.c.b16 %v2147, %v2139
        %v2644 = vpack.c.b16 %v2148, %v2140
        %v2645 = vpack.c.b16 %v2157, %v2149
        %v2646 = vpack.c.b16 %v2158, %v2150
        %v2647 = vpack.c.b16 %v2159, %v2151
        %v2648 = vpack.c.b16 %v2160, %v2152
        %v2649 = vpack.c.b16 %v2161, %v2153
        %v2650 = vpack.c.b16 %v2162, %v2154
        %v2651 = vpack.c.b16 %v2163, %v2155
        %v2652 = vpack.c.b16 %v2164, %v2156
        %v2653 = vpack.c.b16 %v2173, %v2165
        %v2654 = vpack.c.b16 %v2174, %v2166
        %v2655 = vpack.c.b16 %v2175, %v2167
        %v2656 = vpack.c.b16 %v2176, %v2168
        %v2657 = vpack.c.b16 %v2177, %v2169
        %v2658 = vpack.c.b16 %v2178, %v2170
        %v2659 = vpack.c.b16 %v2179, %v2171
        %v2660 = vpack.c.b16 %v2180, %v2172
        %v2661 = vpack.c.b16 %v2189, %v2181
        %v2662 = vpack.c.b16 %v2190, %v2182
        %v2663 = vpack.c.b16 %v2191, %v2183
        %v2664 = vpack.c.b16 %v2192, %v2184
        %v2665 = vpack.c.b16 %v2193, %v2185
        %v2666 = vpack.c.b16 %v2194, %v2186
        %v2667 = vpack.c.b16 %v2195, %v2187
        %v2668 = vpack.c.b16 %v2196, %v2188
        %v2669 = vpack.c.b16 %v2205, %v2197
        %v2670 = vpack.c.b16 %v2206, %v2198
        %v2671 = vpack.c.b16 %v2207, %v2199
        %v2672 = vpack.c.b16 %v2208, %v2200
        %v2673 = vpack.c.b16 %v2209, %v2201
        %v2674 = vpack.c.b16 %v2210, %v2202
        %v2675 = vpack.c.b16 %v2211, %v2203
        %v2676 = vpack.c.b16 %v2212, %v2204
        %v2677 = vpack.c.b16 %v2221, %v2213
        %v2678 = vpack.c.b16 %v2222, %v2214
        %v2679 = vpack.c.b16 %v2223, %v2215
        %v2680 = vpack.c.b16 %v2224, %v2216
        %v2681 = vpack.c.b16 %v2225, %v2217
        %v2682 = vpack.c.b16 %v2226, %v2218
        %v2683 = vpack.c.b16 %v2227, %v2219
        %v2684 = vpack.c.b16 %v2228, %v2220
        %v2685 = vpack.c.b16 %v2237, %v2229
        %v2686 = vpack.c.b16 %v2238, %v2230
        %v2687 = vpack.c.b16 %v2239, %v2231
        %v2688 = vpack.c.b16 %v2240, %v2232
        %v2689 = vpack.c.b16 %v2241, %v2233
        %v2690 = vpack.c.b16 %v2242, %v2234
        %v2691 = vpack.c.b16 %v2243, %v2235
        %v2692 = vpack.c.b16 %v2244, %v2236
        %v2693 = vpack.c.b16 %v2253, %v2245
        %v2694 = vpack.c.b16 %v2254, %v2246
        %v2695 = vpack.c.b16 %v2255, %v2247
        %v2696 = vpack.c.b16 %v2256, %v2248
        %v2697 = vpack.c.b16 %v2257, %v2249
        %v2698 = vpack.c.b16 %v2258, %v2250
        %v2699 = vpack.c.b16 %v2259, %v2251
        %v2700 = vpack.c.b16 %v2260, %v2252
        %v2701 = vpack.c.b16 %v2269, %v2261
        %v2702 = vpack.c.b16 %v2270, %v2262
        %v2703 = vpack.c.b16 %v2271, %v2263
        %v2704 = vpack.c.b16 %v2272, %v2264
        %v2705 = vpack.c.b16 %v2273, %v2265
        %v2706 = vpack.c.b16 %v2274, %v2266
        %v2707 = vpack.c.b16 %v2275, %v2267
        %v2708 = vpack.c.b16 %v2276, %v2268
        %v2709 = vpack.c.b16 %v2285, %v2277
        %v2710 = vpack.c.b16 %v2286, %v2278
        %v2711 = vpack.c.b16 %v2287, %v2279
        %v2712 = vpack.c.b16 %v2288, %v2280
        %v2713 = vpack.c.b16 %v2289, %v2281
        %v2714 = vpack.c.b16 %v2290, %v2282
        %v2715 = vpack.c.b16 %v2291, %v2283
        %v2716 = vpack.c.b16 %v2292, %v2284
        %v2717 = vpack.c.b16 %v2301, %v2293
        %v2718 = vpack.c.b16 %v2302, %v2294
        %v2719 = vpack.c.b16 %v2303, %v2295
        %v2720 = vpack.c.b16 %v2304, %v2296
        %v2721 = vpack.c.b16 %v2305, %v2297
        %v2722 = vpack.c.b16 %v2306, %v2298
        %v2723 = vpack.c.b16 %v2307, %v2299
        %v2724 = vpack.c.b16 %v2308, %v2300
        %v2725 = vpack.c.b16 %v2317, %v2309
        %v2726 = vpack.c.b16 %v2318, %v2310
        %v2727 = vpack.c.b16 %v2319, %v2311
        %v2728 = vpack.c.b16 %v2320, %v2312
        %v2729 = vpack.c.b16 %v2321, %v2313
        %v2730 = vpack.c.b16 %v2322, %v2314
        %v2731 = vpack.c.b16 %v2323, %v2315
        %v2732 = vpack.c.b16 %v2324, %v2316
        %v2733 = vpack.c.b16 %v2333, %v2325
        %v2734 = vpack.c.b16 %v2334, %v2326
        %v2735 = vpack.c.b16 %v2335, %v2327
        %v2736 = vpack.c.b16 %v2336, %v2328
        %v2737 = vpack.c.b16 %v2337, %v2329
        %v2738 = vpack.c.b16 %v2338, %v2330
        %v2739 = vpack.c.b16 %v2339, %v2331
        %v2740 = vpack.c.b16 %v2340, %v2332
        %v2741 = vpack.c.b16 %v2349, %v2341
        %v2742 = vpack.c.b16 %v2350, %v2342
        %v2743 = vpack.c.b16 %v2351, %v2343
        %v2744 = vpack.c.b16 %v2352, %v2344
        %v2745 = vpack.c.b16 %v2353, %v2345
        %v2746 = vpack.c.b16 %v2354, %v2346
        %v2747 = vpack.c.b16 %v2355, %v2347
        %v2748 = vpack.c.b16 %v2356, %v2348
        %v2749 = vpack.c.b16 %v2365, %v2357
        %v2750 = vpack.c.b16 %v2366, %v2358
        %v2751 = vpack.c.b16 %v2367, %v2359
        %v2752 = vpack.c.b16 %v2368, %v2360
        %v2753 = vpack.c.b16 %v2369, %v2361
        %v2754 = vpack.c.b16 %v2370, %v2362
        %v2755 = vpack.c.b16 %v2371, %v2363
        %v2756 = vpack.c.b16 %v2372, %v2364
        %v2757 = vpack.c.b16 %v2381, %v2373
        %v2758 = vpack.c.b16 %v2382, %v2374
        %v2759 = vpack.c.b16 %v2383, %v2375
        %v2760 = vpack.c.b16 %v2384, %v2376
        %v2761 = vpack.c.b16 %v2385, %v2377
        %v2762 = vpack.c.b16 %v2386, %v2378
        %v2763 = vpack.c.b16 %v2387, %v2379
        %v2764 = vpack.c.b16 %v2388, %v2380
        %v2765 = vpack.c.b16 %v2397, %v2389
        %v2766 = vpack.c.b16 %v2398, %v2390
        %v2767 = vpack.c.b16 %v2399, %v2391
        %v2768 = vpack.c.b16 %v2400, %v2392
        %v2769 = vpack.c.b16 %v2401, %v2393
        %v2770 = vpack.c.b16 %v2402, %v2394
        %v2771 = vpack.c.b16 %v2403, %v2395
        %v2772 = vpack.c.b16 %v2404, %v2396
        %v2773 = vpack.c.b16 %v2413, %v2405
        %v2774 = vpack.c.b16 %v2414, %v2406
        %v2775 = vpack.c.b16 %v2415, %v2407
        %v2776 = vpack.c.b16 %v2416, %v2408
        %v2777 = vpack.c.b16 %v2417, %v2409
        %v2778 = vpack.c.b16 %v2418, %v2410
        %v2779 = vpack.c.b16 %v2419, %v2411
        %v2780 = vpack.c.b16 %v2420, %v2412
        %v2781 = vpack.c.b16 %v2429, %v2421
        %v2782 = vpack.c.b16 %v2430, %v2422
        %v2783 = vpack.c.b16 %v2431, %v2423
        %v2784 = vpack.c.b16 %v2432, %v2424
        %v2785 = vpack.c.b16 %v2433, %v2425
        %v2786 = vpack.c.b16 %v2434, %v2426
        %v2787 = vpack.c.b16 %v2435, %v2427
        %v2788 = vpack.c.b16 %v2436, %v2428
        %v2789 = vpack.c.b16 %v2445, %v2437
        %v2790 = vpack.c.b16 %v2446, %v2438
        %v2791 = vpack.c.b16 %v2447, %v2439
        %v2792 = vpack.c.b16 %v2448, %v2440
        %v2793 = vpack.c.b16 %v2449, %v2441
        %v2794 = vpack.c.b16 %v2450, %v2442
        %v2795 = vpack.c.b16 %v2451, %v2443
        %v2796 = vpack.c.b16 %v2452, %v2444
        %v2797 = vpack.c.b16 %v2461, %v2453
        %v2798 = vpack.c.b16 %v2462, %v2454
        %v2799 = vpack.c.b16 %v2463, %v2455
        %v2800 = vpack.c.b16 %v2464, %v2456
        %v2801 = vpack.c.b16 %v2465, %v2457
        %v2802 = vpack.c.b16 %v2466, %v2458
        %v2803 = vpack.c.b16 %v2467, %v2459
        %v2804 = vpack.c.b16 %v2468, %v2460
        %v2805 = vpack.c.b16 %v2477, %v2469
        %v2806 = vpack.c.b16 %v2478, %v2470
        %v2807 = vpack.c.b16 %v2479, %v2471
        %v2808 = vpack.c.b16 %v2480, %v2472
        %v2809 = vpack.c.b16 %v2481, %v2473
        %v2810 = vpack.c.b16 %v2482, %v2474
        %v2811 = vpack.c.b16 %v2483, %v2475
        %v2812 = vpack.c.b16 %v2484, %v2476
        %v2813 = vpack.c.b16 %v2493, %v2485
        %v2814 = vpack.c.b16 %v2494, %v2486
        %v2815 = vpack.c.b16 %v2495, %v2487
        %v2816 = vpack.c.b16 %v2496, %v2488
        %v2817 = vpack.c.b16 %v2497, %v2489
        %v2818 = vpack.c.b16 %v2498, %v2490
        %v2819 = vpack.c.b16 %v2499, %v2491
        %v2820 = vpack.c.b16 %v2500, %v2492
        %v2821 = vpack.c.b16 %v2509, %v2501
        %v2822 = vpack.c.b16 %v2510, %v2502
        %v2823 = vpack.c.b16 %v2511, %v2503
        %v2824 = vpack.c.b16 %v2512, %v2504
        %v2825 = vpack.c.b16 %v2513, %v2505
        %v2826 = vpack.c.b16 %v2514, %v2506
        %v2827 = vpack.c.b16 %v2515, %v2507
        %v2828 = vpack.c.b16 %v2516, %v2508
        %v2829 = vpack.c.b16 %v2525, %v2517
        %v2830 = vpack.c.b16 %v2526, %v2518
        %v2831 = vpack.c.b16 %v2527, %v2519
        %v2832 = vpack.c.b16 %v2528, %v2520
        %v2833 = vpack.c.b16 %v2529, %v2521
        %v2834 = vpack.c.b16 %v2530, %v2522
        %v2835 = vpack.c.b16 %v2531, %v2523
        %v2836 = vpack.c.b16 %v2532, %v2524
        %v2837 = vpack.c.b16 %v2541, %v2533
        %v2838 = vpack.c.b16 %v2542, %v2534
        %v2839 = vpack.c.b16 %v2543, %v2535
        %v2840 = vpack.c.b16 %v2544, %v2536
        %v2841 = vpack.c.b16 %v2545, %v2537
        %v2842 = vpack.c.b16 %v2546, %v2538
        %v2843 = vpack.c.b16 %v2547, %v2539
        %v2844 = vpack.c.b16 %v2548, %v2540
        %v2845 = vpack.c.b16 %v2557, %v2549
        %v2846 = vpack.c.b16 %v2558, %v2550
        %v2847 = vpack.c.b16 %v2559, %v2551
        %v2848 = vpack.c.b16 %v2560, %v2552
        %v2849 = vpack.c.b16 %v2561, %v2553
        %v2850 = vpack.c.b16 %v2562, %v2554
        %v2851 = vpack.c.b16 %v2563, %v2555
        %v2852 = vpack.c.b16 %v2564, %v2556
        %v2853 = vpack.c.b16 %v2573, %v2565
        %v2854 = vpack.c.b16 %v2574, %v2566
        %v2855 = vpack.c.b16 %v2575, %v2567
        %v2856 = vpack.c.b16 %v2576, %v2568
        %v2857 = vpack.c.b16 %v2577, %v2569
        %v2858 = vpack.c.b16 %v2578, %v2570
        %v2859 = vpack.c.b16 %v2579, %v2571
        %v2860 = vpack.c.b16 %v2580, %v2572
        %v2861 = vpack.c.b16 %v2589, %v2581
        %v2862 = vpack.c.b16 %v2590, %v2582
        %v2863 = vpack.c.b16 %v2591, %v2583
        %v2864 = vpack.c.b16 %v2592, %v2584
        %v2865 = vpack.c.b16 %v2593, %v2585
        %v2866 = vpack.c.b16 %v2594, %v2586
        %v2867 = vpack.c.b16 %v2595, %v2587
        %v2868 = vpack.c.b16 %v2596, %v2588
        %v2869 = vpack.c.b16 %v2605, %v2597
        %v2870 = vpack.c.b16 %v2606, %v2598
        %v2871 = vpack.c.b16 %v2607, %v2599
        %v2872 = vpack.c.b16 %v2608, %v2600
        %v2873 = vpack.c.b16 %v2609, %v2601
        %v2874 = vpack.c.b16 %v2610, %v2602
        %v2875 = vpack.c.b16 %v2611, %v2603
        %v2876 = vpack.c.b16 %v2612, %v2604
        %v2877 = vpack.c.b16 %v2621, %v2613
        %v2878 = vpack.c.b16 %v2622, %v2614
        %v2879 = vpack.c.b16 %v2623, %v2615
        %v2880 = vpack.c.b16 %v2624, %v2616
        %v2881 = vpack.c.b16 %v2625, %v2617
        %v2882 = vpack.c.b16 %v2626, %v2618
        %v2883 = vpack.c.b16 %v2627, %v2619
        %v2884 = vpack.c.b16 %v2628, %v2620
        %3141 = vmatpush.bf16.msra.mxu0 %v2685
        %3142 = vmatpush.bf16.msra.mxu0 %v2677
        %3143 = vmatpush.bf16.msra.mxu0 %v2669
        %3144 = vmatpush.bf16.msra.mxu0 %v2661
        %3145 = vmatpush.bf16.msra.mxu0 %v2653
        %3146 = vmatpush.bf16.msra.mxu0 %v2645
        %3147 = vmatpush.bf16.msra.mxu0 %v2637
        %3148 = vmatpush.bf16.msra.mxu0 %v2629
        %3149 = vmatmul.bf16.gmra.mxu0 %v1589
        %v3150 = vpop.f32.mrf.mxu0
        %v3151 = vadd.f32 0.0, %v3150
        %v3152 = vpop.f32.mrf.mxu0
        %v3153 = vadd.f32 0.0, %v3152
        %3154 = vmatmul.bf16.gmra.mxu0 %v1593
        %v3155 = vpop.f32.mrf.mxu0
        %v3156 = vadd.f32 0.0, %v3155
        %v3157 = vpop.f32.mrf.mxu0
        %v3158 = vadd.f32 0.0, %v3157
        %3159 = vmatmul.bf16.gmra.mxu0 %v1597
        %v3160 = vpop.f32.mrf.mxu0
        %v3161 = vadd.f32 0.0, %v3160
        %v3162 = vpop.f32.mrf.mxu0
        %v3163 = vadd.f32 0.0, %v3162
        %3164 = vmatmul.bf16.gmra.mxu0 %v1601
        %v3165 = vpop.f32.mrf.mxu0
        %v3166 = vadd.f32 0.0, %v3165
        %v3167 = vpop.f32.mrf.mxu0
        %v3168 = vadd.f32 0.0, %v3167
        %3169 = vdwg.mxu0
        %3170 = vmatpush.bf16.msra.mxu0 %v2749
        %3171 = vmatpush.bf16.msra.mxu0 %v2741
        %3172 = vmatpush.bf16.msra.mxu0 %v2733
        %3173 = vmatpush.bf16.msra.mxu0 %v2725
        %3174 = vmatpush.bf16.msra.mxu0 %v2717
        %3175 = vmatpush.bf16.msra.mxu0 %v2709
        %3176 = vmatpush.bf16.msra.mxu0 %v2701
        %3177 = vmatpush.bf16.msra.mxu0 %v2693
        %3178 = vmatmul.bf16.gmra.mxu0 %v1590
        %v3179 = vpop.f32.mrf.mxu0
        %v3180 = vadd.f32 %v3151, %v3179
        %v3181 = vpop.f32.mrf.mxu0
        %v3182 = vadd.f32 %v3153, %v3181
        %3183 = vmatmul.bf16.gmra.mxu0 %v1594
        %v3184 = vpop.f32.mrf.mxu0
        %v3185 = vadd.f32 %v3156, %v3184
        %v3186 = vpop.f32.mrf.mxu0
        %v3187 = vadd.f32 %v3158, %v3186
        %3188 = vmatmul.bf16.gmra.mxu0 %v1598
        %v3189 = vpop.f32.mrf.mxu0
        %v3190 = vadd.f32 %v3161, %v3189
        %v3191 = vpop.f32.mrf.mxu0
        %v3192 = vadd.f32 %v3163, %v3191
        %3193 = vmatmul.bf16.gmra.mxu0 %v1602
        %v3194 = vpop.f32.mrf.mxu0
        %v3195 = vadd.f32 %v3166, %v3194
        %v3196 = vpop.f32.mrf.mxu0
        %v3197 = vadd.f32 %v3168, %v3196
        %3198 = vdwg.mxu0
        %3199 = vmatpush.bf16.msra.mxu0 %v2813
        %3200 = vmatpush.bf16.msra.mxu0 %v2805
        %3201 = vmatpush.bf16.msra.mxu0 %v2797
        %3202 = vmatpush.bf16.msra.mxu0 %v2789
        %3203 = vmatpush.bf16.msra.mxu0 %v2781
        %3204 = vmatpush.bf16.msra.mxu0 %v2773
        %3205 = vmatpush.bf16.msra.mxu0 %v2765
        %3206 = vmatpush.bf16.msra.mxu0 %v2757
        %3207 = vmatmul.bf16.gmra.mxu0 %v1591
        %v3208 = vpop.f32.mrf.mxu0
        %v3209 = vadd.f32 %v3180, %v3208
        %v3210 = vpop.f32.mrf.mxu0
        %v3211 = vadd.f32 %v3182, %v3210
        %3212 = vmatmul.bf16.gmra.mxu0 %v1595
        %v3213 = vpop.f32.mrf.mxu0
        %v3214 = vadd.f32 %v3185, %v3213
        %v3215 = vpop.f32.mrf.mxu0
        %v3216 = vadd.f32 %v3187, %v3215
        %3217 = vmatmul.bf16.gmra.mxu0 %v1599
        %v3218 = vpop.f32.mrf.mxu0
        %v3219 = vadd.f32 %v3190, %v3218
        %v3220 = vpop.f32.mrf.mxu0
        %v3221 = vadd.f32 %v3192, %v3220
        %3222 = vmatmul.bf16.gmra.mxu0 %v1603
        %v3223 = vpop.f32.mrf.mxu0
        %v3224 = vadd.f32 %v3195, %v3223
        %v3225 = vpop.f32.mrf.mxu0
        %v3226 = vadd.f32 %v3197, %v3225
        %3227 = vdwg.mxu0
        %3228 = vmatpush.bf16.msra.mxu0 %v2877
        %3229 = vmatpush.bf16.msra.mxu0 %v2869
        %3230 = vmatpush.bf16.msra.mxu0 %v2861
        %3231 = vmatpush.bf16.msra.mxu0 %v2853
        %3232 = vmatpush.bf16.msra.mxu0 %v2845
        %3233 = vmatpush.bf16.msra.mxu0 %v2837
        %3234 = vmatpush.bf16.msra.mxu0 %v2829
        %3235 = vmatpush.bf16.msra.mxu0 %v2821
        %3236 = vmatmul.bf16.gmra.mxu0 %v1592
        %v3237 = vpop.f32.mrf.mxu0
        %v3238 = vadd.f32 %v3209, %v3237
        %v3239 = vpop.f32.mrf.mxu0
        %v3240 = vadd.f32 %v3211, %v3239
        %3241 = vmatmul.bf16.gmra.mxu0 %v1596
        %v3242 = vpop.f32.mrf.mxu0
        %v3243 = vadd.f32 %v3214, %v3242
        %v3244 = vpop.f32.mrf.mxu0
        %v3245 = vadd.f32 %v3216, %v3244
        %3246 = vmatmul.bf16.gmra.mxu0 %v1600
        %v3247 = vpop.f32.mrf.mxu0
        %v3248 = vadd.f32 %v3219, %v3247
        %v3249 = vpop.f32.mrf.mxu0
        %v3250 = vadd.f32 %v3221, %v3249
        %3251 = vmatmul.bf16.gmra.mxu0 %v1604
        %v3252 = vpop.f32.mrf.mxu0
        %v3253 = vadd.f32 %v3224, %v3252
        %v3254 = vpop.f32.mrf.mxu0
        %v3255 = vadd.f32 %v3226, %v3254
        %3256 = vdwg.mxu0
        %3257 = vmatpush.bf16.msra.mxu0 %v2686
        %3258 = vmatpush.bf16.msra.mxu0 %v2678
        %3259 = vmatpush.bf16.msra.mxu0 %v2670
        %3260 = vmatpush.bf16.msra.mxu0 %v2662
        %3261 = vmatpush.bf16.msra.mxu0 %v2654
        %3262 = vmatpush.bf16.msra.mxu0 %v2646
        %3263 = vmatpush.bf16.msra.mxu0 %v2638
        %3264 = vmatpush.bf16.msra.mxu0 %v2630
        %3265 = vmatmul.bf16.gmra.mxu0 %v1589
        %v3266 = vpop.f32.mrf.mxu0
        %v3267 = vadd.f32 0.0, %v3266
        %v3268 = vpop.f32.mrf.mxu0
        %v3269 = vadd.f32 0.0, %v3268
        %3270 = vmatmul.bf16.gmra.mxu0 %v1593
        %v3271 = vpop.f32.mrf.mxu0
        %v3272 = vadd.f32 0.0, %v3271
        %v3273 = vpop.f32.mrf.mxu0
        %v3274 = vadd.f32 0.0, %v3273
        %3275 = vmatmul.bf16.gmra.mxu0 %v1597
        %v3276 = vpop.f32.mrf.mxu0
        %v3277 = vadd.f32 0.0, %v3276
        %v3278 = vpop.f32.mrf.mxu0
        %v3279 = vadd.f32 0.0, %v3278
        %3280 = vmatmul.bf16.gmra.mxu0 %v1601
        %v3281 = vpop.f32.mrf.mxu0
        %v3282 = vadd.f32 0.0, %v3281
        %v3283 = vpop.f32.mrf.mxu0
        %v3284 = vadd.f32 0.0, %v3283
        %3285 = vdwg.mxu0
        %3286 = vmatpush.bf16.msra.mxu0 %v2750
        %3287 = vmatpush.bf16.msra.mxu0 %v2742
        %3288 = vmatpush.bf16.msra.mxu0 %v2734
        %3289 = vmatpush.bf16.msra.mxu0 %v2726
        %3290 = vmatpush.bf16.msra.mxu0 %v2718
        %3291 = vmatpush.bf16.msra.mxu0 %v2710
        %3292 = vmatpush.bf16.msra.mxu0 %v2702
        %3293 = vmatpush.bf16.msra.mxu0 %v2694
        %3294 = vmatmul.bf16.gmra.mxu0 %v1590
        %v3295 = vpop.f32.mrf.mxu0
        %v3296 = vadd.f32 %v3267, %v3295
        %v3297 = vpop.f32.mrf.mxu0
        %v3298 = vadd.f32 %v3269, %v3297
        %3299 = vmatmul.bf16.gmra.mxu0 %v1594
        %v3300 = vpop.f32.mrf.mxu0
        %v3301 = vadd.f32 %v3272, %v3300
        %v3302 = vpop.f32.mrf.mxu0
        %v3303 = vadd.f32 %v3274, %v3302
        %3304 = vmatmul.bf16.gmra.mxu0 %v1598
        %v3305 = vpop.f32.mrf.mxu0
        %v3306 = vadd.f32 %v3277, %v3305
        %v3307 = vpop.f32.mrf.mxu0
        %v3308 = vadd.f32 %v3279, %v3307
        %3309 = vmatmul.bf16.gmra.mxu0 %v1602
        %v3310 = vpop.f32.mrf.mxu0
        %v3311 = vadd.f32 %v3282, %v3310
        %v3312 = vpop.f32.mrf.mxu0
        %v3313 = vadd.f32 %v3284, %v3312
        %3314 = vdwg.mxu0
        %3315 = vmatpush.bf16.msra.mxu0 %v2814
        %3316 = vmatpush.bf16.msra.mxu0 %v2806
        %3317 = vmatpush.bf16.msra.mxu0 %v2798
        %3318 = vmatpush.bf16.msra.mxu0 %v2790
        %3319 = vmatpush.bf16.msra.mxu0 %v2782
        %3320 = vmatpush.bf16.msra.mxu0 %v2774
        %3321 = vmatpush.bf16.msra.mxu0 %v2766
        %3322 = vmatpush.bf16.msra.mxu0 %v2758
        %3323 = vmatmul.bf16.gmra.mxu0 %v1591
        %v3324 = vpop.f32.mrf.mxu0
        %v3325 = vadd.f32 %v3296, %v3324
        %v3326 = vpop.f32.mrf.mxu0
        %v3327 = vadd.f32 %v3298, %v3326
        %3328 = vmatmul.bf16.gmra.mxu0 %v1595
        %v3329 = vpop.f32.mrf.mxu0
        %v3330 = vadd.f32 %v3301, %v3329
        %v3331 = vpop.f32.mrf.mxu0
        %v3332 = vadd.f32 %v3303, %v3331
        %3333 = vmatmul.bf16.gmra.mxu0 %v1599
        %v3334 = vpop.f32.mrf.mxu0
        %v3335 = vadd.f32 %v3306, %v3334
        %v3336 = vpop.f32.mrf.mxu0
        %v3337 = vadd.f32 %v3308, %v3336
        %3338 = vmatmul.bf16.gmra.mxu0 %v1603
        %v3339 = vpop.f32.mrf.mxu0
        %v3340 = vadd.f32 %v3311, %v3339
        %v3341 = vpop.f32.mrf.mxu0
        %v3342 = vadd.f32 %v3313, %v3341
        %3343 = vdwg.mxu0
        %3344 = vmatpush.bf16.msra.mxu0 %v2878
        %3345 = vmatpush.bf16.msra.mxu0 %v2870
        %3346 = vmatpush.bf16.msra.mxu0 %v2862
        %3347 = vmatpush.bf16.msra.mxu0 %v2854
        %3348 = vmatpush.bf16.msra.mxu0 %v2846
        %3349 = vmatpush.bf16.msra.mxu0 %v2838
        %3350 = vmatpush.bf16.msra.mxu0 %v2830
        %3351 = vmatpush.bf16.msra.mxu0 %v2822
        %3352 = vmatmul.bf16.gmra.mxu0 %v1592
        %v3353 = vpop.f32.mrf.mxu0
        %v3354 = vadd.f32 %v3325, %v3353
        %v3355 = vpop.f32.mrf.mxu0
        %v3356 = vadd.f32 %v3327, %v3355
        %3357 = vmatmul.bf16.gmra.mxu0 %v1596
        %v3358 = vpop.f32.mrf.mxu0
        %v3359 = vadd.f32 %v3330, %v3358
        %v3360 = vpop.f32.mrf.mxu0
        %v3361 = vadd.f32 %v3332, %v3360
        %3362 = vmatmul.bf16.gmra.mxu0 %v1600
        %v3363 = vpop.f32.mrf.mxu0
        %v3364 = vadd.f32 %v3335, %v3363
        %v3365 = vpop.f32.mrf.mxu0
        %v3366 = vadd.f32 %v3337, %v3365
        %3367 = vmatmul.bf16.gmra.mxu0 %v1604
        %v3368 = vpop.f32.mrf.mxu0
        %v3369 = vadd.f32 %v3340, %v3368
        %v3370 = vpop.f32.mrf.mxu0
        %v3371 = vadd.f32 %v3342, %v3370
        %3372 = vdwg.mxu0
        %3373 = vmatpush.bf16.msra.mxu0 %v2687
        %3374 = vmatpush.bf16.msra.mxu0 %v2679
        %3375 = vmatpush.bf16.msra.mxu0 %v2671
        %3376 = vmatpush.bf16.msra.mxu0 %v2663
        %3377 = vmatpush.bf16.msra.mxu0 %v2655
        %3378 = vmatpush.bf16.msra.mxu0 %v2647
        %3379 = vmatpush.bf16.msra.mxu0 %v2639
        %3380 = vmatpush.bf16.msra.mxu0 %v2631
        %3381 = vmatmul.bf16.gmra.mxu0 %v1589
        %v3382 = vpop.f32.mrf.mxu0
        %v3383 = vadd.f32 0.0, %v3382
        %v3384 = vpop.f32.mrf.mxu0
        %v3385 = vadd.f32 0.0, %v3384
        %3386 = vmatmul.bf16.gmra.mxu0 %v1593
        %v3387 = vpop.f32.mrf.mxu0
        %v3388 = vadd.f32 0.0, %v3387
        %v3389 = vpop.f32.mrf.mxu0
        %v3390 = vadd.f32 0.0, %v3389
        %3391 = vmatmul.bf16.gmra.mxu0 %v1597
        %v3392 = vpop.f32.mrf.mxu0
        %v3393 = vadd.f32 0.0, %v3392
        %v3394 = vpop.f32.mrf.mxu0
        %v3395 = vadd.f32 0.0, %v3394
        %3396 = vmatmul.bf16.gmra.mxu0 %v1601
        %v3397 = vpop.f32.mrf.mxu0
        %v3398 = vadd.f32 0.0, %v3397
        %v3399 = vpop.f32.mrf.mxu0
        %v3400 = vadd.f32 0.0, %v3399
        %3401 = vdwg.mxu0
        %3402 = vmatpush.bf16.msra.mxu0 %v2751
        %3403 = vmatpush.bf16.msra.mxu0 %v2743
        %3404 = vmatpush.bf16.msra.mxu0 %v2735
        %3405 = vmatpush.bf16.msra.mxu0 %v2727
        %3406 = vmatpush.bf16.msra.mxu0 %v2719
        %3407 = vmatpush.bf16.msra.mxu0 %v2711
        %3408 = vmatpush.bf16.msra.mxu0 %v2703
        %3409 = vmatpush.bf16.msra.mxu0 %v2695
        %3410 = vmatmul.bf16.gmra.mxu0 %v1590
        %v3411 = vpop.f32.mrf.mxu0
        %v3412 = vadd.f32 %v3383, %v3411
        %v3413 = vpop.f32.mrf.mxu0
        %v3414 = vadd.f32 %v3385, %v3413
        %3415 = vmatmul.bf16.gmra.mxu0 %v1594
        %v3416 = vpop.f32.mrf.mxu0
        %v3417 = vadd.f32 %v3388, %v3416
        %v3418 = vpop.f32.mrf.mxu0
        %v3419 = vadd.f32 %v3390, %v3418
        %3420 = vmatmul.bf16.gmra.mxu0 %v1598
        %v3421 = vpop.f32.mrf.mxu0
        %v3422 = vadd.f32 %v3393, %v3421
        %v3423 = vpop.f32.mrf.mxu0
        %v3424 = vadd.f32 %v3395, %v3423
        %3425 = vmatmul.bf16.gmra.mxu0 %v1602
        %v3426 = vpop.f32.mrf.mxu0
        %v3427 = vadd.f32 %v3398, %v3426
        %v3428 = vpop.f32.mrf.mxu0
        %v3429 = vadd.f32 %v3400, %v3428
        %3430 = vdwg.mxu0
        %3431 = vmatpush.bf16.msra.mxu0 %v2815
        %3432 = vmatpush.bf16.msra.mxu0 %v2807
        %3433 = vmatpush.bf16.msra.mxu0 %v2799
        %3434 = vmatpush.bf16.msra.mxu0 %v2791
        %3435 = vmatpush.bf16.msra.mxu0 %v2783
        %3436 = vmatpush.bf16.msra.mxu0 %v2775
        %3437 = vmatpush.bf16.msra.mxu0 %v2767
        %3438 = vmatpush.bf16.msra.mxu0 %v2759
        %3439 = vmatmul.bf16.gmra.mxu0 %v1591
        %v3440 = vpop.f32.mrf.mxu0
        %v3441 = vadd.f32 %v3412, %v3440
        %v3442 = vpop.f32.mrf.mxu0
        %v3443 = vadd.f32 %v3414, %v3442
        %3444 = vmatmul.bf16.gmra.mxu0 %v1595
        %v3445 = vpop.f32.mrf.mxu0
        %v3446 = vadd.f32 %v3417, %v3445
        %v3447 = vpop.f32.mrf.mxu0
        %v3448 = vadd.f32 %v3419, %v3447
        %3449 = vmatmul.bf16.gmra.mxu0 %v1599
        %v3450 = vpop.f32.mrf.mxu0
        %v3451 = vadd.f32 %v3422, %v3450
        %v3452 = vpop.f32.mrf.mxu0
        %v3453 = vadd.f32 %v3424, %v3452
        %3454 = vmatmul.bf16.gmra.mxu0 %v1603
        %v3455 = vpop.f32.mrf.mxu0
        %v3456 = vadd.f32 %v3427, %v3455
        %v3457 = vpop.f32.mrf.mxu0
        %v3458 = vadd.f32 %v3429, %v3457
        %3459 = vdwg.mxu0
        %3460 = vmatpush.bf16.msra.mxu0 %v2879
        %3461 = vmatpush.bf16.msra.mxu0 %v2871
        %3462 = vmatpush.bf16.msra.mxu0 %v2863
        %3463 = vmatpush.bf16.msra.mxu0 %v2855
        %3464 = vmatpush.bf16.msra.mxu0 %v2847
        %3465 = vmatpush.bf16.msra.mxu0 %v2839
        %3466 = vmatpush.bf16.msra.mxu0 %v2831
        %3467 = vmatpush.bf16.msra.mxu0 %v2823
        %3468 = vmatmul.bf16.gmra.mxu0 %v1592
        %v3469 = vpop.f32.mrf.mxu0
        %v3470 = vadd.f32 %v3441, %v3469
        %v3471 = vpop.f32.mrf.mxu0
        %v3472 = vadd.f32 %v3443, %v3471
        %3473 = vmatmul.bf16.gmra.mxu0 %v1596
        %v3474 = vpop.f32.mrf.mxu0
        %v3475 = vadd.f32 %v3446, %v3474
        %v3476 = vpop.f32.mrf.mxu0
        %v3477 = vadd.f32 %v3448, %v3476
        %3478 = vmatmul.bf16.gmra.mxu0 %v1600
        %v3479 = vpop.f32.mrf.mxu0
        %v3480 = vadd.f32 %v3451, %v3479
        %v3481 = vpop.f32.mrf.mxu0
        %v3482 = vadd.f32 %v3453, %v3481
        %3483 = vmatmul.bf16.gmra.mxu0 %v1604
        %v3484 = vpop.f32.mrf.mxu0
        %v3485 = vadd.f32 %v3456, %v3484
        %v3486 = vpop.f32.mrf.mxu0
        %v3487 = vadd.f32 %v3458, %v3486
        %3488 = vdwg.mxu0
        %3489 = vmatpush.bf16.msra.mxu0 %v2688
        %3490 = vmatpush.bf16.msra.mxu0 %v2680
        %3491 = vmatpush.bf16.msra.mxu0 %v2672
        %3492 = vmatpush.bf16.msra.mxu0 %v2664
        %3493 = vmatpush.bf16.msra.mxu0 %v2656
        %3494 = vmatpush.bf16.msra.mxu0 %v2648
        %3495 = vmatpush.bf16.msra.mxu0 %v2640
        %3496 = vmatpush.bf16.msra.mxu0 %v2632
        %3497 = vmatmul.bf16.gmra.mxu0 %v1589
        %v3498 = vpop.f32.mrf.mxu0
        %v3499 = vadd.f32 0.0, %v3498
        %v3500 = vpop.f32.mrf.mxu0
        %v3501 = vadd.f32 0.0, %v3500
        %3502 = vmatmul.bf16.gmra.mxu0 %v1593
        %v3503 = vpop.f32.mrf.mxu0
        %v3504 = vadd.f32 0.0, %v3503
        %v3505 = vpop.f32.mrf.mxu0
        %v3506 = vadd.f32 0.0, %v3505
        %3507 = vmatmul.bf16.gmra.mxu0 %v1597
        %v3508 = vpop.f32.mrf.mxu0
        %v3509 = vadd.f32 0.0, %v3508
        %v3510 = vpop.f32.mrf.mxu0
        %v3511 = vadd.f32 0.0, %v3510
        %3512 = vmatmul.bf16.gmra.mxu0 %v1601
        %v3513 = vpop.f32.mrf.mxu0
        %v3514 = vadd.f32 0.0, %v3513
        %v3515 = vpop.f32.mrf.mxu0
        %v3516 = vadd.f32 0.0, %v3515
        %3517 = vdwg.mxu0
        %3518 = vmatpush.bf16.msra.mxu0 %v2752
        %3519 = vmatpush.bf16.msra.mxu0 %v2744
        %3520 = vmatpush.bf16.msra.mxu0 %v2736
        %3521 = vmatpush.bf16.msra.mxu0 %v2728
        %3522 = vmatpush.bf16.msra.mxu0 %v2720
        %3523 = vmatpush.bf16.msra.mxu0 %v2712
        %3524 = vmatpush.bf16.msra.mxu0 %v2704
        %3525 = vmatpush.bf16.msra.mxu0 %v2696
        %3526 = vmatmul.bf16.gmra.mxu0 %v1590
        %v3527 = vpop.f32.mrf.mxu0
        %v3528 = vadd.f32 %v3499, %v3527
        %v3529 = vpop.f32.mrf.mxu0
        %v3530 = vadd.f32 %v3501, %v3529
        %3531 = vmatmul.bf16.gmra.mxu0 %v1594
        %v3532 = vpop.f32.mrf.mxu0
        %v3533 = vadd.f32 %v3504, %v3532
        %v3534 = vpop.f32.mrf.mxu0
        %v3535 = vadd.f32 %v3506, %v3534
        %3536 = vmatmul.bf16.gmra.mxu0 %v1598
        %v3537 = vpop.f32.mrf.mxu0
        %v3538 = vadd.f32 %v3509, %v3537
        %v3539 = vpop.f32.mrf.mxu0
        %v3540 = vadd.f32 %v3511, %v3539
        %3541 = vmatmul.bf16.gmra.mxu0 %v1602
        %v3542 = vpop.f32.mrf.mxu0
        %v3543 = vadd.f32 %v3514, %v3542
        %v3544 = vpop.f32.mrf.mxu0
        %v3545 = vadd.f32 %v3516, %v3544
        %3546 = vdwg.mxu0
        %3547 = vmatpush.bf16.msra.mxu0 %v2816
        %3548 = vmatpush.bf16.msra.mxu0 %v2808
        %3549 = vmatpush.bf16.msra.mxu0 %v2800
        %3550 = vmatpush.bf16.msra.mxu0 %v2792
        %3551 = vmatpush.bf16.msra.mxu0 %v2784
        %3552 = vmatpush.bf16.msra.mxu0 %v2776
        %3553 = vmatpush.bf16.msra.mxu0 %v2768
        %3554 = vmatpush.bf16.msra.mxu0 %v2760
        %3555 = vmatmul.bf16.gmra.mxu0 %v1591
        %v3556 = vpop.f32.mrf.mxu0
        %v3557 = vadd.f32 %v3528, %v3556
        %v3558 = vpop.f32.mrf.mxu0
        %v3559 = vadd.f32 %v3530, %v3558
        %3560 = vmatmul.bf16.gmra.mxu0 %v1595
        %v3561 = vpop.f32.mrf.mxu0
        %v3562 = vadd.f32 %v3533, %v3561
        %v3563 = vpop.f32.mrf.mxu0
        %v3564 = vadd.f32 %v3535, %v3563
        %3565 = vmatmul.bf16.gmra.mxu0 %v1599
        %v3566 = vpop.f32.mrf.mxu0
        %v3567 = vadd.f32 %v3538, %v3566
        %v3568 = vpop.f32.mrf.mxu0
        %v3569 = vadd.f32 %v3540, %v3568
        %3570 = vmatmul.bf16.gmra.mxu0 %v1603
        %v3571 = vpop.f32.mrf.mxu0
        %v3572 = vadd.f32 %v3543, %v3571
        %v3573 = vpop.f32.mrf.mxu0
        %v3574 = vadd.f32 %v3545, %v3573
        %3575 = vdwg.mxu0
        %3576 = vmatpush.bf16.msra.mxu0 %v2880
        %3577 = vmatpush.bf16.msra.mxu0 %v2872
        %3578 = vmatpush.bf16.msra.mxu0 %v2864
        %3579 = vmatpush.bf16.msra.mxu0 %v2856
        %3580 = vmatpush.bf16.msra.mxu0 %v2848
        %3581 = vmatpush.bf16.msra.mxu0 %v2840
        %3582 = vmatpush.bf16.msra.mxu0 %v2832
        %3583 = vmatpush.bf16.msra.mxu0 %v2824
        %3584 = vmatmul.bf16.gmra.mxu0 %v1592
        %v3585 = vpop.f32.mrf.mxu0
        %v3586 = vadd.f32 %v3557, %v3585
        %v3587 = vpop.f32.mrf.mxu0
        %v3588 = vadd.f32 %v3559, %v3587
        %3589 = vmatmul.bf16.gmra.mxu0 %v1596
        %v3590 = vpop.f32.mrf.mxu0
        %v3591 = vadd.f32 %v3562, %v3590
        %v3592 = vpop.f32.mrf.mxu0
        %v3593 = vadd.f32 %v3564, %v3592
        %3594 = vmatmul.bf16.gmra.mxu0 %v1600
        %v3595 = vpop.f32.mrf.mxu0
        %v3596 = vadd.f32 %v3567, %v3595
        %v3597 = vpop.f32.mrf.mxu0
        %v3598 = vadd.f32 %v3569, %v3597
        %3599 = vmatmul.bf16.gmra.mxu0 %v1604
        %v3600 = vpop.f32.mrf.mxu0
        %v3601 = vadd.f32 %v3572, %v3600
        %v3602 = vpop.f32.mrf.mxu0
        %v3603 = vadd.f32 %v3574, %v3602
        %3604 = vdwg.mxu0
        %3605 = vmatpush.bf16.msra.mxu0 %v2689
        %3606 = vmatpush.bf16.msra.mxu0 %v2681
        %3607 = vmatpush.bf16.msra.mxu0 %v2673
        %3608 = vmatpush.bf16.msra.mxu0 %v2665
        %3609 = vmatpush.bf16.msra.mxu0 %v2657
        %3610 = vmatpush.bf16.msra.mxu0 %v2649
        %3611 = vmatpush.bf16.msra.mxu0 %v2641
        %3612 = vmatpush.bf16.msra.mxu0 %v2633
        %3613 = vmatmul.bf16.gmra.mxu0 %v1589
        %v3614 = vpop.f32.mrf.mxu0
        %v3615 = vadd.f32 0.0, %v3614
        %v3616 = vpop.f32.mrf.mxu0
        %v3617 = vadd.f32 0.0, %v3616
        %3618 = vmatmul.bf16.gmra.mxu0 %v1593
        %v3619 = vpop.f32.mrf.mxu0
        %v3620 = vadd.f32 0.0, %v3619
        %v3621 = vpop.f32.mrf.mxu0
        %v3622 = vadd.f32 0.0, %v3621
        %3623 = vmatmul.bf16.gmra.mxu0 %v1597
        %v3624 = vpop.f32.mrf.mxu0
        %v3625 = vadd.f32 0.0, %v3624
        %v3626 = vpop.f32.mrf.mxu0
        %v3627 = vadd.f32 0.0, %v3626
        %3628 = vmatmul.bf16.gmra.mxu0 %v1601
        %v3629 = vpop.f32.mrf.mxu0
        %v3630 = vadd.f32 0.0, %v3629
        %v3631 = vpop.f32.mrf.mxu0
        %v3632 = vadd.f32 0.0, %v3631
        %3633 = vdwg.mxu0
        %3634 = vmatpush.bf16.msra.mxu0 %v2753
        %3635 = vmatpush.bf16.msra.mxu0 %v2745
        %3636 = vmatpush.bf16.msra.mxu0 %v2737
        %3637 = vmatpush.bf16.msra.mxu0 %v2729
        %3638 = vmatpush.bf16.msra.mxu0 %v2721
        %3639 = vmatpush.bf16.msra.mxu0 %v2713
        %3640 = vmatpush.bf16.msra.mxu0 %v2705
        %3641 = vmatpush.bf16.msra.mxu0 %v2697
        %3642 = vmatmul.bf16.gmra.mxu0 %v1590
        %v3643 = vpop.f32.mrf.mxu0
        %v3644 = vadd.f32 %v3615, %v3643
        %v3645 = vpop.f32.mrf.mxu0
        %v3646 = vadd.f32 %v3617, %v3645
        %3647 = vmatmul.bf16.gmra.mxu0 %v1594
        %v3648 = vpop.f32.mrf.mxu0
        %v3649 = vadd.f32 %v3620, %v3648
        %v3650 = vpop.f32.mrf.mxu0
        %v3651 = vadd.f32 %v3622, %v3650
        %3652 = vmatmul.bf16.gmra.mxu0 %v1598
        %v3653 = vpop.f32.mrf.mxu0
        %v3654 = vadd.f32 %v3625, %v3653
        %v3655 = vpop.f32.mrf.mxu0
        %v3656 = vadd.f32 %v3627, %v3655
        %3657 = vmatmul.bf16.gmra.mxu0 %v1602
        %v3658 = vpop.f32.mrf.mxu0
        %v3659 = vadd.f32 %v3630, %v3658
        %v3660 = vpop.f32.mrf.mxu0
        %v3661 = vadd.f32 %v3632, %v3660
        %3662 = vdwg.mxu0
        %3663 = vmatpush.bf16.msra.mxu0 %v2817
        %3664 = vmatpush.bf16.msra.mxu0 %v2809
        %3665 = vmatpush.bf16.msra.mxu0 %v2801
        %3666 = vmatpush.bf16.msra.mxu0 %v2793
        %3667 = vmatpush.bf16.msra.mxu0 %v2785
        %3668 = vmatpush.bf16.msra.mxu0 %v2777
        %3669 = vmatpush.bf16.msra.mxu0 %v2769
        %3670 = vmatpush.bf16.msra.mxu0 %v2761
        %3671 = vmatmul.bf16.gmra.mxu0 %v1591
        %v3672 = vpop.f32.mrf.mxu0
        %v3673 = vadd.f32 %v3644, %v3672
        %v3674 = vpop.f32.mrf.mxu0
        %v3675 = vadd.f32 %v3646, %v3674
        %3676 = vmatmul.bf16.gmra.mxu0 %v1595
        %v3677 = vpop.f32.mrf.mxu0
        %v3678 = vadd.f32 %v3649, %v3677
        %v3679 = vpop.f32.mrf.mxu0
        %v3680 = vadd.f32 %v3651, %v3679
        %3681 = vmatmul.bf16.gmra.mxu0 %v1599
        %v3682 = vpop.f32.mrf.mxu0
        %v3683 = vadd.f32 %v3654, %v3682
        %v3684 = vpop.f32.mrf.mxu0
        %v3685 = vadd.f32 %v3656, %v3684
        %3686 = vmatmul.bf16.gmra.mxu0 %v1603
        %v3687 = vpop.f32.mrf.mxu0
        %v3688 = vadd.f32 %v3659, %v3687
        %v3689 = vpop.f32.mrf.mxu0
        %v3690 = vadd.f32 %v3661, %v3689
        %3691 = vdwg.mxu0
        %3692 = vmatpush.bf16.msra.mxu0 %v2881
        %3693 = vmatpush.bf16.msra.mxu0 %v2873
        %3694 = vmatpush.bf16.msra.mxu0 %v2865
        %3695 = vmatpush.bf16.msra.mxu0 %v2857
        %3696 = vmatpush.bf16.msra.mxu0 %v2849
        %3697 = vmatpush.bf16.msra.mxu0 %v2841
        %3698 = vmatpush.bf16.msra.mxu0 %v2833
        %3699 = vmatpush.bf16.msra.mxu0 %v2825
        %3700 = vmatmul.bf16.gmra.mxu0 %v1592
        %v3701 = vpop.f32.mrf.mxu0
        %v3702 = vadd.f32 %v3673, %v3701
        %v3703 = vpop.f32.mrf.mxu0
        %v3704 = vadd.f32 %v3675, %v3703
        %3705 = vmatmul.bf16.gmra.mxu0 %v1596
        %v3706 = vpop.f32.mrf.mxu0
        %v3707 = vadd.f32 %v3678, %v3706
        %v3708 = vpop.f32.mrf.mxu0
        %v3709 = vadd.f32 %v3680, %v3708
        %3710 = vmatmul.bf16.gmra.mxu0 %v1600
        %v3711 = vpop.f32.mrf.mxu0
        %v3712 = vadd.f32 %v3683, %v3711
        %v3713 = vpop.f32.mrf.mxu0
        %v3714 = vadd.f32 %v3685, %v3713
        %3715 = vmatmul.bf16.gmra.mxu0 %v1604
        %v3716 = vpop.f32.mrf.mxu0
        %v3717 = vadd.f32 %v3688, %v3716
        %v3718 = vpop.f32.mrf.mxu0
        %v3719 = vadd.f32 %v3690, %v3718
        %3720 = vdwg.mxu0
        %3721 = vmatpush.bf16.msra.mxu0 %v2690
        %3722 = vmatpush.bf16.msra.mxu0 %v2682
        %3723 = vmatpush.bf16.msra.mxu0 %v2674
        %3724 = vmatpush.bf16.msra.mxu0 %v2666
        %3725 = vmatpush.bf16.msra.mxu0 %v2658
        %3726 = vmatpush.bf16.msra.mxu0 %v2650
        %3727 = vmatpush.bf16.msra.mxu0 %v2642
        %3728 = vmatpush.bf16.msra.mxu0 %v2634
        %3729 = vmatmul.bf16.gmra.mxu0 %v1589
        %v3730 = vpop.f32.mrf.mxu0
        %v3731 = vadd.f32 0.0, %v3730
        %v3732 = vpop.f32.mrf.mxu0
        %v3733 = vadd.f32 0.0, %v3732
        %3734 = vmatmul.bf16.gmra.mxu0 %v1593
        %v3735 = vpop.f32.mrf.mxu0
        %v3736 = vadd.f32 0.0, %v3735
        %v3737 = vpop.f32.mrf.mxu0
        %v3738 = vadd.f32 0.0, %v3737
        %3739 = vmatmul.bf16.gmra.mxu0 %v1597
        %v3740 = vpop.f32.mrf.mxu0
        %v3741 = vadd.f32 0.0, %v3740
        %v3742 = vpop.f32.mrf.mxu0
        %v3743 = vadd.f32 0.0, %v3742
        %3744 = vmatmul.bf16.gmra.mxu0 %v1601
        %v3745 = vpop.f32.mrf.mxu0
        %v3746 = vadd.f32 0.0, %v3745
        %v3747 = vpop.f32.mrf.mxu0
        %v3748 = vadd.f32 0.0, %v3747
        %3749 = vdwg.mxu0
        %3750 = vmatpush.bf16.msra.mxu0 %v2754
        %3751 = vmatpush.bf16.msra.mxu0 %v2746
        %3752 = vmatpush.bf16.msra.mxu0 %v2738
        %3753 = vmatpush.bf16.msra.mxu0 %v2730
        %3754 = vmatpush.bf16.msra.mxu0 %v2722
        %3755 = vmatpush.bf16.msra.mxu0 %v2714
        %3756 = vmatpush.bf16.msra.mxu0 %v2706
        %3757 = vmatpush.bf16.msra.mxu0 %v2698
        %3758 = vmatmul.bf16.gmra.mxu0 %v1590
        %v3759 = vpop.f32.mrf.mxu0
        %v3760 = vadd.f32 %v3731, %v3759
        %v3761 = vpop.f32.mrf.mxu0
        %v3762 = vadd.f32 %v3733, %v3761
        %3763 = vmatmul.bf16.gmra.mxu0 %v1594
        %v3764 = vpop.f32.mrf.mxu0
        %v3765 = vadd.f32 %v3736, %v3764
        %v3766 = vpop.f32.mrf.mxu0
        %v3767 = vadd.f32 %v3738, %v3766
        %3768 = vmatmul.bf16.gmra.mxu0 %v1598
        %v3769 = vpop.f32.mrf.mxu0
        %v3770 = vadd.f32 %v3741, %v3769
        %v3771 = vpop.f32.mrf.mxu0
        %v3772 = vadd.f32 %v3743, %v3771
        %3773 = vmatmul.bf16.gmra.mxu0 %v1602
        %v3774 = vpop.f32.mrf.mxu0
        %v3775 = vadd.f32 %v3746, %v3774
        %v3776 = vpop.f32.mrf.mxu0
        %v3777 = vadd.f32 %v3748, %v3776
        %3778 = vdwg.mxu0
        %3779 = vmatpush.bf16.msra.mxu0 %v2818
        %3780 = vmatpush.bf16.msra.mxu0 %v2810
        %3781 = vmatpush.bf16.msra.mxu0 %v2802
        %3782 = vmatpush.bf16.msra.mxu0 %v2794
        %3783 = vmatpush.bf16.msra.mxu0 %v2786
        %3784 = vmatpush.bf16.msra.mxu0 %v2778
        %3785 = vmatpush.bf16.msra.mxu0 %v2770
        %3786 = vmatpush.bf16.msra.mxu0 %v2762
        %3787 = vmatmul.bf16.gmra.mxu0 %v1591
        %v3788 = vpop.f32.mrf.mxu0
        %v3789 = vadd.f32 %v3760, %v3788
        %v3790 = vpop.f32.mrf.mxu0
        %v3791 = vadd.f32 %v3762, %v3790
        %3792 = vmatmul.bf16.gmra.mxu0 %v1595
        %v3793 = vpop.f32.mrf.mxu0
        %v3794 = vadd.f32 %v3765, %v3793
        %v3795 = vpop.f32.mrf.mxu0
        %v3796 = vadd.f32 %v3767, %v3795
        %3797 = vmatmul.bf16.gmra.mxu0 %v1599
        %v3798 = vpop.f32.mrf.mxu0
        %v3799 = vadd.f32 %v3770, %v3798
        %v3800 = vpop.f32.mrf.mxu0
        %v3801 = vadd.f32 %v3772, %v3800
        %3802 = vmatmul.bf16.gmra.mxu0 %v1603
        %v3803 = vpop.f32.mrf.mxu0
        %v3804 = vadd.f32 %v3775, %v3803
        %v3805 = vpop.f32.mrf.mxu0
        %v3806 = vadd.f32 %v3777, %v3805
        %3807 = vdwg.mxu0
        %3808 = vmatpush.bf16.msra.mxu0 %v2882
        %3809 = vmatpush.bf16.msra.mxu0 %v2874
        %3810 = vmatpush.bf16.msra.mxu0 %v2866
        %3811 = vmatpush.bf16.msra.mxu0 %v2858
        %3812 = vmatpush.bf16.msra.mxu0 %v2850
        %3813 = vmatpush.bf16.msra.mxu0 %v2842
        %3814 = vmatpush.bf16.msra.mxu0 %v2834
        %3815 = vmatpush.bf16.msra.mxu0 %v2826
        %3816 = vmatmul.bf16.gmra.mxu0 %v1592
        %v3817 = vpop.f32.mrf.mxu0
        %v3818 = vadd.f32 %v3789, %v3817
        %v3819 = vpop.f32.mrf.mxu0
        %v3820 = vadd.f32 %v3791, %v3819
        %3821 = vmatmul.bf16.gmra.mxu0 %v1596
        %v3822 = vpop.f32.mrf.mxu0
        %v3823 = vadd.f32 %v3794, %v3822
        %v3824 = vpop.f32.mrf.mxu0
        %v3825 = vadd.f32 %v3796, %v3824
        %3826 = vmatmul.bf16.gmra.mxu0 %v1600
        %v3827 = vpop.f32.mrf.mxu0
        %v3828 = vadd.f32 %v3799, %v3827
        %v3829 = vpop.f32.mrf.mxu0
        %v3830 = vadd.f32 %v3801, %v3829
        %3831 = vmatmul.bf16.gmra.mxu0 %v1604
        %v3832 = vpop.f32.mrf.mxu0
        %v3833 = vadd.f32 %v3804, %v3832
        %v3834 = vpop.f32.mrf.mxu0
        %v3835 = vadd.f32 %v3806, %v3834
        %3836 = vdwg.mxu0
        %3837 = vmatpush.bf16.msra.mxu0 %v2691
        %3838 = vmatpush.bf16.msra.mxu0 %v2683
        %3839 = vmatpush.bf16.msra.mxu0 %v2675
        %3840 = vmatpush.bf16.msra.mxu0 %v2667
        %3841 = vmatpush.bf16.msra.mxu0 %v2659
        %3842 = vmatpush.bf16.msra.mxu0 %v2651
        %3843 = vmatpush.bf16.msra.mxu0 %v2643
        %3844 = vmatpush.bf16.msra.mxu0 %v2635
        %3845 = vmatmul.bf16.gmra.mxu0 %v1589
        %v3846 = vpop.f32.mrf.mxu0
        %v3847 = vadd.f32 0.0, %v3846
        %v3848 = vpop.f32.mrf.mxu0
        %v3849 = vadd.f32 0.0, %v3848
        %3850 = vmatmul.bf16.gmra.mxu0 %v1593
        %v3851 = vpop.f32.mrf.mxu0
        %v3852 = vadd.f32 0.0, %v3851
        %v3853 = vpop.f32.mrf.mxu0
        %v3854 = vadd.f32 0.0, %v3853
        %3855 = vmatmul.bf16.gmra.mxu0 %v1597
        %v3856 = vpop.f32.mrf.mxu0
        %v3857 = vadd.f32 0.0, %v3856
        %v3858 = vpop.f32.mrf.mxu0
        %v3859 = vadd.f32 0.0, %v3858
        %3860 = vmatmul.bf16.gmra.mxu0 %v1601
        %v3861 = vpop.f32.mrf.mxu0
        %v3862 = vadd.f32 0.0, %v3861
        %v3863 = vpop.f32.mrf.mxu0
        %v3864 = vadd.f32 0.0, %v3863
        %3865 = vdwg.mxu0
        %3866 = vmatpush.bf16.msra.mxu0 %v2755
        %3867 = vmatpush.bf16.msra.mxu0 %v2747
        %3868 = vmatpush.bf16.msra.mxu0 %v2739
        %3869 = vmatpush.bf16.msra.mxu0 %v2731
        %3870 = vmatpush.bf16.msra.mxu0 %v2723
        %3871 = vmatpush.bf16.msra.mxu0 %v2715
        %3872 = vmatpush.bf16.msra.mxu0 %v2707
        %3873 = vmatpush.bf16.msra.mxu0 %v2699
        %3874 = vmatmul.bf16.gmra.mxu0 %v1590
        %v3875 = vpop.f32.mrf.mxu0
        %v3876 = vadd.f32 %v3847, %v3875
        %v3877 = vpop.f32.mrf.mxu0
        %v3878 = vadd.f32 %v3849, %v3877
        %3879 = vmatmul.bf16.gmra.mxu0 %v1594
        %v3880 = vpop.f32.mrf.mxu0
        %v3881 = vadd.f32 %v3852, %v3880
        %v3882 = vpop.f32.mrf.mxu0
        %v3883 = vadd.f32 %v3854, %v3882
        %3884 = vmatmul.bf16.gmra.mxu0 %v1598
        %v3885 = vpop.f32.mrf.mxu0
        %v3886 = vadd.f32 %v3857, %v3885
        %v3887 = vpop.f32.mrf.mxu0
        %v3888 = vadd.f32 %v3859, %v3887
        %3889 = vmatmul.bf16.gmra.mxu0 %v1602
        %v3890 = vpop.f32.mrf.mxu0
        %v3891 = vadd.f32 %v3862, %v3890
        %v3892 = vpop.f32.mrf.mxu0
        %v3893 = vadd.f32 %v3864, %v3892
        %3894 = vdwg.mxu0
        %3895 = vmatpush.bf16.msra.mxu0 %v2819
        %3896 = vmatpush.bf16.msra.mxu0 %v2811
        %3897 = vmatpush.bf16.msra.mxu0 %v2803
        %3898 = vmatpush.bf16.msra.mxu0 %v2795
        %3899 = vmatpush.bf16.msra.mxu0 %v2787
        %3900 = vmatpush.bf16.msra.mxu0 %v2779
        %3901 = vmatpush.bf16.msra.mxu0 %v2771
        %3902 = vmatpush.bf16.msra.mxu0 %v2763
        %3903 = vmatmul.bf16.gmra.mxu0 %v1591
        %v3904 = vpop.f32.mrf.mxu0
        %v3905 = vadd.f32 %v3876, %v3904
        %v3906 = vpop.f32.mrf.mxu0
        %v3907 = vadd.f32 %v3878, %v3906
        %3908 = vmatmul.bf16.gmra.mxu0 %v1595
        %v3909 = vpop.f32.mrf.mxu0
        %v3910 = vadd.f32 %v3881, %v3909
        %v3911 = vpop.f32.mrf.mxu0
        %v3912 = vadd.f32 %v3883, %v3911
        %3913 = vmatmul.bf16.gmra.mxu0 %v1599
        %v3914 = vpop.f32.mrf.mxu0
        %v3915 = vadd.f32 %v3886, %v3914
        %v3916 = vpop.f32.mrf.mxu0
        %v3917 = vadd.f32 %v3888, %v3916
        %3918 = vmatmul.bf16.gmra.mxu0 %v1603
        %v3919 = vpop.f32.mrf.mxu0
        %v3920 = vadd.f32 %v3891, %v3919
        %v3921 = vpop.f32.mrf.mxu0
        %v3922 = vadd.f32 %v3893, %v3921
        %3923 = vdwg.mxu0
        %3924 = vmatpush.bf16.msra.mxu0 %v2883
        %3925 = vmatpush.bf16.msra.mxu0 %v2875
        %3926 = vmatpush.bf16.msra.mxu0 %v2867
        %3927 = vmatpush.bf16.msra.mxu0 %v2859
        %3928 = vmatpush.bf16.msra.mxu0 %v2851
        %3929 = vmatpush.bf16.msra.mxu0 %v2843
        %3930 = vmatpush.bf16.msra.mxu0 %v2835
        %3931 = vmatpush.bf16.msra.mxu0 %v2827
        %3932 = vmatmul.bf16.gmra.mxu0 %v1592
        %v3933 = vpop.f32.mrf.mxu0
        %v3934 = vadd.f32 %v3905, %v3933
        %v3935 = vpop.f32.mrf.mxu0
        %v3936 = vadd.f32 %v3907, %v3935
        %3937 = vmatmul.bf16.gmra.mxu0 %v1596
        %v3938 = vpop.f32.mrf.mxu0
        %v3939 = vadd.f32 %v3910, %v3938
        %v3940 = vpop.f32.mrf.mxu0
        %v3941 = vadd.f32 %v3912, %v3940
        %3942 = vmatmul.bf16.gmra.mxu0 %v1600
        %v3943 = vpop.f32.mrf.mxu0
        %v3944 = vadd.f32 %v3915, %v3943
        %v3945 = vpop.f32.mrf.mxu0
        %v3946 = vadd.f32 %v3917, %v3945
        %3947 = vmatmul.bf16.gmra.mxu0 %v1604
        %v3948 = vpop.f32.mrf.mxu0
        %v3949 = vadd.f32 %v3920, %v3948
        %v3950 = vpop.f32.mrf.mxu0
        %v3951 = vadd.f32 %v3922, %v3950
        %3952 = vdwg.mxu0
        %3953 = vmatpush.bf16.msra.mxu0 %v2692
        %3954 = vmatpush.bf16.msra.mxu0 %v2684
        %3955 = vmatpush.bf16.msra.mxu0 %v2676
        %3956 = vmatpush.bf16.msra.mxu0 %v2668
        %3957 = vmatpush.bf16.msra.mxu0 %v2660
        %3958 = vmatpush.bf16.msra.mxu0 %v2652
        %3959 = vmatpush.bf16.msra.mxu0 %v2644
        %3960 = vmatpush.bf16.msra.mxu0 %v2636
        %3961 = vmatmul.bf16.gmra.mxu0 %v1589
        %v3962 = vpop.f32.mrf.mxu0
        %v3963 = vadd.f32 0.0, %v3962
        %v3964 = vpop.f32.mrf.mxu0
        %v3965 = vadd.f32 0.0, %v3964
        %3966 = vmatmul.bf16.gmra.mxu0 %v1593
        %v3967 = vpop.f32.mrf.mxu0
        %v3968 = vadd.f32 0.0, %v3967
        %v3969 = vpop.f32.mrf.mxu0
        %v3970 = vadd.f32 0.0, %v3969
        %3971 = vmatmul.bf16.gmra.mxu0 %v1597
        %v3972 = vpop.f32.mrf.mxu0
        %v3973 = vadd.f32 0.0, %v3972
        %v3974 = vpop.f32.mrf.mxu0
        %v3975 = vadd.f32 0.0, %v3974
        %3976 = vmatmul.bf16.gmra.mxu0 %v1601
        %v3977 = vpop.f32.mrf.mxu0
        %v3978 = vadd.f32 0.0, %v3977
        %v3979 = vpop.f32.mrf.mxu0
        %v3980 = vadd.f32 0.0, %v3979
        %3981 = vdwg.mxu0
        %3982 = vmatpush.bf16.msra.mxu0 %v2756
        %3983 = vmatpush.bf16.msra.mxu0 %v2748
        %3984 = vmatpush.bf16.msra.mxu0 %v2740
        %3985 = vmatpush.bf16.msra.mxu0 %v2732
        %3986 = vmatpush.bf16.msra.mxu0 %v2724
        %3987 = vmatpush.bf16.msra.mxu0 %v2716
        %3988 = vmatpush.bf16.msra.mxu0 %v2708
        %3989 = vmatpush.bf16.msra.mxu0 %v2700
        %3990 = vmatmul.bf16.gmra.mxu0 %v1590
        %v3991 = vpop.f32.mrf.mxu0
        %v3992 = vadd.f32 %v3963, %v3991
        %v3993 = vpop.f32.mrf.mxu0
        %v3994 = vadd.f32 %v3965, %v3993
        %3995 = vmatmul.bf16.gmra.mxu0 %v1594
        %v3996 = vpop.f32.mrf.mxu0
        %v3997 = vadd.f32 %v3968, %v3996
        %v3998 = vpop.f32.mrf.mxu0
        %v3999 = vadd.f32 %v3970, %v3998
        %4000 = vmatmul.bf16.gmra.mxu0 %v1598
        %v4001 = vpop.f32.mrf.mxu0
        %v4002 = vadd.f32 %v3973, %v4001
        %v4003 = vpop.f32.mrf.mxu0
        %v4004 = vadd.f32 %v3975, %v4003
        %4005 = vmatmul.bf16.gmra.mxu0 %v1602
        %v4006 = vpop.f32.mrf.mxu0
        %v4007 = vadd.f32 %v3978, %v4006
        %v4008 = vpop.f32.mrf.mxu0
        %v4009 = vadd.f32 %v3980, %v4008
        %4010 = vdwg.mxu0
        %4011 = vmatpush.bf16.msra.mxu0 %v2820
        %4012 = vmatpush.bf16.msra.mxu0 %v2812
        %4013 = vmatpush.bf16.msra.mxu0 %v2804
        %4014 = vmatpush.bf16.msra.mxu0 %v2796
        %4015 = vmatpush.bf16.msra.mxu0 %v2788
        %4016 = vmatpush.bf16.msra.mxu0 %v2780
        %4017 = vmatpush.bf16.msra.mxu0 %v2772
        %4018 = vmatpush.bf16.msra.mxu0 %v2764
        %4019 = vmatmul.bf16.gmra.mxu0 %v1591
        %v4020 = vpop.f32.mrf.mxu0
        %v4021 = vadd.f32 %v3992, %v4020
        %v4022 = vpop.f32.mrf.mxu0
        %v4023 = vadd.f32 %v3994, %v4022
        %4024 = vmatmul.bf16.gmra.mxu0 %v1595
        %v4025 = vpop.f32.mrf.mxu0
        %v4026 = vadd.f32 %v3997, %v4025
        %v4027 = vpop.f32.mrf.mxu0
        %v4028 = vadd.f32 %v3999, %v4027
        %4029 = vmatmul.bf16.gmra.mxu0 %v1599
        %v4030 = vpop.f32.mrf.mxu0
        %v4031 = vadd.f32 %v4002, %v4030
        %v4032 = vpop.f32.mrf.mxu0
        %v4033 = vadd.f32 %v4004, %v4032
        %4034 = vmatmul.bf16.gmra.mxu0 %v1603
        %v4035 = vpop.f32.mrf.mxu0
        %v4036 = vadd.f32 %v4007, %v4035
        %v4037 = vpop.f32.mrf.mxu0
        %v4038 = vadd.f32 %v4009, %v4037
        %4039 = vdwg.mxu0
        %4040 = vmatpush.bf16.msra.mxu0 %v2884
        %4041 = vmatpush.bf16.msra.mxu0 %v2876
        %4042 = vmatpush.bf16.msra.mxu0 %v2868
        %4043 = vmatpush.bf16.msra.mxu0 %v2860
        %4044 = vmatpush.bf16.msra.mxu0 %v2852
        %4045 = vmatpush.bf16.msra.mxu0 %v2844
        %4046 = vmatpush.bf16.msra.mxu0 %v2836
        %4047 = vmatpush.bf16.msra.mxu0 %v2828
        %4048 = vmatmul.bf16.gmra.mxu0 %v1592
        %v4049 = vpop.f32.mrf.mxu0
        %v4050 = vadd.f32 %v4021, %v4049
        %v4051 = vpop.f32.mrf.mxu0
        %v4052 = vadd.f32 %v4023, %v4051
        %4053 = vmatmul.bf16.gmra.mxu0 %v1596
        %v4054 = vpop.f32.mrf.mxu0
        %v4055 = vadd.f32 %v4026, %v4054
        %v4056 = vpop.f32.mrf.mxu0
        %v4057 = vadd.f32 %v4028, %v4056
        %4058 = vmatmul.bf16.gmra.mxu0 %v1600
        %v4059 = vpop.f32.mrf.mxu0
        %v4060 = vadd.f32 %v4031, %v4059
        %v4061 = vpop.f32.mrf.mxu0
        %v4062 = vadd.f32 %v4033, %v4061
        %4063 = vmatmul.bf16.gmra.mxu0 %v1604
        %v4064 = vpop.f32.mrf.mxu0
        %v4065 = vadd.f32 %v4036, %v4064
        %v4066 = vpop.f32.mrf.mxu0
        %v4067 = vadd.f32 %v4038, %v4066
        %4068 = vdwg.mxu0
        %v4325 = vunpack.c.l.b16 %v1237
        %v4326 = vunpack.c.h.b16 %v1237
        %v4327 = vunpack.c.l.b16 %v1238
        %v4328 = vunpack.c.h.b16 %v1238
        %v4329 = vunpack.c.l.b16 %v1239
        %v4330 = vunpack.c.h.b16 %v1239
        %v4331 = vunpack.c.l.b16 %v1240
        %v4332 = vunpack.c.h.b16 %v1240
        %v4333 = vunpack.c.l.b16 %v1241
        %v4334 = vunpack.c.h.b16 %v1241
        %v4335 = vunpack.c.l.b16 %v1242
        %v4336 = vunpack.c.h.b16 %v1242
        %v4337 = vunpack.c.l.b16 %v1243
        %v4338 = vunpack.c.h.b16 %v1243
        %v4339 = vunpack.c.l.b16 %v1244
        %v4340 = vunpack.c.h.b16 %v1244
        %v4341 = vunpack.c.l.b16 %v1245
        %v4342 = vunpack.c.h.b16 %v1245
        %v4343 = vunpack.c.l.b16 %v1246
        %v4344 = vunpack.c.h.b16 %v1246
        %v4345 = vunpack.c.l.b16 %v1247
        %v4346 = vunpack.c.h.b16 %v1247
        %v4347 = vunpack.c.l.b16 %v1248
        %v4348 = vunpack.c.h.b16 %v1248
        %v4349 = vunpack.c.l.b16 %v1249
        %v4350 = vunpack.c.h.b16 %v1249
        %v4351 = vunpack.c.l.b16 %v1250
        %v4352 = vunpack.c.h.b16 %v1250
        %v4353 = vunpack.c.l.b16 %v1251
        %v4354 = vunpack.c.h.b16 %v1251
        %v4355 = vunpack.c.l.b16 %v1252
        %v4356 = vunpack.c.h.b16 %v1252
        %v4357 = vunpack.c.l.b16 %v1253
        %v4358 = vunpack.c.h.b16 %v1253
        %v4359 = vunpack.c.l.b16 %v1254
        %v4360 = vunpack.c.h.b16 %v1254
        %v4361 = vunpack.c.l.b16 %v1255
        %v4362 = vunpack.c.h.b16 %v1255
        %v4363 = vunpack.c.l.b16 %v1256
        %v4364 = vunpack.c.h.b16 %v1256
        %v4365 = vunpack.c.l.b16 %v1257
        %v4366 = vunpack.c.h.b16 %v1257
        %v4367 = vunpack.c.l.b16 %v1258
        %v4368 = vunpack.c.h.b16 %v1258
        %v4369 = vunpack.c.l.b16 %v1259
        %v4370 = vunpack.c.h.b16 %v1259
        %v4371 = vunpack.c.l.b16 %v1260
        %v4372 = vunpack.c.h.b16 %v1260
        %v4373 = vunpack.c.l.b16 %v1261
        %v4374 = vunpack.c.h.b16 %v1261
        %v4375 = vunpack.c.l.b16 %v1262
        %v4376 = vunpack.c.h.b16 %v1262
        %v4377 = vunpack.c.l.b16 %v1263
        %v4378 = vunpack.c.h.b16 %v1263
        %v4379 = vunpack.c.l.b16 %v1264
        %v4380 = vunpack.c.h.b16 %v1264
        %v4381 = vunpack.c.l.b16 %v1265
        %v4382 = vunpack.c.h.b16 %v1265
        %v4383 = vunpack.c.l.b16 %v1266
        %v4384 = vunpack.c.h.b16 %v1266
        %v4385 = vunpack.c.l.b16 %v1267
        %v4386 = vunpack.c.h.b16 %v1267
        %v4387 = vunpack.c.l.b16 %v1268
        %v4388 = vunpack.c.h.b16 %v1268
        %v4389 = vunpack.c.l.b16 %v1269
        %v4390 = vunpack.c.h.b16 %v1269
        %v4391 = vunpack.c.l.b16 %v1270
        %v4392 = vunpack.c.h.b16 %v1270
        %v4393 = vunpack.c.l.b16 %v1271
        %v4394 = vunpack.c.h.b16 %v1271
        %v4395 = vunpack.c.l.b16 %v1272
        %v4396 = vunpack.c.h.b16 %v1272
        %v4397 = vunpack.c.l.b16 %v1273
        %v4398 = vunpack.c.h.b16 %v1273
        %v4399 = vunpack.c.l.b16 %v1274
        %v4400 = vunpack.c.h.b16 %v1274
        %v4401 = vunpack.c.l.b16 %v1275
        %v4402 = vunpack.c.h.b16 %v1275
        %v4403 = vunpack.c.l.b16 %v1276
        %v4404 = vunpack.c.h.b16 %v1276
        %v4405 = vunpack.c.l.b16 %v1277
        %v4406 = vunpack.c.h.b16 %v1277
        %v4407 = vunpack.c.l.b16 %v1278
        %v4408 = vunpack.c.h.b16 %v1278
        %v4409 = vunpack.c.l.b16 %v1279
        %v4410 = vunpack.c.h.b16 %v1279
        %v4411 = vunpack.c.l.b16 %v1280
        %v4412 = vunpack.c.h.b16 %v1280
        %v4413 = vunpack.c.l.b16 %v1281
        %v4414 = vunpack.c.h.b16 %v1281
        %v4415 = vunpack.c.l.b16 %v1282
        %v4416 = vunpack.c.h.b16 %v1282
        %v4417 = vunpack.c.l.b16 %v1283
        %v4418 = vunpack.c.h.b16 %v1283
        %v4419 = vunpack.c.l.b16 %v1284
        %v4420 = vunpack.c.h.b16 %v1284
        %v4421 = vunpack.c.l.b16 %v1285
        %v4422 = vunpack.c.h.b16 %v1285
        %v4423 = vunpack.c.l.b16 %v1286
        %v4424 = vunpack.c.h.b16 %v1286
        %v4425 = vunpack.c.l.b16 %v1287
        %v4426 = vunpack.c.h.b16 %v1287
        %v4427 = vunpack.c.l.b16 %v1288
        %v4428 = vunpack.c.h.b16 %v1288
        %v4429 = vunpack.c.l.b16 %v1289
        %v4430 = vunpack.c.h.b16 %v1289
        %v4431 = vunpack.c.l.b16 %v1290
        %v4432 = vunpack.c.h.b16 %v1290
        %v4433 = vunpack.c.l.b16 %v1291
        %v4434 = vunpack.c.h.b16 %v1291
        %v4435 = vunpack.c.l.b16 %v1292
        %v4436 = vunpack.c.h.b16 %v1292
        %v4437 = vunpack.c.l.b16 %v1293
        %v4438 = vunpack.c.h.b16 %v1293
        %v4439 = vunpack.c.l.b16 %v1294
        %v4440 = vunpack.c.h.b16 %v1294
        %v4441 = vunpack.c.l.b16 %v1295
        %v4442 = vunpack.c.h.b16 %v1295
        %v4443 = vunpack.c.l.b16 %v1296
        %v4444 = vunpack.c.h.b16 %v1296
        %v4445 = vunpack.c.l.b16 %v1297
        %v4446 = vunpack.c.h.b16 %v1297
        %v4447 = vunpack.c.l.b16 %v1298
        %v4448 = vunpack.c.h.b16 %v1298
        %v4449 = vunpack.c.l.b16 %v1299
        %v4450 = vunpack.c.h.b16 %v1299
        %v4451 = vunpack.c.l.b16 %v1300
        %v4452 = vunpack.c.h.b16 %v1300
        %v4453 = vunpack.c.l.b16 %v1301
        %v4454 = vunpack.c.h.b16 %v1301
        %v4455 = vunpack.c.l.b16 %v1302
        %v4456 = vunpack.c.h.b16 %v1302
        %v4457 = vunpack.c.l.b16 %v1303
        %v4458 = vunpack.c.h.b16 %v1303
        %v4459 = vunpack.c.l.b16 %v1304
        %v4460 = vunpack.c.h.b16 %v1304
        %v4461 = vunpack.c.l.b16 %v1305
        %v4462 = vunpack.c.h.b16 %v1305
        %v4463 = vunpack.c.l.b16 %v1306
        %v4464 = vunpack.c.h.b16 %v1306
        %v4465 = vunpack.c.l.b16 %v1307
        %v4466 = vunpack.c.h.b16 %v1307
        %v4467 = vunpack.c.l.b16 %v1308
        %v4468 = vunpack.c.h.b16 %v1308
        %v4469 = vunpack.c.l.b16 %v1309
        %v4470 = vunpack.c.h.b16 %v1309
        %v4471 = vunpack.c.l.b16 %v1310
        %v4472 = vunpack.c.h.b16 %v1310
        %v4473 = vunpack.c.l.b16 %v1311
        %v4474 = vunpack.c.h.b16 %v1311
        %v4475 = vunpack.c.l.b16 %v1312
        %v4476 = vunpack.c.h.b16 %v1312
        %v4477 = vunpack.c.l.b16 %v1313
        %v4478 = vunpack.c.h.b16 %v1313
        %v4479 = vunpack.c.l.b16 %v1314
        %v4480 = vunpack.c.h.b16 %v1314
        %v4481 = vunpack.c.l.b16 %v1315
        %v4482 = vunpack.c.h.b16 %v1315
        %v4483 = vunpack.c.l.b16 %v1316
        %v4484 = vunpack.c.h.b16 %v1316
        %v4485 = vunpack.c.l.b16 %v1317
        %v4486 = vunpack.c.h.b16 %v1317
        %v4487 = vunpack.c.l.b16 %v1318
        %v4488 = vunpack.c.h.b16 %v1318
        %v4489 = vunpack.c.l.b16 %v1319
        %v4490 = vunpack.c.h.b16 %v1319
        %v4491 = vunpack.c.l.b16 %v1320
        %v4492 = vunpack.c.h.b16 %v1320
        %v4493 = vunpack.c.l.b16 %v1321
        %v4494 = vunpack.c.h.b16 %v1321
        %v4495 = vunpack.c.l.b16 %v1322
        %v4496 = vunpack.c.h.b16 %v1322
        %v4497 = vunpack.c.l.b16 %v1323
        %v4498 = vunpack.c.h.b16 %v1323
        %v4499 = vunpack.c.l.b16 %v1324
        %v4500 = vunpack.c.h.b16 %v1324
        %v4501 = vunpack.c.l.b16 %v1325
        %v4502 = vunpack.c.h.b16 %v1325
        %v4503 = vunpack.c.l.b16 %v1326
        %v4504 = vunpack.c.h.b16 %v1326
        %v4505 = vunpack.c.l.b16 %v1327
        %v4506 = vunpack.c.h.b16 %v1327
        %v4507 = vunpack.c.l.b16 %v1328
        %v4508 = vunpack.c.h.b16 %v1328
        %v4509 = vunpack.c.l.b16 %v1329
        %v4510 = vunpack.c.h.b16 %v1329
        %v4511 = vunpack.c.l.b16 %v1330
        %v4512 = vunpack.c.h.b16 %v1330
        %v4513 = vunpack.c.l.b16 %v1331
        %v4514 = vunpack.c.h.b16 %v1331
        %v4515 = vunpack.c.l.b16 %v1332
        %v4516 = vunpack.c.h.b16 %v1332
        %v4517 = vunpack.c.l.b16 %v1333
        %v4518 = vunpack.c.h.b16 %v1333
        %v4519 = vunpack.c.l.b16 %v1334
        %v4520 = vunpack.c.h.b16 %v1334
        %v4521 = vunpack.c.l.b16 %v1335
        %v4522 = vunpack.c.h.b16 %v1335
        %v4523 = vunpack.c.l.b16 %v1336
        %v4524 = vunpack.c.h.b16 %v1336
        %v4525 = vunpack.c.l.b16 %v1337
        %v4526 = vunpack.c.h.b16 %v1337
        %v4527 = vunpack.c.l.b16 %v1338
        %v4528 = vunpack.c.h.b16 %v1338
        %v4529 = vunpack.c.l.b16 %v1339
        %v4530 = vunpack.c.h.b16 %v1339
        %v4531 = vunpack.c.l.b16 %v1340
        %v4532 = vunpack.c.h.b16 %v1340
        %v4533 = vunpack.c.l.b16 %v1341
        %v4534 = vunpack.c.h.b16 %v1341
        %v4535 = vunpack.c.l.b16 %v1342
        %v4536 = vunpack.c.h.b16 %v1342
        %v4537 = vunpack.c.l.b16 %v1343
        %v4538 = vunpack.c.h.b16 %v1343
        %v4539 = vunpack.c.l.b16 %v1344
        %v4540 = vunpack.c.h.b16 %v1344
        %v4541 = vunpack.c.l.b16 %v1345
        %v4542 = vunpack.c.h.b16 %v1345
        %v4543 = vunpack.c.l.b16 %v1346
        %v4544 = vunpack.c.h.b16 %v1346
        %v4545 = vunpack.c.l.b16 %v1347
        %v4546 = vunpack.c.h.b16 %v1347
        %v4547 = vunpack.c.l.b16 %v1348
        %v4548 = vunpack.c.h.b16 %v1348
        %v4549 = vunpack.c.l.b16 %v1349
        %v4550 = vunpack.c.h.b16 %v1349
        %v4551 = vunpack.c.l.b16 %v1350
        %v4552 = vunpack.c.h.b16 %v1350
        %v4553 = vunpack.c.l.b16 %v1351
        %v4554 = vunpack.c.h.b16 %v1351
        %v4555 = vunpack.c.l.b16 %v1352
        %v4556 = vunpack.c.h.b16 %v1352
        %v4557 = vunpack.c.l.b16 %v1353
        %v4558 = vunpack.c.h.b16 %v1353
        %v4559 = vunpack.c.l.b16 %v1354
        %v4560 = vunpack.c.h.b16 %v1354
        %v4561 = vunpack.c.l.b16 %v1355
        %v4562 = vunpack.c.h.b16 %v1355
        %v4563 = vunpack.c.l.b16 %v1356
        %v4564 = vunpack.c.h.b16 %v1356
        %v4565 = vunpack.c.l.b16 %v1357
        %v4566 = vunpack.c.h.b16 %v1357
        %v4567 = vunpack.c.l.b16 %v1358
        %v4568 = vunpack.c.h.b16 %v1358
        %v4569 = vunpack.c.l.b16 %v1359
        %v4570 = vunpack.c.h.b16 %v1359
        %v4571 = vunpack.c.l.b16 %v1360
        %v4572 = vunpack.c.h.b16 %v1360
        %v4573 = vunpack.c.l.b16 %v1361
        %v4574 = vunpack.c.h.b16 %v1361
        %v4575 = vunpack.c.l.b16 %v1362
        %v4576 = vunpack.c.h.b16 %v1362
        %v4577 = vunpack.c.l.b16 %v1363
        %v4578 = vunpack.c.h.b16 %v1363
        %v4579 = vunpack.c.l.b16 %v1364
        %v4580 = vunpack.c.h.b16 %v1364
        %v4581 = vunpack.c.l.b16 %v1365
        %v4582 = vunpack.c.h.b16 %v1365
        %v4583 = vunpack.c.l.b16 %v1366
        %v4584 = vunpack.c.h.b16 %v1366
        %v4585 = vunpack.c.l.b16 %v1367
        %v4586 = vunpack.c.h.b16 %v1367
        %v4587 = vunpack.c.l.b16 %v1368
        %v4588 = vunpack.c.h.b16 %v1368
        %v4589 = vunpack.c.l.b16 %v1369
        %v4590 = vunpack.c.h.b16 %v1369
        %v4591 = vunpack.c.l.b16 %v1370
        %v4592 = vunpack.c.h.b16 %v1370
        %v4593 = vunpack.c.l.b16 %v1371
        %v4594 = vunpack.c.h.b16 %v1371
        %v4595 = vunpack.c.l.b16 %v1372
        %v4596 = vunpack.c.h.b16 %v1372
        %v4597 = vunpack.c.l.b16 %v1373
        %v4598 = vunpack.c.h.b16 %v1373
        %v4599 = vunpack.c.l.b16 %v1374
        %v4600 = vunpack.c.h.b16 %v1374
        %v4601 = vunpack.c.l.b16 %v1375
        %v4602 = vunpack.c.h.b16 %v1375
        %v4603 = vunpack.c.l.b16 %v1376
        %v4604 = vunpack.c.h.b16 %v1376
        %v4605 = vunpack.c.l.b16 %v1377
        %v4606 = vunpack.c.h.b16 %v1377
        %v4607 = vunpack.c.l.b16 %v1378
        %v4608 = vunpack.c.h.b16 %v1378
        %v4609 = vunpack.c.l.b16 %v1379
        %v4610 = vunpack.c.h.b16 %v1379
        %v4611 = vunpack.c.l.b16 %v1380
        %v4612 = vunpack.c.h.b16 %v1380
        %v4613 = vunpack.c.l.b16 %v1381
        %v4614 = vunpack.c.h.b16 %v1381
        %v4615 = vunpack.c.l.b16 %v1382
        %v4616 = vunpack.c.h.b16 %v1382
        %v4617 = vunpack.c.l.b16 %v1383
        %v4618 = vunpack.c.h.b16 %v1383
        %v4619 = vunpack.c.l.b16 %v1384
        %v4620 = vunpack.c.h.b16 %v1384
        %v4621 = vunpack.c.l.b16 %v1385
        %v4622 = vunpack.c.h.b16 %v1385
        %v4623 = vunpack.c.l.b16 %v1386
        %v4624 = vunpack.c.h.b16 %v1386
        %v4625 = vunpack.c.l.b16 %v1387
        %v4626 = vunpack.c.h.b16 %v1387
        %v4627 = vunpack.c.l.b16 %v1388
        %v4628 = vunpack.c.h.b16 %v1388
        %v4629 = vunpack.c.l.b16 %v1389
        %v4630 = vunpack.c.h.b16 %v1389
        %v4631 = vunpack.c.l.b16 %v1390
        %v4632 = vunpack.c.h.b16 %v1390
        %v4633 = vunpack.c.l.b16 %v1391
        %v4634 = vunpack.c.h.b16 %v1391
        %v4635 = vunpack.c.l.b16 %v1392
        %v4636 = vunpack.c.h.b16 %v1392
        %v4637 = vunpack.c.l.b16 %v1393
        %v4638 = vunpack.c.h.b16 %v1393
        %v4639 = vunpack.c.l.b16 %v1394
        %v4640 = vunpack.c.h.b16 %v1394
        %v4641 = vunpack.c.l.b16 %v1395
        %v4642 = vunpack.c.h.b16 %v1395
        %v4643 = vunpack.c.l.b16 %v1396
        %v4644 = vunpack.c.h.b16 %v1396
        %v4645 = vunpack.c.l.b16 %v1397
        %v4646 = vunpack.c.h.b16 %v1397
        %v4647 = vunpack.c.l.b16 %v1398
        %v4648 = vunpack.c.h.b16 %v1398
        %v4649 = vunpack.c.l.b16 %v1399
        %v4650 = vunpack.c.h.b16 %v1399
        %v4651 = vunpack.c.l.b16 %v1400
        %v4652 = vunpack.c.h.b16 %v1400
        %v4653 = vunpack.c.l.b16 %v1401
        %v4654 = vunpack.c.h.b16 %v1401
        %v4655 = vunpack.c.l.b16 %v1402
        %v4656 = vunpack.c.h.b16 %v1402
        %v4657 = vunpack.c.l.b16 %v1403
        %v4658 = vunpack.c.h.b16 %v1403
        %v4659 = vunpack.c.l.b16 %v1404
        %v4660 = vunpack.c.h.b16 %v1404
        %v4661 = vunpack.c.l.b16 %v1405
        %v4662 = vunpack.c.h.b16 %v1405
        %v4663 = vunpack.c.l.b16 %v1406
        %v4664 = vunpack.c.h.b16 %v1406
        %v4665 = vunpack.c.l.b16 %v1407
        %v4666 = vunpack.c.h.b16 %v1407
        %v4667 = vunpack.c.l.b16 %v1408
        %v4668 = vunpack.c.h.b16 %v1408
        %v4669 = vunpack.c.l.b16 %v1409
        %v4670 = vunpack.c.h.b16 %v1409
        %v4671 = vunpack.c.l.b16 %v1410
        %v4672 = vunpack.c.h.b16 %v1410
        %v4673 = vunpack.c.l.b16 %v1411
        %v4674 = vunpack.c.h.b16 %v1411
        %v4675 = vunpack.c.l.b16 %v1412
        %v4676 = vunpack.c.h.b16 %v1412
        %v4677 = vunpack.c.l.b16 %v1413
        %v4678 = vunpack.c.h.b16 %v1413
        %v4679 = vunpack.c.l.b16 %v1414
        %v4680 = vunpack.c.h.b16 %v1414
        %v4681 = vunpack.c.l.b16 %v1415
        %v4682 = vunpack.c.h.b16 %v1415
        %v4683 = vunpack.c.l.b16 %v1416
        %v4684 = vunpack.c.h.b16 %v1416
        %v4685 = vunpack.c.l.b16 %v1417
        %v4686 = vunpack.c.h.b16 %v1417
        %v4687 = vunpack.c.l.b16 %v1418
        %v4688 = vunpack.c.h.b16 %v1418
        %v4689 = vunpack.c.l.b16 %v1419
        %v4690 = vunpack.c.h.b16 %v1419
        %v4691 = vunpack.c.l.b16 %v1420
        %v4692 = vunpack.c.h.b16 %v1420
        %v4693 = vunpack.c.l.b16 %v1421
        %v4694 = vunpack.c.h.b16 %v1421
        %v4695 = vunpack.c.l.b16 %v1422
        %v4696 = vunpack.c.h.b16 %v1422
        %v4697 = vunpack.c.l.b16 %v1423
        %v4698 = vunpack.c.h.b16 %v1423
        %v4699 = vunpack.c.l.b16 %v1424
        %v4700 = vunpack.c.h.b16 %v1424
        %v4701 = vunpack.c.l.b16 %v1425
        %v4702 = vunpack.c.h.b16 %v1425
        %v4703 = vunpack.c.l.b16 %v1426
        %v4704 = vunpack.c.h.b16 %v1426
        %v4705 = vunpack.c.l.b16 %v1427
        %v4706 = vunpack.c.h.b16 %v1427
        %v4707 = vunpack.c.l.b16 %v1428
        %v4708 = vunpack.c.h.b16 %v1428
        %v4709 = vunpack.c.l.b16 %v1429
        %v4710 = vunpack.c.h.b16 %v1429
        %v4711 = vunpack.c.l.b16 %v1430
        %v4712 = vunpack.c.h.b16 %v1430
        %v4713 = vunpack.c.l.b16 %v1431
        %v4714 = vunpack.c.h.b16 %v1431
        %v4715 = vunpack.c.l.b16 %v1432
        %v4716 = vunpack.c.h.b16 %v1432
        %v4717 = vunpack.c.l.b16 %v1433
        %v4718 = vunpack.c.h.b16 %v1433
        %v4719 = vunpack.c.l.b16 %v1434
        %v4720 = vunpack.c.h.b16 %v1434
        %v4721 = vunpack.c.l.b16 %v1435
        %v4722 = vunpack.c.h.b16 %v1435
        %v4723 = vunpack.c.l.b16 %v1436
        %v4724 = vunpack.c.h.b16 %v1436
        %v4725 = vunpack.c.l.b16 %v1437
        %v4726 = vunpack.c.h.b16 %v1437
        %v4727 = vunpack.c.l.b16 %v1438
        %v4728 = vunpack.c.h.b16 %v1438
        %v4729 = vunpack.c.l.b16 %v1439
        %v4730 = vunpack.c.h.b16 %v1439
        %v4731 = vunpack.c.l.b16 %v1440
        %v4732 = vunpack.c.h.b16 %v1440
        %v4733 = vunpack.c.l.b16 %v1441
        %v4734 = vunpack.c.h.b16 %v1441
        %v4735 = vunpack.c.l.b16 %v1442
        %v4736 = vunpack.c.h.b16 %v1442
        %v4737 = vunpack.c.l.b16 %v1443
        %v4738 = vunpack.c.h.b16 %v1443
        %v4739 = vunpack.c.l.b16 %v1444
        %v4740 = vunpack.c.h.b16 %v1444
        %v4741 = vunpack.c.l.b16 %v1445
        %v4742 = vunpack.c.h.b16 %v1445
        %v4743 = vunpack.c.l.b16 %v1446
        %v4744 = vunpack.c.h.b16 %v1446
        %v4745 = vunpack.c.l.b16 %v1447
        %v4746 = vunpack.c.h.b16 %v1447
        %v4747 = vunpack.c.l.b16 %v1448
        %v4748 = vunpack.c.h.b16 %v1448
        %v4749 = vunpack.c.l.b16 %v1449
        %v4750 = vunpack.c.h.b16 %v1449
        %v4751 = vunpack.c.l.b16 %v1450
        %v4752 = vunpack.c.h.b16 %v1450
        %v4753 = vunpack.c.l.b16 %v1451
        %v4754 = vunpack.c.h.b16 %v1451
        %v4755 = vunpack.c.l.b16 %v1452
        %v4756 = vunpack.c.h.b16 %v1452
        %v4757 = vunpack.c.l.b16 %v1453
        %v4758 = vunpack.c.h.b16 %v1453
        %v4759 = vunpack.c.l.b16 %v1454
        %v4760 = vunpack.c.h.b16 %v1454
        %v4761 = vunpack.c.l.b16 %v1455
        %v4762 = vunpack.c.h.b16 %v1455
        %v4763 = vunpack.c.l.b16 %v1456
        %v4764 = vunpack.c.h.b16 %v1456
        %v4765 = vunpack.c.l.b16 %v1457
        %v4766 = vunpack.c.h.b16 %v1457
        %v4767 = vunpack.c.l.b16 %v1458
        %v4768 = vunpack.c.h.b16 %v1458
        %v4769 = vunpack.c.l.b16 %v1459
        %v4770 = vunpack.c.h.b16 %v1459
        %v4771 = vunpack.c.l.b16 %v1460
        %v4772 = vunpack.c.h.b16 %v1460
        %v4773 = vunpack.c.l.b16 %v1461
        %v4774 = vunpack.c.h.b16 %v1461
        %v4775 = vunpack.c.l.b16 %v1462
        %v4776 = vunpack.c.h.b16 %v1462
        %v4777 = vunpack.c.l.b16 %v1463
        %v4778 = vunpack.c.h.b16 %v1463
        %v4779 = vunpack.c.l.b16 %v1464
        %v4780 = vunpack.c.h.b16 %v1464
        %v4781 = vunpack.c.l.b16 %v1465
        %v4782 = vunpack.c.h.b16 %v1465
        %v4783 = vunpack.c.l.b16 %v1466
        %v4784 = vunpack.c.h.b16 %v1466
        %v4785 = vunpack.c.l.b16 %v1467
        %v4786 = vunpack.c.h.b16 %v1467
        %v4787 = vunpack.c.l.b16 %v1468
        %v4788 = vunpack.c.h.b16 %v1468
        %v4789 = vunpack.c.l.b16 %v1469
        %v4790 = vunpack.c.h.b16 %v1469
        %v4791 = vunpack.c.l.b16 %v1470
        %v4792 = vunpack.c.h.b16 %v1470
        %v4793 = vunpack.c.l.b16 %v1471
        %v4794 = vunpack.c.h.b16 %v1471
        %v4795 = vunpack.c.l.b16 %v1472
        %v4796 = vunpack.c.h.b16 %v1472
        %v4797 = vunpack.c.l.b16 %v1473
        %v4798 = vunpack.c.h.b16 %v1473
        %v4799 = vunpack.c.l.b16 %v1474
        %v4800 = vunpack.c.h.b16 %v1474
        %v4801 = vunpack.c.l.b16 %v1475
        %v4802 = vunpack.c.h.b16 %v1475
        %v4803 = vunpack.c.l.b16 %v1476
        %v4804 = vunpack.c.h.b16 %v1476
        %v4805 = vunpack.c.l.b16 %v1477
        %v4806 = vunpack.c.h.b16 %v1477
        %v4807 = vunpack.c.l.b16 %v1478
        %v4808 = vunpack.c.h.b16 %v1478
        %v4809 = vunpack.c.l.b16 %v1479
        %v4810 = vunpack.c.h.b16 %v1479
        %v4811 = vunpack.c.l.b16 %v1480
        %v4812 = vunpack.c.h.b16 %v1480
        %v4813 = vunpack.c.l.b16 %v1481
        %v4814 = vunpack.c.h.b16 %v1481
        %v4815 = vunpack.c.l.b16 %v1482
        %v4816 = vunpack.c.h.b16 %v1482
        %v4817 = vunpack.c.l.b16 %v1483
        %v4818 = vunpack.c.h.b16 %v1483
        %v4819 = vunpack.c.l.b16 %v1484
        %v4820 = vunpack.c.h.b16 %v1484
        %v4821 = vunpack.c.l.b16 %v1485
        %v4822 = vunpack.c.h.b16 %v1485
        %v4823 = vunpack.c.l.b16 %v1486
        %v4824 = vunpack.c.h.b16 %v1486
        %v4825 = vunpack.c.l.b16 %v1487
        %v4826 = vunpack.c.h.b16 %v1487
        %v4827 = vunpack.c.l.b16 %v1488
        %v4828 = vunpack.c.h.b16 %v1488
        %v4829 = vunpack.c.l.b16 %v1489
        %v4830 = vunpack.c.h.b16 %v1489
        %v4831 = vunpack.c.l.b16 %v1490
        %v4832 = vunpack.c.h.b16 %v1490
        %v4833 = vunpack.c.l.b16 %v1491
        %v4834 = vunpack.c.h.b16 %v1491
        %v4835 = vunpack.c.l.b16 %v1492
        %v4836 = vunpack.c.h.b16 %v1492
        %v4837 = vpack.c.b16 %v4333, %v4325
        %v4838 = vpack.c.b16 %v4334, %v4326
        %v4839 = vpack.c.b16 %v4335, %v4327
        %v4840 = vpack.c.b16 %v4336, %v4328
        %v4841 = vpack.c.b16 %v4337, %v4329
        %v4842 = vpack.c.b16 %v4338, %v4330
        %v4843 = vpack.c.b16 %v4339, %v4331
        %v4844 = vpack.c.b16 %v4340, %v4332
        %v4845 = vpack.c.b16 %v4349, %v4341
        %v4846 = vpack.c.b16 %v4350, %v4342
        %v4847 = vpack.c.b16 %v4351, %v4343
        %v4848 = vpack.c.b16 %v4352, %v4344
        %v4849 = vpack.c.b16 %v4353, %v4345
        %v4850 = vpack.c.b16 %v4354, %v4346
        %v4851 = vpack.c.b16 %v4355, %v4347
        %v4852 = vpack.c.b16 %v4356, %v4348
        %v4853 = vpack.c.b16 %v4365, %v4357
        %v4854 = vpack.c.b16 %v4366, %v4358
        %v4855 = vpack.c.b16 %v4367, %v4359
        %v4856 = vpack.c.b16 %v4368, %v4360
        %v4857 = vpack.c.b16 %v4369, %v4361
        %v4858 = vpack.c.b16 %v4370, %v4362
        %v4859 = vpack.c.b16 %v4371, %v4363
        %v4860 = vpack.c.b16 %v4372, %v4364
        %v4861 = vpack.c.b16 %v4381, %v4373
        %v4862 = vpack.c.b16 %v4382, %v4374
        %v4863 = vpack.c.b16 %v4383, %v4375
        %v4864 = vpack.c.b16 %v4384, %v4376
        %v4865 = vpack.c.b16 %v4385, %v4377
        %v4866 = vpack.c.b16 %v4386, %v4378
        %v4867 = vpack.c.b16 %v4387, %v4379
        %v4868 = vpack.c.b16 %v4388, %v4380
        %v4869 = vpack.c.b16 %v4397, %v4389
        %v4870 = vpack.c.b16 %v4398, %v4390
        %v4871 = vpack.c.b16 %v4399, %v4391
        %v4872 = vpack.c.b16 %v4400, %v4392
        %v4873 = vpack.c.b16 %v4401, %v4393
        %v4874 = vpack.c.b16 %v4402, %v4394
        %v4875 = vpack.c.b16 %v4403, %v4395
        %v4876 = vpack.c.b16 %v4404, %v4396
        %v4877 = vpack.c.b16 %v4413, %v4405
        %v4878 = vpack.c.b16 %v4414, %v4406
        %v4879 = vpack.c.b16 %v4415, %v4407
        %v4880 = vpack.c.b16 %v4416, %v4408
        %v4881 = vpack.c.b16 %v4417, %v4409
        %v4882 = vpack.c.b16 %v4418, %v4410
        %v4883 = vpack.c.b16 %v4419, %v4411
        %v4884 = vpack.c.b16 %v4420, %v4412
        %v4885 = vpack.c.b16 %v4429, %v4421
        %v4886 = vpack.c.b16 %v4430, %v4422
        %v4887 = vpack.c.b16 %v4431, %v4423
        %v4888 = vpack.c.b16 %v4432, %v4424
        %v4889 = vpack.c.b16 %v4433, %v4425
        %v4890 = vpack.c.b16 %v4434, %v4426
        %v4891 = vpack.c.b16 %v4435, %v4427
        %v4892 = vpack.c.b16 %v4436, %v4428
        %v4893 = vpack.c.b16 %v4445, %v4437
        %v4894 = vpack.c.b16 %v4446, %v4438
        %v4895 = vpack.c.b16 %v4447, %v4439
        %v4896 = vpack.c.b16 %v4448, %v4440
        %v4897 = vpack.c.b16 %v4449, %v4441
        %v4898 = vpack.c.b16 %v4450, %v4442
        %v4899 = vpack.c.b16 %v4451, %v4443
        %v4900 = vpack.c.b16 %v4452, %v4444
        %v4901 = vpack.c.b16 %v4461, %v4453
        %v4902 = vpack.c.b16 %v4462, %v4454
        %v4903 = vpack.c.b16 %v4463, %v4455
        %v4904 = vpack.c.b16 %v4464, %v4456
        %v4905 = vpack.c.b16 %v4465, %v4457
        %v4906 = vpack.c.b16 %v4466, %v4458
        %v4907 = vpack.c.b16 %v4467, %v4459
        %v4908 = vpack.c.b16 %v4468, %v4460
        %v4909 = vpack.c.b16 %v4477, %v4469
        %v4910 = vpack.c.b16 %v4478, %v4470
        %v4911 = vpack.c.b16 %v4479, %v4471
        %v4912 = vpack.c.b16 %v4480, %v4472
        %v4913 = vpack.c.b16 %v4481, %v4473
        %v4914 = vpack.c.b16 %v4482, %v4474
        %v4915 = vpack.c.b16 %v4483, %v4475
        %v4916 = vpack.c.b16 %v4484, %v4476
        %v4917 = vpack.c.b16 %v4493, %v4485
        %v4918 = vpack.c.b16 %v4494, %v4486
        %v4919 = vpack.c.b16 %v4495, %v4487
        %v4920 = vpack.c.b16 %v4496, %v4488
        %v4921 = vpack.c.b16 %v4497, %v4489
        %v4922 = vpack.c.b16 %v4498, %v4490
        %v4923 = vpack.c.b16 %v4499, %v4491
        %v4924 = vpack.c.b16 %v4500, %v4492
        %v4925 = vpack.c.b16 %v4509, %v4501
        %v4926 = vpack.c.b16 %v4510, %v4502
        %v4927 = vpack.c.b16 %v4511, %v4503
        %v4928 = vpack.c.b16 %v4512, %v4504
        %v4929 = vpack.c.b16 %v4513, %v4505
        %v4930 = vpack.c.b16 %v4514, %v4506
        %v4931 = vpack.c.b16 %v4515, %v4507
        %v4932 = vpack.c.b16 %v4516, %v4508
        %v4933 = vpack.c.b16 %v4525, %v4517
        %v4934 = vpack.c.b16 %v4526, %v4518
        %v4935 = vpack.c.b16 %v4527, %v4519
        %v4936 = vpack.c.b16 %v4528, %v4520
        %v4937 = vpack.c.b16 %v4529, %v4521
        %v4938 = vpack.c.b16 %v4530, %v4522
        %v4939 = vpack.c.b16 %v4531, %v4523
        %v4940 = vpack.c.b16 %v4532, %v4524
        %v4941 = vpack.c.b16 %v4541, %v4533
        %v4942 = vpack.c.b16 %v4542, %v4534
        %v4943 = vpack.c.b16 %v4543, %v4535
        %v4944 = vpack.c.b16 %v4544, %v4536
        %v4945 = vpack.c.b16 %v4545, %v4537
        %v4946 = vpack.c.b16 %v4546, %v4538
        %v4947 = vpack.c.b16 %v4547, %v4539
        %v4948 = vpack.c.b16 %v4548, %v4540
        %v4949 = vpack.c.b16 %v4557, %v4549
        %v4950 = vpack.c.b16 %v4558, %v4550
        %v4951 = vpack.c.b16 %v4559, %v4551
        %v4952 = vpack.c.b16 %v4560, %v4552
        %v4953 = vpack.c.b16 %v4561, %v4553
        %v4954 = vpack.c.b16 %v4562, %v4554
        %v4955 = vpack.c.b16 %v4563, %v4555
        %v4956 = vpack.c.b16 %v4564, %v4556
        %v4957 = vpack.c.b16 %v4573, %v4565
        %v4958 = vpack.c.b16 %v4574, %v4566
        %v4959 = vpack.c.b16 %v4575, %v4567
        %v4960 = vpack.c.b16 %v4576, %v4568
        %v4961 = vpack.c.b16 %v4577, %v4569
        %v4962 = vpack.c.b16 %v4578, %v4570
        %v4963 = vpack.c.b16 %v4579, %v4571
        %v4964 = vpack.c.b16 %v4580, %v4572
        %v4965 = vpack.c.b16 %v4589, %v4581
        %v4966 = vpack.c.b16 %v4590, %v4582
        %v4967 = vpack.c.b16 %v4591, %v4583
        %v4968 = vpack.c.b16 %v4592, %v4584
        %v4969 = vpack.c.b16 %v4593, %v4585
        %v4970 = vpack.c.b16 %v4594, %v4586
        %v4971 = vpack.c.b16 %v4595, %v4587
        %v4972 = vpack.c.b16 %v4596, %v4588
        %v4973 = vpack.c.b16 %v4605, %v4597
        %v4974 = vpack.c.b16 %v4606, %v4598
        %v4975 = vpack.c.b16 %v4607, %v4599
        %v4976 = vpack.c.b16 %v4608, %v4600
        %v4977 = vpack.c.b16 %v4609, %v4601
        %v4978 = vpack.c.b16 %v4610, %v4602
        %v4979 = vpack.c.b16 %v4611, %v4603
        %v4980 = vpack.c.b16 %v4612, %v4604
        %v4981 = vpack.c.b16 %v4621, %v4613
        %v4982 = vpack.c.b16 %v4622, %v4614
        %v4983 = vpack.c.b16 %v4623, %v4615
        %v4984 = vpack.c.b16 %v4624, %v4616
        %v4985 = vpack.c.b16 %v4625, %v4617
        %v4986 = vpack.c.b16 %v4626, %v4618
        %v4987 = vpack.c.b16 %v4627, %v4619
        %v4988 = vpack.c.b16 %v4628, %v4620
        %v4989 = vpack.c.b16 %v4637, %v4629
        %v4990 = vpack.c.b16 %v4638, %v4630
        %v4991 = vpack.c.b16 %v4639, %v4631
        %v4992 = vpack.c.b16 %v4640, %v4632
        %v4993 = vpack.c.b16 %v4641, %v4633
        %v4994 = vpack.c.b16 %v4642, %v4634
        %v4995 = vpack.c.b16 %v4643, %v4635
        %v4996 = vpack.c.b16 %v4644, %v4636
        %v4997 = vpack.c.b16 %v4653, %v4645
        %v4998 = vpack.c.b16 %v4654, %v4646
        %v4999 = vpack.c.b16 %v4655, %v4647
        %v5000 = vpack.c.b16 %v4656, %v4648
        %v5001 = vpack.c.b16 %v4657, %v4649
        %v5002 = vpack.c.b16 %v4658, %v4650
        %v5003 = vpack.c.b16 %v4659, %v4651
        %v5004 = vpack.c.b16 %v4660, %v4652
        %v5005 = vpack.c.b16 %v4669, %v4661
        %v5006 = vpack.c.b16 %v4670, %v4662
        %v5007 = vpack.c.b16 %v4671, %v4663
        %v5008 = vpack.c.b16 %v4672, %v4664
        %v5009 = vpack.c.b16 %v4673, %v4665
        %v5010 = vpack.c.b16 %v4674, %v4666
        %v5011 = vpack.c.b16 %v4675, %v4667
        %v5012 = vpack.c.b16 %v4676, %v4668
        %v5013 = vpack.c.b16 %v4685, %v4677
        %v5014 = vpack.c.b16 %v4686, %v4678
        %v5015 = vpack.c.b16 %v4687, %v4679
        %v5016 = vpack.c.b16 %v4688, %v4680
        %v5017 = vpack.c.b16 %v4689, %v4681
        %v5018 = vpack.c.b16 %v4690, %v4682
        %v5019 = vpack.c.b16 %v4691, %v4683
        %v5020 = vpack.c.b16 %v4692, %v4684
        %v5021 = vpack.c.b16 %v4701, %v4693
        %v5022 = vpack.c.b16 %v4702, %v4694
        %v5023 = vpack.c.b16 %v4703, %v4695
        %v5024 = vpack.c.b16 %v4704, %v4696
        %v5025 = vpack.c.b16 %v4705, %v4697
        %v5026 = vpack.c.b16 %v4706, %v4698
        %v5027 = vpack.c.b16 %v4707, %v4699
        %v5028 = vpack.c.b16 %v4708, %v4700
        %v5029 = vpack.c.b16 %v4717, %v4709
        %v5030 = vpack.c.b16 %v4718, %v4710
        %v5031 = vpack.c.b16 %v4719, %v4711
        %v5032 = vpack.c.b16 %v4720, %v4712
        %v5033 = vpack.c.b16 %v4721, %v4713
        %v5034 = vpack.c.b16 %v4722, %v4714
        %v5035 = vpack.c.b16 %v4723, %v4715
        %v5036 = vpack.c.b16 %v4724, %v4716
        %v5037 = vpack.c.b16 %v4733, %v4725
        %v5038 = vpack.c.b16 %v4734, %v4726
        %v5039 = vpack.c.b16 %v4735, %v4727
        %v5040 = vpack.c.b16 %v4736, %v4728
        %v5041 = vpack.c.b16 %v4737, %v4729
        %v5042 = vpack.c.b16 %v4738, %v4730
        %v5043 = vpack.c.b16 %v4739, %v4731
        %v5044 = vpack.c.b16 %v4740, %v4732
        %v5045 = vpack.c.b16 %v4749, %v4741
        %v5046 = vpack.c.b16 %v4750, %v4742
        %v5047 = vpack.c.b16 %v4751, %v4743
        %v5048 = vpack.c.b16 %v4752, %v4744
        %v5049 = vpack.c.b16 %v4753, %v4745
        %v5050 = vpack.c.b16 %v4754, %v4746
        %v5051 = vpack.c.b16 %v4755, %v4747
        %v5052 = vpack.c.b16 %v4756, %v4748
        %v5053 = vpack.c.b16 %v4765, %v4757
        %v5054 = vpack.c.b16 %v4766, %v4758
        %v5055 = vpack.c.b16 %v4767, %v4759
        %v5056 = vpack.c.b16 %v4768, %v4760
        %v5057 = vpack.c.b16 %v4769, %v4761
        %v5058 = vpack.c.b16 %v4770, %v4762
        %v5059 = vpack.c.b16 %v4771, %v4763
        %v5060 = vpack.c.b16 %v4772, %v4764
        %v5061 = vpack.c.b16 %v4781, %v4773
        %v5062 = vpack.c.b16 %v4782, %v4774
        %v5063 = vpack.c.b16 %v4783, %v4775
        %v5064 = vpack.c.b16 %v4784, %v4776
        %v5065 = vpack.c.b16 %v4785, %v4777
        %v5066 = vpack.c.b16 %v4786, %v4778
        %v5067 = vpack.c.b16 %v4787, %v4779
        %v5068 = vpack.c.b16 %v4788, %v4780
        %v5069 = vpack.c.b16 %v4797, %v4789
        %v5070 = vpack.c.b16 %v4798, %v4790
        %v5071 = vpack.c.b16 %v4799, %v4791
        %v5072 = vpack.c.b16 %v4800, %v4792
        %v5073 = vpack.c.b16 %v4801, %v4793
        %v5074 = vpack.c.b16 %v4802, %v4794
        %v5075 = vpack.c.b16 %v4803, %v4795
        %v5076 = vpack.c.b16 %v4804, %v4796
        %v5077 = vpack.c.b16 %v4813, %v4805
        %v5078 = vpack.c.b16 %v4814, %v4806
        %v5079 = vpack.c.b16 %v4815, %v4807
        %v5080 = vpack.c.b16 %v4816, %v4808
        %v5081 = vpack.c.b16 %v4817, %v4809
        %v5082 = vpack.c.b16 %v4818, %v4810
        %v5083 = vpack.c.b16 %v4819, %v4811
        %v5084 = vpack.c.b16 %v4820, %v4812
        %v5085 = vpack.c.b16 %v4829, %v4821
        %v5086 = vpack.c.b16 %v4830, %v4822
        %v5087 = vpack.c.b16 %v4831, %v4823
        %v5088 = vpack.c.b16 %v4832, %v4824
        %v5089 = vpack.c.b16 %v4833, %v4825
        %v5090 = vpack.c.b16 %v4834, %v4826
        %v5091 = vpack.c.b16 %v4835, %v4827
        %v5092 = vpack.c.b16 %v4836, %v4828
        %5349 = vmatpush.bf16.msra.mxu0 %v4893
        %5350 = vmatpush.bf16.msra.mxu0 %v4885
        %5351 = vmatpush.bf16.msra.mxu0 %v4877
        %5352 = vmatpush.bf16.msra.mxu0 %v4869
        %5353 = vmatpush.bf16.msra.mxu0 %v4861
        %5354 = vmatpush.bf16.msra.mxu0 %v4853
        %5355 = vmatpush.bf16.msra.mxu0 %v4845
        %5356 = vmatpush.bf16.msra.mxu0 %v4837
        %5357 = vmatmul.bf16.gmra.mxu0 %v1220
        %v5358 = vpop.f32.mrf.mxu0
        %v5359 = vadd.f32 %v3238, %v5358
        %v5360 = vpop.f32.mrf.mxu0
        %v5361 = vadd.f32 %v3240, %v5360
        %5362 = vmatmul.bf16.gmra.mxu0 %v1224
        %v5363 = vpop.f32.mrf.mxu0
        %v5364 = vadd.f32 %v3243, %v5363
        %v5365 = vpop.f32.mrf.mxu0
        %v5366 = vadd.f32 %v3245, %v5365
        %5367 = vmatmul.bf16.gmra.mxu0 %v1228
        %v5368 = vpop.f32.mrf.mxu0
        %v5369 = vadd.f32 %v3248, %v5368
        %v5370 = vpop.f32.mrf.mxu0
        %v5371 = vadd.f32 %v3250, %v5370
        %5372 = vmatmul.bf16.gmra.mxu0 %v1232
        %v5373 = vpop.f32.mrf.mxu0
        %v5374 = vadd.f32 %v3253, %v5373
        %v5375 = vpop.f32.mrf.mxu0
        %v5376 = vadd.f32 %v3255, %v5375
        %5377 = vdwg.mxu0
        %5378 = vmatpush.bf16.msra.mxu0 %v4957
        %5379 = vmatpush.bf16.msra.mxu0 %v4949
        %5380 = vmatpush.bf16.msra.mxu0 %v4941
        %5381 = vmatpush.bf16.msra.mxu0 %v4933
        %5382 = vmatpush.bf16.msra.mxu0 %v4925
        %5383 = vmatpush.bf16.msra.mxu0 %v4917
        %5384 = vmatpush.bf16.msra.mxu0 %v4909
        %5385 = vmatpush.bf16.msra.mxu0 %v4901
        %5386 = vmatmul.bf16.gmra.mxu0 %v1221
        %v5387 = vpop.f32.mrf.mxu0
        %v5388 = vadd.f32 %v5359, %v5387
        %v5389 = vpop.f32.mrf.mxu0
        %v5390 = vadd.f32 %v5361, %v5389
        %5391 = vmatmul.bf16.gmra.mxu0 %v1225
        %v5392 = vpop.f32.mrf.mxu0
        %v5393 = vadd.f32 %v5364, %v5392
        %v5394 = vpop.f32.mrf.mxu0
        %v5395 = vadd.f32 %v5366, %v5394
        %5396 = vmatmul.bf16.gmra.mxu0 %v1229
        %v5397 = vpop.f32.mrf.mxu0
        %v5398 = vadd.f32 %v5369, %v5397
        %v5399 = vpop.f32.mrf.mxu0
        %v5400 = vadd.f32 %v5371, %v5399
        %5401 = vmatmul.bf16.gmra.mxu0 %v1233
        %v5402 = vpop.f32.mrf.mxu0
        %v5403 = vadd.f32 %v5374, %v5402
        %v5404 = vpop.f32.mrf.mxu0
        %v5405 = vadd.f32 %v5376, %v5404
        %5406 = vdwg.mxu0
        %5407 = vmatpush.bf16.msra.mxu0 %v5021
        %5408 = vmatpush.bf16.msra.mxu0 %v5013
        %5409 = vmatpush.bf16.msra.mxu0 %v5005
        %5410 = vmatpush.bf16.msra.mxu0 %v4997
        %5411 = vmatpush.bf16.msra.mxu0 %v4989
        %5412 = vmatpush.bf16.msra.mxu0 %v4981
        %5413 = vmatpush.bf16.msra.mxu0 %v4973
        %5414 = vmatpush.bf16.msra.mxu0 %v4965
        %5415 = vmatmul.bf16.gmra.mxu0 %v1222
        %v5416 = vpop.f32.mrf.mxu0
        %v5417 = vadd.f32 %v5388, %v5416
        %v5418 = vpop.f32.mrf.mxu0
        %v5419 = vadd.f32 %v5390, %v5418
        %5420 = vmatmul.bf16.gmra.mxu0 %v1226
        %v5421 = vpop.f32.mrf.mxu0
        %v5422 = vadd.f32 %v5393, %v5421
        %v5423 = vpop.f32.mrf.mxu0
        %v5424 = vadd.f32 %v5395, %v5423
        %5425 = vmatmul.bf16.gmra.mxu0 %v1230
        %v5426 = vpop.f32.mrf.mxu0
        %v5427 = vadd.f32 %v5398, %v5426
        %v5428 = vpop.f32.mrf.mxu0
        %v5429 = vadd.f32 %v5400, %v5428
        %5430 = vmatmul.bf16.gmra.mxu0 %v1234
        %v5431 = vpop.f32.mrf.mxu0
        %v5432 = vadd.f32 %v5403, %v5431
        %v5433 = vpop.f32.mrf.mxu0
        %v5434 = vadd.f32 %v5405, %v5433
        %5435 = vdwg.mxu0
        %5436 = vmatpush.bf16.msra.mxu0 %v5085
        %5437 = vmatpush.bf16.msra.mxu0 %v5077
        %5438 = vmatpush.bf16.msra.mxu0 %v5069
        %5439 = vmatpush.bf16.msra.mxu0 %v5061
        %5440 = vmatpush.bf16.msra.mxu0 %v5053
        %5441 = vmatpush.bf16.msra.mxu0 %v5045
        %5442 = vmatpush.bf16.msra.mxu0 %v5037
        %5443 = vmatpush.bf16.msra.mxu0 %v5029
        %5444 = vmatmul.bf16.gmra.mxu0 %v1223
        %v5445 = vpop.f32.mrf.mxu0
        %v5446 = vadd.f32 %v5417, %v5445
        %v5447 = vpop.f32.mrf.mxu0
        %v5448 = vadd.f32 %v5419, %v5447
        %5449 = vmatmul.bf16.gmra.mxu0 %v1227
        %v5450 = vpop.f32.mrf.mxu0
        %v5451 = vadd.f32 %v5422, %v5450
        %v5452 = vpop.f32.mrf.mxu0
        %v5453 = vadd.f32 %v5424, %v5452
        %5454 = vmatmul.bf16.gmra.mxu0 %v1231
        %v5455 = vpop.f32.mrf.mxu0
        %v5456 = vadd.f32 %v5427, %v5455
        %v5457 = vpop.f32.mrf.mxu0
        %v5458 = vadd.f32 %v5429, %v5457
        %5459 = vmatmul.bf16.gmra.mxu0 %v1235
        %v5460 = vpop.f32.mrf.mxu0
        %v5461 = vadd.f32 %v5432, %v5460
        %v5462 = vpop.f32.mrf.mxu0
        %v5463 = vadd.f32 %v5434, %v5462
        %5464 = vdwg.mxu0
        %5465 = vmatpush.bf16.msra.mxu0 %v4894
        %5466 = vmatpush.bf16.msra.mxu0 %v4886
        %5467 = vmatpush.bf16.msra.mxu0 %v4878
        %5468 = vmatpush.bf16.msra.mxu0 %v4870
        %5469 = vmatpush.bf16.msra.mxu0 %v4862
        %5470 = vmatpush.bf16.msra.mxu0 %v4854
        %5471 = vmatpush.bf16.msra.mxu0 %v4846
        %5472 = vmatpush.bf16.msra.mxu0 %v4838
        %5473 = vmatmul.bf16.gmra.mxu0 %v1220
        %v5474 = vpop.f32.mrf.mxu0
        %v5475 = vadd.f32 %v3354, %v5474
        %v5476 = vpop.f32.mrf.mxu0
        %v5477 = vadd.f32 %v3356, %v5476
        %5478 = vmatmul.bf16.gmra.mxu0 %v1224
        %v5479 = vpop.f32.mrf.mxu0
        %v5480 = vadd.f32 %v3359, %v5479
        %v5481 = vpop.f32.mrf.mxu0
        %v5482 = vadd.f32 %v3361, %v5481
        %5483 = vmatmul.bf16.gmra.mxu0 %v1228
        %v5484 = vpop.f32.mrf.mxu0
        %v5485 = vadd.f32 %v3364, %v5484
        %v5486 = vpop.f32.mrf.mxu0
        %v5487 = vadd.f32 %v3366, %v5486
        %5488 = vmatmul.bf16.gmra.mxu0 %v1232
        %v5489 = vpop.f32.mrf.mxu0
        %v5490 = vadd.f32 %v3369, %v5489
        %v5491 = vpop.f32.mrf.mxu0
        %v5492 = vadd.f32 %v3371, %v5491
        %5493 = vdwg.mxu0
        %5494 = vmatpush.bf16.msra.mxu0 %v4958
        %5495 = vmatpush.bf16.msra.mxu0 %v4950
        %5496 = vmatpush.bf16.msra.mxu0 %v4942
        %5497 = vmatpush.bf16.msra.mxu0 %v4934
        %5498 = vmatpush.bf16.msra.mxu0 %v4926
        %5499 = vmatpush.bf16.msra.mxu0 %v4918
        %5500 = vmatpush.bf16.msra.mxu0 %v4910
        %5501 = vmatpush.bf16.msra.mxu0 %v4902
        %5502 = vmatmul.bf16.gmra.mxu0 %v1221
        %v5503 = vpop.f32.mrf.mxu0
        %v5504 = vadd.f32 %v5475, %v5503
        %v5505 = vpop.f32.mrf.mxu0
        %v5506 = vadd.f32 %v5477, %v5505
        %5507 = vmatmul.bf16.gmra.mxu0 %v1225
        %v5508 = vpop.f32.mrf.mxu0
        %v5509 = vadd.f32 %v5480, %v5508
        %v5510 = vpop.f32.mrf.mxu0
        %v5511 = vadd.f32 %v5482, %v5510
        %5512 = vmatmul.bf16.gmra.mxu0 %v1229
        %v5513 = vpop.f32.mrf.mxu0
        %v5514 = vadd.f32 %v5485, %v5513
        %v5515 = vpop.f32.mrf.mxu0
        %v5516 = vadd.f32 %v5487, %v5515
        %5517 = vmatmul.bf16.gmra.mxu0 %v1233
        %v5518 = vpop.f32.mrf.mxu0
        %v5519 = vadd.f32 %v5490, %v5518
        %v5520 = vpop.f32.mrf.mxu0
        %v5521 = vadd.f32 %v5492, %v5520
        %5522 = vdwg.mxu0
        %5523 = vmatpush.bf16.msra.mxu0 %v5022
        %5524 = vmatpush.bf16.msra.mxu0 %v5014
        %5525 = vmatpush.bf16.msra.mxu0 %v5006
        %5526 = vmatpush.bf16.msra.mxu0 %v4998
        %5527 = vmatpush.bf16.msra.mxu0 %v4990
        %5528 = vmatpush.bf16.msra.mxu0 %v4982
        %5529 = vmatpush.bf16.msra.mxu0 %v4974
        %5530 = vmatpush.bf16.msra.mxu0 %v4966
        %5531 = vmatmul.bf16.gmra.mxu0 %v1222
        %v5532 = vpop.f32.mrf.mxu0
        %v5533 = vadd.f32 %v5504, %v5532
        %v5534 = vpop.f32.mrf.mxu0
        %v5535 = vadd.f32 %v5506, %v5534
        %5536 = vmatmul.bf16.gmra.mxu0 %v1226
        %v5537 = vpop.f32.mrf.mxu0
        %v5538 = vadd.f32 %v5509, %v5537
        %v5539 = vpop.f32.mrf.mxu0
        %v5540 = vadd.f32 %v5511, %v5539
        %5541 = vmatmul.bf16.gmra.mxu0 %v1230
        %v5542 = vpop.f32.mrf.mxu0
        %v5543 = vadd.f32 %v5514, %v5542
        %v5544 = vpop.f32.mrf.mxu0
        %v5545 = vadd.f32 %v5516, %v5544
        %5546 = vmatmul.bf16.gmra.mxu0 %v1234
        %v5547 = vpop.f32.mrf.mxu0
        %v5548 = vadd.f32 %v5519, %v5547
        %v5549 = vpop.f32.mrf.mxu0
        %v5550 = vadd.f32 %v5521, %v5549
        %5551 = vdwg.mxu0
        %5552 = vmatpush.bf16.msra.mxu0 %v5086
        %5553 = vmatpush.bf16.msra.mxu0 %v5078
        %5554 = vmatpush.bf16.msra.mxu0 %v5070
        %5555 = vmatpush.bf16.msra.mxu0 %v5062
        %5556 = vmatpush.bf16.msra.mxu0 %v5054
        %5557 = vmatpush.bf16.msra.mxu0 %v5046
        %5558 = vmatpush.bf16.msra.mxu0 %v5038
        %5559 = vmatpush.bf16.msra.mxu0 %v5030
        %5560 = vmatmul.bf16.gmra.mxu0 %v1223
        %v5561 = vpop.f32.mrf.mxu0
        %v5562 = vadd.f32 %v5533, %v5561
        %v5563 = vpop.f32.mrf.mxu0
        %v5564 = vadd.f32 %v5535, %v5563
        %5565 = vmatmul.bf16.gmra.mxu0 %v1227
        %v5566 = vpop.f32.mrf.mxu0
        %v5567 = vadd.f32 %v5538, %v5566
        %v5568 = vpop.f32.mrf.mxu0
        %v5569 = vadd.f32 %v5540, %v5568
        %5570 = vmatmul.bf16.gmra.mxu0 %v1231
        %v5571 = vpop.f32.mrf.mxu0
        %v5572 = vadd.f32 %v5543, %v5571
        %v5573 = vpop.f32.mrf.mxu0
        %v5574 = vadd.f32 %v5545, %v5573
        %5575 = vmatmul.bf16.gmra.mxu0 %v1235
        %v5576 = vpop.f32.mrf.mxu0
        %v5577 = vadd.f32 %v5548, %v5576
        %v5578 = vpop.f32.mrf.mxu0
        %v5579 = vadd.f32 %v5550, %v5578
        %5580 = vdwg.mxu0
        %5581 = vmatpush.bf16.msra.mxu0 %v4895
        %5582 = vmatpush.bf16.msra.mxu0 %v4887
        %5583 = vmatpush.bf16.msra.mxu0 %v4879
        %5584 = vmatpush.bf16.msra.mxu0 %v4871
        %5585 = vmatpush.bf16.msra.mxu0 %v4863
        %5586 = vmatpush.bf16.msra.mxu0 %v4855
        %5587 = vmatpush.bf16.msra.mxu0 %v4847
        %5588 = vmatpush.bf16.msra.mxu0 %v4839
        %5589 = vmatmul.bf16.gmra.mxu0 %v1220
        %v5590 = vpop.f32.mrf.mxu0
        %v5591 = vadd.f32 %v3470, %v5590
        %v5592 = vpop.f32.mrf.mxu0
        %v5593 = vadd.f32 %v3472, %v5592
        %5594 = vmatmul.bf16.gmra.mxu0 %v1224
        %v5595 = vpop.f32.mrf.mxu0
        %v5596 = vadd.f32 %v3475, %v5595
        %v5597 = vpop.f32.mrf.mxu0
        %v5598 = vadd.f32 %v3477, %v5597
        %5599 = vmatmul.bf16.gmra.mxu0 %v1228
        %v5600 = vpop.f32.mrf.mxu0
        %v5601 = vadd.f32 %v3480, %v5600
        %v5602 = vpop.f32.mrf.mxu0
        %v5603 = vadd.f32 %v3482, %v5602
        %5604 = vmatmul.bf16.gmra.mxu0 %v1232
        %v5605 = vpop.f32.mrf.mxu0
        %v5606 = vadd.f32 %v3485, %v5605
        %v5607 = vpop.f32.mrf.mxu0
        %v5608 = vadd.f32 %v3487, %v5607
        %5609 = vdwg.mxu0
        %5610 = vmatpush.bf16.msra.mxu0 %v4959
        %5611 = vmatpush.bf16.msra.mxu0 %v4951
        %5612 = vmatpush.bf16.msra.mxu0 %v4943
        %5613 = vmatpush.bf16.msra.mxu0 %v4935
        %5614 = vmatpush.bf16.msra.mxu0 %v4927
        %5615 = vmatpush.bf16.msra.mxu0 %v4919
        %5616 = vmatpush.bf16.msra.mxu0 %v4911
        %5617 = vmatpush.bf16.msra.mxu0 %v4903
        %5618 = vmatmul.bf16.gmra.mxu0 %v1221
        %v5619 = vpop.f32.mrf.mxu0
        %v5620 = vadd.f32 %v5591, %v5619
        %v5621 = vpop.f32.mrf.mxu0
        %v5622 = vadd.f32 %v5593, %v5621
        %5623 = vmatmul.bf16.gmra.mxu0 %v1225
        %v5624 = vpop.f32.mrf.mxu0
        %v5625 = vadd.f32 %v5596, %v5624
        %v5626 = vpop.f32.mrf.mxu0
        %v5627 = vadd.f32 %v5598, %v5626
        %5628 = vmatmul.bf16.gmra.mxu0 %v1229
        %v5629 = vpop.f32.mrf.mxu0
        %v5630 = vadd.f32 %v5601, %v5629
        %v5631 = vpop.f32.mrf.mxu0
        %v5632 = vadd.f32 %v5603, %v5631
        %5633 = vmatmul.bf16.gmra.mxu0 %v1233
        %v5634 = vpop.f32.mrf.mxu0
        %v5635 = vadd.f32 %v5606, %v5634
        %v5636 = vpop.f32.mrf.mxu0
        %v5637 = vadd.f32 %v5608, %v5636
        %5638 = vdwg.mxu0
        %5639 = vmatpush.bf16.msra.mxu0 %v5023
        %5640 = vmatpush.bf16.msra.mxu0 %v5015
        %5641 = vmatpush.bf16.msra.mxu0 %v5007
        %5642 = vmatpush.bf16.msra.mxu0 %v4999
        %5643 = vmatpush.bf16.msra.mxu0 %v4991
        %5644 = vmatpush.bf16.msra.mxu0 %v4983
        %5645 = vmatpush.bf16.msra.mxu0 %v4975
        %5646 = vmatpush.bf16.msra.mxu0 %v4967
        %5647 = vmatmul.bf16.gmra.mxu0 %v1222
        %v5648 = vpop.f32.mrf.mxu0
        %v5649 = vadd.f32 %v5620, %v5648
        %v5650 = vpop.f32.mrf.mxu0
        %v5651 = vadd.f32 %v5622, %v5650
        %5652 = vmatmul.bf16.gmra.mxu0 %v1226
        %v5653 = vpop.f32.mrf.mxu0
        %v5654 = vadd.f32 %v5625, %v5653
        %v5655 = vpop.f32.mrf.mxu0
        %v5656 = vadd.f32 %v5627, %v5655
        %5657 = vmatmul.bf16.gmra.mxu0 %v1230
        %v5658 = vpop.f32.mrf.mxu0
        %v5659 = vadd.f32 %v5630, %v5658
        %v5660 = vpop.f32.mrf.mxu0
        %v5661 = vadd.f32 %v5632, %v5660
        %5662 = vmatmul.bf16.gmra.mxu0 %v1234
        %v5663 = vpop.f32.mrf.mxu0
        %v5664 = vadd.f32 %v5635, %v5663
        %v5665 = vpop.f32.mrf.mxu0
        %v5666 = vadd.f32 %v5637, %v5665
        %5667 = vdwg.mxu0
        %5668 = vmatpush.bf16.msra.mxu0 %v5087
        %5669 = vmatpush.bf16.msra.mxu0 %v5079
        %5670 = vmatpush.bf16.msra.mxu0 %v5071
        %5671 = vmatpush.bf16.msra.mxu0 %v5063
        %5672 = vmatpush.bf16.msra.mxu0 %v5055
        %5673 = vmatpush.bf16.msra.mxu0 %v5047
        %5674 = vmatpush.bf16.msra.mxu0 %v5039
        %5675 = vmatpush.bf16.msra.mxu0 %v5031
        %5676 = vmatmul.bf16.gmra.mxu0 %v1223
        %v5677 = vpop.f32.mrf.mxu0
        %v5678 = vadd.f32 %v5649, %v5677
        %v5679 = vpop.f32.mrf.mxu0
        %v5680 = vadd.f32 %v5651, %v5679
        %5681 = vmatmul.bf16.gmra.mxu0 %v1227
        %v5682 = vpop.f32.mrf.mxu0
        %v5683 = vadd.f32 %v5654, %v5682
        %v5684 = vpop.f32.mrf.mxu0
        %v5685 = vadd.f32 %v5656, %v5684
        %5686 = vmatmul.bf16.gmra.mxu0 %v1231
        %v5687 = vpop.f32.mrf.mxu0
        %v5688 = vadd.f32 %v5659, %v5687
        %v5689 = vpop.f32.mrf.mxu0
        %v5690 = vadd.f32 %v5661, %v5689
        %5691 = vmatmul.bf16.gmra.mxu0 %v1235
        %v5692 = vpop.f32.mrf.mxu0
        %v5693 = vadd.f32 %v5664, %v5692
        %v5694 = vpop.f32.mrf.mxu0
        %v5695 = vadd.f32 %v5666, %v5694
        %5696 = vdwg.mxu0
        %5697 = vmatpush.bf16.msra.mxu0 %v4896
        %5698 = vmatpush.bf16.msra.mxu0 %v4888
        %5699 = vmatpush.bf16.msra.mxu0 %v4880
        %5700 = vmatpush.bf16.msra.mxu0 %v4872
        %5701 = vmatpush.bf16.msra.mxu0 %v4864
        %5702 = vmatpush.bf16.msra.mxu0 %v4856
        %5703 = vmatpush.bf16.msra.mxu0 %v4848
        %5704 = vmatpush.bf16.msra.mxu0 %v4840
        %5705 = vmatmul.bf16.gmra.mxu0 %v1220
        %v5706 = vpop.f32.mrf.mxu0
        %v5707 = vadd.f32 %v3586, %v5706
        %v5708 = vpop.f32.mrf.mxu0
        %v5709 = vadd.f32 %v3588, %v5708
        %5710 = vmatmul.bf16.gmra.mxu0 %v1224
        %v5711 = vpop.f32.mrf.mxu0
        %v5712 = vadd.f32 %v3591, %v5711
        %v5713 = vpop.f32.mrf.mxu0
        %v5714 = vadd.f32 %v3593, %v5713
        %5715 = vmatmul.bf16.gmra.mxu0 %v1228
        %v5716 = vpop.f32.mrf.mxu0
        %v5717 = vadd.f32 %v3596, %v5716
        %v5718 = vpop.f32.mrf.mxu0
        %v5719 = vadd.f32 %v3598, %v5718
        %5720 = vmatmul.bf16.gmra.mxu0 %v1232
        %v5721 = vpop.f32.mrf.mxu0
        %v5722 = vadd.f32 %v3601, %v5721
        %v5723 = vpop.f32.mrf.mxu0
        %v5724 = vadd.f32 %v3603, %v5723
        %5725 = vdwg.mxu0
        %5726 = vmatpush.bf16.msra.mxu0 %v4960
        %5727 = vmatpush.bf16.msra.mxu0 %v4952
        %5728 = vmatpush.bf16.msra.mxu0 %v4944
        %5729 = vmatpush.bf16.msra.mxu0 %v4936
        %5730 = vmatpush.bf16.msra.mxu0 %v4928
        %5731 = vmatpush.bf16.msra.mxu0 %v4920
        %5732 = vmatpush.bf16.msra.mxu0 %v4912
        %5733 = vmatpush.bf16.msra.mxu0 %v4904
        %5734 = vmatmul.bf16.gmra.mxu0 %v1221
        %v5735 = vpop.f32.mrf.mxu0
        %v5736 = vadd.f32 %v5707, %v5735
        %v5737 = vpop.f32.mrf.mxu0
        %v5738 = vadd.f32 %v5709, %v5737
        %5739 = vmatmul.bf16.gmra.mxu0 %v1225
        %v5740 = vpop.f32.mrf.mxu0
        %v5741 = vadd.f32 %v5712, %v5740
        %v5742 = vpop.f32.mrf.mxu0
        %v5743 = vadd.f32 %v5714, %v5742
        %5744 = vmatmul.bf16.gmra.mxu0 %v1229
        %v5745 = vpop.f32.mrf.mxu0
        %v5746 = vadd.f32 %v5717, %v5745
        %v5747 = vpop.f32.mrf.mxu0
        %v5748 = vadd.f32 %v5719, %v5747
        %5749 = vmatmul.bf16.gmra.mxu0 %v1233
        %v5750 = vpop.f32.mrf.mxu0
        %v5751 = vadd.f32 %v5722, %v5750
        %v5752 = vpop.f32.mrf.mxu0
        %v5753 = vadd.f32 %v5724, %v5752
        %5754 = vdwg.mxu0
        %5755 = vmatpush.bf16.msra.mxu0 %v5024
        %5756 = vmatpush.bf16.msra.mxu0 %v5016
        %5757 = vmatpush.bf16.msra.mxu0 %v5008
        %5758 = vmatpush.bf16.msra.mxu0 %v5000
        %5759 = vmatpush.bf16.msra.mxu0 %v4992
        %5760 = vmatpush.bf16.msra.mxu0 %v4984
        %5761 = vmatpush.bf16.msra.mxu0 %v4976
        %5762 = vmatpush.bf16.msra.mxu0 %v4968
        %5763 = vmatmul.bf16.gmra.mxu0 %v1222
        %v5764 = vpop.f32.mrf.mxu0
        %v5765 = vadd.f32 %v5736, %v5764
        %v5766 = vpop.f32.mrf.mxu0
        %v5767 = vadd.f32 %v5738, %v5766
        %5768 = vmatmul.bf16.gmra.mxu0 %v1226
        %v5769 = vpop.f32.mrf.mxu0
        %v5770 = vadd.f32 %v5741, %v5769
        %v5771 = vpop.f32.mrf.mxu0
        %v5772 = vadd.f32 %v5743, %v5771
        %5773 = vmatmul.bf16.gmra.mxu0 %v1230
        %v5774 = vpop.f32.mrf.mxu0
        %v5775 = vadd.f32 %v5746, %v5774
        %v5776 = vpop.f32.mrf.mxu0
        %v5777 = vadd.f32 %v5748, %v5776
        %5778 = vmatmul.bf16.gmra.mxu0 %v1234
        %v5779 = vpop.f32.mrf.mxu0
        %v5780 = vadd.f32 %v5751, %v5779
        %v5781 = vpop.f32.mrf.mxu0
        %v5782 = vadd.f32 %v5753, %v5781
        %5783 = vdwg.mxu0
        %5784 = vmatpush.bf16.msra.mxu0 %v5088
        %5785 = vmatpush.bf16.msra.mxu0 %v5080
        %5786 = vmatpush.bf16.msra.mxu0 %v5072
        %5787 = vmatpush.bf16.msra.mxu0 %v5064
        %5788 = vmatpush.bf16.msra.mxu0 %v5056
        %5789 = vmatpush.bf16.msra.mxu0 %v5048
        %5790 = vmatpush.bf16.msra.mxu0 %v5040
        %5791 = vmatpush.bf16.msra.mxu0 %v5032
        %5792 = vmatmul.bf16.gmra.mxu0 %v1223
        %v5793 = vpop.f32.mrf.mxu0
        %v5794 = vadd.f32 %v5765, %v5793
        %v5795 = vpop.f32.mrf.mxu0
        %v5796 = vadd.f32 %v5767, %v5795
        %5797 = vmatmul.bf16.gmra.mxu0 %v1227
        %v5798 = vpop.f32.mrf.mxu0
        %v5799 = vadd.f32 %v5770, %v5798
        %v5800 = vpop.f32.mrf.mxu0
        %v5801 = vadd.f32 %v5772, %v5800
        %5802 = vmatmul.bf16.gmra.mxu0 %v1231
        %v5803 = vpop.f32.mrf.mxu0
        %v5804 = vadd.f32 %v5775, %v5803
        %v5805 = vpop.f32.mrf.mxu0
        %v5806 = vadd.f32 %v5777, %v5805
        %5807 = vmatmul.bf16.gmra.mxu0 %v1235
        %v5808 = vpop.f32.mrf.mxu0
        %v5809 = vadd.f32 %v5780, %v5808
        %v5810 = vpop.f32.mrf.mxu0
        %v5811 = vadd.f32 %v5782, %v5810
        %5812 = vdwg.mxu0
        %5813 = vmatpush.bf16.msra.mxu0 %v4897
        %5814 = vmatpush.bf16.msra.mxu0 %v4889
        %5815 = vmatpush.bf16.msra.mxu0 %v4881
        %5816 = vmatpush.bf16.msra.mxu0 %v4873
        %5817 = vmatpush.bf16.msra.mxu0 %v4865
        %5818 = vmatpush.bf16.msra.mxu0 %v4857
        %5819 = vmatpush.bf16.msra.mxu0 %v4849
        %5820 = vmatpush.bf16.msra.mxu0 %v4841
        %5821 = vmatmul.bf16.gmra.mxu0 %v1220
        %v5822 = vpop.f32.mrf.mxu0
        %v5823 = vadd.f32 %v3702, %v5822
        %v5824 = vpop.f32.mrf.mxu0
        %v5825 = vadd.f32 %v3704, %v5824
        %5826 = vmatmul.bf16.gmra.mxu0 %v1224
        %v5827 = vpop.f32.mrf.mxu0
        %v5828 = vadd.f32 %v3707, %v5827
        %v5829 = vpop.f32.mrf.mxu0
        %v5830 = vadd.f32 %v3709, %v5829
        %5831 = vmatmul.bf16.gmra.mxu0 %v1228
        %v5832 = vpop.f32.mrf.mxu0
        %v5833 = vadd.f32 %v3712, %v5832
        %v5834 = vpop.f32.mrf.mxu0
        %v5835 = vadd.f32 %v3714, %v5834
        %5836 = vmatmul.bf16.gmra.mxu0 %v1232
        %v5837 = vpop.f32.mrf.mxu0
        %v5838 = vadd.f32 %v3717, %v5837
        %v5839 = vpop.f32.mrf.mxu0
        %v5840 = vadd.f32 %v3719, %v5839
        %5841 = vdwg.mxu0
        %5842 = vmatpush.bf16.msra.mxu0 %v4961
        %5843 = vmatpush.bf16.msra.mxu0 %v4953
        %5844 = vmatpush.bf16.msra.mxu0 %v4945
        %5845 = vmatpush.bf16.msra.mxu0 %v4937
        %5846 = vmatpush.bf16.msra.mxu0 %v4929
        %5847 = vmatpush.bf16.msra.mxu0 %v4921
        %5848 = vmatpush.bf16.msra.mxu0 %v4913
        %5849 = vmatpush.bf16.msra.mxu0 %v4905
        %5850 = vmatmul.bf16.gmra.mxu0 %v1221
        %v5851 = vpop.f32.mrf.mxu0
        %v5852 = vadd.f32 %v5823, %v5851
        %v5853 = vpop.f32.mrf.mxu0
        %v5854 = vadd.f32 %v5825, %v5853
        %5855 = vmatmul.bf16.gmra.mxu0 %v1225
        %v5856 = vpop.f32.mrf.mxu0
        %v5857 = vadd.f32 %v5828, %v5856
        %v5858 = vpop.f32.mrf.mxu0
        %v5859 = vadd.f32 %v5830, %v5858
        %5860 = vmatmul.bf16.gmra.mxu0 %v1229
        %v5861 = vpop.f32.mrf.mxu0
        %v5862 = vadd.f32 %v5833, %v5861
        %v5863 = vpop.f32.mrf.mxu0
        %v5864 = vadd.f32 %v5835, %v5863
        %5865 = vmatmul.bf16.gmra.mxu0 %v1233
        %v5866 = vpop.f32.mrf.mxu0
        %v5867 = vadd.f32 %v5838, %v5866
        %v5868 = vpop.f32.mrf.mxu0
        %v5869 = vadd.f32 %v5840, %v5868
        %5870 = vdwg.mxu0
        %5871 = vmatpush.bf16.msra.mxu0 %v5025
        %5872 = vmatpush.bf16.msra.mxu0 %v5017
        %5873 = vmatpush.bf16.msra.mxu0 %v5009
        %5874 = vmatpush.bf16.msra.mxu0 %v5001
        %5875 = vmatpush.bf16.msra.mxu0 %v4993
        %5876 = vmatpush.bf16.msra.mxu0 %v4985
        %5877 = vmatpush.bf16.msra.mxu0 %v4977
        %5878 = vmatpush.bf16.msra.mxu0 %v4969
        %5879 = vmatmul.bf16.gmra.mxu0 %v1222
        %v5880 = vpop.f32.mrf.mxu0
        %v5881 = vadd.f32 %v5852, %v5880
        %v5882 = vpop.f32.mrf.mxu0
        %v5883 = vadd.f32 %v5854, %v5882
        %5884 = vmatmul.bf16.gmra.mxu0 %v1226
        %v5885 = vpop.f32.mrf.mxu0
        %v5886 = vadd.f32 %v5857, %v5885
        %v5887 = vpop.f32.mrf.mxu0
        %v5888 = vadd.f32 %v5859, %v5887
        %5889 = vmatmul.bf16.gmra.mxu0 %v1230
        %v5890 = vpop.f32.mrf.mxu0
        %v5891 = vadd.f32 %v5862, %v5890
        %v5892 = vpop.f32.mrf.mxu0
        %v5893 = vadd.f32 %v5864, %v5892
        %5894 = vmatmul.bf16.gmra.mxu0 %v1234
        %v5895 = vpop.f32.mrf.mxu0
        %v5896 = vadd.f32 %v5867, %v5895
        %v5897 = vpop.f32.mrf.mxu0
        %v5898 = vadd.f32 %v5869, %v5897
        %5899 = vdwg.mxu0
        %5900 = vmatpush.bf16.msra.mxu0 %v5089
        %5901 = vmatpush.bf16.msra.mxu0 %v5081
        %5902 = vmatpush.bf16.msra.mxu0 %v5073
        %5903 = vmatpush.bf16.msra.mxu0 %v5065
        %5904 = vmatpush.bf16.msra.mxu0 %v5057
        %5905 = vmatpush.bf16.msra.mxu0 %v5049
        %5906 = vmatpush.bf16.msra.mxu0 %v5041
        %5907 = vmatpush.bf16.msra.mxu0 %v5033
        %5908 = vmatmul.bf16.gmra.mxu0 %v1223
        %v5909 = vpop.f32.mrf.mxu0
        %v5910 = vadd.f32 %v5881, %v5909
        %v5911 = vpop.f32.mrf.mxu0
        %v5912 = vadd.f32 %v5883, %v5911
        %5913 = vmatmul.bf16.gmra.mxu0 %v1227
        %v5914 = vpop.f32.mrf.mxu0
        %v5915 = vadd.f32 %v5886, %v5914
        %v5916 = vpop.f32.mrf.mxu0
        %v5917 = vadd.f32 %v5888, %v5916
        %5918 = vmatmul.bf16.gmra.mxu0 %v1231
        %v5919 = vpop.f32.mrf.mxu0
        %v5920 = vadd.f32 %v5891, %v5919
        %v5921 = vpop.f32.mrf.mxu0
        %v5922 = vadd.f32 %v5893, %v5921
        %5923 = vmatmul.bf16.gmra.mxu0 %v1235
        %v5924 = vpop.f32.mrf.mxu0
        %v5925 = vadd.f32 %v5896, %v5924
        %v5926 = vpop.f32.mrf.mxu0
        %v5927 = vadd.f32 %v5898, %v5926
        %5928 = vdwg.mxu0
        %5929 = vmatpush.bf16.msra.mxu0 %v4898
        %5930 = vmatpush.bf16.msra.mxu0 %v4890
        %5931 = vmatpush.bf16.msra.mxu0 %v4882
        %5932 = vmatpush.bf16.msra.mxu0 %v4874
        %5933 = vmatpush.bf16.msra.mxu0 %v4866
        %5934 = vmatpush.bf16.msra.mxu0 %v4858
        %5935 = vmatpush.bf16.msra.mxu0 %v4850
        %5936 = vmatpush.bf16.msra.mxu0 %v4842
        %5937 = vmatmul.bf16.gmra.mxu0 %v1220
        %v5938 = vpop.f32.mrf.mxu0
        %v5939 = vadd.f32 %v3818, %v5938
        %v5940 = vpop.f32.mrf.mxu0
        %v5941 = vadd.f32 %v3820, %v5940
        %5942 = vmatmul.bf16.gmra.mxu0 %v1224
        %v5943 = vpop.f32.mrf.mxu0
        %v5944 = vadd.f32 %v3823, %v5943
        %v5945 = vpop.f32.mrf.mxu0
        %v5946 = vadd.f32 %v3825, %v5945
        %5947 = vmatmul.bf16.gmra.mxu0 %v1228
        %v5948 = vpop.f32.mrf.mxu0
        %v5949 = vadd.f32 %v3828, %v5948
        %v5950 = vpop.f32.mrf.mxu0
        %v5951 = vadd.f32 %v3830, %v5950
        %5952 = vmatmul.bf16.gmra.mxu0 %v1232
        %v5953 = vpop.f32.mrf.mxu0
        %v5954 = vadd.f32 %v3833, %v5953
        %v5955 = vpop.f32.mrf.mxu0
        %v5956 = vadd.f32 %v3835, %v5955
        %5957 = vdwg.mxu0
        %5958 = vmatpush.bf16.msra.mxu0 %v4962
        %5959 = vmatpush.bf16.msra.mxu0 %v4954
        %5960 = vmatpush.bf16.msra.mxu0 %v4946
        %5961 = vmatpush.bf16.msra.mxu0 %v4938
        %5962 = vmatpush.bf16.msra.mxu0 %v4930
        %5963 = vmatpush.bf16.msra.mxu0 %v4922
        %5964 = vmatpush.bf16.msra.mxu0 %v4914
        %5965 = vmatpush.bf16.msra.mxu0 %v4906
        %5966 = vmatmul.bf16.gmra.mxu0 %v1221
        %v5967 = vpop.f32.mrf.mxu0
        %v5968 = vadd.f32 %v5939, %v5967
        %v5969 = vpop.f32.mrf.mxu0
        %v5970 = vadd.f32 %v5941, %v5969
        %5971 = vmatmul.bf16.gmra.mxu0 %v1225
        %v5972 = vpop.f32.mrf.mxu0
        %v5973 = vadd.f32 %v5944, %v5972
        %v5974 = vpop.f32.mrf.mxu0
        %v5975 = vadd.f32 %v5946, %v5974
        %5976 = vmatmul.bf16.gmra.mxu0 %v1229
        %v5977 = vpop.f32.mrf.mxu0
        %v5978 = vadd.f32 %v5949, %v5977
        %v5979 = vpop.f32.mrf.mxu0
        %v5980 = vadd.f32 %v5951, %v5979
        %5981 = vmatmul.bf16.gmra.mxu0 %v1233
        %v5982 = vpop.f32.mrf.mxu0
        %v5983 = vadd.f32 %v5954, %v5982
        %v5984 = vpop.f32.mrf.mxu0
        %v5985 = vadd.f32 %v5956, %v5984
        %5986 = vdwg.mxu0
        %5987 = vmatpush.bf16.msra.mxu0 %v5026
        %5988 = vmatpush.bf16.msra.mxu0 %v5018
        %5989 = vmatpush.bf16.msra.mxu0 %v5010
        %5990 = vmatpush.bf16.msra.mxu0 %v5002
        %5991 = vmatpush.bf16.msra.mxu0 %v4994
        %5992 = vmatpush.bf16.msra.mxu0 %v4986
        %5993 = vmatpush.bf16.msra.mxu0 %v4978
        %5994 = vmatpush.bf16.msra.mxu0 %v4970
        %5995 = vmatmul.bf16.gmra.mxu0 %v1222
        %v5996 = vpop.f32.mrf.mxu0
        %v5997 = vadd.f32 %v5968, %v5996
        %v5998 = vpop.f32.mrf.mxu0
        %v5999 = vadd.f32 %v5970, %v5998
        %6000 = vmatmul.bf16.gmra.mxu0 %v1226
        %v6001 = vpop.f32.mrf.mxu0
        %v6002 = vadd.f32 %v5973, %v6001
        %v6003 = vpop.f32.mrf.mxu0
        %v6004 = vadd.f32 %v5975, %v6003
        %6005 = vmatmul.bf16.gmra.mxu0 %v1230
        %v6006 = vpop.f32.mrf.mxu0
        %v6007 = vadd.f32 %v5978, %v6006
        %v6008 = vpop.f32.mrf.mxu0
        %v6009 = vadd.f32 %v5980, %v6008
        %6010 = vmatmul.bf16.gmra.mxu0 %v1234
        %v6011 = vpop.f32.mrf.mxu0
        %v6012 = vadd.f32 %v5983, %v6011
        %v6013 = vpop.f32.mrf.mxu0
        %v6014 = vadd.f32 %v5985, %v6013
        %6015 = vdwg.mxu0
        %6016 = vmatpush.bf16.msra.mxu0 %v5090
        %6017 = vmatpush.bf16.msra.mxu0 %v5082
        %6018 = vmatpush.bf16.msra.mxu0 %v5074
        %6019 = vmatpush.bf16.msra.mxu0 %v5066
        %6020 = vmatpush.bf16.msra.mxu0 %v5058
        %6021 = vmatpush.bf16.msra.mxu0 %v5050
        %6022 = vmatpush.bf16.msra.mxu0 %v5042
        %6023 = vmatpush.bf16.msra.mxu0 %v5034
        %6024 = vmatmul.bf16.gmra.mxu0 %v1223
        %v6025 = vpop.f32.mrf.mxu0
        %v6026 = vadd.f32 %v5997, %v6025
        %v6027 = vpop.f32.mrf.mxu0
        %v6028 = vadd.f32 %v5999, %v6027
        %6029 = vmatmul.bf16.gmra.mxu0 %v1227
        %v6030 = vpop.f32.mrf.mxu0
        %v6031 = vadd.f32 %v6002, %v6030
        %v6032 = vpop.f32.mrf.mxu0
        %v6033 = vadd.f32 %v6004, %v6032
        %6034 = vmatmul.bf16.gmra.mxu0 %v1231
        %v6035 = vpop.f32.mrf.mxu0
        %v6036 = vadd.f32 %v6007, %v6035
        %v6037 = vpop.f32.mrf.mxu0
        %v6038 = vadd.f32 %v6009, %v6037
        %6039 = vmatmul.bf16.gmra.mxu0 %v1235
        %v6040 = vpop.f32.mrf.mxu0
        %v6041 = vadd.f32 %v6012, %v6040
        %v6042 = vpop.f32.mrf.mxu0
        %v6043 = vadd.f32 %v6014, %v6042
        %6044 = vdwg.mxu0
        %6045 = vmatpush.bf16.msra.mxu0 %v4899
        %6046 = vmatpush.bf16.msra.mxu0 %v4891
        %6047 = vmatpush.bf16.msra.mxu0 %v4883
        %6048 = vmatpush.bf16.msra.mxu0 %v4875
        %6049 = vmatpush.bf16.msra.mxu0 %v4867
        %6050 = vmatpush.bf16.msra.mxu0 %v4859
        %6051 = vmatpush.bf16.msra.mxu0 %v4851
        %6052 = vmatpush.bf16.msra.mxu0 %v4843
        %6053 = vmatmul.bf16.gmra.mxu0 %v1220
        %v6054 = vpop.f32.mrf.mxu0
        %v6055 = vadd.f32 %v3934, %v6054
        %v6056 = vpop.f32.mrf.mxu0
        %v6057 = vadd.f32 %v3936, %v6056
        %6058 = vmatmul.bf16.gmra.mxu0 %v1224
        %v6059 = vpop.f32.mrf.mxu0
        %v6060 = vadd.f32 %v3939, %v6059
        %v6061 = vpop.f32.mrf.mxu0
        %v6062 = vadd.f32 %v3941, %v6061
        %6063 = vmatmul.bf16.gmra.mxu0 %v1228
        %v6064 = vpop.f32.mrf.mxu0
        %v6065 = vadd.f32 %v3944, %v6064
        %v6066 = vpop.f32.mrf.mxu0
        %v6067 = vadd.f32 %v3946, %v6066
        %6068 = vmatmul.bf16.gmra.mxu0 %v1232
        %v6069 = vpop.f32.mrf.mxu0
        %v6070 = vadd.f32 %v3949, %v6069
        %v6071 = vpop.f32.mrf.mxu0
        %v6072 = vadd.f32 %v3951, %v6071
        %6073 = vdwg.mxu0
        %6074 = vmatpush.bf16.msra.mxu0 %v4963
        %6075 = vmatpush.bf16.msra.mxu0 %v4955
        %6076 = vmatpush.bf16.msra.mxu0 %v4947
        %6077 = vmatpush.bf16.msra.mxu0 %v4939
        %6078 = vmatpush.bf16.msra.mxu0 %v4931
        %6079 = vmatpush.bf16.msra.mxu0 %v4923
        %6080 = vmatpush.bf16.msra.mxu0 %v4915
        %6081 = vmatpush.bf16.msra.mxu0 %v4907
        %6082 = vmatmul.bf16.gmra.mxu0 %v1221
        %v6083 = vpop.f32.mrf.mxu0
        %v6084 = vadd.f32 %v6055, %v6083
        %v6085 = vpop.f32.mrf.mxu0
        %v6086 = vadd.f32 %v6057, %v6085
        %6087 = vmatmul.bf16.gmra.mxu0 %v1225
        %v6088 = vpop.f32.mrf.mxu0
        %v6089 = vadd.f32 %v6060, %v6088
        %v6090 = vpop.f32.mrf.mxu0
        %v6091 = vadd.f32 %v6062, %v6090
        %6092 = vmatmul.bf16.gmra.mxu0 %v1229
        %v6093 = vpop.f32.mrf.mxu0
        %v6094 = vadd.f32 %v6065, %v6093
        %v6095 = vpop.f32.mrf.mxu0
        %v6096 = vadd.f32 %v6067, %v6095
        %6097 = vmatmul.bf16.gmra.mxu0 %v1233
        %v6098 = vpop.f32.mrf.mxu0
        %v6099 = vadd.f32 %v6070, %v6098
        %v6100 = vpop.f32.mrf.mxu0
        %v6101 = vadd.f32 %v6072, %v6100
        %6102 = vdwg.mxu0
        %6103 = vmatpush.bf16.msra.mxu0 %v5027
        %6104 = vmatpush.bf16.msra.mxu0 %v5019
        %6105 = vmatpush.bf16.msra.mxu0 %v5011
        %6106 = vmatpush.bf16.msra.mxu0 %v5003
        %6107 = vmatpush.bf16.msra.mxu0 %v4995
        %6108 = vmatpush.bf16.msra.mxu0 %v4987
        %6109 = vmatpush.bf16.msra.mxu0 %v4979
        %6110 = vmatpush.bf16.msra.mxu0 %v4971
        %6111 = vmatmul.bf16.gmra.mxu0 %v1222
        %v6112 = vpop.f32.mrf.mxu0
        %v6113 = vadd.f32 %v6084, %v6112
        %v6114 = vpop.f32.mrf.mxu0
        %v6115 = vadd.f32 %v6086, %v6114
        %6116 = vmatmul.bf16.gmra.mxu0 %v1226
        %v6117 = vpop.f32.mrf.mxu0
        %v6118 = vadd.f32 %v6089, %v6117
        %v6119 = vpop.f32.mrf.mxu0
        %v6120 = vadd.f32 %v6091, %v6119
        %6121 = vmatmul.bf16.gmra.mxu0 %v1230
        %v6122 = vpop.f32.mrf.mxu0
        %v6123 = vadd.f32 %v6094, %v6122
        %v6124 = vpop.f32.mrf.mxu0
        %v6125 = vadd.f32 %v6096, %v6124
        %6126 = vmatmul.bf16.gmra.mxu0 %v1234
        %v6127 = vpop.f32.mrf.mxu0
        %v6128 = vadd.f32 %v6099, %v6127
        %v6129 = vpop.f32.mrf.mxu0
        %v6130 = vadd.f32 %v6101, %v6129
        %6131 = vdwg.mxu0
        %6132 = vmatpush.bf16.msra.mxu0 %v5091
        %6133 = vmatpush.bf16.msra.mxu0 %v5083
        %6134 = vmatpush.bf16.msra.mxu0 %v5075
        %6135 = vmatpush.bf16.msra.mxu0 %v5067
        %6136 = vmatpush.bf16.msra.mxu0 %v5059
        %6137 = vmatpush.bf16.msra.mxu0 %v5051
        %6138 = vmatpush.bf16.msra.mxu0 %v5043
        %6139 = vmatpush.bf16.msra.mxu0 %v5035
        %6140 = vmatmul.bf16.gmra.mxu0 %v1223
        %v6141 = vpop.f32.mrf.mxu0
        %v6142 = vadd.f32 %v6113, %v6141
        %v6143 = vpop.f32.mrf.mxu0
        %v6144 = vadd.f32 %v6115, %v6143
        %6145 = vmatmul.bf16.gmra.mxu0 %v1227
        %v6146 = vpop.f32.mrf.mxu0
        %v6147 = vadd.f32 %v6118, %v6146
        %v6148 = vpop.f32.mrf.mxu0
        %v6149 = vadd.f32 %v6120, %v6148
        %6150 = vmatmul.bf16.gmra.mxu0 %v1231
        %v6151 = vpop.f32.mrf.mxu0
        %v6152 = vadd.f32 %v6123, %v6151
        %v6153 = vpop.f32.mrf.mxu0
        %v6154 = vadd.f32 %v6125, %v6153
        %6155 = vmatmul.bf16.gmra.mxu0 %v1235
        %v6156 = vpop.f32.mrf.mxu0
        %v6157 = vadd.f32 %v6128, %v6156
        %v6158 = vpop.f32.mrf.mxu0
        %v6159 = vadd.f32 %v6130, %v6158
        %6160 = vdwg.mxu0
        %6161 = vmatpush.bf16.msra.mxu0 %v4900
        %6162 = vmatpush.bf16.msra.mxu0 %v4892
        %6163 = vmatpush.bf16.msra.mxu0 %v4884
        %6164 = vmatpush.bf16.msra.mxu0 %v4876
        %6165 = vmatpush.bf16.msra.mxu0 %v4868
        %6166 = vmatpush.bf16.msra.mxu0 %v4860
        %6167 = vmatpush.bf16.msra.mxu0 %v4852
        %6168 = vmatpush.bf16.msra.mxu0 %v4844
        %6169 = vmatmul.bf16.gmra.mxu0 %v1220
        %v6170 = vpop.f32.mrf.mxu0
        %v6171 = vadd.f32 %v4050, %v6170
        %v6172 = vpop.f32.mrf.mxu0
        %v6173 = vadd.f32 %v4052, %v6172
        %6174 = vmatmul.bf16.gmra.mxu0 %v1224
        %v6175 = vpop.f32.mrf.mxu0
        %v6176 = vadd.f32 %v4055, %v6175
        %v6177 = vpop.f32.mrf.mxu0
        %v6178 = vadd.f32 %v4057, %v6177
        %6179 = vmatmul.bf16.gmra.mxu0 %v1228
        %v6180 = vpop.f32.mrf.mxu0
        %v6181 = vadd.f32 %v4060, %v6180
        %v6182 = vpop.f32.mrf.mxu0
        %v6183 = vadd.f32 %v4062, %v6182
        %6184 = vmatmul.bf16.gmra.mxu0 %v1232
        %v6185 = vpop.f32.mrf.mxu0
        %v6186 = vadd.f32 %v4065, %v6185
        %v6187 = vpop.f32.mrf.mxu0
        %v6188 = vadd.f32 %v4067, %v6187
        %6189 = vdwg.mxu0
        %6190 = vmatpush.bf16.msra.mxu0 %v4964
        %6191 = vmatpush.bf16.msra.mxu0 %v4956
        %6192 = vmatpush.bf16.msra.mxu0 %v4948
        %6193 = vmatpush.bf16.msra.mxu0 %v4940
        %6194 = vmatpush.bf16.msra.mxu0 %v4932
        %6195 = vmatpush.bf16.msra.mxu0 %v4924
        %6196 = vmatpush.bf16.msra.mxu0 %v4916
        %6197 = vmatpush.bf16.msra.mxu0 %v4908
        %6198 = vmatmul.bf16.gmra.mxu0 %v1221
        %v6199 = vpop.f32.mrf.mxu0
        %v6200 = vadd.f32 %v6171, %v6199
        %v6201 = vpop.f32.mrf.mxu0
        %v6202 = vadd.f32 %v6173, %v6201
        %6203 = vmatmul.bf16.gmra.mxu0 %v1225
        %v6204 = vpop.f32.mrf.mxu0
        %v6205 = vadd.f32 %v6176, %v6204
        %v6206 = vpop.f32.mrf.mxu0
        %v6207 = vadd.f32 %v6178, %v6206
        %6208 = vmatmul.bf16.gmra.mxu0 %v1229
        %v6209 = vpop.f32.mrf.mxu0
        %v6210 = vadd.f32 %v6181, %v6209
        %v6211 = vpop.f32.mrf.mxu0
        %v6212 = vadd.f32 %v6183, %v6211
        %6213 = vmatmul.bf16.gmra.mxu0 %v1233
        %v6214 = vpop.f32.mrf.mxu0
        %v6215 = vadd.f32 %v6186, %v6214
        %v6216 = vpop.f32.mrf.mxu0
        %v6217 = vadd.f32 %v6188, %v6216
        %6218 = vdwg.mxu0
        %6219 = vmatpush.bf16.msra.mxu0 %v5028
        %6220 = vmatpush.bf16.msra.mxu0 %v5020
        %6221 = vmatpush.bf16.msra.mxu0 %v5012
        %6222 = vmatpush.bf16.msra.mxu0 %v5004
        %6223 = vmatpush.bf16.msra.mxu0 %v4996
        %6224 = vmatpush.bf16.msra.mxu0 %v4988
        %6225 = vmatpush.bf16.msra.mxu0 %v4980
        %6226 = vmatpush.bf16.msra.mxu0 %v4972
        %6227 = vmatmul.bf16.gmra.mxu0 %v1222
        %v6228 = vpop.f32.mrf.mxu0
        %v6229 = vadd.f32 %v6200, %v6228
        %v6230 = vpop.f32.mrf.mxu0
        %v6231 = vadd.f32 %v6202, %v6230
        %6232 = vmatmul.bf16.gmra.mxu0 %v1226
        %v6233 = vpop.f32.mrf.mxu0
        %v6234 = vadd.f32 %v6205, %v6233
        %v6235 = vpop.f32.mrf.mxu0
        %v6236 = vadd.f32 %v6207, %v6235
        %6237 = vmatmul.bf16.gmra.mxu0 %v1230
        %v6238 = vpop.f32.mrf.mxu0
        %v6239 = vadd.f32 %v6210, %v6238
        %v6240 = vpop.f32.mrf.mxu0
        %v6241 = vadd.f32 %v6212, %v6240
        %6242 = vmatmul.bf16.gmra.mxu0 %v1234
        %v6243 = vpop.f32.mrf.mxu0
        %v6244 = vadd.f32 %v6215, %v6243
        %v6245 = vpop.f32.mrf.mxu0
        %v6246 = vadd.f32 %v6217, %v6245
        %6247 = vdwg.mxu0
        %6248 = vmatpush.bf16.msra.mxu0 %v5092
        %6249 = vmatpush.bf16.msra.mxu0 %v5084
        %6250 = vmatpush.bf16.msra.mxu0 %v5076
        %6251 = vmatpush.bf16.msra.mxu0 %v5068
        %6252 = vmatpush.bf16.msra.mxu0 %v5060
        %6253 = vmatpush.bf16.msra.mxu0 %v5052
        %6254 = vmatpush.bf16.msra.mxu0 %v5044
        %6255 = vmatpush.bf16.msra.mxu0 %v5036
        %6256 = vmatmul.bf16.gmra.mxu0 %v1223
        %v6257 = vpop.f32.mrf.mxu0
        %v6258 = vadd.f32 %v6229, %v6257
        %v6259 = vpop.f32.mrf.mxu0
        %v6260 = vadd.f32 %v6231, %v6259
        %6261 = vmatmul.bf16.gmra.mxu0 %v1227
        %v6262 = vpop.f32.mrf.mxu0
        %v6263 = vadd.f32 %v6234, %v6262
        %v6264 = vpop.f32.mrf.mxu0
        %v6265 = vadd.f32 %v6236, %v6264
        %6266 = vmatmul.bf16.gmra.mxu0 %v1231
        %v6267 = vpop.f32.mrf.mxu0
        %v6268 = vadd.f32 %v6239, %v6267
        %v6269 = vpop.f32.mrf.mxu0
        %v6270 = vadd.f32 %v6241, %v6269
        %6271 = vmatmul.bf16.gmra.mxu0 %v1235
        %v6272 = vpop.f32.mrf.mxu0
        %v6273 = vadd.f32 %v6244, %v6272
        %v6274 = vpop.f32.mrf.mxu0
        %v6275 = vadd.f32 %v6246, %v6274
        %6276 = vdwg.mxu0
        %v6277 = vrot.slane %v1188, 1
        %v6278 = vrot.slane %v1189, 1
        %v6279 = vrot.slane %v1190, 1
        %v6280 = vrot.slane %v1191, 1
        %v6281 = vrot.slane %v1192, 1
        %v6282 = vrot.slane %v1193, 1
        %v6283 = vrot.slane %v1194, 1
        %v6284 = vrot.slane %v1195, 1
        %v6285 = vrot.slane %v1196, 1
        %v6286 = vrot.slane %v1197, 1
        %v6287 = vrot.slane %v1198, 1
        %v6288 = vrot.slane %v1199, 1
        %v6289 = vrot.slane %v1200, 1
        %v6290 = vrot.slane %v1201, 1
        %v6291 = vrot.slane %v1202, 1
        %v6292 = vrot.slane %v1203, 1
        %v6293 = vrot.slane %v1204, 1
        %v6294 = vrot.slane %v1205, 1
        %v6295 = vrot.slane %v1206, 1
        %v6296 = vrot.slane %v1207, 1
        %v6297 = vrot.slane %v1208, 1
        %v6298 = vrot.slane %v1209, 1
        %v6299 = vrot.slane %v1210, 1
        %v6300 = vrot.slane %v1211, 1
        %v6301 = vrot.slane %v1212, 1
        %v6302 = vrot.slane %v1213, 1
        %v6303 = vrot.slane %v1214, 1
        %v6304 = vrot.slane %v1215, 1
        %v6305 = vrot.slane %v1216, 1
        %v6306 = vrot.slane %v1217, 1
        %v6307 = vrot.slane %v1218, 1
        %v6308 = vrot.slane %v1219, 1
        %v6309 = vsel %vm868, %v6301, %v6305
        %v6310 = vsel %vm868, %v6302, %v6306
        %v6311 = vsel %vm868, %v6303, %v6307
        %v6312 = vsel %vm868, %v6304, %v6308
        %v6313 = vsel %vm868, %v6297, %v6301
        %v6314 = vsel %vm868, %v6298, %v6302
        %v6315 = vsel %vm868, %v6299, %v6303
        %v6316 = vsel %vm868, %v6300, %v6304
        %v6317 = vsel %vm868, %v6293, %v6297
        %v6318 = vsel %vm868, %v6294, %v6298
        %v6319 = vsel %vm868, %v6295, %v6299
        %v6320 = vsel %vm868, %v6296, %v6300
        %v6321 = vsel %vm868, %v6289, %v6293
        %v6322 = vsel %vm868, %v6290, %v6294
        %v6323 = vsel %vm868, %v6291, %v6295
        %v6324 = vsel %vm868, %v6292, %v6296
        %v6325 = vsel %vm868, %v6285, %v6289
        %v6326 = vsel %vm868, %v6286, %v6290
        %v6327 = vsel %vm868, %v6287, %v6291
        %v6328 = vsel %vm868, %v6288, %v6292
        %v6329 = vsel %vm868, %v6281, %v6285
        %v6330 = vsel %vm868, %v6282, %v6286
        %v6331 = vsel %vm868, %v6283, %v6287
        %v6332 = vsel %vm868, %v6284, %v6288
        %v6333 = vsel %vm868, %v6277, %v6281
        %v6334 = vsel %vm868, %v6278, %v6282
        %v6335 = vsel %vm868, %v6279, %v6283
        %v6336 = vsel %vm868, %v6280, %v6284
        %v6337 = vsel %vm868, %v6305, %v6277
        %v6338 = vsel %vm868, %v6306, %v6278
        %v6339 = vsel %vm868, %v6307, %v6279
        %v6340 = vsel %vm868, %v6308, %v6280
        %v6341 = vmul.f32 %v6333, %v879
        %v6342 = vmul.f32 %v6334, %v879
        %v6343 = vmul.f32 %v6335, %v879
        %v6344 = vmul.f32 %v6336, %v879
        %v6345 = vmul.f32 %v6329, %v883
        %v6346 = vmul.f32 %v6330, %v883
        %v6347 = vmul.f32 %v6331, %v883
        %v6348 = vmul.f32 %v6332, %v883
        %v6349 = vmul.f32 %v6325, %v887
        %v6350 = vmul.f32 %v6326, %v887
        %v6351 = vmul.f32 %v6327, %v887
        %v6352 = vmul.f32 %v6328, %v887
        %v6353 = vmul.f32 %v6321, %v891
        %v6354 = vmul.f32 %v6322, %v891
        %v6355 = vmul.f32 %v6323, %v891
        %v6356 = vmul.f32 %v6324, %v891
        %v6357 = vmul.f32 %v6317, %v895
        %v6358 = vmul.f32 %v6318, %v895
        %v6359 = vmul.f32 %v6319, %v895
        %v6360 = vmul.f32 %v6320, %v895
        %v6361 = vmul.f32 %v6313, %v899
        %v6362 = vmul.f32 %v6314, %v899
        %v6363 = vmul.f32 %v6315, %v899
        %v6364 = vmul.f32 %v6316, %v899
        %v6365 = vmul.f32 %v6309, %v903
        %v6366 = vmul.f32 %v6310, %v903
        %v6367 = vmul.f32 %v6311, %v903
        %v6368 = vmul.f32 %v6312, %v903
        %v6369 = vmul.f32 %v6337, %v907
        %v6370 = vmul.f32 %v6338, %v907
        %v6371 = vmul.f32 %v6339, %v907
        %v6372 = vmul.f32 %v6340, %v907
        %v6373 = vpack.c.bf16 %v6345, %v6341
        %v6374 = vpack.c.bf16 %v6346, %v6342
        %v6375 = vpack.c.bf16 %v6347, %v6343
        %v6376 = vpack.c.bf16 %v6348, %v6344
        %v6377 = vpack.c.bf16 %v6353, %v6349
        %v6378 = vpack.c.bf16 %v6354, %v6350
        %v6379 = vpack.c.bf16 %v6355, %v6351
        %v6380 = vpack.c.bf16 %v6356, %v6352
        %v6381 = vpack.c.bf16 %v6361, %v6357
        %v6382 = vpack.c.bf16 %v6362, %v6358
        %v6383 = vpack.c.bf16 %v6363, %v6359
        %v6384 = vpack.c.bf16 %v6364, %v6360
        %v6385 = vpack.c.bf16 %v6369, %v6365
        %v6386 = vpack.c.bf16 %v6370, %v6366
        %v6387 = vpack.c.bf16 %v6371, %v6367
        %v6388 = vpack.c.bf16 %v6372, %v6368
        %s6389 = scalar_lea.vmem [#allocation7], 4096
        %v6390 = vld [vmem:[%s6389] sm:$0xff]
        %v6391 = vld [vmem:[%s6389 + $0x8] sm:$0xff]
        %v6392 = vld [vmem:[%s6389 + $0x10] sm:$0xff]
        %v6393 = vld [vmem:[%s6389 + $0x18] sm:$0xff]
        %v6394 = vld [vmem:[%s6389 + $0x20] sm:$0xff]
        %v6395 = vld [vmem:[%s6389 + $0x28] sm:$0xff]
        %v6396 = vld [vmem:[%s6389 + $0x30] sm:$0xff]
        %v6397 = vld [vmem:[%s6389 + $0x38] sm:$0xff]
        %v6398 = vld [vmem:[%s6389 + $0x40] sm:$0xff]
        %v6399 = vld [vmem:[%s6389 + $0x48] sm:$0xff]
        %v6400 = vld [vmem:[%s6389 + $0x50] sm:$0xff]
        %v6401 = vld [vmem:[%s6389 + $0x58] sm:$0xff]
        %v6402 = vld [vmem:[%s6389 + $0x60] sm:$0xff]
        %v6403 = vld [vmem:[%s6389 + $0x68] sm:$0xff]
        %v6404 = vld [vmem:[%s6389 + $0x70] sm:$0xff]
        %v6405 = vld [vmem:[%s6389 + $0x78] sm:$0xff]
        %v6406 = vld [vmem:[%s6389 + $0x80] sm:$0xff]
        %v6407 = vld [vmem:[%s6389 + $0x88] sm:$0xff]
        %v6408 = vld [vmem:[%s6389 + $0x90] sm:$0xff]
        %v6409 = vld [vmem:[%s6389 + $0x98] sm:$0xff]
        %v6410 = vld [vmem:[%s6389 + $0xa0] sm:$0xff]
        %v6411 = vld [vmem:[%s6389 + $0xa8] sm:$0xff]
        %v6412 = vld [vmem:[%s6389 + $0xb0] sm:$0xff]
        %v6413 = vld [vmem:[%s6389 + $0xb8] sm:$0xff]
        %v6414 = vld [vmem:[%s6389 + $0xc0] sm:$0xff]
        %v6415 = vld [vmem:[%s6389 + $0xc8] sm:$0xff]
        %v6416 = vld [vmem:[%s6389 + $0xd0] sm:$0xff]
        %v6417 = vld [vmem:[%s6389 + $0xd8] sm:$0xff]
        %v6418 = vld [vmem:[%s6389 + $0xe0] sm:$0xff]
        %v6419 = vld [vmem:[%s6389 + $0xe8] sm:$0xff]
        %v6420 = vld [vmem:[%s6389 + $0xf0] sm:$0xff]
        %v6421 = vld [vmem:[%s6389 + $0xf8] sm:$0xff]
        %v6422 = vld [vmem:[%s6389 + $0x100] sm:$0xff]
        %v6423 = vld [vmem:[%s6389 + $0x108] sm:$0xff]
        %v6424 = vld [vmem:[%s6389 + $0x110] sm:$0xff]
        %v6425 = vld [vmem:[%s6389 + $0x118] sm:$0xff]
        %v6426 = vld [vmem:[%s6389 + $0x120] sm:$0xff]
        %v6427 = vld [vmem:[%s6389 + $0x128] sm:$0xff]
        %v6428 = vld [vmem:[%s6389 + $0x130] sm:$0xff]
        %v6429 = vld [vmem:[%s6389 + $0x138] sm:$0xff]
        %v6430 = vld [vmem:[%s6389 + $0x140] sm:$0xff]
        %v6431 = vld [vmem:[%s6389 + $0x148] sm:$0xff]
        %v6432 = vld [vmem:[%s6389 + $0x150] sm:$0xff]
        %v6433 = vld [vmem:[%s6389 + $0x158] sm:$0xff]
        %v6434 = vld [vmem:[%s6389 + $0x160] sm:$0xff]
        %v6435 = vld [vmem:[%s6389 + $0x168] sm:$0xff]
        %v6436 = vld [vmem:[%s6389 + $0x170] sm:$0xff]
        %v6437 = vld [vmem:[%s6389 + $0x178] sm:$0xff]
        %v6438 = vld [vmem:[%s6389 + $0x180] sm:$0xff]
        %v6439 = vld [vmem:[%s6389 + $0x188] sm:$0xff]
        %v6440 = vld [vmem:[%s6389 + $0x190] sm:$0xff]
        %v6441 = vld [vmem:[%s6389 + $0x198] sm:$0xff]
        %v6442 = vld [vmem:[%s6389 + $0x1a0] sm:$0xff]
        %v6443 = vld [vmem:[%s6389 + $0x1a8] sm:$0xff]
        %v6444 = vld [vmem:[%s6389 + $0x1b0] sm:$0xff]
        %v6445 = vld [vmem:[%s6389 + $0x1b8] sm:$0xff]
        %v6446 = vld [vmem:[%s6389 + $0x1c0] sm:$0xff]
        %v6447 = vld [vmem:[%s6389 + $0x1c8] sm:$0xff]
        %v6448 = vld [vmem:[%s6389 + $0x1d0] sm:$0xff]
        %v6449 = vld [vmem:[%s6389 + $0x1d8] sm:$0xff]
        %v6450 = vld [vmem:[%s6389 + $0x1e0] sm:$0xff]
        %v6451 = vld [vmem:[%s6389 + $0x1e8] sm:$0xff]
        %v6452 = vld [vmem:[%s6389 + $0x1f0] sm:$0xff]
        %v6453 = vld [vmem:[%s6389 + $0x1f8] sm:$0xff]
        %v6454 = vld [vmem:[%s6389 + $0x200] sm:$0xff]
        %v6455 = vld [vmem:[%s6389 + $0x208] sm:$0xff]
        %v6456 = vld [vmem:[%s6389 + $0x210] sm:$0xff]
        %v6457 = vld [vmem:[%s6389 + $0x218] sm:$0xff]
        %v6458 = vld [vmem:[%s6389 + $0x220] sm:$0xff]
        %v6459 = vld [vmem:[%s6389 + $0x228] sm:$0xff]
        %v6460 = vld [vmem:[%s6389 + $0x230] sm:$0xff]
        %v6461 = vld [vmem:[%s6389 + $0x238] sm:$0xff]
        %v6462 = vld [vmem:[%s6389 + $0x240] sm:$0xff]
        %v6463 = vld [vmem:[%s6389 + $0x248] sm:$0xff]
        %v6464 = vld [vmem:[%s6389 + $0x250] sm:$0xff]
        %v6465 = vld [vmem:[%s6389 + $0x258] sm:$0xff]
        %v6466 = vld [vmem:[%s6389 + $0x260] sm:$0xff]
        %v6467 = vld [vmem:[%s6389 + $0x268] sm:$0xff]
        %v6468 = vld [vmem:[%s6389 + $0x270] sm:$0xff]
        %v6469 = vld [vmem:[%s6389 + $0x278] sm:$0xff]
        %v6470 = vld [vmem:[%s6389 + $0x280] sm:$0xff]
        %v6471 = vld [vmem:[%s6389 + $0x288] sm:$0xff]
        %v6472 = vld [vmem:[%s6389 + $0x290] sm:$0xff]
        %v6473 = vld [vmem:[%s6389 + $0x298] sm:$0xff]
        %v6474 = vld [vmem:[%s6389 + $0x2a0] sm:$0xff]
        %v6475 = vld [vmem:[%s6389 + $0x2a8] sm:$0xff]
        %v6476 = vld [vmem:[%s6389 + $0x2b0] sm:$0xff]
        %v6477 = vld [vmem:[%s6389 + $0x2b8] sm:$0xff]
        %v6478 = vld [vmem:[%s6389 + $0x2c0] sm:$0xff]
        %v6479 = vld [vmem:[%s6389 + $0x2c8] sm:$0xff]
        %v6480 = vld [vmem:[%s6389 + $0x2d0] sm:$0xff]
        %v6481 = vld [vmem:[%s6389 + $0x2d8] sm:$0xff]
        %v6482 = vld [vmem:[%s6389 + $0x2e0] sm:$0xff]
        %v6483 = vld [vmem:[%s6389 + $0x2e8] sm:$0xff]
        %v6484 = vld [vmem:[%s6389 + $0x2f0] sm:$0xff]
        %v6485 = vld [vmem:[%s6389 + $0x2f8] sm:$0xff]
        %v6486 = vld [vmem:[%s6389 + $0x300] sm:$0xff]
        %v6487 = vld [vmem:[%s6389 + $0x308] sm:$0xff]
        %v6488 = vld [vmem:[%s6389 + $0x310] sm:$0xff]
        %v6489 = vld [vmem:[%s6389 + $0x318] sm:$0xff]
        %v6490 = vld [vmem:[%s6389 + $0x320] sm:$0xff]
        %v6491 = vld [vmem:[%s6389 + $0x328] sm:$0xff]
        %v6492 = vld [vmem:[%s6389 + $0x330] sm:$0xff]
        %v6493 = vld [vmem:[%s6389 + $0x338] sm:$0xff]
        %v6494 = vld [vmem:[%s6389 + $0x340] sm:$0xff]
        %v6495 = vld [vmem:[%s6389 + $0x348] sm:$0xff]
        %v6496 = vld [vmem:[%s6389 + $0x350] sm:$0xff]
        %v6497 = vld [vmem:[%s6389 + $0x358] sm:$0xff]
        %v6498 = vld [vmem:[%s6389 + $0x360] sm:$0xff]
        %v6499 = vld [vmem:[%s6389 + $0x368] sm:$0xff]
        %v6500 = vld [vmem:[%s6389 + $0x370] sm:$0xff]
        %v6501 = vld [vmem:[%s6389 + $0x378] sm:$0xff]
        %v6502 = vld [vmem:[%s6389 + $0x380] sm:$0xff]
        %v6503 = vld [vmem:[%s6389 + $0x388] sm:$0xff]
        %v6504 = vld [vmem:[%s6389 + $0x390] sm:$0xff]
        %v6505 = vld [vmem:[%s6389 + $0x398] sm:$0xff]
        %v6506 = vld [vmem:[%s6389 + $0x3a0] sm:$0xff]
        %v6507 = vld [vmem:[%s6389 + $0x3a8] sm:$0xff]
        %v6508 = vld [vmem:[%s6389 + $0x3b0] sm:$0xff]
        %v6509 = vld [vmem:[%s6389 + $0x3b8] sm:$0xff]
        %v6510 = vld [vmem:[%s6389 + $0x3c0] sm:$0xff]
        %v6511 = vld [vmem:[%s6389 + $0x3c8] sm:$0xff]
        %v6512 = vld [vmem:[%s6389 + $0x3d0] sm:$0xff]
        %v6513 = vld [vmem:[%s6389 + $0x3d8] sm:$0xff]
        %v6514 = vld [vmem:[%s6389 + $0x3e0] sm:$0xff]
        %v6515 = vld [vmem:[%s6389 + $0x3e8] sm:$0xff]
        %v6516 = vld [vmem:[%s6389 + $0x3f0] sm:$0xff]
        %v6517 = vld [vmem:[%s6389 + $0x3f8] sm:$0xff]
        %v6518 = vld [vmem:[%s6389 + $0x400] sm:$0xff]
        %v6519 = vld [vmem:[%s6389 + $0x408] sm:$0xff]
        %v6520 = vld [vmem:[%s6389 + $0x410] sm:$0xff]
        %v6521 = vld [vmem:[%s6389 + $0x418] sm:$0xff]
        %v6522 = vld [vmem:[%s6389 + $0x420] sm:$0xff]
        %v6523 = vld [vmem:[%s6389 + $0x428] sm:$0xff]
        %v6524 = vld [vmem:[%s6389 + $0x430] sm:$0xff]
        %v6525 = vld [vmem:[%s6389 + $0x438] sm:$0xff]
        %v6526 = vld [vmem:[%s6389 + $0x440] sm:$0xff]
        %v6527 = vld [vmem:[%s6389 + $0x448] sm:$0xff]
        %v6528 = vld [vmem:[%s6389 + $0x450] sm:$0xff]
        %v6529 = vld [vmem:[%s6389 + $0x458] sm:$0xff]
        %v6530 = vld [vmem:[%s6389 + $0x460] sm:$0xff]
        %v6531 = vld [vmem:[%s6389 + $0x468] sm:$0xff]
        %v6532 = vld [vmem:[%s6389 + $0x470] sm:$0xff]
        %v6533 = vld [vmem:[%s6389 + $0x478] sm:$0xff]
        %v6534 = vld [vmem:[%s6389 + $0x480] sm:$0xff]
        %v6535 = vld [vmem:[%s6389 + $0x488] sm:$0xff]
        %v6536 = vld [vmem:[%s6389 + $0x490] sm:$0xff]
        %v6537 = vld [vmem:[%s6389 + $0x498] sm:$0xff]
        %v6538 = vld [vmem:[%s6389 + $0x4a0] sm:$0xff]
        %v6539 = vld [vmem:[%s6389 + $0x4a8] sm:$0xff]
        %v6540 = vld [vmem:[%s6389 + $0x4b0] sm:$0xff]
        %v6541 = vld [vmem:[%s6389 + $0x4b8] sm:$0xff]
        %v6542 = vld [vmem:[%s6389 + $0x4c0] sm:$0xff]
        %v6543 = vld [vmem:[%s6389 + $0x4c8] sm:$0xff]
        %v6544 = vld [vmem:[%s6389 + $0x4d0] sm:$0xff]
        %v6545 = vld [vmem:[%s6389 + $0x4d8] sm:$0xff]
        %v6546 = vld [vmem:[%s6389 + $0x4e0] sm:$0xff]
        %v6547 = vld [vmem:[%s6389 + $0x4e8] sm:$0xff]
        %v6548 = vld [vmem:[%s6389 + $0x4f0] sm:$0xff]
        %v6549 = vld [vmem:[%s6389 + $0x4f8] sm:$0xff]
        %v6550 = vld [vmem:[%s6389 + $0x500] sm:$0xff]
        %v6551 = vld [vmem:[%s6389 + $0x508] sm:$0xff]
        %v6552 = vld [vmem:[%s6389 + $0x510] sm:$0xff]
        %v6553 = vld [vmem:[%s6389 + $0x518] sm:$0xff]
        %v6554 = vld [vmem:[%s6389 + $0x520] sm:$0xff]
        %v6555 = vld [vmem:[%s6389 + $0x528] sm:$0xff]
        %v6556 = vld [vmem:[%s6389 + $0x530] sm:$0xff]
        %v6557 = vld [vmem:[%s6389 + $0x538] sm:$0xff]
        %v6558 = vld [vmem:[%s6389 + $0x540] sm:$0xff]
        %v6559 = vld [vmem:[%s6389 + $0x548] sm:$0xff]
        %v6560 = vld [vmem:[%s6389 + $0x550] sm:$0xff]
        %v6561 = vld [vmem:[%s6389 + $0x558] sm:$0xff]
        %v6562 = vld [vmem:[%s6389 + $0x560] sm:$0xff]
        %v6563 = vld [vmem:[%s6389 + $0x568] sm:$0xff]
        %v6564 = vld [vmem:[%s6389 + $0x570] sm:$0xff]
        %v6565 = vld [vmem:[%s6389 + $0x578] sm:$0xff]
        %v6566 = vld [vmem:[%s6389 + $0x580] sm:$0xff]
        %v6567 = vld [vmem:[%s6389 + $0x588] sm:$0xff]
        %v6568 = vld [vmem:[%s6389 + $0x590] sm:$0xff]
        %v6569 = vld [vmem:[%s6389 + $0x598] sm:$0xff]
        %v6570 = vld [vmem:[%s6389 + $0x5a0] sm:$0xff]
        %v6571 = vld [vmem:[%s6389 + $0x5a8] sm:$0xff]
        %v6572 = vld [vmem:[%s6389 + $0x5b0] sm:$0xff]
        %v6573 = vld [vmem:[%s6389 + $0x5b8] sm:$0xff]
        %v6574 = vld [vmem:[%s6389 + $0x5c0] sm:$0xff]
        %v6575 = vld [vmem:[%s6389 + $0x5c8] sm:$0xff]
        %v6576 = vld [vmem:[%s6389 + $0x5d0] sm:$0xff]
        %v6577 = vld [vmem:[%s6389 + $0x5d8] sm:$0xff]
        %v6578 = vld [vmem:[%s6389 + $0x5e0] sm:$0xff]
        %v6579 = vld [vmem:[%s6389 + $0x5e8] sm:$0xff]
        %v6580 = vld [vmem:[%s6389 + $0x5f0] sm:$0xff]
        %v6581 = vld [vmem:[%s6389 + $0x5f8] sm:$0xff]
        %v6582 = vld [vmem:[%s6389 + $0x600] sm:$0xff]
        %v6583 = vld [vmem:[%s6389 + $0x608] sm:$0xff]
        %v6584 = vld [vmem:[%s6389 + $0x610] sm:$0xff]
        %v6585 = vld [vmem:[%s6389 + $0x618] sm:$0xff]
        %v6586 = vld [vmem:[%s6389 + $0x620] sm:$0xff]
        %v6587 = vld [vmem:[%s6389 + $0x628] sm:$0xff]
        %v6588 = vld [vmem:[%s6389 + $0x630] sm:$0xff]
        %v6589 = vld [vmem:[%s6389 + $0x638] sm:$0xff]
        %v6590 = vld [vmem:[%s6389 + $0x640] sm:$0xff]
        %v6591 = vld [vmem:[%s6389 + $0x648] sm:$0xff]
        %v6592 = vld [vmem:[%s6389 + $0x650] sm:$0xff]
        %v6593 = vld [vmem:[%s6389 + $0x658] sm:$0xff]
        %v6594 = vld [vmem:[%s6389 + $0x660] sm:$0xff]
        %v6595 = vld [vmem:[%s6389 + $0x668] sm:$0xff]
        %v6596 = vld [vmem:[%s6389 + $0x670] sm:$0xff]
        %v6597 = vld [vmem:[%s6389 + $0x678] sm:$0xff]
        %v6598 = vld [vmem:[%s6389 + $0x680] sm:$0xff]
        %v6599 = vld [vmem:[%s6389 + $0x688] sm:$0xff]
        %v6600 = vld [vmem:[%s6389 + $0x690] sm:$0xff]
        %v6601 = vld [vmem:[%s6389 + $0x698] sm:$0xff]
        %v6602 = vld [vmem:[%s6389 + $0x6a0] sm:$0xff]
        %v6603 = vld [vmem:[%s6389 + $0x6a8] sm:$0xff]
        %v6604 = vld [vmem:[%s6389 + $0x6b0] sm:$0xff]
        %v6605 = vld [vmem:[%s6389 + $0x6b8] sm:$0xff]
        %v6606 = vld [vmem:[%s6389 + $0x6c0] sm:$0xff]
        %v6607 = vld [vmem:[%s6389 + $0x6c8] sm:$0xff]
        %v6608 = vld [vmem:[%s6389 + $0x6d0] sm:$0xff]
        %v6609 = vld [vmem:[%s6389 + $0x6d8] sm:$0xff]
        %v6610 = vld [vmem:[%s6389 + $0x6e0] sm:$0xff]
        %v6611 = vld [vmem:[%s6389 + $0x6e8] sm:$0xff]
        %v6612 = vld [vmem:[%s6389 + $0x6f0] sm:$0xff]
        %v6613 = vld [vmem:[%s6389 + $0x6f8] sm:$0xff]
        %v6614 = vld [vmem:[%s6389 + $0x700] sm:$0xff]
        %v6615 = vld [vmem:[%s6389 + $0x708] sm:$0xff]
        %v6616 = vld [vmem:[%s6389 + $0x710] sm:$0xff]
        %v6617 = vld [vmem:[%s6389 + $0x718] sm:$0xff]
        %v6618 = vld [vmem:[%s6389 + $0x720] sm:$0xff]
        %v6619 = vld [vmem:[%s6389 + $0x728] sm:$0xff]
        %v6620 = vld [vmem:[%s6389 + $0x730] sm:$0xff]
        %v6621 = vld [vmem:[%s6389 + $0x738] sm:$0xff]
        %v6622 = vld [vmem:[%s6389 + $0x740] sm:$0xff]
        %v6623 = vld [vmem:[%s6389 + $0x748] sm:$0xff]
        %v6624 = vld [vmem:[%s6389 + $0x750] sm:$0xff]
        %v6625 = vld [vmem:[%s6389 + $0x758] sm:$0xff]
        %v6626 = vld [vmem:[%s6389 + $0x760] sm:$0xff]
        %v6627 = vld [vmem:[%s6389 + $0x768] sm:$0xff]
        %v6628 = vld [vmem:[%s6389 + $0x770] sm:$0xff]
        %v6629 = vld [vmem:[%s6389 + $0x778] sm:$0xff]
        %v6630 = vld [vmem:[%s6389 + $0x780] sm:$0xff]
        %v6631 = vld [vmem:[%s6389 + $0x788] sm:$0xff]
        %v6632 = vld [vmem:[%s6389 + $0x790] sm:$0xff]
        %v6633 = vld [vmem:[%s6389 + $0x798] sm:$0xff]
        %v6634 = vld [vmem:[%s6389 + $0x7a0] sm:$0xff]
        %v6635 = vld [vmem:[%s6389 + $0x7a8] sm:$0xff]
        %v6636 = vld [vmem:[%s6389 + $0x7b0] sm:$0xff]
        %v6637 = vld [vmem:[%s6389 + $0x7b8] sm:$0xff]
        %v6638 = vld [vmem:[%s6389 + $0x7c0] sm:$0xff]
        %v6639 = vld [vmem:[%s6389 + $0x7c8] sm:$0xff]
        %v6640 = vld [vmem:[%s6389 + $0x7d0] sm:$0xff]
        %v6641 = vld [vmem:[%s6389 + $0x7d8] sm:$0xff]
        %v6642 = vld [vmem:[%s6389 + $0x7e0] sm:$0xff]
        %v6643 = vld [vmem:[%s6389 + $0x7e8] sm:$0xff]
        %v6644 = vld [vmem:[%s6389 + $0x7f0] sm:$0xff]
        %v6645 = vld [vmem:[%s6389 + $0x7f8] sm:$0xff]
        %v6902 = vunpack.c.l.b16 %v6390
        %v6903 = vunpack.c.h.b16 %v6390
        %v6904 = vunpack.c.l.b16 %v6391
        %v6905 = vunpack.c.h.b16 %v6391
        %v6906 = vunpack.c.l.b16 %v6392
        %v6907 = vunpack.c.h.b16 %v6392
        %v6908 = vunpack.c.l.b16 %v6393
        %v6909 = vunpack.c.h.b16 %v6393
        %v6910 = vunpack.c.l.b16 %v6394
        %v6911 = vunpack.c.h.b16 %v6394
        %v6912 = vunpack.c.l.b16 %v6395
        %v6913 = vunpack.c.h.b16 %v6395
        %v6914 = vunpack.c.l.b16 %v6396
        %v6915 = vunpack.c.h.b16 %v6396
        %v6916 = vunpack.c.l.b16 %v6397
        %v6917 = vunpack.c.h.b16 %v6397
        %v6918 = vunpack.c.l.b16 %v6398
        %v6919 = vunpack.c.h.b16 %v6398
        %v6920 = vunpack.c.l.b16 %v6399
        %v6921 = vunpack.c.h.b16 %v6399
        %v6922 = vunpack.c.l.b16 %v6400
        %v6923 = vunpack.c.h.b16 %v6400
        %v6924 = vunpack.c.l.b16 %v6401
        %v6925 = vunpack.c.h.b16 %v6401
        %v6926 = vunpack.c.l.b16 %v6402
        %v6927 = vunpack.c.h.b16 %v6402
        %v6928 = vunpack.c.l.b16 %v6403
        %v6929 = vunpack.c.h.b16 %v6403
        %v6930 = vunpack.c.l.b16 %v6404
        %v6931 = vunpack.c.h.b16 %v6404
        %v6932 = vunpack.c.l.b16 %v6405
        %v6933 = vunpack.c.h.b16 %v6405
        %v6934 = vunpack.c.l.b16 %v6406
        %v6935 = vunpack.c.h.b16 %v6406
        %v6936 = vunpack.c.l.b16 %v6407
        %v6937 = vunpack.c.h.b16 %v6407
        %v6938 = vunpack.c.l.b16 %v6408
        %v6939 = vunpack.c.h.b16 %v6408
        %v6940 = vunpack.c.l.b16 %v6409
        %v6941 = vunpack.c.h.b16 %v6409
        %v6942 = vunpack.c.l.b16 %v6410
        %v6943 = vunpack.c.h.b16 %v6410
        %v6944 = vunpack.c.l.b16 %v6411
        %v6945 = vunpack.c.h.b16 %v6411
        %v6946 = vunpack.c.l.b16 %v6412
        %v6947 = vunpack.c.h.b16 %v6412
        %v6948 = vunpack.c.l.b16 %v6413
        %v6949 = vunpack.c.h.b16 %v6413
        %v6950 = vunpack.c.l.b16 %v6414
        %v6951 = vunpack.c.h.b16 %v6414
        %v6952 = vunpack.c.l.b16 %v6415
        %v6953 = vunpack.c.h.b16 %v6415
        %v6954 = vunpack.c.l.b16 %v6416
        %v6955 = vunpack.c.h.b16 %v6416
        %v6956 = vunpack.c.l.b16 %v6417
        %v6957 = vunpack.c.h.b16 %v6417
        %v6958 = vunpack.c.l.b16 %v6418
        %v6959 = vunpack.c.h.b16 %v6418
        %v6960 = vunpack.c.l.b16 %v6419
        %v6961 = vunpack.c.h.b16 %v6419
        %v6962 = vunpack.c.l.b16 %v6420
        %v6963 = vunpack.c.h.b16 %v6420
        %v6964 = vunpack.c.l.b16 %v6421
        %v6965 = vunpack.c.h.b16 %v6421
        %v6966 = vunpack.c.l.b16 %v6422
        %v6967 = vunpack.c.h.b16 %v6422
        %v6968 = vunpack.c.l.b16 %v6423
        %v6969 = vunpack.c.h.b16 %v6423
        %v6970 = vunpack.c.l.b16 %v6424
        %v6971 = vunpack.c.h.b16 %v6424
        %v6972 = vunpack.c.l.b16 %v6425
        %v6973 = vunpack.c.h.b16 %v6425
        %v6974 = vunpack.c.l.b16 %v6426
        %v6975 = vunpack.c.h.b16 %v6426
        %v6976 = vunpack.c.l.b16 %v6427
        %v6977 = vunpack.c.h.b16 %v6427
        %v6978 = vunpack.c.l.b16 %v6428
        %v6979 = vunpack.c.h.b16 %v6428
        %v6980 = vunpack.c.l.b16 %v6429
        %v6981 = vunpack.c.h.b16 %v6429
        %v6982 = vunpack.c.l.b16 %v6430
        %v6983 = vunpack.c.h.b16 %v6430
        %v6984 = vunpack.c.l.b16 %v6431
        %v6985 = vunpack.c.h.b16 %v6431
        %v6986 = vunpack.c.l.b16 %v6432
        %v6987 = vunpack.c.h.b16 %v6432
        %v6988 = vunpack.c.l.b16 %v6433
        %v6989 = vunpack.c.h.b16 %v6433
        %v6990 = vunpack.c.l.b16 %v6434
        %v6991 = vunpack.c.h.b16 %v6434
        %v6992 = vunpack.c.l.b16 %v6435
        %v6993 = vunpack.c.h.b16 %v6435
        %v6994 = vunpack.c.l.b16 %v6436
        %v6995 = vunpack.c.h.b16 %v6436
        %v6996 = vunpack.c.l.b16 %v6437
        %v6997 = vunpack.c.h.b16 %v6437
        %v6998 = vunpack.c.l.b16 %v6438
        %v6999 = vunpack.c.h.b16 %v6438
        %v7000 = vunpack.c.l.b16 %v6439
        %v7001 = vunpack.c.h.b16 %v6439
        %v7002 = vunpack.c.l.b16 %v6440
        %v7003 = vunpack.c.h.b16 %v6440
        %v7004 = vunpack.c.l.b16 %v6441
        %v7005 = vunpack.c.h.b16 %v6441
        %v7006 = vunpack.c.l.b16 %v6442
        %v7007 = vunpack.c.h.b16 %v6442
        %v7008 = vunpack.c.l.b16 %v6443
        %v7009 = vunpack.c.h.b16 %v6443
        %v7010 = vunpack.c.l.b16 %v6444
        %v7011 = vunpack.c.h.b16 %v6444
        %v7012 = vunpack.c.l.b16 %v6445
        %v7013 = vunpack.c.h.b16 %v6445
        %v7014 = vunpack.c.l.b16 %v6446
        %v7015 = vunpack.c.h.b16 %v6446
        %v7016 = vunpack.c.l.b16 %v6447
        %v7017 = vunpack.c.h.b16 %v6447
        %v7018 = vunpack.c.l.b16 %v6448
        %v7019 = vunpack.c.h.b16 %v6448
        %v7020 = vunpack.c.l.b16 %v6449
        %v7021 = vunpack.c.h.b16 %v6449
        %v7022 = vunpack.c.l.b16 %v6450
        %v7023 = vunpack.c.h.b16 %v6450
        %v7024 = vunpack.c.l.b16 %v6451
        %v7025 = vunpack.c.h.b16 %v6451
        %v7026 = vunpack.c.l.b16 %v6452
        %v7027 = vunpack.c.h.b16 %v6452
        %v7028 = vunpack.c.l.b16 %v6453
        %v7029 = vunpack.c.h.b16 %v6453
        %v7030 = vunpack.c.l.b16 %v6454
        %v7031 = vunpack.c.h.b16 %v6454
        %v7032 = vunpack.c.l.b16 %v6455
        %v7033 = vunpack.c.h.b16 %v6455
        %v7034 = vunpack.c.l.b16 %v6456
        %v7035 = vunpack.c.h.b16 %v6456
        %v7036 = vunpack.c.l.b16 %v6457
        %v7037 = vunpack.c.h.b16 %v6457
        %v7038 = vunpack.c.l.b16 %v6458
        %v7039 = vunpack.c.h.b16 %v6458
        %v7040 = vunpack.c.l.b16 %v6459
        %v7041 = vunpack.c.h.b16 %v6459
        %v7042 = vunpack.c.l.b16 %v6460
        %v7043 = vunpack.c.h.b16 %v6460
        %v7044 = vunpack.c.l.b16 %v6461
        %v7045 = vunpack.c.h.b16 %v6461
        %v7046 = vunpack.c.l.b16 %v6462
        %v7047 = vunpack.c.h.b16 %v6462
        %v7048 = vunpack.c.l.b16 %v6463
        %v7049 = vunpack.c.h.b16 %v6463
        %v7050 = vunpack.c.l.b16 %v6464
        %v7051 = vunpack.c.h.b16 %v6464
        %v7052 = vunpack.c.l.b16 %v6465
        %v7053 = vunpack.c.h.b16 %v6465
        %v7054 = vunpack.c.l.b16 %v6466
        %v7055 = vunpack.c.h.b16 %v6466
        %v7056 = vunpack.c.l.b16 %v6467
        %v7057 = vunpack.c.h.b16 %v6467
        %v7058 = vunpack.c.l.b16 %v6468
        %v7059 = vunpack.c.h.b16 %v6468
        %v7060 = vunpack.c.l.b16 %v6469
        %v7061 = vunpack.c.h.b16 %v6469
        %v7062 = vunpack.c.l.b16 %v6470
        %v7063 = vunpack.c.h.b16 %v6470
        %v7064 = vunpack.c.l.b16 %v6471
        %v7065 = vunpack.c.h.b16 %v6471
        %v7066 = vunpack.c.l.b16 %v6472
        %v7067 = vunpack.c.h.b16 %v6472
        %v7068 = vunpack.c.l.b16 %v6473
        %v7069 = vunpack.c.h.b16 %v6473
        %v7070 = vunpack.c.l.b16 %v6474
        %v7071 = vunpack.c.h.b16 %v6474
        %v7072 = vunpack.c.l.b16 %v6475
        %v7073 = vunpack.c.h.b16 %v6475
        %v7074 = vunpack.c.l.b16 %v6476
        %v7075 = vunpack.c.h.b16 %v6476
        %v7076 = vunpack.c.l.b16 %v6477
        %v7077 = vunpack.c.h.b16 %v6477
        %v7078 = vunpack.c.l.b16 %v6478
        %v7079 = vunpack.c.h.b16 %v6478
        %v7080 = vunpack.c.l.b16 %v6479
        %v7081 = vunpack.c.h.b16 %v6479
        %v7082 = vunpack.c.l.b16 %v6480
        %v7083 = vunpack.c.h.b16 %v6480
        %v7084 = vunpack.c.l.b16 %v6481
        %v7085 = vunpack.c.h.b16 %v6481
        %v7086 = vunpack.c.l.b16 %v6482
        %v7087 = vunpack.c.h.b16 %v6482
        %v7088 = vunpack.c.l.b16 %v6483
        %v7089 = vunpack.c.h.b16 %v6483
        %v7090 = vunpack.c.l.b16 %v6484
        %v7091 = vunpack.c.h.b16 %v6484
        %v7092 = vunpack.c.l.b16 %v6485
        %v7093 = vunpack.c.h.b16 %v6485
        %v7094 = vunpack.c.l.b16 %v6486
        %v7095 = vunpack.c.h.b16 %v6486
        %v7096 = vunpack.c.l.b16 %v6487
        %v7097 = vunpack.c.h.b16 %v6487
        %v7098 = vunpack.c.l.b16 %v6488
        %v7099 = vunpack.c.h.b16 %v6488
        %v7100 = vunpack.c.l.b16 %v6489
        %v7101 = vunpack.c.h.b16 %v6489
        %v7102 = vunpack.c.l.b16 %v6490
        %v7103 = vunpack.c.h.b16 %v6490
        %v7104 = vunpack.c.l.b16 %v6491
        %v7105 = vunpack.c.h.b16 %v6491
        %v7106 = vunpack.c.l.b16 %v6492
        %v7107 = vunpack.c.h.b16 %v6492
        %v7108 = vunpack.c.l.b16 %v6493
        %v7109 = vunpack.c.h.b16 %v6493
        %v7110 = vunpack.c.l.b16 %v6494
        %v7111 = vunpack.c.h.b16 %v6494
        %v7112 = vunpack.c.l.b16 %v6495
        %v7113 = vunpack.c.h.b16 %v6495
        %v7114 = vunpack.c.l.b16 %v6496
        %v7115 = vunpack.c.h.b16 %v6496
        %v7116 = vunpack.c.l.b16 %v6497
        %v7117 = vunpack.c.h.b16 %v6497
        %v7118 = vunpack.c.l.b16 %v6498
        %v7119 = vunpack.c.h.b16 %v6498
        %v7120 = vunpack.c.l.b16 %v6499
        %v7121 = vunpack.c.h.b16 %v6499
        %v7122 = vunpack.c.l.b16 %v6500
        %v7123 = vunpack.c.h.b16 %v6500
        %v7124 = vunpack.c.l.b16 %v6501
        %v7125 = vunpack.c.h.b16 %v6501
        %v7126 = vunpack.c.l.b16 %v6502
        %v7127 = vunpack.c.h.b16 %v6502
        %v7128 = vunpack.c.l.b16 %v6503
        %v7129 = vunpack.c.h.b16 %v6503
        %v7130 = vunpack.c.l.b16 %v6504
        %v7131 = vunpack.c.h.b16 %v6504
        %v7132 = vunpack.c.l.b16 %v6505
        %v7133 = vunpack.c.h.b16 %v6505
        %v7134 = vunpack.c.l.b16 %v6506
        %v7135 = vunpack.c.h.b16 %v6506
        %v7136 = vunpack.c.l.b16 %v6507
        %v7137 = vunpack.c.h.b16 %v6507
        %v7138 = vunpack.c.l.b16 %v6508
        %v7139 = vunpack.c.h.b16 %v6508
        %v7140 = vunpack.c.l.b16 %v6509
        %v7141 = vunpack.c.h.b16 %v6509
        %v7142 = vunpack.c.l.b16 %v6510
        %v7143 = vunpack.c.h.b16 %v6510
        %v7144 = vunpack.c.l.b16 %v6511
        %v7145 = vunpack.c.h.b16 %v6511
        %v7146 = vunpack.c.l.b16 %v6512
        %v7147 = vunpack.c.h.b16 %v6512
        %v7148 = vunpack.c.l.b16 %v6513
        %v7149 = vunpack.c.h.b16 %v6513
        %v7150 = vunpack.c.l.b16 %v6514
        %v7151 = vunpack.c.h.b16 %v6514
        %v7152 = vunpack.c.l.b16 %v6515
        %v7153 = vunpack.c.h.b16 %v6515
        %v7154 = vunpack.c.l.b16 %v6516
        %v7155 = vunpack.c.h.b16 %v6516
        %v7156 = vunpack.c.l.b16 %v6517
        %v7157 = vunpack.c.h.b16 %v6517
        %v7158 = vunpack.c.l.b16 %v6518
        %v7159 = vunpack.c.h.b16 %v6518
        %v7160 = vunpack.c.l.b16 %v6519
        %v7161 = vunpack.c.h.b16 %v6519
        %v7162 = vunpack.c.l.b16 %v6520
        %v7163 = vunpack.c.h.b16 %v6520
        %v7164 = vunpack.c.l.b16 %v6521
        %v7165 = vunpack.c.h.b16 %v6521
        %v7166 = vunpack.c.l.b16 %v6522
        %v7167 = vunpack.c.h.b16 %v6522
        %v7168 = vunpack.c.l.b16 %v6523
        %v7169 = vunpack.c.h.b16 %v6523
        %v7170 = vunpack.c.l.b16 %v6524
        %v7171 = vunpack.c.h.b16 %v6524
        %v7172 = vunpack.c.l.b16 %v6525
        %v7173 = vunpack.c.h.b16 %v6525
        %v7174 = vunpack.c.l.b16 %v6526
        %v7175 = vunpack.c.h.b16 %v6526
        %v7176 = vunpack.c.l.b16 %v6527
        %v7177 = vunpack.c.h.b16 %v6527
        %v7178 = vunpack.c.l.b16 %v6528
        %v7179 = vunpack.c.h.b16 %v6528
        %v7180 = vunpack.c.l.b16 %v6529
        %v7181 = vunpack.c.h.b16 %v6529
        %v7182 = vunpack.c.l.b16 %v6530
        %v7183 = vunpack.c.h.b16 %v6530
        %v7184 = vunpack.c.l.b16 %v6531
        %v7185 = vunpack.c.h.b16 %v6531
        %v7186 = vunpack.c.l.b16 %v6532
        %v7187 = vunpack.c.h.b16 %v6532
        %v7188 = vunpack.c.l.b16 %v6533
        %v7189 = vunpack.c.h.b16 %v6533
        %v7190 = vunpack.c.l.b16 %v6534
        %v7191 = vunpack.c.h.b16 %v6534
        %v7192 = vunpack.c.l.b16 %v6535
        %v7193 = vunpack.c.h.b16 %v6535
        %v7194 = vunpack.c.l.b16 %v6536
        %v7195 = vunpack.c.h.b16 %v6536
        %v7196 = vunpack.c.l.b16 %v6537
        %v7197 = vunpack.c.h.b16 %v6537
        %v7198 = vunpack.c.l.b16 %v6538
        %v7199 = vunpack.c.h.b16 %v6538
        %v7200 = vunpack.c.l.b16 %v6539
        %v7201 = vunpack.c.h.b16 %v6539
        %v7202 = vunpack.c.l.b16 %v6540
        %v7203 = vunpack.c.h.b16 %v6540
        %v7204 = vunpack.c.l.b16 %v6541
        %v7205 = vunpack.c.h.b16 %v6541
        %v7206 = vunpack.c.l.b16 %v6542
        %v7207 = vunpack.c.h.b16 %v6542
        %v7208 = vunpack.c.l.b16 %v6543
        %v7209 = vunpack.c.h.b16 %v6543
        %v7210 = vunpack.c.l.b16 %v6544
        %v7211 = vunpack.c.h.b16 %v6544
        %v7212 = vunpack.c.l.b16 %v6545
        %v7213 = vunpack.c.h.b16 %v6545
        %v7214 = vunpack.c.l.b16 %v6546
        %v7215 = vunpack.c.h.b16 %v6546
        %v7216 = vunpack.c.l.b16 %v6547
        %v7217 = vunpack.c.h.b16 %v6547
        %v7218 = vunpack.c.l.b16 %v6548
        %v7219 = vunpack.c.h.b16 %v6548
        %v7220 = vunpack.c.l.b16 %v6549
        %v7221 = vunpack.c.h.b16 %v6549
        %v7222 = vunpack.c.l.b16 %v6550
        %v7223 = vunpack.c.h.b16 %v6550
        %v7224 = vunpack.c.l.b16 %v6551
        %v7225 = vunpack.c.h.b16 %v6551
        %v7226 = vunpack.c.l.b16 %v6552
        %v7227 = vunpack.c.h.b16 %v6552
        %v7228 = vunpack.c.l.b16 %v6553
        %v7229 = vunpack.c.h.b16 %v6553
        %v7230 = vunpack.c.l.b16 %v6554
        %v7231 = vunpack.c.h.b16 %v6554
        %v7232 = vunpack.c.l.b16 %v6555
        %v7233 = vunpack.c.h.b16 %v6555
        %v7234 = vunpack.c.l.b16 %v6556
        %v7235 = vunpack.c.h.b16 %v6556
        %v7236 = vunpack.c.l.b16 %v6557
        %v7237 = vunpack.c.h.b16 %v6557
        %v7238 = vunpack.c.l.b16 %v6558
        %v7239 = vunpack.c.h.b16 %v6558
        %v7240 = vunpack.c.l.b16 %v6559
        %v7241 = vunpack.c.h.b16 %v6559
        %v7242 = vunpack.c.l.b16 %v6560
        %v7243 = vunpack.c.h.b16 %v6560
        %v7244 = vunpack.c.l.b16 %v6561
        %v7245 = vunpack.c.h.b16 %v6561
        %v7246 = vunpack.c.l.b16 %v6562
        %v7247 = vunpack.c.h.b16 %v6562
        %v7248 = vunpack.c.l.b16 %v6563
        %v7249 = vunpack.c.h.b16 %v6563
        %v7250 = vunpack.c.l.b16 %v6564
        %v7251 = vunpack.c.h.b16 %v6564
        %v7252 = vunpack.c.l.b16 %v6565
        %v7253 = vunpack.c.h.b16 %v6565
        %v7254 = vunpack.c.l.b16 %v6566
        %v7255 = vunpack.c.h.b16 %v6566
        %v7256 = vunpack.c.l.b16 %v6567
        %v7257 = vunpack.c.h.b16 %v6567
        %v7258 = vunpack.c.l.b16 %v6568
        %v7259 = vunpack.c.h.b16 %v6568
        %v7260 = vunpack.c.l.b16 %v6569
        %v7261 = vunpack.c.h.b16 %v6569
        %v7262 = vunpack.c.l.b16 %v6570
        %v7263 = vunpack.c.h.b16 %v6570
        %v7264 = vunpack.c.l.b16 %v6571
        %v7265 = vunpack.c.h.b16 %v6571
        %v7266 = vunpack.c.l.b16 %v6572
        %v7267 = vunpack.c.h.b16 %v6572
        %v7268 = vunpack.c.l.b16 %v6573
        %v7269 = vunpack.c.h.b16 %v6573
        %v7270 = vunpack.c.l.b16 %v6574
        %v7271 = vunpack.c.h.b16 %v6574
        %v7272 = vunpack.c.l.b16 %v6575
        %v7273 = vunpack.c.h.b16 %v6575
        %v7274 = vunpack.c.l.b16 %v6576
        %v7275 = vunpack.c.h.b16 %v6576
        %v7276 = vunpack.c.l.b16 %v6577
        %v7277 = vunpack.c.h.b16 %v6577
        %v7278 = vunpack.c.l.b16 %v6578
        %v7279 = vunpack.c.h.b16 %v6578
        %v7280 = vunpack.c.l.b16 %v6579
        %v7281 = vunpack.c.h.b16 %v6579
        %v7282 = vunpack.c.l.b16 %v6580
        %v7283 = vunpack.c.h.b16 %v6580
        %v7284 = vunpack.c.l.b16 %v6581
        %v7285 = vunpack.c.h.b16 %v6581
        %v7286 = vunpack.c.l.b16 %v6582
        %v7287 = vunpack.c.h.b16 %v6582
        %v7288 = vunpack.c.l.b16 %v6583
        %v7289 = vunpack.c.h.b16 %v6583
        %v7290 = vunpack.c.l.b16 %v6584
        %v7291 = vunpack.c.h.b16 %v6584
        %v7292 = vunpack.c.l.b16 %v6585
        %v7293 = vunpack.c.h.b16 %v6585
        %v7294 = vunpack.c.l.b16 %v6586
        %v7295 = vunpack.c.h.b16 %v6586
        %v7296 = vunpack.c.l.b16 %v6587
        %v7297 = vunpack.c.h.b16 %v6587
        %v7298 = vunpack.c.l.b16 %v6588
        %v7299 = vunpack.c.h.b16 %v6588
        %v7300 = vunpack.c.l.b16 %v6589
        %v7301 = vunpack.c.h.b16 %v6589
        %v7302 = vunpack.c.l.b16 %v6590
        %v7303 = vunpack.c.h.b16 %v6590
        %v7304 = vunpack.c.l.b16 %v6591
        %v7305 = vunpack.c.h.b16 %v6591
        %v7306 = vunpack.c.l.b16 %v6592
        %v7307 = vunpack.c.h.b16 %v6592
        %v7308 = vunpack.c.l.b16 %v6593
        %v7309 = vunpack.c.h.b16 %v6593
        %v7310 = vunpack.c.l.b16 %v6594
        %v7311 = vunpack.c.h.b16 %v6594
        %v7312 = vunpack.c.l.b16 %v6595
        %v7313 = vunpack.c.h.b16 %v6595
        %v7314 = vunpack.c.l.b16 %v6596
        %v7315 = vunpack.c.h.b16 %v6596
        %v7316 = vunpack.c.l.b16 %v6597
        %v7317 = vunpack.c.h.b16 %v6597
        %v7318 = vunpack.c.l.b16 %v6598
        %v7319 = vunpack.c.h.b16 %v6598
        %v7320 = vunpack.c.l.b16 %v6599
        %v7321 = vunpack.c.h.b16 %v6599
        %v7322 = vunpack.c.l.b16 %v6600
        %v7323 = vunpack.c.h.b16 %v6600
        %v7324 = vunpack.c.l.b16 %v6601
        %v7325 = vunpack.c.h.b16 %v6601
        %v7326 = vunpack.c.l.b16 %v6602
        %v7327 = vunpack.c.h.b16 %v6602
        %v7328 = vunpack.c.l.b16 %v6603
        %v7329 = vunpack.c.h.b16 %v6603
        %v7330 = vunpack.c.l.b16 %v6604
        %v7331 = vunpack.c.h.b16 %v6604
        %v7332 = vunpack.c.l.b16 %v6605
        %v7333 = vunpack.c.h.b16 %v6605
        %v7334 = vunpack.c.l.b16 %v6606
        %v7335 = vunpack.c.h.b16 %v6606
        %v7336 = vunpack.c.l.b16 %v6607
        %v7337 = vunpack.c.h.b16 %v6607
        %v7338 = vunpack.c.l.b16 %v6608
        %v7339 = vunpack.c.h.b16 %v6608
        %v7340 = vunpack.c.l.b16 %v6609
        %v7341 = vunpack.c.h.b16 %v6609
        %v7342 = vunpack.c.l.b16 %v6610
        %v7343 = vunpack.c.h.b16 %v6610
        %v7344 = vunpack.c.l.b16 %v6611
        %v7345 = vunpack.c.h.b16 %v6611
        %v7346 = vunpack.c.l.b16 %v6612
        %v7347 = vunpack.c.h.b16 %v6612
        %v7348 = vunpack.c.l.b16 %v6613
        %v7349 = vunpack.c.h.b16 %v6613
        %v7350 = vunpack.c.l.b16 %v6614
        %v7351 = vunpack.c.h.b16 %v6614
        %v7352 = vunpack.c.l.b16 %v6615
        %v7353 = vunpack.c.h.b16 %v6615
        %v7354 = vunpack.c.l.b16 %v6616
        %v7355 = vunpack.c.h.b16 %v6616
        %v7356 = vunpack.c.l.b16 %v6617
        %v7357 = vunpack.c.h.b16 %v6617
        %v7358 = vunpack.c.l.b16 %v6618
        %v7359 = vunpack.c.h.b16 %v6618
        %v7360 = vunpack.c.l.b16 %v6619
        %v7361 = vunpack.c.h.b16 %v6619
        %v7362 = vunpack.c.l.b16 %v6620
        %v7363 = vunpack.c.h.b16 %v6620
        %v7364 = vunpack.c.l.b16 %v6621
        %v7365 = vunpack.c.h.b16 %v6621
        %v7366 = vunpack.c.l.b16 %v6622
        %v7367 = vunpack.c.h.b16 %v6622
        %v7368 = vunpack.c.l.b16 %v6623
        %v7369 = vunpack.c.h.b16 %v6623
        %v7370 = vunpack.c.l.b16 %v6624
        %v7371 = vunpack.c.h.b16 %v6624
        %v7372 = vunpack.c.l.b16 %v6625
        %v7373 = vunpack.c.h.b16 %v6625
        %v7374 = vunpack.c.l.b16 %v6626
        %v7375 = vunpack.c.h.b16 %v6626
        %v7376 = vunpack.c.l.b16 %v6627
        %v7377 = vunpack.c.h.b16 %v6627
        %v7378 = vunpack.c.l.b16 %v6628
        %v7379 = vunpack.c.h.b16 %v6628
        %v7380 = vunpack.c.l.b16 %v6629
        %v7381 = vunpack.c.h.b16 %v6629
        %v7382 = vunpack.c.l.b16 %v6630
        %v7383 = vunpack.c.h.b16 %v6630
        %v7384 = vunpack.c.l.b16 %v6631
        %v7385 = vunpack.c.h.b16 %v6631
        %v7386 = vunpack.c.l.b16 %v6632
        %v7387 = vunpack.c.h.b16 %v6632
        %v7388 = vunpack.c.l.b16 %v6633
        %v7389 = vunpack.c.h.b16 %v6633
        %v7390 = vunpack.c.l.b16 %v6634
        %v7391 = vunpack.c.h.b16 %v6634
        %v7392 = vunpack.c.l.b16 %v6635
        %v7393 = vunpack.c.h.b16 %v6635
        %v7394 = vunpack.c.l.b16 %v6636
        %v7395 = vunpack.c.h.b16 %v6636
        %v7396 = vunpack.c.l.b16 %v6637
        %v7397 = vunpack.c.h.b16 %v6637
        %v7398 = vunpack.c.l.b16 %v6638
        %v7399 = vunpack.c.h.b16 %v6638
        %v7400 = vunpack.c.l.b16 %v6639
        %v7401 = vunpack.c.h.b16 %v6639
        %v7402 = vunpack.c.l.b16 %v6640
        %v7403 = vunpack.c.h.b16 %v6640
        %v7404 = vunpack.c.l.b16 %v6641
        %v7405 = vunpack.c.h.b16 %v6641
        %v7406 = vunpack.c.l.b16 %v6642
        %v7407 = vunpack.c.h.b16 %v6642
        %v7408 = vunpack.c.l.b16 %v6643
        %v7409 = vunpack.c.h.b16 %v6643
        %v7410 = vunpack.c.l.b16 %v6644
        %v7411 = vunpack.c.h.b16 %v6644
        %v7412 = vunpack.c.l.b16 %v6645
        %v7413 = vunpack.c.h.b16 %v6645
        %v7414 = vpack.c.b16 %v6910, %v6902
        %v7415 = vpack.c.b16 %v6911, %v6903
        %v7416 = vpack.c.b16 %v6912, %v6904
        %v7417 = vpack.c.b16 %v6913, %v6905
        %v7418 = vpack.c.b16 %v6914, %v6906
        %v7419 = vpack.c.b16 %v6915, %v6907
        %v7420 = vpack.c.b16 %v6916, %v6908
        %v7421 = vpack.c.b16 %v6917, %v6909
        %v7422 = vpack.c.b16 %v6926, %v6918
        %v7423 = vpack.c.b16 %v6927, %v6919
        %v7424 = vpack.c.b16 %v6928, %v6920
        %v7425 = vpack.c.b16 %v6929, %v6921
        %v7426 = vpack.c.b16 %v6930, %v6922
        %v7427 = vpack.c.b16 %v6931, %v6923
        %v7428 = vpack.c.b16 %v6932, %v6924
        %v7429 = vpack.c.b16 %v6933, %v6925
        %v7430 = vpack.c.b16 %v6942, %v6934
        %v7431 = vpack.c.b16 %v6943, %v6935
        %v7432 = vpack.c.b16 %v6944, %v6936
        %v7433 = vpack.c.b16 %v6945, %v6937
        %v7434 = vpack.c.b16 %v6946, %v6938
        %v7435 = vpack.c.b16 %v6947, %v6939
        %v7436 = vpack.c.b16 %v6948, %v6940
        %v7437 = vpack.c.b16 %v6949, %v6941
        %v7438 = vpack.c.b16 %v6958, %v6950
        %v7439 = vpack.c.b16 %v6959, %v6951
        %v7440 = vpack.c.b16 %v6960, %v6952
        %v7441 = vpack.c.b16 %v6961, %v6953
        %v7442 = vpack.c.b16 %v6962, %v6954
        %v7443 = vpack.c.b16 %v6963, %v6955
        %v7444 = vpack.c.b16 %v6964, %v6956
        %v7445 = vpack.c.b16 %v6965, %v6957
        %v7446 = vpack.c.b16 %v6974, %v6966
        %v7447 = vpack.c.b16 %v6975, %v6967
        %v7448 = vpack.c.b16 %v6976, %v6968
        %v7449 = vpack.c.b16 %v6977, %v6969
        %v7450 = vpack.c.b16 %v6978, %v6970
        %v7451 = vpack.c.b16 %v6979, %v6971
        %v7452 = vpack.c.b16 %v6980, %v6972
        %v7453 = vpack.c.b16 %v6981, %v6973
        %v7454 = vpack.c.b16 %v6990, %v6982
        %v7455 = vpack.c.b16 %v6991, %v6983
        %v7456 = vpack.c.b16 %v6992, %v6984
        %v7457 = vpack.c.b16 %v6993, %v6985
        %v7458 = vpack.c.b16 %v6994, %v6986
        %v7459 = vpack.c.b16 %v6995, %v6987
        %v7460 = vpack.c.b16 %v6996, %v6988
        %v7461 = vpack.c.b16 %v6997, %v6989
        %v7462 = vpack.c.b16 %v7006, %v6998
        %v7463 = vpack.c.b16 %v7007, %v6999
        %v7464 = vpack.c.b16 %v7008, %v7000
        %v7465 = vpack.c.b16 %v7009, %v7001
        %v7466 = vpack.c.b16 %v7010, %v7002
        %v7467 = vpack.c.b16 %v7011, %v7003
        %v7468 = vpack.c.b16 %v7012, %v7004
        %v7469 = vpack.c.b16 %v7013, %v7005
        %v7470 = vpack.c.b16 %v7022, %v7014
        %v7471 = vpack.c.b16 %v7023, %v7015
        %v7472 = vpack.c.b16 %v7024, %v7016
        %v7473 = vpack.c.b16 %v7025, %v7017
        %v7474 = vpack.c.b16 %v7026, %v7018
        %v7475 = vpack.c.b16 %v7027, %v7019
        %v7476 = vpack.c.b16 %v7028, %v7020
        %v7477 = vpack.c.b16 %v7029, %v7021
        %v7478 = vpack.c.b16 %v7038, %v7030
        %v7479 = vpack.c.b16 %v7039, %v7031
        %v7480 = vpack.c.b16 %v7040, %v7032
        %v7481 = vpack.c.b16 %v7041, %v7033
        %v7482 = vpack.c.b16 %v7042, %v7034
        %v7483 = vpack.c.b16 %v7043, %v7035
        %v7484 = vpack.c.b16 %v7044, %v7036
        %v7485 = vpack.c.b16 %v7045, %v7037
        %v7486 = vpack.c.b16 %v7054, %v7046
        %v7487 = vpack.c.b16 %v7055, %v7047
        %v7488 = vpack.c.b16 %v7056, %v7048
        %v7489 = vpack.c.b16 %v7057, %v7049
        %v7490 = vpack.c.b16 %v7058, %v7050
        %v7491 = vpack.c.b16 %v7059, %v7051
        %v7492 = vpack.c.b16 %v7060, %v7052
        %v7493 = vpack.c.b16 %v7061, %v7053
        %v7494 = vpack.c.b16 %v7070, %v7062
        %v7495 = vpack.c.b16 %v7071, %v7063
        %v7496 = vpack.c.b16 %v7072, %v7064
        %v7497 = vpack.c.b16 %v7073, %v7065
        %v7498 = vpack.c.b16 %v7074, %v7066
        %v7499 = vpack.c.b16 %v7075, %v7067
        %v7500 = vpack.c.b16 %v7076, %v7068
        %v7501 = vpack.c.b16 %v7077, %v7069
        %v7502 = vpack.c.b16 %v7086, %v7078
        %v7503 = vpack.c.b16 %v7087, %v7079
        %v7504 = vpack.c.b16 %v7088, %v7080
        %v7505 = vpack.c.b16 %v7089, %v7081
        %v7506 = vpack.c.b16 %v7090, %v7082
        %v7507 = vpack.c.b16 %v7091, %v7083
        %v7508 = vpack.c.b16 %v7092, %v7084
        %v7509 = vpack.c.b16 %v7093, %v7085
        %v7510 = vpack.c.b16 %v7102, %v7094
        %v7511 = vpack.c.b16 %v7103, %v7095
        %v7512 = vpack.c.b16 %v7104, %v7096
        %v7513 = vpack.c.b16 %v7105, %v7097
        %v7514 = vpack.c.b16 %v7106, %v7098
        %v7515 = vpack.c.b16 %v7107, %v7099
        %v7516 = vpack.c.b16 %v7108, %v7100
        %v7517 = vpack.c.b16 %v7109, %v7101
        %v7518 = vpack.c.b16 %v7118, %v7110
        %v7519 = vpack.c.b16 %v7119, %v7111
        %v7520 = vpack.c.b16 %v7120, %v7112
        %v7521 = vpack.c.b16 %v7121, %v7113
        %v7522 = vpack.c.b16 %v7122, %v7114
        %v7523 = vpack.c.b16 %v7123, %v7115
        %v7524 = vpack.c.b16 %v7124, %v7116
        %v7525 = vpack.c.b16 %v7125, %v7117
        %v7526 = vpack.c.b16 %v7134, %v7126
        %v7527 = vpack.c.b16 %v7135, %v7127
        %v7528 = vpack.c.b16 %v7136, %v7128
        %v7529 = vpack.c.b16 %v7137, %v7129
        %v7530 = vpack.c.b16 %v7138, %v7130
        %v7531 = vpack.c.b16 %v7139, %v7131
        %v7532 = vpack.c.b16 %v7140, %v7132
        %v7533 = vpack.c.b16 %v7141, %v7133
        %v7534 = vpack.c.b16 %v7150, %v7142
        %v7535 = vpack.c.b16 %v7151, %v7143
        %v7536 = vpack.c.b16 %v7152, %v7144
        %v7537 = vpack.c.b16 %v7153, %v7145
        %v7538 = vpack.c.b16 %v7154, %v7146
        %v7539 = vpack.c.b16 %v7155, %v7147
        %v7540 = vpack.c.b16 %v7156, %v7148
        %v7541 = vpack.c.b16 %v7157, %v7149
        %v7542 = vpack.c.b16 %v7166, %v7158
        %v7543 = vpack.c.b16 %v7167, %v7159
        %v7544 = vpack.c.b16 %v7168, %v7160
        %v7545 = vpack.c.b16 %v7169, %v7161
        %v7546 = vpack.c.b16 %v7170, %v7162
        %v7547 = vpack.c.b16 %v7171, %v7163
        %v7548 = vpack.c.b16 %v7172, %v7164
        %v7549 = vpack.c.b16 %v7173, %v7165
        %v7550 = vpack.c.b16 %v7182, %v7174
        %v7551 = vpack.c.b16 %v7183, %v7175
        %v7552 = vpack.c.b16 %v7184, %v7176
        %v7553 = vpack.c.b16 %v7185, %v7177
        %v7554 = vpack.c.b16 %v7186, %v7178
        %v7555 = vpack.c.b16 %v7187, %v7179
        %v7556 = vpack.c.b16 %v7188, %v7180
        %v7557 = vpack.c.b16 %v7189, %v7181
        %v7558 = vpack.c.b16 %v7198, %v7190
        %v7559 = vpack.c.b16 %v7199, %v7191
        %v7560 = vpack.c.b16 %v7200, %v7192
        %v7561 = vpack.c.b16 %v7201, %v7193
        %v7562 = vpack.c.b16 %v7202, %v7194
        %v7563 = vpack.c.b16 %v7203, %v7195
        %v7564 = vpack.c.b16 %v7204, %v7196
        %v7565 = vpack.c.b16 %v7205, %v7197
        %v7566 = vpack.c.b16 %v7214, %v7206
        %v7567 = vpack.c.b16 %v7215, %v7207
        %v7568 = vpack.c.b16 %v7216, %v7208
        %v7569 = vpack.c.b16 %v7217, %v7209
        %v7570 = vpack.c.b16 %v7218, %v7210
        %v7571 = vpack.c.b16 %v7219, %v7211
        %v7572 = vpack.c.b16 %v7220, %v7212
        %v7573 = vpack.c.b16 %v7221, %v7213
        %v7574 = vpack.c.b16 %v7230, %v7222
        %v7575 = vpack.c.b16 %v7231, %v7223
        %v7576 = vpack.c.b16 %v7232, %v7224
        %v7577 = vpack.c.b16 %v7233, %v7225
        %v7578 = vpack.c.b16 %v7234, %v7226
        %v7579 = vpack.c.b16 %v7235, %v7227
        %v7580 = vpack.c.b16 %v7236, %v7228
        %v7581 = vpack.c.b16 %v7237, %v7229
        %v7582 = vpack.c.b16 %v7246, %v7238
        %v7583 = vpack.c.b16 %v7247, %v7239
        %v7584 = vpack.c.b16 %v7248, %v7240
        %v7585 = vpack.c.b16 %v7249, %v7241
        %v7586 = vpack.c.b16 %v7250, %v7242
        %v7587 = vpack.c.b16 %v7251, %v7243
        %v7588 = vpack.c.b16 %v7252, %v7244
        %v7589 = vpack.c.b16 %v7253, %v7245
        %v7590 = vpack.c.b16 %v7262, %v7254
        %v7591 = vpack.c.b16 %v7263, %v7255
        %v7592 = vpack.c.b16 %v7264, %v7256
        %v7593 = vpack.c.b16 %v7265, %v7257
        %v7594 = vpack.c.b16 %v7266, %v7258
        %v7595 = vpack.c.b16 %v7267, %v7259
        %v7596 = vpack.c.b16 %v7268, %v7260
        %v7597 = vpack.c.b16 %v7269, %v7261
        %v7598 = vpack.c.b16 %v7278, %v7270
        %v7599 = vpack.c.b16 %v7279, %v7271
        %v7600 = vpack.c.b16 %v7280, %v7272
        %v7601 = vpack.c.b16 %v7281, %v7273
        %v7602 = vpack.c.b16 %v7282, %v7274
        %v7603 = vpack.c.b16 %v7283, %v7275
        %v7604 = vpack.c.b16 %v7284, %v7276
        %v7605 = vpack.c.b16 %v7285, %v7277
        %v7606 = vpack.c.b16 %v7294, %v7286
        %v7607 = vpack.c.b16 %v7295, %v7287
        %v7608 = vpack.c.b16 %v7296, %v7288
        %v7609 = vpack.c.b16 %v7297, %v7289
        %v7610 = vpack.c.b16 %v7298, %v7290
        %v7611 = vpack.c.b16 %v7299, %v7291
        %v7612 = vpack.c.b16 %v7300, %v7292
        %v7613 = vpack.c.b16 %v7301, %v7293
        %v7614 = vpack.c.b16 %v7310, %v7302
        %v7615 = vpack.c.b16 %v7311, %v7303
        %v7616 = vpack.c.b16 %v7312, %v7304
        %v7617 = vpack.c.b16 %v7313, %v7305
        %v7618 = vpack.c.b16 %v7314, %v7306
        %v7619 = vpack.c.b16 %v7315, %v7307
        %v7620 = vpack.c.b16 %v7316, %v7308
        %v7621 = vpack.c.b16 %v7317, %v7309
        %v7622 = vpack.c.b16 %v7326, %v7318
        %v7623 = vpack.c.b16 %v7327, %v7319
        %v7624 = vpack.c.b16 %v7328, %v7320
        %v7625 = vpack.c.b16 %v7329, %v7321
        %v7626 = vpack.c.b16 %v7330, %v7322
        %v7627 = vpack.c.b16 %v7331, %v7323
        %v7628 = vpack.c.b16 %v7332, %v7324
        %v7629 = vpack.c.b16 %v7333, %v7325
        %v7630 = vpack.c.b16 %v7342, %v7334
        %v7631 = vpack.c.b16 %v7343, %v7335
        %v7632 = vpack.c.b16 %v7344, %v7336
        %v7633 = vpack.c.b16 %v7345, %v7337
        %v7634 = vpack.c.b16 %v7346, %v7338
        %v7635 = vpack.c.b16 %v7347, %v7339
        %v7636 = vpack.c.b16 %v7348, %v7340
        %v7637 = vpack.c.b16 %v7349, %v7341
        %v7638 = vpack.c.b16 %v7358, %v7350
        %v7639 = vpack.c.b16 %v7359, %v7351
        %v7640 = vpack.c.b16 %v7360, %v7352
        %v7641 = vpack.c.b16 %v7361, %v7353
        %v7642 = vpack.c.b16 %v7362, %v7354
        %v7643 = vpack.c.b16 %v7363, %v7355
        %v7644 = vpack.c.b16 %v7364, %v7356
        %v7645 = vpack.c.b16 %v7365, %v7357
        %v7646 = vpack.c.b16 %v7374, %v7366
        %v7647 = vpack.c.b16 %v7375, %v7367
        %v7648 = vpack.c.b16 %v7376, %v7368
        %v7649 = vpack.c.b16 %v7377, %v7369
        %v7650 = vpack.c.b16 %v7378, %v7370
        %v7651 = vpack.c.b16 %v7379, %v7371
        %v7652 = vpack.c.b16 %v7380, %v7372
        %v7653 = vpack.c.b16 %v7381, %v7373
        %v7654 = vpack.c.b16 %v7390, %v7382
        %v7655 = vpack.c.b16 %v7391, %v7383
        %v7656 = vpack.c.b16 %v7392, %v7384
        %v7657 = vpack.c.b16 %v7393, %v7385
        %v7658 = vpack.c.b16 %v7394, %v7386
        %v7659 = vpack.c.b16 %v7395, %v7387
        %v7660 = vpack.c.b16 %v7396, %v7388
        %v7661 = vpack.c.b16 %v7397, %v7389
        %v7662 = vpack.c.b16 %v7406, %v7398
        %v7663 = vpack.c.b16 %v7407, %v7399
        %v7664 = vpack.c.b16 %v7408, %v7400
        %v7665 = vpack.c.b16 %v7409, %v7401
        %v7666 = vpack.c.b16 %v7410, %v7402
        %v7667 = vpack.c.b16 %v7411, %v7403
        %v7668 = vpack.c.b16 %v7412, %v7404
        %v7669 = vpack.c.b16 %v7413, %v7405
        %7926 = vmatpush.bf16.msra.mxu0 %v7470
        %7927 = vmatpush.bf16.msra.mxu0 %v7462
        %7928 = vmatpush.bf16.msra.mxu0 %v7454
        %7929 = vmatpush.bf16.msra.mxu0 %v7446
        %7930 = vmatpush.bf16.msra.mxu0 %v7438
        %7931 = vmatpush.bf16.msra.mxu0 %v7430
        %7932 = vmatpush.bf16.msra.mxu0 %v7422
        %7933 = vmatpush.bf16.msra.mxu0 %v7414
        %7934 = vmatmul.bf16.gmra.mxu0 %v6373
        %v7935 = vpop.f32.mrf.mxu0
        %v7936 = vadd.f32 0.0, %v7935
        %v7937 = vpop.f32.mrf.mxu0
        %v7938 = vadd.f32 0.0, %v7937
        %7939 = vmatmul.bf16.gmra.mxu0 %v6377
        %v7940 = vpop.f32.mrf.mxu0
        %v7941 = vadd.f32 0.0, %v7940
        %v7942 = vpop.f32.mrf.mxu0
        %v7943 = vadd.f32 0.0, %v7942
        %7944 = vmatmul.bf16.gmra.mxu0 %v6381
        %v7945 = vpop.f32.mrf.mxu0
        %v7946 = vadd.f32 0.0, %v7945
        %v7947 = vpop.f32.mrf.mxu0
        %v7948 = vadd.f32 0.0, %v7947
        %7949 = vmatmul.bf16.gmra.mxu0 %v6385
        %v7950 = vpop.f32.mrf.mxu0
        %v7951 = vadd.f32 0.0, %v7950
        %v7952 = vpop.f32.mrf.mxu0
        %v7953 = vadd.f32 0.0, %v7952
        %7954 = vdwg.mxu0
        %7955 = vmatpush.bf16.msra.mxu0 %v7534
        %7956 = vmatpush.bf16.msra.mxu0 %v7526
        %7957 = vmatpush.bf16.msra.mxu0 %v7518
        %7958 = vmatpush.bf16.msra.mxu0 %v7510
        %7959 = vmatpush.bf16.msra.mxu0 %v7502
        %7960 = vmatpush.bf16.msra.mxu0 %v7494
        %7961 = vmatpush.bf16.msra.mxu0 %v7486
        %7962 = vmatpush.bf16.msra.mxu0 %v7478
        %7963 = vmatmul.bf16.gmra.mxu0 %v6374
        %v7964 = vpop.f32.mrf.mxu0
        %v7965 = vadd.f32 %v7936, %v7964
        %v7966 = vpop.f32.mrf.mxu0
        %v7967 = vadd.f32 %v7938, %v7966
        %7968 = vmatmul.bf16.gmra.mxu0 %v6378
        %v7969 = vpop.f32.mrf.mxu0
        %v7970 = vadd.f32 %v7941, %v7969
        %v7971 = vpop.f32.mrf.mxu0
        %v7972 = vadd.f32 %v7943, %v7971
        %7973 = vmatmul.bf16.gmra.mxu0 %v6382
        %v7974 = vpop.f32.mrf.mxu0
        %v7975 = vadd.f32 %v7946, %v7974
        %v7976 = vpop.f32.mrf.mxu0
        %v7977 = vadd.f32 %v7948, %v7976
        %7978 = vmatmul.bf16.gmra.mxu0 %v6386
        %v7979 = vpop.f32.mrf.mxu0
        %v7980 = vadd.f32 %v7951, %v7979
        %v7981 = vpop.f32.mrf.mxu0
        %v7982 = vadd.f32 %v7953, %v7981
        %7983 = vdwg.mxu0
        %7984 = vmatpush.bf16.msra.mxu0 %v7598
        %7985 = vmatpush.bf16.msra.mxu0 %v7590
        %7986 = vmatpush.bf16.msra.mxu0 %v7582
        %7987 = vmatpush.bf16.msra.mxu0 %v7574
        %7988 = vmatpush.bf16.msra.mxu0 %v7566
        %7989 = vmatpush.bf16.msra.mxu0 %v7558
        %7990 = vmatpush.bf16.msra.mxu0 %v7550
        %7991 = vmatpush.bf16.msra.mxu0 %v7542
        %7992 = vmatmul.bf16.gmra.mxu0 %v6375
        %v7993 = vpop.f32.mrf.mxu0
        %v7994 = vadd.f32 %v7965, %v7993
        %v7995 = vpop.f32.mrf.mxu0
        %v7996 = vadd.f32 %v7967, %v7995
        %7997 = vmatmul.bf16.gmra.mxu0 %v6379
        %v7998 = vpop.f32.mrf.mxu0
        %v7999 = vadd.f32 %v7970, %v7998
        %v8000 = vpop.f32.mrf.mxu0
        %v8001 = vadd.f32 %v7972, %v8000
        %8002 = vmatmul.bf16.gmra.mxu0 %v6383
        %v8003 = vpop.f32.mrf.mxu0
        %v8004 = vadd.f32 %v7975, %v8003
        %v8005 = vpop.f32.mrf.mxu0
        %v8006 = vadd.f32 %v7977, %v8005
        %8007 = vmatmul.bf16.gmra.mxu0 %v6387
        %v8008 = vpop.f32.mrf.mxu0
        %v8009 = vadd.f32 %v7980, %v8008
        %v8010 = vpop.f32.mrf.mxu0
        %v8011 = vadd.f32 %v7982, %v8010
        %8012 = vdwg.mxu0
        %8013 = vmatpush.bf16.msra.mxu0 %v7662
        %8014 = vmatpush.bf16.msra.mxu0 %v7654
        %8015 = vmatpush.bf16.msra.mxu0 %v7646
        %8016 = vmatpush.bf16.msra.mxu0 %v7638
        %8017 = vmatpush.bf16.msra.mxu0 %v7630
        %8018 = vmatpush.bf16.msra.mxu0 %v7622
        %8019 = vmatpush.bf16.msra.mxu0 %v7614
        %8020 = vmatpush.bf16.msra.mxu0 %v7606
        %8021 = vmatmul.bf16.gmra.mxu0 %v6376
        %v8022 = vpop.f32.mrf.mxu0
        %v8023 = vadd.f32 %v7994, %v8022
        %v8024 = vpop.f32.mrf.mxu0
        %v8025 = vadd.f32 %v7996, %v8024
        %8026 = vmatmul.bf16.gmra.mxu0 %v6380
        %v8027 = vpop.f32.mrf.mxu0
        %v8028 = vadd.f32 %v7999, %v8027
        %v8029 = vpop.f32.mrf.mxu0
        %v8030 = vadd.f32 %v8001, %v8029
        %8031 = vmatmul.bf16.gmra.mxu0 %v6384
        %v8032 = vpop.f32.mrf.mxu0
        %v8033 = vadd.f32 %v8004, %v8032
        %v8034 = vpop.f32.mrf.mxu0
        %v8035 = vadd.f32 %v8006, %v8034
        %8036 = vmatmul.bf16.gmra.mxu0 %v6388
        %v8037 = vpop.f32.mrf.mxu0
        %v8038 = vadd.f32 %v8009, %v8037
        %v8039 = vpop.f32.mrf.mxu0
        %v8040 = vadd.f32 %v8011, %v8039
        %8041 = vdwg.mxu0
        %8042 = vmatpush.bf16.msra.mxu0 %v7471
        %8043 = vmatpush.bf16.msra.mxu0 %v7463
        %8044 = vmatpush.bf16.msra.mxu0 %v7455
        %8045 = vmatpush.bf16.msra.mxu0 %v7447
        %8046 = vmatpush.bf16.msra.mxu0 %v7439
        %8047 = vmatpush.bf16.msra.mxu0 %v7431
        %8048 = vmatpush.bf16.msra.mxu0 %v7423
        %8049 = vmatpush.bf16.msra.mxu0 %v7415
        %8050 = vmatmul.bf16.gmra.mxu0 %v6373
        %v8051 = vpop.f32.mrf.mxu0
        %v8052 = vadd.f32 0.0, %v8051
        %v8053 = vpop.f32.mrf.mxu0
        %v8054 = vadd.f32 0.0, %v8053
        %8055 = vmatmul.bf16.gmra.mxu0 %v6377
        %v8056 = vpop.f32.mrf.mxu0
        %v8057 = vadd.f32 0.0, %v8056
        %v8058 = vpop.f32.mrf.mxu0
        %v8059 = vadd.f32 0.0, %v8058
        %8060 = vmatmul.bf16.gmra.mxu0 %v6381
        %v8061 = vpop.f32.mrf.mxu0
        %v8062 = vadd.f32 0.0, %v8061
        %v8063 = vpop.f32.mrf.mxu0
        %v8064 = vadd.f32 0.0, %v8063
        %8065 = vmatmul.bf16.gmra.mxu0 %v6385
        %v8066 = vpop.f32.mrf.mxu0
        %v8067 = vadd.f32 0.0, %v8066
        %v8068 = vpop.f32.mrf.mxu0
        %v8069 = vadd.f32 0.0, %v8068
        %8070 = vdwg.mxu0
        %8071 = vmatpush.bf16.msra.mxu0 %v7535
        %8072 = vmatpush.bf16.msra.mxu0 %v7527
        %8073 = vmatpush.bf16.msra.mxu0 %v7519
        %8074 = vmatpush.bf16.msra.mxu0 %v7511
        %8075 = vmatpush.bf16.msra.mxu0 %v7503
        %8076 = vmatpush.bf16.msra.mxu0 %v7495
        %8077 = vmatpush.bf16.msra.mxu0 %v7487
        %8078 = vmatpush.bf16.msra.mxu0 %v7479
        %8079 = vmatmul.bf16.gmra.mxu0 %v6374
        %v8080 = vpop.f32.mrf.mxu0
        %v8081 = vadd.f32 %v8052, %v8080
        %v8082 = vpop.f32.mrf.mxu0
        %v8083 = vadd.f32 %v8054, %v8082
        %8084 = vmatmul.bf16.gmra.mxu0 %v6378
        %v8085 = vpop.f32.mrf.mxu0
        %v8086 = vadd.f32 %v8057, %v8085
        %v8087 = vpop.f32.mrf.mxu0
        %v8088 = vadd.f32 %v8059, %v8087
        %8089 = vmatmul.bf16.gmra.mxu0 %v6382
        %v8090 = vpop.f32.mrf.mxu0
        %v8091 = vadd.f32 %v8062, %v8090
        %v8092 = vpop.f32.mrf.mxu0
        %v8093 = vadd.f32 %v8064, %v8092
        %8094 = vmatmul.bf16.gmra.mxu0 %v6386
        %v8095 = vpop.f32.mrf.mxu0
        %v8096 = vadd.f32 %v8067, %v8095
        %v8097 = vpop.f32.mrf.mxu0
        %v8098 = vadd.f32 %v8069, %v8097
        %8099 = vdwg.mxu0
        %8100 = vmatpush.bf16.msra.mxu0 %v7599
        %8101 = vmatpush.bf16.msra.mxu0 %v7591
        %8102 = vmatpush.bf16.msra.mxu0 %v7583
        %8103 = vmatpush.bf16.msra.mxu0 %v7575
        %8104 = vmatpush.bf16.msra.mxu0 %v7567
        %8105 = vmatpush.bf16.msra.mxu0 %v7559
        %8106 = vmatpush.bf16.msra.mxu0 %v7551
        %8107 = vmatpush.bf16.msra.mxu0 %v7543
        %8108 = vmatmul.bf16.gmra.mxu0 %v6375
        %v8109 = vpop.f32.mrf.mxu0
        %v8110 = vadd.f32 %v8081, %v8109
        %v8111 = vpop.f32.mrf.mxu0
        %v8112 = vadd.f32 %v8083, %v8111
        %8113 = vmatmul.bf16.gmra.mxu0 %v6379
        %v8114 = vpop.f32.mrf.mxu0
        %v8115 = vadd.f32 %v8086, %v8114
        %v8116 = vpop.f32.mrf.mxu0
        %v8117 = vadd.f32 %v8088, %v8116
        %8118 = vmatmul.bf16.gmra.mxu0 %v6383
        %v8119 = vpop.f32.mrf.mxu0
        %v8120 = vadd.f32 %v8091, %v8119
        %v8121 = vpop.f32.mrf.mxu0
        %v8122 = vadd.f32 %v8093, %v8121
        %8123 = vmatmul.bf16.gmra.mxu0 %v6387
        %v8124 = vpop.f32.mrf.mxu0
        %v8125 = vadd.f32 %v8096, %v8124
        %v8126 = vpop.f32.mrf.mxu0
        %v8127 = vadd.f32 %v8098, %v8126
        %8128 = vdwg.mxu0
        %8129 = vmatpush.bf16.msra.mxu0 %v7663
        %8130 = vmatpush.bf16.msra.mxu0 %v7655
        %8131 = vmatpush.bf16.msra.mxu0 %v7647
        %8132 = vmatpush.bf16.msra.mxu0 %v7639
        %8133 = vmatpush.bf16.msra.mxu0 %v7631
        %8134 = vmatpush.bf16.msra.mxu0 %v7623
        %8135 = vmatpush.bf16.msra.mxu0 %v7615
        %8136 = vmatpush.bf16.msra.mxu0 %v7607
        %8137 = vmatmul.bf16.gmra.mxu0 %v6376
        %v8138 = vpop.f32.mrf.mxu0
        %v8139 = vadd.f32 %v8110, %v8138
        %v8140 = vpop.f32.mrf.mxu0
        %v8141 = vadd.f32 %v8112, %v8140
        %8142 = vmatmul.bf16.gmra.mxu0 %v6380
        %v8143 = vpop.f32.mrf.mxu0
        %v8144 = vadd.f32 %v8115, %v8143
        %v8145 = vpop.f32.mrf.mxu0
        %v8146 = vadd.f32 %v8117, %v8145
        %8147 = vmatmul.bf16.gmra.mxu0 %v6384
        %v8148 = vpop.f32.mrf.mxu0
        %v8149 = vadd.f32 %v8120, %v8148
        %v8150 = vpop.f32.mrf.mxu0
        %v8151 = vadd.f32 %v8122, %v8150
        %8152 = vmatmul.bf16.gmra.mxu0 %v6388
        %v8153 = vpop.f32.mrf.mxu0
        %v8154 = vadd.f32 %v8125, %v8153
        %v8155 = vpop.f32.mrf.mxu0
        %v8156 = vadd.f32 %v8127, %v8155
        %8157 = vdwg.mxu0
        %8158 = vmatpush.bf16.msra.mxu0 %v7472
        %8159 = vmatpush.bf16.msra.mxu0 %v7464
        %8160 = vmatpush.bf16.msra.mxu0 %v7456
        %8161 = vmatpush.bf16.msra.mxu0 %v7448
        %8162 = vmatpush.bf16.msra.mxu0 %v7440
        %8163 = vmatpush.bf16.msra.mxu0 %v7432
        %8164 = vmatpush.bf16.msra.mxu0 %v7424
        %8165 = vmatpush.bf16.msra.mxu0 %v7416
        %8166 = vmatmul.bf16.gmra.mxu0 %v6373
        %v8167 = vpop.f32.mrf.mxu0
        %v8168 = vadd.f32 0.0, %v8167
        %v8169 = vpop.f32.mrf.mxu0
        %v8170 = vadd.f32 0.0, %v8169
        %8171 = vmatmul.bf16.gmra.mxu0 %v6377
        %v8172 = vpop.f32.mrf.mxu0
        %v8173 = vadd.f32 0.0, %v8172
        %v8174 = vpop.f32.mrf.mxu0
        %v8175 = vadd.f32 0.0, %v8174
        %8176 = vmatmul.bf16.gmra.mxu0 %v6381
        %v8177 = vpop.f32.mrf.mxu0
        %v8178 = vadd.f32 0.0, %v8177
        %v8179 = vpop.f32.mrf.mxu0
        %v8180 = vadd.f32 0.0, %v8179
        %8181 = vmatmul.bf16.gmra.mxu0 %v6385
        %v8182 = vpop.f32.mrf.mxu0
        %v8183 = vadd.f32 0.0, %v8182
        %v8184 = vpop.f32.mrf.mxu0
        %v8185 = vadd.f32 0.0, %v8184
        %8186 = vdwg.mxu0
        %8187 = vmatpush.bf16.msra.mxu0 %v7536
        %8188 = vmatpush.bf16.msra.mxu0 %v7528
        %8189 = vmatpush.bf16.msra.mxu0 %v7520
        %8190 = vmatpush.bf16.msra.mxu0 %v7512
        %8191 = vmatpush.bf16.msra.mxu0 %v7504
        %8192 = vmatpush.bf16.msra.mxu0 %v7496
        %8193 = vmatpush.bf16.msra.mxu0 %v7488
        %8194 = vmatpush.bf16.msra.mxu0 %v7480
        %8195 = vmatmul.bf16.gmra.mxu0 %v6374
        %v8196 = vpop.f32.mrf.mxu0
        %v8197 = vadd.f32 %v8168, %v8196
        %v8198 = vpop.f32.mrf.mxu0
        %v8199 = vadd.f32 %v8170, %v8198
        %8200 = vmatmul.bf16.gmra.mxu0 %v6378
        %v8201 = vpop.f32.mrf.mxu0
        %v8202 = vadd.f32 %v8173, %v8201
        %v8203 = vpop.f32.mrf.mxu0
        %v8204 = vadd.f32 %v8175, %v8203
        %8205 = vmatmul.bf16.gmra.mxu0 %v6382
        %v8206 = vpop.f32.mrf.mxu0
        %v8207 = vadd.f32 %v8178, %v8206
        %v8208 = vpop.f32.mrf.mxu0
        %v8209 = vadd.f32 %v8180, %v8208
        %8210 = vmatmul.bf16.gmra.mxu0 %v6386
        %v8211 = vpop.f32.mrf.mxu0
        %v8212 = vadd.f32 %v8183, %v8211
        %v8213 = vpop.f32.mrf.mxu0
        %v8214 = vadd.f32 %v8185, %v8213
        %8215 = vdwg.mxu0
        %8216 = vmatpush.bf16.msra.mxu0 %v7600
        %8217 = vmatpush.bf16.msra.mxu0 %v7592
        %8218 = vmatpush.bf16.msra.mxu0 %v7584
        %8219 = vmatpush.bf16.msra.mxu0 %v7576
        %8220 = vmatpush.bf16.msra.mxu0 %v7568
        %8221 = vmatpush.bf16.msra.mxu0 %v7560
        %8222 = vmatpush.bf16.msra.mxu0 %v7552
        %8223 = vmatpush.bf16.msra.mxu0 %v7544
        %8224 = vmatmul.bf16.gmra.mxu0 %v6375
        %v8225 = vpop.f32.mrf.mxu0
        %v8226 = vadd.f32 %v8197, %v8225
        %v8227 = vpop.f32.mrf.mxu0
        %v8228 = vadd.f32 %v8199, %v8227
        %8229 = vmatmul.bf16.gmra.mxu0 %v6379
        %v8230 = vpop.f32.mrf.mxu0
        %v8231 = vadd.f32 %v8202, %v8230
        %v8232 = vpop.f32.mrf.mxu0
        %v8233 = vadd.f32 %v8204, %v8232
        %8234 = vmatmul.bf16.gmra.mxu0 %v6383
        %v8235 = vpop.f32.mrf.mxu0
        %v8236 = vadd.f32 %v8207, %v8235
        %v8237 = vpop.f32.mrf.mxu0
        %v8238 = vadd.f32 %v8209, %v8237
        %8239 = vmatmul.bf16.gmra.mxu0 %v6387
        %v8240 = vpop.f32.mrf.mxu0
        %v8241 = vadd.f32 %v8212, %v8240
        %v8242 = vpop.f32.mrf.mxu0
        %v8243 = vadd.f32 %v8214, %v8242
        %8244 = vdwg.mxu0
        %8245 = vmatpush.bf16.msra.mxu0 %v7664
        %8246 = vmatpush.bf16.msra.mxu0 %v7656
        %8247 = vmatpush.bf16.msra.mxu0 %v7648
        %8248 = vmatpush.bf16.msra.mxu0 %v7640
        %8249 = vmatpush.bf16.msra.mxu0 %v7632
        %8250 = vmatpush.bf16.msra.mxu0 %v7624
        %8251 = vmatpush.bf16.msra.mxu0 %v7616
        %8252 = vmatpush.bf16.msra.mxu0 %v7608
        %8253 = vmatmul.bf16.gmra.mxu0 %v6376
        %v8254 = vpop.f32.mrf.mxu0
        %v8255 = vadd.f32 %v8226, %v8254
        %v8256 = vpop.f32.mrf.mxu0
        %v8257 = vadd.f32 %v8228, %v8256
        %8258 = vmatmul.bf16.gmra.mxu0 %v6380
        %v8259 = vpop.f32.mrf.mxu0
        %v8260 = vadd.f32 %v8231, %v8259
        %v8261 = vpop.f32.mrf.mxu0
        %v8262 = vadd.f32 %v8233, %v8261
        %8263 = vmatmul.bf16.gmra.mxu0 %v6384
        %v8264 = vpop.f32.mrf.mxu0
        %v8265 = vadd.f32 %v8236, %v8264
        %v8266 = vpop.f32.mrf.mxu0
        %v8267 = vadd.f32 %v8238, %v8266
        %8268 = vmatmul.bf16.gmra.mxu0 %v6388
        %v8269 = vpop.f32.mrf.mxu0
        %v8270 = vadd.f32 %v8241, %v8269
        %v8271 = vpop.f32.mrf.mxu0
        %v8272 = vadd.f32 %v8243, %v8271
        %8273 = vdwg.mxu0
        %8274 = vmatpush.bf16.msra.mxu0 %v7473
        %8275 = vmatpush.bf16.msra.mxu0 %v7465
        %8276 = vmatpush.bf16.msra.mxu0 %v7457
        %8277 = vmatpush.bf16.msra.mxu0 %v7449
        %8278 = vmatpush.bf16.msra.mxu0 %v7441
        %8279 = vmatpush.bf16.msra.mxu0 %v7433
        %8280 = vmatpush.bf16.msra.mxu0 %v7425
        %8281 = vmatpush.bf16.msra.mxu0 %v7417
        %8282 = vmatmul.bf16.gmra.mxu0 %v6373
        %v8283 = vpop.f32.mrf.mxu0
        %v8284 = vadd.f32 0.0, %v8283
        %v8285 = vpop.f32.mrf.mxu0
        %v8286 = vadd.f32 0.0, %v8285
        %8287 = vmatmul.bf16.gmra.mxu0 %v6377
        %v8288 = vpop.f32.mrf.mxu0
        %v8289 = vadd.f32 0.0, %v8288
        %v8290 = vpop.f32.mrf.mxu0
        %v8291 = vadd.f32 0.0, %v8290
        %8292 = vmatmul.bf16.gmra.mxu0 %v6381
        %v8293 = vpop.f32.mrf.mxu0
        %v8294 = vadd.f32 0.0, %v8293
        %v8295 = vpop.f32.mrf.mxu0
        %v8296 = vadd.f32 0.0, %v8295
        %8297 = vmatmul.bf16.gmra.mxu0 %v6385
        %v8298 = vpop.f32.mrf.mxu0
        %v8299 = vadd.f32 0.0, %v8298
        %v8300 = vpop.f32.mrf.mxu0
        %v8301 = vadd.f32 0.0, %v8300
        %8302 = vdwg.mxu0
        %8303 = vmatpush.bf16.msra.mxu0 %v7537
        %8304 = vmatpush.bf16.msra.mxu0 %v7529
        %8305 = vmatpush.bf16.msra.mxu0 %v7521
        %8306 = vmatpush.bf16.msra.mxu0 %v7513
        %8307 = vmatpush.bf16.msra.mxu0 %v7505
        %8308 = vmatpush.bf16.msra.mxu0 %v7497
        %8309 = vmatpush.bf16.msra.mxu0 %v7489
        %8310 = vmatpush.bf16.msra.mxu0 %v7481
        %8311 = vmatmul.bf16.gmra.mxu0 %v6374
        %v8312 = vpop.f32.mrf.mxu0
        %v8313 = vadd.f32 %v8284, %v8312
        %v8314 = vpop.f32.mrf.mxu0
        %v8315 = vadd.f32 %v8286, %v8314
        %8316 = vmatmul.bf16.gmra.mxu0 %v6378
        %v8317 = vpop.f32.mrf.mxu0
        %v8318 = vadd.f32 %v8289, %v8317
        %v8319 = vpop.f32.mrf.mxu0
        %v8320 = vadd.f32 %v8291, %v8319
        %8321 = vmatmul.bf16.gmra.mxu0 %v6382
        %v8322 = vpop.f32.mrf.mxu0
        %v8323 = vadd.f32 %v8294, %v8322
        %v8324 = vpop.f32.mrf.mxu0
        %v8325 = vadd.f32 %v8296, %v8324
        %8326 = vmatmul.bf16.gmra.mxu0 %v6386
        %v8327 = vpop.f32.mrf.mxu0
        %v8328 = vadd.f32 %v8299, %v8327
        %v8329 = vpop.f32.mrf.mxu0
        %v8330 = vadd.f32 %v8301, %v8329
        %8331 = vdwg.mxu0
        %8332 = vmatpush.bf16.msra.mxu0 %v7601
        %8333 = vmatpush.bf16.msra.mxu0 %v7593
        %8334 = vmatpush.bf16.msra.mxu0 %v7585
        %8335 = vmatpush.bf16.msra.mxu0 %v7577
        %8336 = vmatpush.bf16.msra.mxu0 %v7569
        %8337 = vmatpush.bf16.msra.mxu0 %v7561
        %8338 = vmatpush.bf16.msra.mxu0 %v7553
        %8339 = vmatpush.bf16.msra.mxu0 %v7545
        %8340 = vmatmul.bf16.gmra.mxu0 %v6375
        %v8341 = vpop.f32.mrf.mxu0
        %v8342 = vadd.f32 %v8313, %v8341
        %v8343 = vpop.f32.mrf.mxu0
        %v8344 = vadd.f32 %v8315, %v8343
        %8345 = vmatmul.bf16.gmra.mxu0 %v6379
        %v8346 = vpop.f32.mrf.mxu0
        %v8347 = vadd.f32 %v8318, %v8346
        %v8348 = vpop.f32.mrf.mxu0
        %v8349 = vadd.f32 %v8320, %v8348
        %8350 = vmatmul.bf16.gmra.mxu0 %v6383
        %v8351 = vpop.f32.mrf.mxu0
        %v8352 = vadd.f32 %v8323, %v8351
        %v8353 = vpop.f32.mrf.mxu0
        %v8354 = vadd.f32 %v8325, %v8353
        %8355 = vmatmul.bf16.gmra.mxu0 %v6387
        %v8356 = vpop.f32.mrf.mxu0
        %v8357 = vadd.f32 %v8328, %v8356
        %v8358 = vpop.f32.mrf.mxu0
        %v8359 = vadd.f32 %v8330, %v8358
        %8360 = vdwg.mxu0
        %8361 = vmatpush.bf16.msra.mxu0 %v7665
        %8362 = vmatpush.bf16.msra.mxu0 %v7657
        %8363 = vmatpush.bf16.msra.mxu0 %v7649
        %8364 = vmatpush.bf16.msra.mxu0 %v7641
        %8365 = vmatpush.bf16.msra.mxu0 %v7633
        %8366 = vmatpush.bf16.msra.mxu0 %v7625
        %8367 = vmatpush.bf16.msra.mxu0 %v7617
        %8368 = vmatpush.bf16.msra.mxu0 %v7609
        %8369 = vmatmul.bf16.gmra.mxu0 %v6376
        %v8370 = vpop.f32.mrf.mxu0
        %v8371 = vadd.f32 %v8342, %v8370
        %v8372 = vpop.f32.mrf.mxu0
        %v8373 = vadd.f32 %v8344, %v8372
        %8374 = vmatmul.bf16.gmra.mxu0 %v6380
        %v8375 = vpop.f32.mrf.mxu0
        %v8376 = vadd.f32 %v8347, %v8375
        %v8377 = vpop.f32.mrf.mxu0
        %v8378 = vadd.f32 %v8349, %v8377
        %8379 = vmatmul.bf16.gmra.mxu0 %v6384
        %v8380 = vpop.f32.mrf.mxu0
        %v8381 = vadd.f32 %v8352, %v8380
        %v8382 = vpop.f32.mrf.mxu0
        %v8383 = vadd.f32 %v8354, %v8382
        %8384 = vmatmul.bf16.gmra.mxu0 %v6388
        %v8385 = vpop.f32.mrf.mxu0
        %v8386 = vadd.f32 %v8357, %v8385
        %v8387 = vpop.f32.mrf.mxu0
        %v8388 = vadd.f32 %v8359, %v8387
        %8389 = vdwg.mxu0
        %8390 = vmatpush.bf16.msra.mxu0 %v7474
        %8391 = vmatpush.bf16.msra.mxu0 %v7466
        %8392 = vmatpush.bf16.msra.mxu0 %v7458
        %8393 = vmatpush.bf16.msra.mxu0 %v7450
        %8394 = vmatpush.bf16.msra.mxu0 %v7442
        %8395 = vmatpush.bf16.msra.mxu0 %v7434
        %8396 = vmatpush.bf16.msra.mxu0 %v7426
        %8397 = vmatpush.bf16.msra.mxu0 %v7418
        %8398 = vmatmul.bf16.gmra.mxu0 %v6373
        %v8399 = vpop.f32.mrf.mxu0
        %v8400 = vadd.f32 0.0, %v8399
        %v8401 = vpop.f32.mrf.mxu0
        %v8402 = vadd.f32 0.0, %v8401
        %8403 = vmatmul.bf16.gmra.mxu0 %v6377
        %v8404 = vpop.f32.mrf.mxu0
        %v8405 = vadd.f32 0.0, %v8404
        %v8406 = vpop.f32.mrf.mxu0
        %v8407 = vadd.f32 0.0, %v8406
        %8408 = vmatmul.bf16.gmra.mxu0 %v6381
        %v8409 = vpop.f32.mrf.mxu0
        %v8410 = vadd.f32 0.0, %v8409
        %v8411 = vpop.f32.mrf.mxu0
        %v8412 = vadd.f32 0.0, %v8411
        %8413 = vmatmul.bf16.gmra.mxu0 %v6385
        %v8414 = vpop.f32.mrf.mxu0
        %v8415 = vadd.f32 0.0, %v8414
        %v8416 = vpop.f32.mrf.mxu0
        %v8417 = vadd.f32 0.0, %v8416
        %8418 = vdwg.mxu0
        %8419 = vmatpush.bf16.msra.mxu0 %v7538
        %8420 = vmatpush.bf16.msra.mxu0 %v7530
        %8421 = vmatpush.bf16.msra.mxu0 %v7522
        %8422 = vmatpush.bf16.msra.mxu0 %v7514
        %8423 = vmatpush.bf16.msra.mxu0 %v7506
        %8424 = vmatpush.bf16.msra.mxu0 %v7498
        %8425 = vmatpush.bf16.msra.mxu0 %v7490
        %8426 = vmatpush.bf16.msra.mxu0 %v7482
        %8427 = vmatmul.bf16.gmra.mxu0 %v6374
        %v8428 = vpop.f32.mrf.mxu0
        %v8429 = vadd.f32 %v8400, %v8428
        %v8430 = vpop.f32.mrf.mxu0
        %v8431 = vadd.f32 %v8402, %v8430
        %8432 = vmatmul.bf16.gmra.mxu0 %v6378
        %v8433 = vpop.f32.mrf.mxu0
        %v8434 = vadd.f32 %v8405, %v8433
        %v8435 = vpop.f32.mrf.mxu0
        %v8436 = vadd.f32 %v8407, %v8435
        %8437 = vmatmul.bf16.gmra.mxu0 %v6382
        %v8438 = vpop.f32.mrf.mxu0
        %v8439 = vadd.f32 %v8410, %v8438
        %v8440 = vpop.f32.mrf.mxu0
        %v8441 = vadd.f32 %v8412, %v8440
        %8442 = vmatmul.bf16.gmra.mxu0 %v6386
        %v8443 = vpop.f32.mrf.mxu0
        %v8444 = vadd.f32 %v8415, %v8443
        %v8445 = vpop.f32.mrf.mxu0
        %v8446 = vadd.f32 %v8417, %v8445
        %8447 = vdwg.mxu0
        %8448 = vmatpush.bf16.msra.mxu0 %v7602
        %8449 = vmatpush.bf16.msra.mxu0 %v7594
        %8450 = vmatpush.bf16.msra.mxu0 %v7586
        %8451 = vmatpush.bf16.msra.mxu0 %v7578
        %8452 = vmatpush.bf16.msra.mxu0 %v7570
        %8453 = vmatpush.bf16.msra.mxu0 %v7562
        %8454 = vmatpush.bf16.msra.mxu0 %v7554
        %8455 = vmatpush.bf16.msra.mxu0 %v7546
        %8456 = vmatmul.bf16.gmra.mxu0 %v6375
        %v8457 = vpop.f32.mrf.mxu0
        %v8458 = vadd.f32 %v8429, %v8457
        %v8459 = vpop.f32.mrf.mxu0
        %v8460 = vadd.f32 %v8431, %v8459
        %8461 = vmatmul.bf16.gmra.mxu0 %v6379
        %v8462 = vpop.f32.mrf.mxu0
        %v8463 = vadd.f32 %v8434, %v8462
        %v8464 = vpop.f32.mrf.mxu0
        %v8465 = vadd.f32 %v8436, %v8464
        %8466 = vmatmul.bf16.gmra.mxu0 %v6383
        %v8467 = vpop.f32.mrf.mxu0
        %v8468 = vadd.f32 %v8439, %v8467
        %v8469 = vpop.f32.mrf.mxu0
        %v8470 = vadd.f32 %v8441, %v8469
        %8471 = vmatmul.bf16.gmra.mxu0 %v6387
        %v8472 = vpop.f32.mrf.mxu0
        %v8473 = vadd.f32 %v8444, %v8472
        %v8474 = vpop.f32.mrf.mxu0
        %v8475 = vadd.f32 %v8446, %v8474
        %8476 = vdwg.mxu0
        %8477 = vmatpush.bf16.msra.mxu0 %v7666
        %8478 = vmatpush.bf16.msra.mxu0 %v7658
        %8479 = vmatpush.bf16.msra.mxu0 %v7650
        %8480 = vmatpush.bf16.msra.mxu0 %v7642
        %8481 = vmatpush.bf16.msra.mxu0 %v7634
        %8482 = vmatpush.bf16.msra.mxu0 %v7626
        %8483 = vmatpush.bf16.msra.mxu0 %v7618
        %8484 = vmatpush.bf16.msra.mxu0 %v7610
        %8485 = vmatmul.bf16.gmra.mxu0 %v6376
        %v8486 = vpop.f32.mrf.mxu0
        %v8487 = vadd.f32 %v8458, %v8486
        %v8488 = vpop.f32.mrf.mxu0
        %v8489 = vadd.f32 %v8460, %v8488
        %8490 = vmatmul.bf16.gmra.mxu0 %v6380
        %v8491 = vpop.f32.mrf.mxu0
        %v8492 = vadd.f32 %v8463, %v8491
        %v8493 = vpop.f32.mrf.mxu0
        %v8494 = vadd.f32 %v8465, %v8493
        %8495 = vmatmul.bf16.gmra.mxu0 %v6384
        %v8496 = vpop.f32.mrf.mxu0
        %v8497 = vadd.f32 %v8468, %v8496
        %v8498 = vpop.f32.mrf.mxu0
        %v8499 = vadd.f32 %v8470, %v8498
        %8500 = vmatmul.bf16.gmra.mxu0 %v6388
        %v8501 = vpop.f32.mrf.mxu0
        %v8502 = vadd.f32 %v8473, %v8501
        %v8503 = vpop.f32.mrf.mxu0
        %v8504 = vadd.f32 %v8475, %v8503
        %8505 = vdwg.mxu0
        %8506 = vmatpush.bf16.msra.mxu0 %v7475
        %8507 = vmatpush.bf16.msra.mxu0 %v7467
        %8508 = vmatpush.bf16.msra.mxu0 %v7459
        %8509 = vmatpush.bf16.msra.mxu0 %v7451
        %8510 = vmatpush.bf16.msra.mxu0 %v7443
        %8511 = vmatpush.bf16.msra.mxu0 %v7435
        %8512 = vmatpush.bf16.msra.mxu0 %v7427
        %8513 = vmatpush.bf16.msra.mxu0 %v7419
        %8514 = vmatmul.bf16.gmra.mxu0 %v6373
        %v8515 = vpop.f32.mrf.mxu0
        %v8516 = vadd.f32 0.0, %v8515
        %v8517 = vpop.f32.mrf.mxu0
        %v8518 = vadd.f32 0.0, %v8517
        %8519 = vmatmul.bf16.gmra.mxu0 %v6377
        %v8520 = vpop.f32.mrf.mxu0
        %v8521 = vadd.f32 0.0, %v8520
        %v8522 = vpop.f32.mrf.mxu0
        %v8523 = vadd.f32 0.0, %v8522
        %8524 = vmatmul.bf16.gmra.mxu0 %v6381
        %v8525 = vpop.f32.mrf.mxu0
        %v8526 = vadd.f32 0.0, %v8525
        %v8527 = vpop.f32.mrf.mxu0
        %v8528 = vadd.f32 0.0, %v8527
        %8529 = vmatmul.bf16.gmra.mxu0 %v6385
        %v8530 = vpop.f32.mrf.mxu0
        %v8531 = vadd.f32 0.0, %v8530
        %v8532 = vpop.f32.mrf.mxu0
        %v8533 = vadd.f32 0.0, %v8532
        %8534 = vdwg.mxu0
        %8535 = vmatpush.bf16.msra.mxu0 %v7539
        %8536 = vmatpush.bf16.msra.mxu0 %v7531
        %8537 = vmatpush.bf16.msra.mxu0 %v7523
        %8538 = vmatpush.bf16.msra.mxu0 %v7515
        %8539 = vmatpush.bf16.msra.mxu0 %v7507
        %8540 = vmatpush.bf16.msra.mxu0 %v7499
        %8541 = vmatpush.bf16.msra.mxu0 %v7491
        %8542 = vmatpush.bf16.msra.mxu0 %v7483
        %8543 = vmatmul.bf16.gmra.mxu0 %v6374
        %v8544 = vpop.f32.mrf.mxu0
        %v8545 = vadd.f32 %v8516, %v8544
        %v8546 = vpop.f32.mrf.mxu0
        %v8547 = vadd.f32 %v8518, %v8546
        %8548 = vmatmul.bf16.gmra.mxu0 %v6378
        %v8549 = vpop.f32.mrf.mxu0
        %v8550 = vadd.f32 %v8521, %v8549
        %v8551 = vpop.f32.mrf.mxu0
        %v8552 = vadd.f32 %v8523, %v8551
        %8553 = vmatmul.bf16.gmra.mxu0 %v6382
        %v8554 = vpop.f32.mrf.mxu0
        %v8555 = vadd.f32 %v8526, %v8554
        %v8556 = vpop.f32.mrf.mxu0
        %v8557 = vadd.f32 %v8528, %v8556
        %8558 = vmatmul.bf16.gmra.mxu0 %v6386
        %v8559 = vpop.f32.mrf.mxu0
        %v8560 = vadd.f32 %v8531, %v8559
        %v8561 = vpop.f32.mrf.mxu0
        %v8562 = vadd.f32 %v8533, %v8561
        %8563 = vdwg.mxu0
        %8564 = vmatpush.bf16.msra.mxu0 %v7603
        %8565 = vmatpush.bf16.msra.mxu0 %v7595
        %8566 = vmatpush.bf16.msra.mxu0 %v7587
        %8567 = vmatpush.bf16.msra.mxu0 %v7579
        %8568 = vmatpush.bf16.msra.mxu0 %v7571
        %8569 = vmatpush.bf16.msra.mxu0 %v7563
        %8570 = vmatpush.bf16.msra.mxu0 %v7555
        %8571 = vmatpush.bf16.msra.mxu0 %v7547
        %8572 = vmatmul.bf16.gmra.mxu0 %v6375
        %v8573 = vpop.f32.mrf.mxu0
        %v8574 = vadd.f32 %v8545, %v8573
        %v8575 = vpop.f32.mrf.mxu0
        %v8576 = vadd.f32 %v8547, %v8575
        %8577 = vmatmul.bf16.gmra.mxu0 %v6379
        %v8578 = vpop.f32.mrf.mxu0
        %v8579 = vadd.f32 %v8550, %v8578
        %v8580 = vpop.f32.mrf.mxu0
        %v8581 = vadd.f32 %v8552, %v8580
        %8582 = vmatmul.bf16.gmra.mxu0 %v6383
        %v8583 = vpop.f32.mrf.mxu0
        %v8584 = vadd.f32 %v8555, %v8583
        %v8585 = vpop.f32.mrf.mxu0
        %v8586 = vadd.f32 %v8557, %v8585
        %8587 = vmatmul.bf16.gmra.mxu0 %v6387
        %v8588 = vpop.f32.mrf.mxu0
        %v8589 = vadd.f32 %v8560, %v8588
        %v8590 = vpop.f32.mrf.mxu0
        %v8591 = vadd.f32 %v8562, %v8590
        %8592 = vdwg.mxu0
        %8593 = vmatpush.bf16.msra.mxu0 %v7667
        %8594 = vmatpush.bf16.msra.mxu0 %v7659
        %8595 = vmatpush.bf16.msra.mxu0 %v7651
        %8596 = vmatpush.bf16.msra.mxu0 %v7643
        %8597 = vmatpush.bf16.msra.mxu0 %v7635
        %8598 = vmatpush.bf16.msra.mxu0 %v7627
        %8599 = vmatpush.bf16.msra.mxu0 %v7619
        %8600 = vmatpush.bf16.msra.mxu0 %v7611
        %8601 = vmatmul.bf16.gmra.mxu0 %v6376
        %v8602 = vpop.f32.mrf.mxu0
        %v8603 = vadd.f32 %v8574, %v8602
        %v8604 = vpop.f32.mrf.mxu0
        %v8605 = vadd.f32 %v8576, %v8604
        %8606 = vmatmul.bf16.gmra.mxu0 %v6380
        %v8607 = vpop.f32.mrf.mxu0
        %v8608 = vadd.f32 %v8579, %v8607
        %v8609 = vpop.f32.mrf.mxu0
        %v8610 = vadd.f32 %v8581, %v8609
        %8611 = vmatmul.bf16.gmra.mxu0 %v6384
        %v8612 = vpop.f32.mrf.mxu0
        %v8613 = vadd.f32 %v8584, %v8612
        %v8614 = vpop.f32.mrf.mxu0
        %v8615 = vadd.f32 %v8586, %v8614
        %8616 = vmatmul.bf16.gmra.mxu0 %v6388
        %v8617 = vpop.f32.mrf.mxu0
        %v8618 = vadd.f32 %v8589, %v8617
        %v8619 = vpop.f32.mrf.mxu0
        %v8620 = vadd.f32 %v8591, %v8619
        %8621 = vdwg.mxu0
        %8622 = vmatpush.bf16.msra.mxu0 %v7476
        %8623 = vmatpush.bf16.msra.mxu0 %v7468
        %8624 = vmatpush.bf16.msra.mxu0 %v7460
        %8625 = vmatpush.bf16.msra.mxu0 %v7452
        %8626 = vmatpush.bf16.msra.mxu0 %v7444
        %8627 = vmatpush.bf16.msra.mxu0 %v7436
        %8628 = vmatpush.bf16.msra.mxu0 %v7428
        %8629 = vmatpush.bf16.msra.mxu0 %v7420
        %8630 = vmatmul.bf16.gmra.mxu0 %v6373
        %v8631 = vpop.f32.mrf.mxu0
        %v8632 = vadd.f32 0.0, %v8631
        %v8633 = vpop.f32.mrf.mxu0
        %v8634 = vadd.f32 0.0, %v8633
        %8635 = vmatmul.bf16.gmra.mxu0 %v6377
        %v8636 = vpop.f32.mrf.mxu0
        %v8637 = vadd.f32 0.0, %v8636
        %v8638 = vpop.f32.mrf.mxu0
        %v8639 = vadd.f32 0.0, %v8638
        %8640 = vmatmul.bf16.gmra.mxu0 %v6381
        %v8641 = vpop.f32.mrf.mxu0
        %v8642 = vadd.f32 0.0, %v8641
        %v8643 = vpop.f32.mrf.mxu0
        %v8644 = vadd.f32 0.0, %v8643
        %8645 = vmatmul.bf16.gmra.mxu0 %v6385
        %v8646 = vpop.f32.mrf.mxu0
        %v8647 = vadd.f32 0.0, %v8646
        %v8648 = vpop.f32.mrf.mxu0
        %v8649 = vadd.f32 0.0, %v8648
        %8650 = vdwg.mxu0
        %8651 = vmatpush.bf16.msra.mxu0 %v7540
        %8652 = vmatpush.bf16.msra.mxu0 %v7532
        %8653 = vmatpush.bf16.msra.mxu0 %v7524
        %8654 = vmatpush.bf16.msra.mxu0 %v7516
        %8655 = vmatpush.bf16.msra.mxu0 %v7508
        %8656 = vmatpush.bf16.msra.mxu0 %v7500
        %8657 = vmatpush.bf16.msra.mxu0 %v7492
        %8658 = vmatpush.bf16.msra.mxu0 %v7484
        %8659 = vmatmul.bf16.gmra.mxu0 %v6374
        %v8660 = vpop.f32.mrf.mxu0
        %v8661 = vadd.f32 %v8632, %v8660
        %v8662 = vpop.f32.mrf.mxu0
        %v8663 = vadd.f32 %v8634, %v8662
        %8664 = vmatmul.bf16.gmra.mxu0 %v6378
        %v8665 = vpop.f32.mrf.mxu0
        %v8666 = vadd.f32 %v8637, %v8665
        %v8667 = vpop.f32.mrf.mxu0
        %v8668 = vadd.f32 %v8639, %v8667
        %8669 = vmatmul.bf16.gmra.mxu0 %v6382
        %v8670 = vpop.f32.mrf.mxu0
        %v8671 = vadd.f32 %v8642, %v8670
        %v8672 = vpop.f32.mrf.mxu0
        %v8673 = vadd.f32 %v8644, %v8672
        %8674 = vmatmul.bf16.gmra.mxu0 %v6386
        %v8675 = vpop.f32.mrf.mxu0
        %v8676 = vadd.f32 %v8647, %v8675
        %v8677 = vpop.f32.mrf.mxu0
        %v8678 = vadd.f32 %v8649, %v8677
        %8679 = vdwg.mxu0
        %8680 = vmatpush.bf16.msra.mxu0 %v7604
        %8681 = vmatpush.bf16.msra.mxu0 %v7596
        %8682 = vmatpush.bf16.msra.mxu0 %v7588
        %8683 = vmatpush.bf16.msra.mxu0 %v7580
        %8684 = vmatpush.bf16.msra.mxu0 %v7572
        %8685 = vmatpush.bf16.msra.mxu0 %v7564
        %8686 = vmatpush.bf16.msra.mxu0 %v7556
        %8687 = vmatpush.bf16.msra.mxu0 %v7548
        %8688 = vmatmul.bf16.gmra.mxu0 %v6375
        %v8689 = vpop.f32.mrf.mxu0
        %v8690 = vadd.f32 %v8661, %v8689
        %v8691 = vpop.f32.mrf.mxu0
        %v8692 = vadd.f32 %v8663, %v8691
        %8693 = vmatmul.bf16.gmra.mxu0 %v6379
        %v8694 = vpop.f32.mrf.mxu0
        %v8695 = vadd.f32 %v8666, %v8694
        %v8696 = vpop.f32.mrf.mxu0
        %v8697 = vadd.f32 %v8668, %v8696
        %8698 = vmatmul.bf16.gmra.mxu0 %v6383
        %v8699 = vpop.f32.mrf.mxu0
        %v8700 = vadd.f32 %v8671, %v8699
        %v8701 = vpop.f32.mrf.mxu0
        %v8702 = vadd.f32 %v8673, %v8701
        %8703 = vmatmul.bf16.gmra.mxu0 %v6387
        %v8704 = vpop.f32.mrf.mxu0
        %v8705 = vadd.f32 %v8676, %v8704
        %v8706 = vpop.f32.mrf.mxu0
        %v8707 = vadd.f32 %v8678, %v8706
        %8708 = vdwg.mxu0
        %8709 = vmatpush.bf16.msra.mxu0 %v7668
        %8710 = vmatpush.bf16.msra.mxu0 %v7660
        %8711 = vmatpush.bf16.msra.mxu0 %v7652
        %8712 = vmatpush.bf16.msra.mxu0 %v7644
        %8713 = vmatpush.bf16.msra.mxu0 %v7636
        %8714 = vmatpush.bf16.msra.mxu0 %v7628
        %8715 = vmatpush.bf16.msra.mxu0 %v7620
        %8716 = vmatpush.bf16.msra.mxu0 %v7612
        %8717 = vmatmul.bf16.gmra.mxu0 %v6376
        %v8718 = vpop.f32.mrf.mxu0
        %v8719 = vadd.f32 %v8690, %v8718
        %v8720 = vpop.f32.mrf.mxu0
        %v8721 = vadd.f32 %v8692, %v8720
        %8722 = vmatmul.bf16.gmra.mxu0 %v6380
        %v8723 = vpop.f32.mrf.mxu0
        %v8724 = vadd.f32 %v8695, %v8723
        %v8725 = vpop.f32.mrf.mxu0
        %v8726 = vadd.f32 %v8697, %v8725
        %8727 = vmatmul.bf16.gmra.mxu0 %v6384
        %v8728 = vpop.f32.mrf.mxu0
        %v8729 = vadd.f32 %v8700, %v8728
        %v8730 = vpop.f32.mrf.mxu0
        %v8731 = vadd.f32 %v8702, %v8730
        %8732 = vmatmul.bf16.gmra.mxu0 %v6388
        %v8733 = vpop.f32.mrf.mxu0
        %v8734 = vadd.f32 %v8705, %v8733
        %v8735 = vpop.f32.mrf.mxu0
        %v8736 = vadd.f32 %v8707, %v8735
        %8737 = vdwg.mxu0
        %8738 = vmatpush.bf16.msra.mxu0 %v7477
        %8739 = vmatpush.bf16.msra.mxu0 %v7469
        %8740 = vmatpush.bf16.msra.mxu0 %v7461
        %8741 = vmatpush.bf16.msra.mxu0 %v7453
        %8742 = vmatpush.bf16.msra.mxu0 %v7445
        %8743 = vmatpush.bf16.msra.mxu0 %v7437
        %8744 = vmatpush.bf16.msra.mxu0 %v7429
        %8745 = vmatpush.bf16.msra.mxu0 %v7421
        %8746 = vmatmul.bf16.gmra.mxu0 %v6373
        %v8747 = vpop.f32.mrf.mxu0
        %v8748 = vadd.f32 0.0, %v8747
        %v8749 = vpop.f32.mrf.mxu0
        %v8750 = vadd.f32 0.0, %v8749
        %8751 = vmatmul.bf16.gmra.mxu0 %v6377
        %v8752 = vpop.f32.mrf.mxu0
        %v8753 = vadd.f32 0.0, %v8752
        %v8754 = vpop.f32.mrf.mxu0
        %v8755 = vadd.f32 0.0, %v8754
        %8756 = vmatmul.bf16.gmra.mxu0 %v6381
        %v8757 = vpop.f32.mrf.mxu0
        %v8758 = vadd.f32 0.0, %v8757
        %v8759 = vpop.f32.mrf.mxu0
        %v8760 = vadd.f32 0.0, %v8759
        %8761 = vmatmul.bf16.gmra.mxu0 %v6385
        %v8762 = vpop.f32.mrf.mxu0
        %v8763 = vadd.f32 0.0, %v8762
        %v8764 = vpop.f32.mrf.mxu0
        %v8765 = vadd.f32 0.0, %v8764
        %8766 = vdwg.mxu0
        %8767 = vmatpush.bf16.msra.mxu0 %v7541
        %8768 = vmatpush.bf16.msra.mxu0 %v7533
        %8769 = vmatpush.bf16.msra.mxu0 %v7525
        %8770 = vmatpush.bf16.msra.mxu0 %v7517
        %8771 = vmatpush.bf16.msra.mxu0 %v7509
        %8772 = vmatpush.bf16.msra.mxu0 %v7501
        %8773 = vmatpush.bf16.msra.mxu0 %v7493
        %8774 = vmatpush.bf16.msra.mxu0 %v7485
        %8775 = vmatmul.bf16.gmra.mxu0 %v6374
        %v8776 = vpop.f32.mrf.mxu0
        %v8777 = vadd.f32 %v8748, %v8776
        %v8778 = vpop.f32.mrf.mxu0
        %v8779 = vadd.f32 %v8750, %v8778
        %8780 = vmatmul.bf16.gmra.mxu0 %v6378
        %v8781 = vpop.f32.mrf.mxu0
        %v8782 = vadd.f32 %v8753, %v8781
        %v8783 = vpop.f32.mrf.mxu0
        %v8784 = vadd.f32 %v8755, %v8783
        %8785 = vmatmul.bf16.gmra.mxu0 %v6382
        %v8786 = vpop.f32.mrf.mxu0
        %v8787 = vadd.f32 %v8758, %v8786
        %v8788 = vpop.f32.mrf.mxu0
        %v8789 = vadd.f32 %v8760, %v8788
        %8790 = vmatmul.bf16.gmra.mxu0 %v6386
        %v8791 = vpop.f32.mrf.mxu0
        %v8792 = vadd.f32 %v8763, %v8791
        %v8793 = vpop.f32.mrf.mxu0
        %v8794 = vadd.f32 %v8765, %v8793
        %8795 = vdwg.mxu0
        %8796 = vmatpush.bf16.msra.mxu0 %v7605
        %8797 = vmatpush.bf16.msra.mxu0 %v7597
        %8798 = vmatpush.bf16.msra.mxu0 %v7589
        %8799 = vmatpush.bf16.msra.mxu0 %v7581
        %8800 = vmatpush.bf16.msra.mxu0 %v7573
        %8801 = vmatpush.bf16.msra.mxu0 %v7565
        %8802 = vmatpush.bf16.msra.mxu0 %v7557
        %8803 = vmatpush.bf16.msra.mxu0 %v7549
        %8804 = vmatmul.bf16.gmra.mxu0 %v6375
        %v8805 = vpop.f32.mrf.mxu0
        %v8806 = vadd.f32 %v8777, %v8805
        %v8807 = vpop.f32.mrf.mxu0
        %v8808 = vadd.f32 %v8779, %v8807
        %8809 = vmatmul.bf16.gmra.mxu0 %v6379
        %v8810 = vpop.f32.mrf.mxu0
        %v8811 = vadd.f32 %v8782, %v8810
        %v8812 = vpop.f32.mrf.mxu0
        %v8813 = vadd.f32 %v8784, %v8812
        %8814 = vmatmul.bf16.gmra.mxu0 %v6383
        %v8815 = vpop.f32.mrf.mxu0
        %v8816 = vadd.f32 %v8787, %v8815
        %v8817 = vpop.f32.mrf.mxu0
        %v8818 = vadd.f32 %v8789, %v8817
        %8819 = vmatmul.bf16.gmra.mxu0 %v6387
        %v8820 = vpop.f32.mrf.mxu0
        %v8821 = vadd.f32 %v8792, %v8820
        %v8822 = vpop.f32.mrf.mxu0
        %v8823 = vadd.f32 %v8794, %v8822
        %8824 = vdwg.mxu0
        %8825 = vmatpush.bf16.msra.mxu0 %v7669
        %8826 = vmatpush.bf16.msra.mxu0 %v7661
        %8827 = vmatpush.bf16.msra.mxu0 %v7653
        %8828 = vmatpush.bf16.msra.mxu0 %v7645
        %8829 = vmatpush.bf16.msra.mxu0 %v7637
        %8830 = vmatpush.bf16.msra.mxu0 %v7629
        %8831 = vmatpush.bf16.msra.mxu0 %v7621
        %8832 = vmatpush.bf16.msra.mxu0 %v7613
        %8833 = vmatmul.bf16.gmra.mxu0 %v6376
        %v8834 = vpop.f32.mrf.mxu0
        %v8835 = vadd.f32 %v8806, %v8834
        %v8836 = vpop.f32.mrf.mxu0
        %v8837 = vadd.f32 %v8808, %v8836
        %8838 = vmatmul.bf16.gmra.mxu0 %v6380
        %v8839 = vpop.f32.mrf.mxu0
        %v8840 = vadd.f32 %v8811, %v8839
        %v8841 = vpop.f32.mrf.mxu0
        %v8842 = vadd.f32 %v8813, %v8841
        %8843 = vmatmul.bf16.gmra.mxu0 %v6384
        %v8844 = vpop.f32.mrf.mxu0
        %v8845 = vadd.f32 %v8816, %v8844
        %v8846 = vpop.f32.mrf.mxu0
        %v8847 = vadd.f32 %v8818, %v8846
        %8848 = vmatmul.bf16.gmra.mxu0 %v6388
        %v8849 = vpop.f32.mrf.mxu0
        %v8850 = vadd.f32 %v8821, %v8849
        %v8851 = vpop.f32.mrf.mxu0
        %v8852 = vadd.f32 %v8823, %v8851
        %8853 = vdwg.mxu0
        %v8854 = vadd.f32 %v5446, %v8023
        %v8855 = vadd.f32 %v5562, %v8139
        %v8856 = vadd.f32 %v5678, %v8255
        %v8857 = vadd.f32 %v5794, %v8371
        %v8858 = vadd.f32 %v5910, %v8487
        %v8859 = vadd.f32 %v6026, %v8603
        %v8860 = vadd.f32 %v6142, %v8719
        %v8861 = vadd.f32 %v6258, %v8835
        %v8862 = vadd.f32 %v5448, %v8025
        %v8863 = vadd.f32 %v5564, %v8141
        %v8864 = vadd.f32 %v5680, %v8257
        %v8865 = vadd.f32 %v5796, %v8373
        %v8866 = vadd.f32 %v5912, %v8489
        %v8867 = vadd.f32 %v6028, %v8605
        %v8868 = vadd.f32 %v6144, %v8721
        %v8869 = vadd.f32 %v6260, %v8837
        %v8870 = vadd.f32 %v5451, %v8028
        %v8871 = vadd.f32 %v5567, %v8144
        %v8872 = vadd.f32 %v5683, %v8260
        %v8873 = vadd.f32 %v5799, %v8376
        %v8874 = vadd.f32 %v5915, %v8492
        %v8875 = vadd.f32 %v6031, %v8608
        %v8876 = vadd.f32 %v6147, %v8724
        %v8877 = vadd.f32 %v6263, %v8840
        %v8878 = vadd.f32 %v5453, %v8030
        %v8879 = vadd.f32 %v5569, %v8146
        %v8880 = vadd.f32 %v5685, %v8262
        %v8881 = vadd.f32 %v5801, %v8378
        %v8882 = vadd.f32 %v5917, %v8494
        %v8883 = vadd.f32 %v6033, %v8610
        %v8884 = vadd.f32 %v6149, %v8726
        %v8885 = vadd.f32 %v6265, %v8842
        %v8886 = vadd.f32 %v5456, %v8033
        %v8887 = vadd.f32 %v5572, %v8149
        %v8888 = vadd.f32 %v5688, %v8265
        %v8889 = vadd.f32 %v5804, %v8381
        %v8890 = vadd.f32 %v5920, %v8497
        %v8891 = vadd.f32 %v6036, %v8613
        %v8892 = vadd.f32 %v6152, %v8729
        %v8893 = vadd.f32 %v6268, %v8845
        %v8894 = vadd.f32 %v5458, %v8035
        %v8895 = vadd.f32 %v5574, %v8151
        %v8896 = vadd.f32 %v5690, %v8267
        %v8897 = vadd.f32 %v5806, %v8383
        %v8898 = vadd.f32 %v5922, %v8499
        %v8899 = vadd.f32 %v6038, %v8615
        %v8900 = vadd.f32 %v6154, %v8731
        %v8901 = vadd.f32 %v6270, %v8847
        %v8902 = vadd.f32 %v5461, %v8038
        %v8903 = vadd.f32 %v5577, %v8154
        %v8904 = vadd.f32 %v5693, %v8270
        %v8905 = vadd.f32 %v5809, %v8386
        %v8906 = vadd.f32 %v5925, %v8502
        %v8907 = vadd.f32 %v6041, %v8618
        %v8908 = vadd.f32 %v6157, %v8734
        %v8909 = vadd.f32 %v6273, %v8850
        %v8910 = vadd.f32 %v5463, %v8040
        %v8911 = vadd.f32 %v5579, %v8156
        %v8912 = vadd.f32 %v5695, %v8272
        %v8913 = vadd.f32 %v5811, %v8388
        %v8914 = vadd.f32 %v5927, %v8504
        %v8915 = vadd.f32 %v6043, %v8620
        %v8916 = vadd.f32 %v6159, %v8736
        %v8917 = vadd.f32 %v6275, %v8852
        %v8918 = vld [vmem:[#allocation8] sm:$0xff]
        %v8920 = vperm.slane %v8918, 0
        %v8921 = vperm.slane %v8918, 1
        %v8922 = vperm.slane %v8918, 2
        %v8923 = vperm.slane %v8918, 3
        %v8924 = vperm.slane %v8918, 4
        %v8925 = vperm.slane %v8918, 5
        %v8926 = vperm.slane %v8918, 6
        %v8927 = vperm.slane %v8918, 7
        %v8936 = vadd.f32 %v8854, %v8920
        %v8937 = vadd.f32 %v8855, %v8921
        %v8938 = vadd.f32 %v8856, %v8922
        %v8939 = vadd.f32 %v8857, %v8923
        %v8940 = vadd.f32 %v8858, %v8924
        %v8941 = vadd.f32 %v8859, %v8925
        %v8942 = vadd.f32 %v8860, %v8926
        %v8943 = vadd.f32 %v8861, %v8927
        %v8944 = vadd.f32 %v8862, %v8920
        %v8945 = vadd.f32 %v8863, %v8921
        %v8946 = vadd.f32 %v8864, %v8922
        %v8947 = vadd.f32 %v8865, %v8923
        %v8948 = vadd.f32 %v8866, %v8924
        %v8949 = vadd.f32 %v8867, %v8925
        %v8950 = vadd.f32 %v8868, %v8926
        %v8951 = vadd.f32 %v8869, %v8927
        %v8952 = vadd.f32 %v8870, %v8920
        %v8953 = vadd.f32 %v8871, %v8921
        %v8954 = vadd.f32 %v8872, %v8922
        %v8955 = vadd.f32 %v8873, %v8923
        %v8956 = vadd.f32 %v8874, %v8924
        %v8957 = vadd.f32 %v8875, %v8925
        %v8958 = vadd.f32 %v8876, %v8926
        %v8959 = vadd.f32 %v8877, %v8927
        %v8960 = vadd.f32 %v8878, %v8920
        %v8961 = vadd.f32 %v8879, %v8921
        %v8962 = vadd.f32 %v8880, %v8922
        %v8963 = vadd.f32 %v8881, %v8923
        %v8964 = vadd.f32 %v8882, %v8924
        %v8965 = vadd.f32 %v8883, %v8925
        %v8966 = vadd.f32 %v8884, %v8926
        %v8967 = vadd.f32 %v8885, %v8927
        %v8968 = vadd.f32 %v8886, %v8920
        %v8969 = vadd.f32 %v8887, %v8921
        %v8970 = vadd.f32 %v8888, %v8922
        %v8971 = vadd.f32 %v8889, %v8923
        %v8972 = vadd.f32 %v8890, %v8924
        %v8973 = vadd.f32 %v8891, %v8925
        %v8974 = vadd.f32 %v8892, %v8926
        %v8975 = vadd.f32 %v8893, %v8927
        %v8976 = vadd.f32 %v8894, %v8920
        %v8977 = vadd.f32 %v8895, %v8921
        %v8978 = vadd.f32 %v8896, %v8922
        %v8979 = vadd.f32 %v8897, %v8923
        %v8980 = vadd.f32 %v8898, %v8924
        %v8981 = vadd.f32 %v8899, %v8925
        %v8982 = vadd.f32 %v8900, %v8926
        %v8983 = vadd.f32 %v8901, %v8927
        %v8984 = vadd.f32 %v8902, %v8920
        %v8985 = vadd.f32 %v8903, %v8921
        %v8986 = vadd.f32 %v8904, %v8922
        %v8987 = vadd.f32 %v8905, %v8923
        %v8988 = vadd.f32 %v8906, %v8924
        %v8989 = vadd.f32 %v8907, %v8925
        %v8990 = vadd.f32 %v8908, %v8926
        %v8991 = vadd.f32 %v8909, %v8927
        %v8992 = vadd.f32 %v8910, %v8920
        %v8993 = vadd.f32 %v8911, %v8921
        %v8994 = vadd.f32 %v8912, %v8922
        %v8995 = vadd.f32 %v8913, %v8923
        %v8996 = vadd.f32 %v8914, %v8924
        %v8997 = vadd.f32 %v8915, %v8925
        %v8998 = vadd.f32 %v8916, %v8926
        %v8999 = vadd.f32 %v8917, %v8927
        %v9000 = vmax.f32 %v8936, 0.0
        %v9001 = vmax.f32 %v8937, 0.0
        %v9002 = vmax.f32 %v8938, 0.0
        %v9003 = vmax.f32 %v8939, 0.0
        %v9004 = vmax.f32 %v8940, 0.0
        %v9005 = vmax.f32 %v8941, 0.0
        %v9006 = vmax.f32 %v8942, 0.0
        %v9007 = vmax.f32 %v8943, 0.0
        %v9008 = vmax.f32 %v8944, 0.0
        %v9009 = vmax.f32 %v8945, 0.0
        %v9010 = vmax.f32 %v8946, 0.0
        %v9011 = vmax.f32 %v8947, 0.0
        %v9012 = vmax.f32 %v8948, 0.0
        %v9013 = vmax.f32 %v8949, 0.0
        %v9014 = vmax.f32 %v8950, 0.0
        %v9015 = vmax.f32 %v8951, 0.0
        %v9016 = vmax.f32 %v8952, 0.0
        %v9017 = vmax.f32 %v8953, 0.0
        %v9018 = vmax.f32 %v8954, 0.0
        %v9019 = vmax.f32 %v8955, 0.0
        %v9020 = vmax.f32 %v8956, 0.0
        %v9021 = vmax.f32 %v8957, 0.0
        %v9022 = vmax.f32 %v8958, 0.0
        %v9023 = vmax.f32 %v8959, 0.0
        %v9024 = vmax.f32 %v8960, 0.0
        %v9025 = vmax.f32 %v8961, 0.0
        %v9026 = vmax.f32 %v8962, 0.0
        %v9027 = vmax.f32 %v8963, 0.0
        %v9028 = vmax.f32 %v8964, 0.0
        %v9029 = vmax.f32 %v8965, 0.0
        %v9030 = vmax.f32 %v8966, 0.0
        %v9031 = vmax.f32 %v8967, 0.0
        %v9032 = vmax.f32 %v8968, 0.0
        %v9033 = vmax.f32 %v8969, 0.0
        %v9034 = vmax.f32 %v8970, 0.0
        %v9035 = vmax.f32 %v8971, 0.0
        %v9036 = vmax.f32 %v8972, 0.0
        %v9037 = vmax.f32 %v8973, 0.0
        %v9038 = vmax.f32 %v8974, 0.0
        %v9039 = vmax.f32 %v8975, 0.0
        %v9040 = vmax.f32 %v8976, 0.0
        %v9041 = vmax.f32 %v8977, 0.0
        %v9042 = vmax.f32 %v8978, 0.0
        %v9043 = vmax.f32 %v8979, 0.0
        %v9044 = vmax.f32 %v8980, 0.0
        %v9045 = vmax.f32 %v8981, 0.0
        %v9046 = vmax.f32 %v8982, 0.0
        %v9047 = vmax.f32 %v8983, 0.0
        %v9048 = vmax.f32 %v8984, 0.0
        %v9049 = vmax.f32 %v8985, 0.0
        %v9050 = vmax.f32 %v8986, 0.0
        %v9051 = vmax.f32 %v8987, 0.0
        %v9052 = vmax.f32 %v8988, 0.0
        %v9053 = vmax.f32 %v8989, 0.0
        %v9054 = vmax.f32 %v8990, 0.0
        %v9055 = vmax.f32 %v8991, 0.0
        %v9056 = vmax.f32 %v8992, 0.0
        %v9057 = vmax.f32 %v8993, 0.0
        %v9058 = vmax.f32 %v8994, 0.0
        %v9059 = vmax.f32 %v8995, 0.0
        %v9060 = vmax.f32 %v8996, 0.0
        %v9061 = vmax.f32 %v8997, 0.0
        %v9062 = vmax.f32 %v8998, 0.0
        %v9063 = vmax.f32 %v8999, 0.0
        %v9064 = vadd.f32 %v9000, %v9008
        %v9065 = vrot.slane %v9064, 4
        %v9066 = vadd.f32 %v9064, %v9065
        %v9067 = vrot.slane %v9066, 2
        %v9068 = vadd.f32 %v9066, %v9067
        %v9069 = vrot.slane %v9068, 1
        %v9070 = vadd.f32 %v9068, %v9069
        %v9071 = vadd.f32 %v9001, %v9009
        %v9072 = vrot.slane %v9071, 4
        %v9073 = vadd.f32 %v9071, %v9072
        %v9074 = vrot.slane %v9073, 2
        %v9075 = vadd.f32 %v9073, %v9074
        %v9076 = vrot.slane %v9075, 1
        %v9077 = vadd.f32 %v9075, %v9076
        %v9078 = vadd.f32 %v9002, %v9010
        %v9079 = vrot.slane %v9078, 4
        %v9080 = vadd.f32 %v9078, %v9079
        %v9081 = vrot.slane %v9080, 2
        %v9082 = vadd.f32 %v9080, %v9081
        %v9083 = vrot.slane %v9082, 1
        %v9084 = vadd.f32 %v9082, %v9083
        %v9085 = vadd.f32 %v9003, %v9011
        %v9086 = vrot.slane %v9085, 4
        %v9087 = vadd.f32 %v9085, %v9086
        %v9088 = vrot.slane %v9087, 2
        %v9089 = vadd.f32 %v9087, %v9088
        %v9090 = vrot.slane %v9089, 1
        %v9091 = vadd.f32 %v9089, %v9090
        %v9092 = vadd.f32 %v9004, %v9012
        %v9093 = vrot.slane %v9092, 4
        %v9094 = vadd.f32 %v9092, %v9093
        %v9095 = vrot.slane %v9094, 2
        %v9096 = vadd.f32 %v9094, %v9095
        %v9097 = vrot.slane %v9096, 1
        %v9098 = vadd.f32 %v9096, %v9097
        %v9099 = vadd.f32 %v9005, %v9013
        %v9100 = vrot.slane %v9099, 4
        %v9101 = vadd.f32 %v9099, %v9100
        %v9102 = vrot.slane %v9101, 2
        %v9103 = vadd.f32 %v9101, %v9102
        %v9104 = vrot.slane %v9103, 1
        %v9105 = vadd.f32 %v9103, %v9104
        %v9106 = vadd.f32 %v9006, %v9014
        %v9107 = vrot.slane %v9106, 4
        %v9108 = vadd.f32 %v9106, %v9107
        %v9109 = vrot.slane %v9108, 2
        %v9110 = vadd.f32 %v9108, %v9109
        %v9111 = vrot.slane %v9110, 1
        %v9112 = vadd.f32 %v9110, %v9111
        %v9113 = vadd.f32 %v9007, %v9015
        %v9114 = vrot.slane %v9113, 4
        %v9115 = vadd.f32 %v9113, %v9114
        %v9116 = vrot.slane %v9115, 2
        %v9117 = vadd.f32 %v9115, %v9116
        %v9118 = vrot.slane %v9117, 1
        %v9119 = vadd.f32 %v9117, %v9118
        %v9120 = vadd.f32 %v9016, %v9024
        %v9121 = vrot.slane %v9120, 4
        %v9122 = vadd.f32 %v9120, %v9121
        %v9123 = vrot.slane %v9122, 2
        %v9124 = vadd.f32 %v9122, %v9123
        %v9125 = vrot.slane %v9124, 1
        %v9126 = vadd.f32 %v9124, %v9125
        %v9127 = vadd.f32 %v9017, %v9025
        %v9128 = vrot.slane %v9127, 4
        %v9129 = vadd.f32 %v9127, %v9128
        %v9130 = vrot.slane %v9129, 2
        %v9131 = vadd.f32 %v9129, %v9130
        %v9132 = vrot.slane %v9131, 1
        %v9133 = vadd.f32 %v9131, %v9132
        %v9134 = vadd.f32 %v9018, %v9026
        %v9135 = vrot.slane %v9134, 4
        %v9136 = vadd.f32 %v9134, %v9135
        %v9137 = vrot.slane %v9136, 2
        %v9138 = vadd.f32 %v9136, %v9137
        %v9139 = vrot.slane %v9138, 1
        %v9140 = vadd.f32 %v9138, %v9139
        %v9141 = vadd.f32 %v9019, %v9027
        %v9142 = vrot.slane %v9141, 4
        %v9143 = vadd.f32 %v9141, %v9142
        %v9144 = vrot.slane %v9143, 2
        %v9145 = vadd.f32 %v9143, %v9144
        %v9146 = vrot.slane %v9145, 1
        %v9147 = vadd.f32 %v9145, %v9146
        %v9148 = vadd.f32 %v9020, %v9028
        %v9149 = vrot.slane %v9148, 4
        %v9150 = vadd.f32 %v9148, %v9149
        %v9151 = vrot.slane %v9150, 2
        %v9152 = vadd.f32 %v9150, %v9151
        %v9153 = vrot.slane %v9152, 1
        %v9154 = vadd.f32 %v9152, %v9153
        %v9155 = vadd.f32 %v9021, %v9029
        %v9156 = vrot.slane %v9155, 4
        %v9157 = vadd.f32 %v9155, %v9156
        %v9158 = vrot.slane %v9157, 2
        %v9159 = vadd.f32 %v9157, %v9158
        %v9160 = vrot.slane %v9159, 1
        %v9161 = vadd.f32 %v9159, %v9160
        %v9162 = vadd.f32 %v9022, %v9030
        %v9163 = vrot.slane %v9162, 4
        %v9164 = vadd.f32 %v9162, %v9163
        %v9165 = vrot.slane %v9164, 2
        %v9166 = vadd.f32 %v9164, %v9165
        %v9167 = vrot.slane %v9166, 1
        %v9168 = vadd.f32 %v9166, %v9167
        %v9169 = vadd.f32 %v9023, %v9031
        %v9170 = vrot.slane %v9169, 4
        %v9171 = vadd.f32 %v9169, %v9170
        %v9172 = vrot.slane %v9171, 2
        %v9173 = vadd.f32 %v9171, %v9172
        %v9174 = vrot.slane %v9173, 1
        %v9175 = vadd.f32 %v9173, %v9174
        %v9176 = vadd.f32 %v9032, %v9040
        %v9177 = vrot.slane %v9176, 4
        %v9178 = vadd.f32 %v9176, %v9177
        %v9179 = vrot.slane %v9178, 2
        %v9180 = vadd.f32 %v9178, %v9179
        %v9181 = vrot.slane %v9180, 1
        %v9182 = vadd.f32 %v9180, %v9181
        %v9183 = vadd.f32 %v9033, %v9041
        %v9184 = vrot.slane %v9183, 4
        %v9185 = vadd.f32 %v9183, %v9184
        %v9186 = vrot.slane %v9185, 2
        %v9187 = vadd.f32 %v9185, %v9186
        %v9188 = vrot.slane %v9187, 1
        %v9189 = vadd.f32 %v9187, %v9188
        %v9190 = vadd.f32 %v9034, %v9042
        %v9191 = vrot.slane %v9190, 4
        %v9192 = vadd.f32 %v9190, %v9191
        %v9193 = vrot.slane %v9192, 2
        %v9194 = vadd.f32 %v9192, %v9193
        %v9195 = vrot.slane %v9194, 1
        %v9196 = vadd.f32 %v9194, %v9195
        %v9197 = vadd.f32 %v9035, %v9043
        %v9198 = vrot.slane %v9197, 4
        %v9199 = vadd.f32 %v9197, %v9198
        %v9200 = vrot.slane %v9199, 2
        %v9201 = vadd.f32 %v9199, %v9200
        %v9202 = vrot.slane %v9201, 1
        %v9203 = vadd.f32 %v9201, %v9202
        %v9204 = vadd.f32 %v9036, %v9044
        %v9205 = vrot.slane %v9204, 4
        %v9206 = vadd.f32 %v9204, %v9205
        %v9207 = vrot.slane %v9206, 2
        %v9208 = vadd.f32 %v9206, %v9207
        %v9209 = vrot.slane %v9208, 1
        %v9210 = vadd.f32 %v9208, %v9209
        %v9211 = vadd.f32 %v9037, %v9045
        %v9212 = vrot.slane %v9211, 4
        %v9213 = vadd.f32 %v9211, %v9212
        %v9214 = vrot.slane %v9213, 2
        %v9215 = vadd.f32 %v9213, %v9214
        %v9216 = vrot.slane %v9215, 1
        %v9217 = vadd.f32 %v9215, %v9216
        %v9218 = vadd.f32 %v9038, %v9046
        %v9219 = vrot.slane %v9218, 4
        %v9220 = vadd.f32 %v9218, %v9219
        %v9221 = vrot.slane %v9220, 2
        %v9222 = vadd.f32 %v9220, %v9221
        %v9223 = vrot.slane %v9222, 1
        %v9224 = vadd.f32 %v9222, %v9223
        %v9225 = vadd.f32 %v9039, %v9047
        %v9226 = vrot.slane %v9225, 4
        %v9227 = vadd.f32 %v9225, %v9226
        %v9228 = vrot.slane %v9227, 2
        %v9229 = vadd.f32 %v9227, %v9228
        %v9230 = vrot.slane %v9229, 1
        %v9231 = vadd.f32 %v9229, %v9230
        %v9232 = vadd.f32 %v9048, %v9056
        %v9233 = vrot.slane %v9232, 4
        %v9234 = vadd.f32 %v9232, %v9233
        %v9235 = vrot.slane %v9234, 2
        %v9236 = vadd.f32 %v9234, %v9235
        %v9237 = vrot.slane %v9236, 1
        %v9238 = vadd.f32 %v9236, %v9237
        %v9239 = vadd.f32 %v9049, %v9057
        %v9240 = vrot.slane %v9239, 4
        %v9241 = vadd.f32 %v9239, %v9240
        %v9242 = vrot.slane %v9241, 2
        %v9243 = vadd.f32 %v9241, %v9242
        %v9244 = vrot.slane %v9243, 1
        %v9245 = vadd.f32 %v9243, %v9244
        %v9246 = vadd.f32 %v9050, %v9058
        %v9247 = vrot.slane %v9246, 4
        %v9248 = vadd.f32 %v9246, %v9247
        %v9249 = vrot.slane %v9248, 2
        %v9250 = vadd.f32 %v9248, %v9249
        %v9251 = vrot.slane %v9250, 1
        %v9252 = vadd.f32 %v9250, %v9251
        %v9253 = vadd.f32 %v9051, %v9059
        %v9254 = vrot.slane %v9253, 4
        %v9255 = vadd.f32 %v9253, %v9254
        %v9256 = vrot.slane %v9255, 2
        %v9257 = vadd.f32 %v9255, %v9256
        %v9258 = vrot.slane %v9257, 1
        %v9259 = vadd.f32 %v9257, %v9258
        %v9260 = vadd.f32 %v9052, %v9060
        %v9261 = vrot.slane %v9260, 4
        %v9262 = vadd.f32 %v9260, %v9261
        %v9263 = vrot.slane %v9262, 2
        %v9264 = vadd.f32 %v9262, %v9263
        %v9265 = vrot.slane %v9264, 1
        %v9266 = vadd.f32 %v9264, %v9265
        %v9267 = vadd.f32 %v9053, %v9061
        %v9268 = vrot.slane %v9267, 4
        %v9269 = vadd.f32 %v9267, %v9268
        %v9270 = vrot.slane %v9269, 2
        %v9271 = vadd.f32 %v9269, %v9270
        %v9272 = vrot.slane %v9271, 1
        %v9273 = vadd.f32 %v9271, %v9272
        %v9274 = vadd.f32 %v9054, %v9062
        %v9275 = vrot.slane %v9274, 4
        %v9276 = vadd.f32 %v9274, %v9275
        %v9277 = vrot.slane %v9276, 2
        %v9278 = vadd.f32 %v9276, %v9277
        %v9279 = vrot.slane %v9278, 1
        %v9280 = vadd.f32 %v9278, %v9279
        %v9281 = vadd.f32 %v9055, %v9063
        %v9282 = vrot.slane %v9281, 4
        %v9283 = vadd.f32 %v9281, %v9282
        %v9284 = vrot.slane %v9283, 2
        %v9285 = vadd.f32 %v9283, %v9284
        %v9286 = vrot.slane %v9285, 1
        %v9287 = vadd.f32 %v9285, %v9286
        %v9288 = vld [vmem:[%s6] sm:$0xff]
        %v9289 = vld [vmem:[%s6 + $0x8] sm:$0xff]
        %v9290 = vld [vmem:[%s6 + $0x10] sm:$0xff]
        %v9291 = vld [vmem:[%s6 + $0x18] sm:$0xff]
        %v9292 = vld [vmem:[%s6 + $0x20] sm:$0xff]
        %v9293 = vld [vmem:[%s6 + $0x28] sm:$0xff]
        %v9294 = vld [vmem:[%s6 + $0x30] sm:$0xff]
        %v9295 = vld [vmem:[%s6 + $0x38] sm:$0xff]
        %v9296 = vld [vmem:[%s6 + $0x40] sm:$0xff]
        %v9297 = vld [vmem:[%s6 + $0x48] sm:$0xff]
        %v9298 = vld [vmem:[%s6 + $0x50] sm:$0xff]
        %v9299 = vld [vmem:[%s6 + $0x58] sm:$0xff]
        %v9300 = vld [vmem:[%s6 + $0x60] sm:$0xff]
        %v9301 = vld [vmem:[%s6 + $0x68] sm:$0xff]
        %v9302 = vld [vmem:[%s6 + $0x70] sm:$0xff]
        %v9303 = vld [vmem:[%s6 + $0x78] sm:$0xff]
        %v9304 = vld [vmem:[%s6 + $0x80] sm:$0xff]
        %v9305 = vld [vmem:[%s6 + $0x88] sm:$0xff]
        %v9306 = vld [vmem:[%s6 + $0x90] sm:$0xff]
        %v9307 = vld [vmem:[%s6 + $0x98] sm:$0xff]
        %v9308 = vld [vmem:[%s6 + $0xa0] sm:$0xff]
        %v9309 = vld [vmem:[%s6 + $0xa8] sm:$0xff]
        %v9310 = vld [vmem:[%s6 + $0xb0] sm:$0xff]
        %v9311 = vld [vmem:[%s6 + $0xb8] sm:$0xff]
        %v9312 = vld [vmem:[%s6 + $0xc0] sm:$0xff]
        %v9313 = vld [vmem:[%s6 + $0xc8] sm:$0xff]
        %v9314 = vld [vmem:[%s6 + $0xd0] sm:$0xff]
        %v9315 = vld [vmem:[%s6 + $0xd8] sm:$0xff]
        %v9316 = vld [vmem:[%s6 + $0xe0] sm:$0xff]
        %v9317 = vld [vmem:[%s6 + $0xe8] sm:$0xff]
        %v9318 = vld [vmem:[%s6 + $0xf0] sm:$0xff]
        %v9319 = vld [vmem:[%s6 + $0xf8] sm:$0xff]
        %v9320 = vld [vmem:[%s6 + $0x100] sm:$0xff]
        %v9321 = vld [vmem:[%s6 + $0x108] sm:$0xff]
        %v9322 = vld [vmem:[%s6 + $0x110] sm:$0xff]
        %v9323 = vld [vmem:[%s6 + $0x118] sm:$0xff]
        %v9324 = vld [vmem:[%s6 + $0x120] sm:$0xff]
        %v9325 = vld [vmem:[%s6 + $0x128] sm:$0xff]
        %v9326 = vld [vmem:[%s6 + $0x130] sm:$0xff]
        %v9327 = vld [vmem:[%s6 + $0x138] sm:$0xff]
        %v9328 = vld [vmem:[%s6 + $0x140] sm:$0xff]
        %v9329 = vld [vmem:[%s6 + $0x148] sm:$0xff]
        %v9330 = vld [vmem:[%s6 + $0x150] sm:$0xff]
        %v9331 = vld [vmem:[%s6 + $0x158] sm:$0xff]
        %v9332 = vld [vmem:[%s6 + $0x160] sm:$0xff]
        %v9333 = vld [vmem:[%s6 + $0x168] sm:$0xff]
        %v9334 = vld [vmem:[%s6 + $0x170] sm:$0xff]
        %v9335 = vld [vmem:[%s6 + $0x178] sm:$0xff]
        %v9336 = vld [vmem:[%s6 + $0x180] sm:$0xff]
        %v9337 = vld [vmem:[%s6 + $0x188] sm:$0xff]
        %v9338 = vld [vmem:[%s6 + $0x190] sm:$0xff]
        %v9339 = vld [vmem:[%s6 + $0x198] sm:$0xff]
        %v9340 = vld [vmem:[%s6 + $0x1a0] sm:$0xff]
        %v9341 = vld [vmem:[%s6 + $0x1a8] sm:$0xff]
        %v9342 = vld [vmem:[%s6 + $0x1b0] sm:$0xff]
        %v9343 = vld [vmem:[%s6 + $0x1b8] sm:$0xff]
        %v9344 = vld [vmem:[%s6 + $0x1c0] sm:$0xff]
        %v9345 = vld [vmem:[%s6 + $0x1c8] sm:$0xff]
        %v9346 = vld [vmem:[%s6 + $0x1d0] sm:$0xff]
        %v9347 = vld [vmem:[%s6 + $0x1d8] sm:$0xff]
        %v9348 = vld [vmem:[%s6 + $0x1e0] sm:$0xff]
        %v9349 = vld [vmem:[%s6 + $0x1e8] sm:$0xff]
        %v9350 = vld [vmem:[%s6 + $0x1f0] sm:$0xff]
        %v9351 = vld [vmem:[%s6 + $0x1f8] sm:$0xff]
        %v9352 = vld [vmem:[%s6 + $0x200] sm:$0xff]
        %v9353 = vld [vmem:[%s6 + $0x208] sm:$0xff]
        %v9354 = vld [vmem:[%s6 + $0x210] sm:$0xff]
        %v9355 = vld [vmem:[%s6 + $0x218] sm:$0xff]
        %v9356 = vld [vmem:[%s6 + $0x220] sm:$0xff]
        %v9357 = vld [vmem:[%s6 + $0x228] sm:$0xff]
        %v9358 = vld [vmem:[%s6 + $0x230] sm:$0xff]
        %v9359 = vld [vmem:[%s6 + $0x238] sm:$0xff]
        %v9360 = vld [vmem:[%s6 + $0x240] sm:$0xff]
        %v9361 = vld [vmem:[%s6 + $0x248] sm:$0xff]
        %v9362 = vld [vmem:[%s6 + $0x250] sm:$0xff]
        %v9363 = vld [vmem:[%s6 + $0x258] sm:$0xff]
        %v9364 = vld [vmem:[%s6 + $0x260] sm:$0xff]
        %v9365 = vld [vmem:[%s6 + $0x268] sm:$0xff]
        %v9366 = vld [vmem:[%s6 + $0x270] sm:$0xff]
        %v9367 = vld [vmem:[%s6 + $0x278] sm:$0xff]
        %v9368 = vld [vmem:[%s6 + $0x280] sm:$0xff]
        %v9369 = vld [vmem:[%s6 + $0x288] sm:$0xff]
        %v9370 = vld [vmem:[%s6 + $0x290] sm:$0xff]
        %v9371 = vld [vmem:[%s6 + $0x298] sm:$0xff]
        %v9372 = vld [vmem:[%s6 + $0x2a0] sm:$0xff]
        %v9373 = vld [vmem:[%s6 + $0x2a8] sm:$0xff]
        %v9374 = vld [vmem:[%s6 + $0x2b0] sm:$0xff]
        %v9375 = vld [vmem:[%s6 + $0x2b8] sm:$0xff]
        %v9376 = vld [vmem:[%s6 + $0x2c0] sm:$0xff]
        %v9377 = vld [vmem:[%s6 + $0x2c8] sm:$0xff]
        %v9378 = vld [vmem:[%s6 + $0x2d0] sm:$0xff]
        %v9379 = vld [vmem:[%s6 + $0x2d8] sm:$0xff]
        %v9380 = vld [vmem:[%s6 + $0x2e0] sm:$0xff]
        %v9381 = vld [vmem:[%s6 + $0x2e8] sm:$0xff]
        %v9382 = vld [vmem:[%s6 + $0x2f0] sm:$0xff]
        %v9383 = vld [vmem:[%s6 + $0x2f8] sm:$0xff]
        %v9384 = vld [vmem:[%s6 + $0x300] sm:$0xff]
        %v9385 = vld [vmem:[%s6 + $0x308] sm:$0xff]
        %v9386 = vld [vmem:[%s6 + $0x310] sm:$0xff]
        %v9387 = vld [vmem:[%s6 + $0x318] sm:$0xff]
        %v9388 = vld [vmem:[%s6 + $0x320] sm:$0xff]
        %v9389 = vld [vmem:[%s6 + $0x328] sm:$0xff]
        %v9390 = vld [vmem:[%s6 + $0x330] sm:$0xff]
        %v9391 = vld [vmem:[%s6 + $0x338] sm:$0xff]
        %v9392 = vld [vmem:[%s6 + $0x340] sm:$0xff]
        %v9393 = vld [vmem:[%s6 + $0x348] sm:$0xff]
        %v9394 = vld [vmem:[%s6 + $0x350] sm:$0xff]
        %v9395 = vld [vmem:[%s6 + $0x358] sm:$0xff]
        %v9396 = vld [vmem:[%s6 + $0x360] sm:$0xff]
        %v9397 = vld [vmem:[%s6 + $0x368] sm:$0xff]
        %v9398 = vld [vmem:[%s6 + $0x370] sm:$0xff]
        %v9399 = vld [vmem:[%s6 + $0x378] sm:$0xff]
        %v9400 = vld [vmem:[%s6 + $0x380] sm:$0xff]
        %v9401 = vld [vmem:[%s6 + $0x388] sm:$0xff]
        %v9402 = vld [vmem:[%s6 + $0x390] sm:$0xff]
        %v9403 = vld [vmem:[%s6 + $0x398] sm:$0xff]
        %v9404 = vld [vmem:[%s6 + $0x3a0] sm:$0xff]
        %v9405 = vld [vmem:[%s6 + $0x3a8] sm:$0xff]
        %v9406 = vld [vmem:[%s6 + $0x3b0] sm:$0xff]
        %v9407 = vld [vmem:[%s6 + $0x3b8] sm:$0xff]
        %v9408 = vld [vmem:[%s6 + $0x3c0] sm:$0xff]
        %v9409 = vld [vmem:[%s6 + $0x3c8] sm:$0xff]
        %v9410 = vld [vmem:[%s6 + $0x3d0] sm:$0xff]
        %v9411 = vld [vmem:[%s6 + $0x3d8] sm:$0xff]
        %v9412 = vld [vmem:[%s6 + $0x3e0] sm:$0xff]
        %v9413 = vld [vmem:[%s6 + $0x3e8] sm:$0xff]
        %v9414 = vld [vmem:[%s6 + $0x3f0] sm:$0xff]
        %v9415 = vld [vmem:[%s6 + $0x3f8] sm:$0xff]
        %vm9448 = vcmask 1041409
        %v9449 = vsel %vm9448, %v9126, %v9070
        %vm9450 = vcmask 1042434
        %v9451 = vsel %vm9450, %v9182, %v9449
        %vm9452 = vcmask 1043459
        %v9453 = vsel %vm9452, %v9238, %v9451
        %v9454 = vsel %vm9448, %v9133, %v9077
        %v9455 = vsel %vm9450, %v9189, %v9454
        %v9456 = vsel %vm9452, %v9245, %v9455
        %v9457 = vsel %vm9448, %v9140, %v9084
        %v9458 = vsel %vm9450, %v9196, %v9457
        %v9459 = vsel %vm9452, %v9252, %v9458
        %v9460 = vsel %vm9448, %v9147, %v9091
        %v9461 = vsel %vm9450, %v9203, %v9460
        %v9462 = vsel %vm9452, %v9259, %v9461
        %v9463 = vsel %vm9448, %v9154, %v9098
        %v9464 = vsel %vm9450, %v9210, %v9463
        %v9465 = vsel %vm9452, %v9266, %v9464
        %v9466 = vsel %vm9448, %v9161, %v9105
        %v9467 = vsel %vm9450, %v9217, %v9466
        %v9468 = vsel %vm9452, %v9273, %v9467
        %v9469 = vsel %vm9448, %v9168, %v9112
        %v9470 = vsel %vm9450, %v9224, %v9469
        %v9471 = vsel %vm9452, %v9280, %v9470
        %v9472 = vsel %vm9448, %v9175, %v9119
        %v9473 = vsel %vm9450, %v9231, %v9472
        %v9474 = vsel %vm9452, %v9287, %v9473
        %9483 = vmatpush.msra.mxu0 %v9303
        %9484 = vmatpush.msra.mxu0 %v9302
        %9485 = vmatpush.msra.mxu0 %v9301
        %9486 = vmatpush.msra.mxu0 %v9300
        %9487 = vmatpush.msra.mxu0 %v9299
        %9488 = vmatpush.msra.mxu0 %v9298
        %9489 = vmatpush.msra.mxu0 %v9297
        %9490 = vmatpush.msra.mxu0 %v9296
        %9491 = vmatpush.msra.mxu0 %v9295
        %9492 = vmatpush.msra.mxu0 %v9294
        %9493 = vmatpush.msra.mxu0 %v9293
        %9494 = vmatpush.msra.mxu0 %v9292
        %9495 = vmatpush.msra.mxu0 %v9291
        %9496 = vmatpush.msra.mxu0 %v9290
        %9497 = vmatpush.msra.mxu0 %v9289
        %9498 = vmatpush.msra.mxu0 %v9288
        %9499 = vmatmul.f32.gmra.mxu0 %v9453
        %v9500 = vpop.f32.mrf.mxu0
        %v9501 = vadd.f32 0.0, %v9500
        %9502 = vdwg.mxu0
        %9503 = vmatpush.msra.mxu0 %v9319
        %9504 = vmatpush.msra.mxu0 %v9318
        %9505 = vmatpush.msra.mxu0 %v9317
        %9506 = vmatpush.msra.mxu0 %v9316
        %9507 = vmatpush.msra.mxu0 %v9315
        %9508 = vmatpush.msra.mxu0 %v9314
        %9509 = vmatpush.msra.mxu0 %v9313
        %9510 = vmatpush.msra.mxu0 %v9312
        %9511 = vmatpush.msra.mxu0 %v9311
        %9512 = vmatpush.msra.mxu0 %v9310
        %9513 = vmatpush.msra.mxu0 %v9309
        %9514 = vmatpush.msra.mxu0 %v9308
        %9515 = vmatpush.msra.mxu0 %v9307
        %9516 = vmatpush.msra.mxu0 %v9306
        %9517 = vmatpush.msra.mxu0 %v9305
        %9518 = vmatpush.msra.mxu0 %v9304
        %9519 = vmatmul.f32.gmra.mxu0 %v9456
        %v9520 = vpop.f32.mrf.mxu0
        %v9521 = vadd.f32 %v9501, %v9520
        %9522 = vdwg.mxu0
        %9523 = vmatpush.msra.mxu0 %v9335
        %9524 = vmatpush.msra.mxu0 %v9334
        %9525 = vmatpush.msra.mxu0 %v9333
        %9526 = vmatpush.msra.mxu0 %v9332
        %9527 = vmatpush.msra.mxu0 %v9331
        %9528 = vmatpush.msra.mxu0 %v9330
        %9529 = vmatpush.msra.mxu0 %v9329
        %9530 = vmatpush.msra.mxu0 %v9328
        %9531 = vmatpush.msra.mxu0 %v9327
        %9532 = vmatpush.msra.mxu0 %v9326
        %9533 = vmatpush.msra.mxu0 %v9325
        %9534 = vmatpush.msra.mxu0 %v9324
        %9535 = vmatpush.msra.mxu0 %v9323
        %9536 = vmatpush.msra.mxu0 %v9322
        %9537 = vmatpush.msra.mxu0 %v9321
        %9538 = vmatpush.msra.mxu0 %v9320
        %9539 = vmatmul.f32.gmra.mxu0 %v9459
        %v9540 = vpop.f32.mrf.mxu0
        %v9541 = vadd.f32 %v9521, %v9540
        %9542 = vdwg.mxu0
        %9543 = vmatpush.msra.mxu0 %v9351
        %9544 = vmatpush.msra.mxu0 %v9350
        %9545 = vmatpush.msra.mxu0 %v9349
        %9546 = vmatpush.msra.mxu0 %v9348
        %9547 = vmatpush.msra.mxu0 %v9347
        %9548 = vmatpush.msra.mxu0 %v9346
        %9549 = vmatpush.msra.mxu0 %v9345
        %9550 = vmatpush.msra.mxu0 %v9344
        %9551 = vmatpush.msra.mxu0 %v9343
        %9552 = vmatpush.msra.mxu0 %v9342
        %9553 = vmatpush.msra.mxu0 %v9341
        %9554 = vmatpush.msra.mxu0 %v9340
        %9555 = vmatpush.msra.mxu0 %v9339
        %9556 = vmatpush.msra.mxu0 %v9338
        %9557 = vmatpush.msra.mxu0 %v9337
        %9558 = vmatpush.msra.mxu0 %v9336
        %9559 = vmatmul.f32.gmra.mxu0 %v9462
        %v9560 = vpop.f32.mrf.mxu0
        %v9561 = vadd.f32 %v9541, %v9560
        %9562 = vdwg.mxu0
        %9563 = vmatpush.msra.mxu0 %v9367
        %9564 = vmatpush.msra.mxu0 %v9366
        %9565 = vmatpush.msra.mxu0 %v9365
        %9566 = vmatpush.msra.mxu0 %v9364
        %9567 = vmatpush.msra.mxu0 %v9363
        %9568 = vmatpush.msra.mxu0 %v9362
        %9569 = vmatpush.msra.mxu0 %v9361
        %9570 = vmatpush.msra.mxu0 %v9360
        %9571 = vmatpush.msra.mxu0 %v9359
        %9572 = vmatpush.msra.mxu0 %v9358
        %9573 = vmatpush.msra.mxu0 %v9357
        %9574 = vmatpush.msra.mxu0 %v9356
        %9575 = vmatpush.msra.mxu0 %v9355
        %9576 = vmatpush.msra.mxu0 %v9354
        %9577 = vmatpush.msra.mxu0 %v9353
        %9578 = vmatpush.msra.mxu0 %v9352
        %9579 = vmatmul.f32.gmra.mxu0 %v9465
        %v9580 = vpop.f32.mrf.mxu0
        %v9581 = vadd.f32 %v9561, %v9580
        %9582 = vdwg.mxu0
        %9583 = vmatpush.msra.mxu0 %v9383
        %9584 = vmatpush.msra.mxu0 %v9382
        %9585 = vmatpush.msra.mxu0 %v9381
        %9586 = vmatpush.msra.mxu0 %v9380
        %9587 = vmatpush.msra.mxu0 %v9379
        %9588 = vmatpush.msra.mxu0 %v9378
        %9589 = vmatpush.msra.mxu0 %v9377
        %9590 = vmatpush.msra.mxu0 %v9376
        %9591 = vmatpush.msra.mxu0 %v9375
        %9592 = vmatpush.msra.mxu0 %v9374
        %9593 = vmatpush.msra.mxu0 %v9373
        %9594 = vmatpush.msra.mxu0 %v9372
        %9595 = vmatpush.msra.mxu0 %v9371
        %9596 = vmatpush.msra.mxu0 %v9370
        %9597 = vmatpush.msra.mxu0 %v9369
        %9598 = vmatpush.msra.mxu0 %v9368
        %9599 = vmatmul.f32.gmra.mxu0 %v9468
        %v9600 = vpop.f32.mrf.mxu0
        %v9601 = vadd.f32 %v9581, %v9600
        %9602 = vdwg.mxu0
        %9603 = vmatpush.msra.mxu0 %v9399
        %9604 = vmatpush.msra.mxu0 %v9398
        %9605 = vmatpush.msra.mxu0 %v9397
        %9606 = vmatpush.msra.mxu0 %v9396
        %9607 = vmatpush.msra.mxu0 %v9395
        %9608 = vmatpush.msra.mxu0 %v9394
        %9609 = vmatpush.msra.mxu0 %v9393
        %9610 = vmatpush.msra.mxu0 %v9392
        %9611 = vmatpush.msra.mxu0 %v9391
        %9612 = vmatpush.msra.mxu0 %v9390
        %9613 = vmatpush.msra.mxu0 %v9389
        %9614 = vmatpush.msra.mxu0 %v9388
        %9615 = vmatpush.msra.mxu0 %v9387
        %9616 = vmatpush.msra.mxu0 %v9386
        %9617 = vmatpush.msra.mxu0 %v9385
        %9618 = vmatpush.msra.mxu0 %v9384
        %9619 = vmatmul.f32.gmra.mxu0 %v9471
        %v9620 = vpop.f32.mrf.mxu0
        %v9621 = vadd.f32 %v9601, %v9620
        %9622 = vdwg.mxu0
        %9623 = vmatpush.msra.mxu0 %v9415
        %9624 = vmatpush.msra.mxu0 %v9414
        %9625 = vmatpush.msra.mxu0 %v9413
        %9626 = vmatpush.msra.mxu0 %v9412
        %9627 = vmatpush.msra.mxu0 %v9411
        %9628 = vmatpush.msra.mxu0 %v9410
        %9629 = vmatpush.msra.mxu0 %v9409
        %9630 = vmatpush.msra.mxu0 %v9408
        %9631 = vmatpush.msra.mxu0 %v9407
        %9632 = vmatpush.msra.mxu0 %v9406
        %9633 = vmatpush.msra.mxu0 %v9405
        %9634 = vmatpush.msra.mxu0 %v9404
        %9635 = vmatpush.msra.mxu0 %v9403
        %9636 = vmatpush.msra.mxu0 %v9402
        %9637 = vmatpush.msra.mxu0 %v9401
        %9638 = vmatpush.msra.mxu0 %v9400
        %9639 = vmatmul.f32.gmra.mxu0 %v9474
        %v9640 = vpop.f32.mrf.mxu0
        %v9641 = vadd.f32 %v9621, %v9640
        %9642 = vdwg.mxu0
        %v9643 = vmul.f32 %v9641, 0.00390625
        %v9644 = vld [vmem:[#allocation10] sm:$0x1]
        %v9646 = vperm.slane %v9644, 0
        %v9648 = vadd.f32 %v9643, %v9646
        %vm9649 = vcmask 257024
        %9650 = vst.msk [vmem:[%s376] sm:$0xf] %vm9649, %v9648
        %s9651 = sand.u32 %s206, 1
        %s9652 = scalar_lea.sflag [#allocation4], %s9651
        %s9653 = sand.u32 %s206, 1
        %s9654 = smul.addr %s9653, 4
        %s9655 = scalar_lea.vmem [#allocation11], %s9654
        // Predicated region
        $region73: #{tpu_custom_call.1} parent=51 // pred_check
          %p9656 = pneg %p216
        $region74: #{tpu_custom_call.1} parent=51 // pred_check_branch
          %9658 = sbr.rel (%p9656) target = $region76
        $region75: #{tpu_custom_call.1} parent=51 // pred_region
          %9660 = vsyncadd %s9652, 0
          %s9661 = smul.addr %s25, 4
          %s9662 = scalar_lea.hbm %s8, %s9661
          %s9664 = sshll.u32 %s9655, 4
          %s9665 = int_to_ptr.vmem [resolvable:$true] %s9664
          %s9666 = sshll.u32 %s9662, 4
          %s9667 = int_to_ptr.hbm [resolvable:$true] %s9666
          %9669 = dma.vmem_to_hbm [thread:$0]  %s9665, 64, %s9667, %s9652
        $region76: #{tpu_custom_call.1} parent=51 // pred_fallthru
          _
      $region52: #{tpu_custom_call.1} parent=5 // pred_fallthru
        _
      %p9670 = scmp.le.s32.totalorder 2, %s20
      // Predicated region
      $region77: #{tpu_custom_call.1} parent=5 // pred_check
        %p9671 = pneg %p9670
      $region78: #{tpu_custom_call.1} parent=5 // pred_check_branch
        %9673 = sbr.rel (%p9671) target = $region80
      $region79: #{tpu_custom_call.1} parent=5 // pred_region
        %s9674 = ssub.s32 %s20, 2
        // Predicated region
        $region81: #{tpu_custom_call.1} parent=79 // pred_check
          %p9675 = pneg %p222
        $region82: #{tpu_custom_call.1} parent=79 // pred_check_branch
          %9677 = sbr.rel (%p9675) target = $region84
        $region83: #{tpu_custom_call.1} parent=79 // pred_region
          %s9678 = sand.u32 %s207, 1
          %s9679 = scalar_lea.sflag [#allocation4], %s9678
          %s9680 = sand.u32 %s207, 1
          %s9681 = smul.addr %s9680, 4
          %s9682 = scalar_lea.vmem [#allocation11], %s9681
          %9684 = dma.done %s9679, 64
        $region84: #{tpu_custom_call.1} parent=79 // pred_fallthru
          _
      $region80: #{tpu_custom_call.1} parent=5 // pred_fallthru
        _
    $region6: #{tpu_custom_call.1} parent=1 // loop_footer
      %s24 = sadd.s32 1, %s20
    $region7: #{tpu_custom_call.1} parent=1 // loop_footer_branch
      %19 = sbr.rel target = $region3
    $region8: #{tpu_custom_call.1} parent=1 // loop_exit
      _
    %9685 = vsyncpa [#allocation3], 1
    %s9686 = scalar_lea.sflag [#allocation3], 1
    %9687 = vsyncpa %s9686, 1
    %9688 = vsyncpa [#allocation6], 1
    %9689 = vsyncpa [#allocation9], 1
    %9690 = vsyncpa [#allocation4], 1
    %s9691 = scalar_lea.sflag [#allocation4], 1
    %9692 = vsyncpa %s9691, 1

</llo_original>
